<compile_context>
chip_gen: v6e
topology: v6e:2x2x1
jax: 0.10.0
libtpu: 0.0.40
codegen_flags: <defaults>
</compile_context>

<pallas_src>
import functools

import jax
import jax.numpy as jnp
from jax import lax
from jax.experimental import pallas as pl
from jax.experimental.pallas import tpu as pltpu

LRELU_SLOPE = 0.2
EPS = 1e-5
NUM_LAYERS = 6
LANE = 128


def _round_up(x, m):
    return (x + m - 1) // m * m


def _style_layout(couts):
    """Lane-aligned column layout of the packed per-layer (gamma, beta) affines."""
    offsets = []
    off = 0
    for c in couts:
        cpad = _round_up(c, LANE)
        offsets.append((off, off + cpad))  # (gamma_offset, beta_offset)
        off += 2 * cpad
    return tuple(offsets), off


# ----------------------------------------------------------------------------
# Fused kernel: one grid step == G graphs, full Decoder2 forward in VMEM.
# ----------------------------------------------------------------------------
def _decoder2_kernel(x_ref, s1_ref, s2_ref, wsty1_ref, bsty1_ref,
                     wsty2_ref, bsty2_ref, *rest, couts, nroi, graphs):
    n = len(couts)
    w1_refs = rest[:n]          # branch-1 layer weights (cin, c)
    w2_refs = rest[n:2 * n]     # branch-2 layer weights (cin, c)
    a_ref = rest[2 * n]         # output block (1, nroi, graphs*nroi)

    offsets, _ = _style_layout(couts)
    rows = graphs * nroi
    inv_n = 1.0 / float(nroi)

    x = x_ref[...].reshape(rows, x_ref.shape[-1])       # (G*nroi, Cin), shared input

    # All 12 per-layer style affines of one branch in a single (G,S)x(S,W) matmul.
    def style_affines(s_ref, wsty_ref, bsty_ref):
        s = s_ref[...][:, 0, :].astype(wsty_ref.dtype)   # (G, S)
        return (jnp.dot(s, wsty_ref[...], preferred_element_type=jnp.float32)
                + bsty_ref[...])                         # (G, W), f32

    gb1 = style_affines(s1_ref, wsty1_ref, bsty1_ref)
    gb2 = style_affines(s2_ref, wsty2_ref, bsty2_ref)

    def layer(h, w_ref, gb, l):
        c = couts[l]
        go, bo = offsets[l]
        # Linear. (nn.Linear bias omitted: exactly cancelled by the instance
        # norm's per-graph mean subtraction.)  bf16 operands, f32 accumulation.
        z = jnp.dot(h.astype(w_ref.dtype), w_ref[...],
                    preferred_element_type=jnp.float32)          # (G*nroi, c)
        z3 = z.reshape(graphs, nroi, c)
        # One-pass per-graph instance-norm statistics.
        mean = jnp.sum(z3, axis=1, keepdims=True) * inv_n         # (G, 1, c)
        ez2 = jnp.sum(z3 * z3, axis=1, keepdims=True) * inv_n
        var = jnp.maximum(ez2 - mean * mean, 0.0)
        # Fold norm + AdaIN into a single per-column scale/shift.
        gamma = gb[:, go:go + c][:, None, :]                      # lane-aligned view
        beta = gb[:, bo:bo + c][:, None, :]
        scale = gamma * lax.rsqrt(var + EPS)                      # EUP rsqrt
        shift = beta - mean * scale
        y = z3 * scale + shift                                    # one VPU pass
        y = jnp.maximum(y, LRELU_SLOPE * y)                       # LeakyReLU(0.2)
        return y.reshape(rows, c)

    h1 = x
    h2 = x
    for l in range(n):
        h1 = layer(h1, w1_refs[l], gb1, l)
        h2 = layer(h2, w2_refs[l], gb2, l)

    # A_g = x1_g @ x2_g^T per graph (contract feature axes directly; this is the
    # trans_b form, so no explicit transpose/VMEM temp for x2).  Graphs are laid
    # side by side along the lane axis for a dense output store.
    c_last = couts[-1]
    x1 = h1.astype(w1_refs[-1].dtype).reshape(graphs, nroi, c_last)
    x2 = h2.astype(w2_refs[-1].dtype).reshape(graphs, nroi, c_last)
    blocks = [lax.dot_general(x1[g], x2[g], (((1,), (1,)), ((), ())),
                              preferred_element_type=jnp.float32)
              for g in range(graphs)]
    slab = blocks[0] if graphs == 1 else jnp.concatenate(blocks, axis=-1)
    a_ref[0] = slab


# ----------------------------------------------------------------------------
# Parameters (deterministic, synthetic) and fusion preprocessing.
# ----------------------------------------------------------------------------
def init_decoder2_params(key, input_size, style_dim):
    i = input_size
    dims = [(i, i), (i, 2 * i), (2 * i, 2 * i),
            (2 * i, 4 * i), (4 * i, 4 * i), (4 * i, 8 * i)]

    def init_unit(k, cin, cout):
        ks = jax.random.split(k, 4)
        return {
            "w": jax.random.normal(ks[0], (cin, cout), jnp.float32) / jnp.sqrt(cin),
            "b": jax.random.normal(ks[1], (cout,), jnp.float32) * 0.01,
            "wsg": jax.random.normal(ks[2], (style_dim, cout), jnp.float32) / jnp.sqrt(style_dim),
            "bsg": jnp.ones((cout,), jnp.float32),      # gamma biased to 1
            "wsb": jax.random.normal(ks[3], (style_dim, cout), jnp.float32) / jnp.sqrt(style_dim),
            "bsb": jnp.zeros((cout,), jnp.float32),     # beta biased to 0
        }

    keys = jax.random.split(key, 2 * NUM_LAYERS)
    branch1 = [init_unit(keys[l], *dims[l]) for l in range(NUM_LAYERS)]
    branch2 = [init_unit(keys[NUM_LAYERS + l], *dims[l]) for l in range(NUM_LAYERS)]
    return {"branch1": branch1, "branch2": branch2}


def fuse_decoder2_params(params, matmul_dtype=jnp.bfloat16):
    """Per-branch weights in the matmul dtype + lane-aligned packed style affines."""
    couts = tuple(int(p["w"].shape[1]) for p in params["branch1"])
    offsets, width = _style_layout(couts)
    style_dim = int(params["branch1"][0]["wsg"].shape[0])

    def pack_branch(layers):
        ws = tuple(p["w"].astype(matmul_dtype) for p in layers)
        wsty = jnp.zeros((style_dim, width), jnp.float32)
        bsty = jnp.zeros((1, width), jnp.float32)
        for (go, bo), p in zip(offsets, layers):
            c = int(p["w"].shape[1])
            wsty = wsty.at[:, go:go + c].set(p["wsg"])
            wsty = wsty.at[:, bo:bo + c].set(p["wsb"])
            bsty = bsty.at[:, go:go + c].set(p["bsg"][None, :])
            bsty = bsty.at[:, bo:bo + c].set(p["bsb"][None, :])
        return ws, wsty.astype(matmul_dtype), bsty

    w1, wsty1, bsty1 = pack_branch(params["branch1"])
    w2, wsty2, bsty2 = pack_branch(params["branch2"])
    return {"w1": w1, "w2": w2,
            "wsty1": wsty1, "bsty1": bsty1,
            "wsty2": wsty2, "bsty2": bsty2}


def _pick_graphs_per_step(batch_size, nroi, row_target=256):
    """Smallest divisor of batch_size whose row count fills the MXU sublanes."""
    divisors = [g for g in range(1, batch_size + 1) if batch_size % g == 0]
    for g in divisors:
        if g * nroi >= row_target:
            return g
    return divisors[-1]


def _resident_spec(shape, single_buffer):
    """Full-array spec for grid-invariant weights; single-buffer if supported."""
    idx = lambda *_: (0,) * len(shape)
    if single_buffer and hasattr(pl, "Buffered"):
        try:
            return pl.BlockSpec(shape, idx, pipeline_mode=pl.Buffered(1))
        except TypeError:
            pass
    return pl.BlockSpec(shape, idx)


# ----------------------------------------------------------------------------
# Forward wrapper: single pallas_call for the entire Decoder2 forward.
# ----------------------------------------------------------------------------
@functools.partial(jax.jit, static_argnames=("batch_size", "nroi", "graphs_per_step",
                                             "single_buffer_weights"))
def decoder2_forward(fused, x_flat, style1, style2, batch_size, nroi,
                     graphs_per_step=None, single_buffer_weights=True):
    input_size = x_flat.shape[-1]
    style_dim = style1.shape[-1]
    couts = tuple(int(w.shape[1]) for w in fused["w1"])
    width = fused["wsty1"].shape[1]

    g = (graphs_per_step if graphs_per_step is not None
         else _pick_graphs_per_step(batch_size, nroi))
    assert batch_size % g == 0, (batch_size, g)
    steps = batch_size // g

    x = x_flat.reshape(batch_size, nroi, input_size)
    s1 = style1.reshape(batch_size, 1, style_dim)
    s2 = style2.reshape(batch_size, 1, style_dim)

    in_specs = [
        pl.BlockSpec((g, nroi, input_size), lambda b: (b, 0, 0)),
        pl.BlockSpec((g, 1, style_dim), lambda b: (b, 0, 0)),
        pl.BlockSpec((g, 1, style_dim), lambda b: (b, 0, 0)),
    ]
    resident = (fused["wsty1"], fused["bsty1"], fused["wsty2"], fused["bsty2"]) \
        + fused["w1"] + fused["w2"]
    in_specs += [_resident_spec(a.shape, single_buffer_weights) for a in resident]

    out_specs = pl.BlockSpec((1, nroi, g * nroi), lambda b: (b, 0, 0))
    out_shape = jax.ShapeDtypeStruct((steps, nroi, g * nroi), jnp.float32)

    # Roofline hint for XLA's scheduler.
    flops = 0
    cin = input_size
    for c in couts:
        flops += 2 * 2 * nroi * cin * c                 # two branches of linears
        cin = c
    flops += 2 * nroi * nroi * couts[-1]                # A = x1 @ x2^T
    flops += 2 * 2 * style_dim * width                  # style-affine matmuls
    flops *= batch_size
    transcendentals = batch_size * 2 * sum(couts)       # one rsqrt per norm column
    param_bytes = sum(int(a.size) * a.dtype.itemsize for a in resident)
    bytes_accessed = (param_bytes + int(x.size) * 4 + int(s1.size) * 4
                      + int(s2.size) * 4 + batch_size * nroi * nroi * 4)
    cost = pl.CostEstimate(flops=flops, transcendentals=transcendentals,
                           bytes_accessed=bytes_accessed)

    # Explicit VMEM budget with headroom (v7x has only 64 MiB physical).
    act_bytes = g * nroi * (8 * input_size) * 4 * 8
    block_bytes = 2 * 4 * (g * nroi * input_size + 2 * g * style_dim + nroi * g * nroi)
    vmem_limit = int(min(64 * 2 ** 20,
                         max(32 * 2 ** 20, 2 * (param_bytes + act_bytes + block_bytes))))

    kernel = functools.partial(_decoder2_kernel, couts=couts, nroi=nroi, graphs=g)
    out = pl.pallas_call(
        kernel,
        out_shape=out_shape,
        grid=(steps,),
        in_specs=in_specs,
        out_specs=out_specs,
        compiler_params=pltpu.CompilerParams(
            dimension_semantics=("parallel",),
            vmem_limit_bytes=vmem_limit),
        cost_estimate=cost,
    )(x, s1, s2, *resident)

    # Un-interleave the lane-dense (steps, nroi, g*nroi) slab -> (batch, nroi, nroi).
    a = out.reshape(steps, nroi, g, nroi).transpose(0, 2, 1, 3)
    return a.reshape(batch_size, nroi, nroi)


def _forward_with_fallback(fused, x_flat, style1, style2, batch_size, nroi,
                           graphs_per_step=None):
    """Prefer single-buffered resident weights; fall back if this Pallas build
    does not support pipeline_mode=pl.Buffered(1)."""
    try:
        out = decoder2_forward(fused, x_flat, style1, style2,
                               batch_size=batch_size, nroi=nroi,
                               graphs_per_step=graphs_per_step,
                               single_buffer_weights=True)
        jax.block_until_ready(out)
        return out
    except Exception:
        out = decoder2_forward(fused, x_flat, style1, style2,
                               batch_size=batch_size, nroi=nroi,
                               graphs_per_step=graphs_per_step,
                               single_buffer_weights=False)
        jax.block_until_ready(out)
        return out


# ----------------------------------------------------------------------------
# Pure-JAX reference (unfused, f32, with linear biases) for correctness checks.
# ----------------------------------------------------------------------------
def decoder2_reference(params, x_flat, style1, style2, batch_size, nroi):
    hp = lax.Precision.HIGHEST

    def run_branch(h, style, layers):
        for p in layers:
            z = jnp.einsum("bnc,cd->bnd", h, p["w"], precision=hp) + p["b"]
            mean = jnp.mean(z, axis=1, keepdims=True)
            var = jnp.mean((z - mean) ** 2, axis=1, keepdims=True)
            zn = (z - mean) * lax.rsqrt(var + EPS)
            gamma = jnp.dot(style, p["wsg"], precision=hp) + p["bsg"]
            beta = jnp.dot(style, p["wsb"], precision=hp) + p["bsb"]
            y = gamma[:, None, :] * zn + beta[:, None, :]
            h = jnp.where(y > 0.0, y, LRELU_SLOPE * y)
        return h

    x = x_flat.reshape(batch_size, nroi, -1)
    x1 = run_branch(x, style1, params["branch1"])
    x2 = run_branch(x, style2, params["branch2"])
    return jnp.einsum("bnc,bmc->bnm", x1, x2, precision=hp)


# ----------------------------------------------------------------------------
if __name__ == "__main__":
    batch_size = 2
    nroi = 8
    input_size = 16
    style_dim = 16

    key = jax.random.PRNGKey(0)
    k_params, k_x, k_s1, k_s2 = jax.random.split(key, 4)

    params = init_decoder2_params(k_params, input_size, style_dim)

    # PyTorch layout: x is (batch_size*nroi, input_size), styles are (batch, S).
    x_flat = jax.random.normal(k_x, (batch_size * nroi, input_size), jnp.float32)
    style1 = jax.random.normal(k_s1, (batch_size, style_dim), jnp.float32)
    style2 = jax.random.normal(k_s2, (batch_size, style_dim), jnp.float32)

    a_ref = decoder2_reference(params, x_flat, style1, style2, batch_size, nroi)
    jax.block_until_ready(a_ref)

    def rel_err(a, b):
        return float(jnp.linalg.norm(a - b) / (jnp.linalg.norm(b) + 1e-6))

    # 1) f32-weight variant: tighter semantic check of the fused kernel
    #    (structure / instance-norm grouping / style-slice offsets).
    fused_f32 = fuse_decoder2_params(params, matmul_dtype=jnp.float32)
    a_f32 = _forward_with_fallback(fused_f32, x_flat, style1, style2, batch_size, nroi)
    assert a_f32.shape == (batch_size, nroi, nroi)
    assert bool(jnp.all(jnp.isfinite(a_f32)))
    assert rel_err(a_f32, a_ref) < 2e-2, rel_err(a_f32, a_ref)

    # 2) Same weights, one graph per grid step (grid=2): exercises the
    #    multi-step grid path and the output un-interleave.
    a_g1 = _forward_with_fallback(fused_f32, x_flat, style1, style2, batch_size, nroi,
                                  graphs_per_step=1)
    assert rel_err(a_g1, a_ref) < 2e-2, rel_err(a_g1, a_ref)

    # 3) Production bf16-matmul variant (f32 accumulation): loose check.
    fused_bf16 = fuse_decoder2_params(params, matmul_dtype=jnp.bfloat16)
    a_bf16 = _forward_with_fallback(fused_bf16, x_flat, style1, style2, batch_size, nroi)
    assert a_bf16.shape == (batch_size, nroi, nroi)
    assert bool(jnp.all(jnp.isfinite(a_bf16)))
    assert rel_err(a_bf16, a_ref) < 1.5e-1, rel_err(a_bf16, a_ref)

    print("KERNEL_OK")
</pallas_src>

<mosaic_0001>
module attributes {stable_mosaic.version = 11 : i64} {
  func.func @_decoder2_kernel(%arg0: i32, %arg1: memref<2x8x16xf32, #tpu.memory_space<vmem>>, %arg2: memref<2x1x16xf32, #tpu.memory_space<vmem>>, %arg3: memref<2x1x16xf32, #tpu.memory_space<vmem>>, %arg4: memref<16x1536xf32, #tpu.memory_space<vmem>>, %arg5: memref<1x1536xf32, #tpu.memory_space<vmem>>, %arg6: memref<16x1536xf32, #tpu.memory_space<vmem>>, %arg7: memref<1x1536xf32, #tpu.memory_space<vmem>>, %arg8: memref<16x16xf32, #tpu.memory_space<vmem>>, %arg9: memref<16x32xf32, #tpu.memory_space<vmem>>, %arg10: memref<32x32xf32, #tpu.memory_space<vmem>>, %arg11: memref<32x64xf32, #tpu.memory_space<vmem>>, %arg12: memref<64x64xf32, #tpu.memory_space<vmem>>, %arg13: memref<64x128xf32, #tpu.memory_space<vmem>>, %arg14: memref<16x16xf32, #tpu.memory_space<vmem>>, %arg15: memref<16x32xf32, #tpu.memory_space<vmem>>, %arg16: memref<32x32xf32, #tpu.memory_space<vmem>>, %arg17: memref<32x64xf32, #tpu.memory_space<vmem>>, %arg18: memref<64x64xf32, #tpu.memory_space<vmem>>, %arg19: memref<64x128xf32, #tpu.memory_space<vmem>>, %arg20: memref<1x8x16xf32, #tpu.memory_space<vmem>>) attributes {dimension_semantics = [#tpu.dimension_semantics<parallel>], iteration_bounds = array<i64: 1>, scalar_prefetch = 0 : i64, scratch_operands = 0 : i64, tpu.core_type = #tpu.core_type<tc>, window_params = [{transform_indices = @transform_0, window_bounds = array<i64: 2, 8, 16>}, {transform_indices = @transform_1, window_bounds = array<i64: 2, 1, 16>}, {transform_indices = @transform_2, window_bounds = array<i64: 2, 1, 16>}, {pipeline_mode = #tpu.pipeline_mode<synchronous>, transform_indices = @transform_3, window_bounds = array<i64: 16, 1536>}, {pipeline_mode = #tpu.pipeline_mode<synchronous>, transform_indices = @transform_4, window_bounds = array<i64: 1, 1536>}, {pipeline_mode = #tpu.pipeline_mode<synchronous>, transform_indices = @transform_5, window_bounds = array<i64: 16, 1536>}, {pipeline_mode = #tpu.pipeline_mode<synchronous>, transform_indices = @transform_6, window_bounds = array<i64: 1, 1536>}, {pipeline_mode = #tpu.pipeline_mode<synchronous>, transform_indices = @transform_7, window_bounds = array<i64: 16, 16>}, {pipeline_mode = #tpu.pipeline_mode<synchronous>, transform_indices = @transform_8, window_bounds = array<i64: 16, 32>}, {pipeline_mode = #tpu.pipeline_mode<synchronous>, transform_indices = @transform_9, window_bounds = array<i64: 32, 32>}, {pipeline_mode = #tpu.pipeline_mode<synchronous>, transform_indices = @transform_10, window_bounds = array<i64: 32, 64>}, {pipeline_mode = #tpu.pipeline_mode<synchronous>, transform_indices = @transform_11, window_bounds = array<i64: 64, 64>}, {pipeline_mode = #tpu.pipeline_mode<synchronous>, transform_indices = @transform_12, window_bounds = array<i64: 64, 128>}, {pipeline_mode = #tpu.pipeline_mode<synchronous>, transform_indices = @transform_13, window_bounds = array<i64: 16, 16>}, {pipeline_mode = #tpu.pipeline_mode<synchronous>, transform_indices = @transform_14, window_bounds = array<i64: 16, 32>}, {pipeline_mode = #tpu.pipeline_mode<synchronous>, transform_indices = @transform_15, window_bounds = array<i64: 32, 32>}, {pipeline_mode = #tpu.pipeline_mode<synchronous>, transform_indices = @transform_16, window_bounds = array<i64: 32, 64>}, {pipeline_mode = #tpu.pipeline_mode<synchronous>, transform_indices = @transform_17, window_bounds = array<i64: 64, 64>}, {pipeline_mode = #tpu.pipeline_mode<synchronous>, transform_indices = @transform_18, window_bounds = array<i64: 64, 128>}, {transform_indices = @transform_19, window_bounds = array<i64: 1, 8, 16>}]} {
    %c0 = arith.constant 0 : index
    %c0_0 = arith.constant 0 : index
    %c0_1 = arith.constant 0 : index
    %0 = vector.load %arg1[%c0, %c0_0, %c0_1] : memref<2x8x16xf32, #tpu.memory_space<vmem>>, vector<2x8x16xf32>
    %1 = vector.shape_cast %0 : vector<2x8x16xf32> to vector<16x16xf32>
    %c0_2 = arith.constant 0 : index
    %c0_3 = arith.constant 0 : index
    %c0_4 = arith.constant 0 : index
    %2 = vector.load %arg2[%c0_2, %c0_3, %c0_4] : memref<2x1x16xf32, #tpu.memory_space<vmem>>, vector<2x1x16xf32>
    %3 = vector.shape_cast %2 : vector<2x1x16xf32> to vector<2x16xf32>
    %c0_5 = arith.constant 0 : index
    %c0_6 = arith.constant 0 : index
    %4 = vector.load %arg4[%c0_5, %c0_6] : memref<16x1536xf32, #tpu.memory_space<vmem>>, vector<16x1536xf32>
    %cst = arith.constant dense<0.000000e+00> : vector<2x1536xf32>
    %5 = tpu.matmul %3, %4, %cst {dimension_numbers = #tpu.dot_dimension_numbers<[1], [0], [0], [1], [0, 0, 1, 1], [], []>} : vector<2x16xf32>, vector<16x1536xf32>, vector<2x1536xf32> -> vector<2x1536xf32>
    %c0_7 = arith.constant 0 : index
    %c0_8 = arith.constant 0 : index
    %6 = vector.load %arg5[%c0_7, %c0_8] : memref<1x1536xf32, #tpu.memory_space<vmem>>, vector<1x1536xf32>
    %7 = vector.broadcast %6 : vector<1x1536xf32> to vector<2x1536xf32>
    %8 = arith.addf %5, %7 : vector<2x1536xf32>
    %c0_9 = arith.constant 0 : index
    %c0_10 = arith.constant 0 : index
    %c0_11 = arith.constant 0 : index
    %9 = vector.load %arg3[%c0_9, %c0_10, %c0_11] : memref<2x1x16xf32, #tpu.memory_space<vmem>>, vector<2x1x16xf32>
    %10 = vector.shape_cast %9 : vector<2x1x16xf32> to vector<2x16xf32>
    %c0_12 = arith.constant 0 : index
    %c0_13 = arith.constant 0 : index
    %11 = vector.load %arg6[%c0_12, %c0_13] : memref<16x1536xf32, #tpu.memory_space<vmem>>, vector<16x1536xf32>
    %cst_14 = arith.constant dense<0.000000e+00> : vector<2x1536xf32>
    %12 = tpu.matmul %10, %11, %cst_14 {dimension_numbers = #tpu.dot_dimension_numbers<[1], [0], [0], [1], [0, 0, 1, 1], [], []>} : vector<2x16xf32>, vector<16x1536xf32>, vector<2x1536xf32> -> vector<2x1536xf32>
    %c0_15 = arith.constant 0 : index
    %c0_16 = arith.constant 0 : index
    %13 = vector.load %arg7[%c0_15, %c0_16] : memref<1x1536xf32, #tpu.memory_space<vmem>>, vector<1x1536xf32>
    %14 = vector.broadcast %13 : vector<1x1536xf32> to vector<2x1536xf32>
    %15 = arith.addf %12, %14 : vector<2x1536xf32>
    %c0_17 = arith.constant 0 : index
    %c0_18 = arith.constant 0 : index
    %16 = vector.load %arg8[%c0_17, %c0_18] : memref<16x16xf32, #tpu.memory_space<vmem>>, vector<16x16xf32>
    %cst_19 = arith.constant dense<0.000000e+00> : vector<16x16xf32>
    %17 = tpu.matmul %1, %16, %cst_19 {dimension_numbers = #tpu.dot_dimension_numbers<[1], [0], [0], [1], [0, 0, 1, 1], [], []>} : vector<16x16xf32>, vector<16x16xf32>, vector<16x16xf32> -> vector<16x16xf32>
    %18 = vector.shape_cast %17 : vector<16x16xf32> to vector<2x8x16xf32>
    %cst_20 = arith.constant dense<0.000000e+00> : vector<2x16xf32>
    %19 = vector.multi_reduction <add>, %18, %cst_20 [1] : vector<2x8x16xf32> to vector<2x16xf32>
    %20 = vector.shape_cast %19 : vector<2x16xf32> to vector<2x1x16xf32>
    %cst_21 = arith.constant 1.250000e-01 : f32
    %21 = vector.broadcast %cst_21 : f32 to vector<2x1x16xf32>
    %22 = arith.mulf %20, %21 : vector<2x1x16xf32>
    %23 = arith.mulf %18, %18 : vector<2x8x16xf32>
    %cst_22 = arith.constant dense<0.000000e+00> : vector<2x16xf32>
    %24 = vector.multi_reduction <add>, %23, %cst_22 [1] : vector<2x8x16xf32> to vector<2x16xf32>
    %25 = vector.shape_cast %24 : vector<2x16xf32> to vector<2x1x16xf32>
    %cst_23 = arith.constant 1.250000e-01 : f32
    %26 = vector.broadcast %cst_23 : f32 to vector<2x1x16xf32>
    %27 = arith.mulf %25, %26 : vector<2x1x16xf32>
    %28 = arith.mulf %22, %22 : vector<2x1x16xf32>
    %29 = arith.subf %27, %28 : vector<2x1x16xf32>
    %cst_24 = arith.constant 0.000000e+00 : f32
    %30 = vector.broadcast %cst_24 : f32 to vector<2x1x16xf32>
    %31 = arith.maximumf %29, %30 : vector<2x1x16xf32>
    %32 = vector.extract_strided_slice %8 {offsets = [0, 0], sizes = [2, 16], strides = [1, 1]} : vector<2x1536xf32> to vector<2x16xf32>
    %33 = vector.shape_cast %32 : vector<2x16xf32> to vector<2x1x16xf32>
    %34 = vector.extract_strided_slice %8 {offsets = [0, 128], sizes = [2, 16], strides = [1, 1]} : vector<2x1536xf32> to vector<2x16xf32>
    %35 = vector.shape_cast %34 : vector<2x16xf32> to vector<2x1x16xf32>
    %cst_25 = arith.constant 9.99999974E-6 : f32
    %36 = vector.broadcast %cst_25 : f32 to vector<2x1x16xf32>
    %37 = arith.addf %31, %36 : vector<2x1x16xf32>
    %38 = math.rsqrt %37 : vector<2x1x16xf32>
    %39 = arith.mulf %33, %38 : vector<2x1x16xf32>
    %40 = arith.mulf %22, %39 : vector<2x1x16xf32>
    %41 = arith.subf %35, %40 : vector<2x1x16xf32>
    %42 = vector.broadcast %39 : vector<2x1x16xf32> to vector<2x8x16xf32>
    %43 = arith.mulf %18, %42 : vector<2x8x16xf32>
    %44 = vector.broadcast %41 : vector<2x1x16xf32> to vector<2x8x16xf32>
    %45 = arith.addf %43, %44 : vector<2x8x16xf32>
    %cst_26 = arith.constant 2.000000e-01 : f32
    %46 = vector.broadcast %cst_26 : f32 to vector<2x8x16xf32>
    %47 = arith.mulf %46, %45 : vector<2x8x16xf32>
    %48 = arith.maximumf %45, %47 : vector<2x8x16xf32>
    %49 = vector.shape_cast %48 : vector<2x8x16xf32> to vector<16x16xf32>
    %c0_27 = arith.constant 0 : index
    %c0_28 = arith.constant 0 : index
    %50 = vector.load %arg14[%c0_27, %c0_28] : memref<16x16xf32, #tpu.memory_space<vmem>>, vector<16x16xf32>
    %cst_29 = arith.constant dense<0.000000e+00> : vector<16x16xf32>
    %51 = tpu.matmul %1, %50, %cst_29 {dimension_numbers = #tpu.dot_dimension_numbers<[1], [0], [0], [1], [0, 0, 1, 1], [], []>} : vector<16x16xf32>, vector<16x16xf32>, vector<16x16xf32> -> vector<16x16xf32>
    %52 = vector.shape_cast %51 : vector<16x16xf32> to vector<2x8x16xf32>
    %cst_30 = arith.constant dense<0.000000e+00> : vector<2x16xf32>
    %53 = vector.multi_reduction <add>, %52, %cst_30 [1] : vector<2x8x16xf32> to vector<2x16xf32>
    %54 = vector.shape_cast %53 : vector<2x16xf32> to vector<2x1x16xf32>
    %cst_31 = arith.constant 1.250000e-01 : f32
    %55 = vector.broadcast %cst_31 : f32 to vector<2x1x16xf32>
    %56 = arith.mulf %54, %55 : vector<2x1x16xf32>
    %57 = arith.mulf %52, %52 : vector<2x8x16xf32>
    %cst_32 = arith.constant dense<0.000000e+00> : vector<2x16xf32>
    %58 = vector.multi_reduction <add>, %57, %cst_32 [1] : vector<2x8x16xf32> to vector<2x16xf32>
    %59 = vector.shape_cast %58 : vector<2x16xf32> to vector<2x1x16xf32>
    %cst_33 = arith.constant 1.250000e-01 : f32
    %60 = vector.broadcast %cst_33 : f32 to vector<2x1x16xf32>
    %61 = arith.mulf %59, %60 : vector<2x1x16xf32>
    %62 = arith.mulf %56, %56 : vector<2x1x16xf32>
    %63 = arith.subf %61, %62 : vector<2x1x16xf32>
    %cst_34 = arith.constant 0.000000e+00 : f32
    %64 = vector.broadcast %cst_34 : f32 to vector<2x1x16xf32>
    %65 = arith.maximumf %63, %64 : vector<2x1x16xf32>
    %66 = vector.extract_strided_slice %15 {offsets = [0, 0], sizes = [2, 16], strides = [1, 1]} : vector<2x1536xf32> to vector<2x16xf32>
    %67 = vector.shape_cast %66 : vector<2x16xf32> to vector<2x1x16xf32>
    %68 = vector.extract_strided_slice %15 {offsets = [0, 128], sizes = [2, 16], strides = [1, 1]} : vector<2x1536xf32> to vector<2x16xf32>
    %69 = vector.shape_cast %68 : vector<2x16xf32> to vector<2x1x16xf32>
    %cst_35 = arith.constant 9.99999974E-6 : f32
    %70 = vector.broadcast %cst_35 : f32 to vector<2x1x16xf32>
    %71 = arith.addf %65, %70 : vector<2x1x16xf32>
    %72 = math.rsqrt %71 : vector<2x1x16xf32>
    %73 = arith.mulf %67, %72 : vector<2x1x16xf32>
    %74 = arith.mulf %56, %73 : vector<2x1x16xf32>
    %75 = arith.subf %69, %74 : vector<2x1x16xf32>
    %76 = vector.broadcast %73 : vector<2x1x16xf32> to vector<2x8x16xf32>
    %77 = arith.mulf %52, %76 : vector<2x8x16xf32>
    %78 = vector.broadcast %75 : vector<2x1x16xf32> to vector<2x8x16xf32>
    %79 = arith.addf %77, %78 : vector<2x8x16xf32>
    %cst_36 = arith.constant 2.000000e-01 : f32
    %80 = vector.broadcast %cst_36 : f32 to vector<2x8x16xf32>
    %81 = arith.mulf %80, %79 : vector<2x8x16xf32>
    %82 = arith.maximumf %79, %81 : vector<2x8x16xf32>
    %83 = vector.shape_cast %82 : vector<2x8x16xf32> to vector<16x16xf32>
    %c0_37 = arith.constant 0 : index
    %c0_38 = arith.constant 0 : index
    %84 = vector.load %arg9[%c0_37, %c0_38] : memref<16x32xf32, #tpu.memory_space<vmem>>, vector<16x32xf32>
    %cst_39 = arith.constant dense<0.000000e+00> : vector<16x32xf32>
    %85 = tpu.matmul %49, %84, %cst_39 {dimension_numbers = #tpu.dot_dimension_numbers<[1], [0], [0], [1], [0, 0, 1, 1], [], []>} : vector<16x16xf32>, vector<16x32xf32>, vector<16x32xf32> -> vector<16x32xf32>
    %86 = vector.shape_cast %85 : vector<16x32xf32> to vector<2x8x32xf32>
    %cst_40 = arith.constant dense<0.000000e+00> : vector<2x32xf32>
    %87 = vector.multi_reduction <add>, %86, %cst_40 [1] : vector<2x8x32xf32> to vector<2x32xf32>
    %88 = vector.shape_cast %87 : vector<2x32xf32> to vector<2x1x32xf32>
    %cst_41 = arith.constant 1.250000e-01 : f32
    %89 = vector.broadcast %cst_41 : f32 to vector<2x1x32xf32>
    %90 = arith.mulf %88, %89 : vector<2x1x32xf32>
    %91 = arith.mulf %86, %86 : vector<2x8x32xf32>
    %cst_42 = arith.constant dense<0.000000e+00> : vector<2x32xf32>
    %92 = vector.multi_reduction <add>, %91, %cst_42 [1] : vector<2x8x32xf32> to vector<2x32xf32>
    %93 = vector.shape_cast %92 : vector<2x32xf32> to vector<2x1x32xf32>
    %cst_43 = arith.constant 1.250000e-01 : f32
    %94 = vector.broadcast %cst_43 : f32 to vector<2x1x32xf32>
    %95 = arith.mulf %93, %94 : vector<2x1x32xf32>
    %96 = arith.mulf %90, %90 : vector<2x1x32xf32>
    %97 = arith.subf %95, %96 : vector<2x1x32xf32>
    %cst_44 = arith.constant 0.000000e+00 : f32
    %98 = vector.broadcast %cst_44 : f32 to vector<2x1x32xf32>
    %99 = arith.maximumf %97, %98 : vector<2x1x32xf32>
    %100 = vector.extract_strided_slice %8 {offsets = [0, 256], sizes = [2, 32], strides = [1, 1]} : vector<2x1536xf32> to vector<2x32xf32>
    %101 = vector.shape_cast %100 : vector<2x32xf32> to vector<2x1x32xf32>
    %102 = vector.extract_strided_slice %8 {offsets = [0, 384], sizes = [2, 32], strides = [1, 1]} : vector<2x1536xf32> to vector<2x32xf32>
    %103 = vector.shape_cast %102 : vector<2x32xf32> to vector<2x1x32xf32>
    %cst_45 = arith.constant 9.99999974E-6 : f32
    %104 = vector.broadcast %cst_45 : f32 to vector<2x1x32xf32>
    %105 = arith.addf %99, %104 : vector<2x1x32xf32>
    %106 = math.rsqrt %105 : vector<2x1x32xf32>
    %107 = arith.mulf %101, %106 : vector<2x1x32xf32>
    %108 = arith.mulf %90, %107 : vector<2x1x32xf32>
    %109 = arith.subf %103, %108 : vector<2x1x32xf32>
    %110 = vector.broadcast %107 : vector<2x1x32xf32> to vector<2x8x32xf32>
    %111 = arith.mulf %86, %110 : vector<2x8x32xf32>
    %112 = vector.broadcast %109 : vector<2x1x32xf32> to vector<2x8x32xf32>
    %113 = arith.addf %111, %112 : vector<2x8x32xf32>
    %cst_46 = arith.constant 2.000000e-01 : f32
    %114 = vector.broadcast %cst_46 : f32 to vector<2x8x32xf32>
    %115 = arith.mulf %114, %113 : vector<2x8x32xf32>
    %116 = arith.maximumf %113, %115 : vector<2x8x32xf32>
    %117 = vector.shape_cast %116 : vector<2x8x32xf32> to vector<16x32xf32>
    %c0_47 = arith.constant 0 : index
    %c0_48 = arith.constant 0 : index
    %118 = vector.load %arg15[%c0_47, %c0_48] : memref<16x32xf32, #tpu.memory_space<vmem>>, vector<16x32xf32>
    %cst_49 = arith.constant dense<0.000000e+00> : vector<16x32xf32>
    %119 = tpu.matmul %83, %118, %cst_49 {dimension_numbers = #tpu.dot_dimension_numbers<[1], [0], [0], [1], [0, 0, 1, 1], [], []>} : vector<16x16xf32>, vector<16x32xf32>, vector<16x32xf32> -> vector<16x32xf32>
    %120 = vector.shape_cast %119 : vector<16x32xf32> to vector<2x8x32xf32>
    %cst_50 = arith.constant dense<0.000000e+00> : vector<2x32xf32>
    %121 = vector.multi_reduction <add>, %120, %cst_50 [1] : vector<2x8x32xf32> to vector<2x32xf32>
    %122 = vector.shape_cast %121 : vector<2x32xf32> to vector<2x1x32xf32>
    %cst_51 = arith.constant 1.250000e-01 : f32
    %123 = vector.broadcast %cst_51 : f32 to vector<2x1x32xf32>
    %124 = arith.mulf %122, %123 : vector<2x1x32xf32>
    %125 = arith.mulf %120, %120 : vector<2x8x32xf32>
    %cst_52 = arith.constant dense<0.000000e+00> : vector<2x32xf32>
    %126 = vector.multi_reduction <add>, %125, %cst_52 [1] : vector<2x8x32xf32> to vector<2x32xf32>
    %127 = vector.shape_cast %126 : vector<2x32xf32> to vector<2x1x32xf32>
    %cst_53 = arith.constant 1.250000e-01 : f32
    %128 = vector.broadcast %cst_53 : f32 to vector<2x1x32xf32>
    %129 = arith.mulf %127, %128 : vector<2x1x32xf32>
    %130 = arith.mulf %124, %124 : vector<2x1x32xf32>
    %131 = arith.subf %129, %130 : vector<2x1x32xf32>
    %cst_54 = arith.constant 0.000000e+00 : f32
    %132 = vector.broadcast %cst_54 : f32 to vector<2x1x32xf32>
    %133 = arith.maximumf %131, %132 : vector<2x1x32xf32>
    %134 = vector.extract_strided_slice %15 {offsets = [0, 256], sizes = [2, 32], strides = [1, 1]} : vector<2x1536xf32> to vector<2x32xf32>
    %135 = vector.shape_cast %134 : vector<2x32xf32> to vector<2x1x32xf32>
    %136 = vector.extract_strided_slice %15 {offsets = [0, 384], sizes = [2, 32], strides = [1, 1]} : vector<2x1536xf32> to vector<2x32xf32>
    %137 = vector.shape_cast %136 : vector<2x32xf32> to vector<2x1x32xf32>
    %cst_55 = arith.constant 9.99999974E-6 : f32
    %138 = vector.broadcast %cst_55 : f32 to vector<2x1x32xf32>
    %139 = arith.addf %133, %138 : vector<2x1x32xf32>
    %140 = math.rsqrt %139 : vector<2x1x32xf32>
    %141 = arith.mulf %135, %140 : vector<2x1x32xf32>
    %142 = arith.mulf %124, %141 : vector<2x1x32xf32>
    %143 = arith.subf %137, %142 : vector<2x1x32xf32>
    %144 = vector.broadcast %141 : vector<2x1x32xf32> to vector<2x8x32xf32>
    %145 = arith.mulf %120, %144 : vector<2x8x32xf32>
    %146 = vector.broadcast %143 : vector<2x1x32xf32> to vector<2x8x32xf32>
    %147 = arith.addf %145, %146 : vector<2x8x32xf32>
    %cst_56 = arith.constant 2.000000e-01 : f32
    %148 = vector.broadcast %cst_56 : f32 to vector<2x8x32xf32>
    %149 = arith.mulf %148, %147 : vector<2x8x32xf32>
    %150 = arith.maximumf %147, %149 : vector<2x8x32xf32>
    %151 = vector.shape_cast %150 : vector<2x8x32xf32> to vector<16x32xf32>
    %c0_57 = arith.constant 0 : index
    %c0_58 = arith.constant 0 : index
    %152 = vector.load %arg10[%c0_57, %c0_58] : memref<32x32xf32, #tpu.memory_space<vmem>>, vector<32x32xf32>
    %cst_59 = arith.constant dense<0.000000e+00> : vector<16x32xf32>
    %153 = tpu.matmul %117, %152, %cst_59 {dimension_numbers = #tpu.dot_dimension_numbers<[1], [0], [0], [1], [0, 0, 1, 1], [], []>} : vector<16x32xf32>, vector<32x32xf32>, vector<16x32xf32> -> vector<16x32xf32>
    %154 = vector.shape_cast %153 : vector<16x32xf32> to vector<2x8x32xf32>
    %cst_60 = arith.constant dense<0.000000e+00> : vector<2x32xf32>
    %155 = vector.multi_reduction <add>, %154, %cst_60 [1] : vector<2x8x32xf32> to vector<2x32xf32>
    %156 = vector.shape_cast %155 : vector<2x32xf32> to vector<2x1x32xf32>
    %cst_61 = arith.constant 1.250000e-01 : f32
    %157 = vector.broadcast %cst_61 : f32 to vector<2x1x32xf32>
    %158 = arith.mulf %156, %157 : vector<2x1x32xf32>
    %159 = arith.mulf %154, %154 : vector<2x8x32xf32>
    %cst_62 = arith.constant dense<0.000000e+00> : vector<2x32xf32>
    %160 = vector.multi_reduction <add>, %159, %cst_62 [1] : vector<2x8x32xf32> to vector<2x32xf32>
    %161 = vector.shape_cast %160 : vector<2x32xf32> to vector<2x1x32xf32>
    %cst_63 = arith.constant 1.250000e-01 : f32
    %162 = vector.broadcast %cst_63 : f32 to vector<2x1x32xf32>
    %163 = arith.mulf %161, %162 : vector<2x1x32xf32>
    %164 = arith.mulf %158, %158 : vector<2x1x32xf32>
    %165 = arith.subf %163, %164 : vector<2x1x32xf32>
    %cst_64 = arith.constant 0.000000e+00 : f32
    %166 = vector.broadcast %cst_64 : f32 to vector<2x1x32xf32>
    %167 = arith.maximumf %165, %166 : vector<2x1x32xf32>
    %168 = vector.extract_strided_slice %8 {offsets = [0, 512], sizes = [2, 32], strides = [1, 1]} : vector<2x1536xf32> to vector<2x32xf32>
    %169 = vector.shape_cast %168 : vector<2x32xf32> to vector<2x1x32xf32>
    %170 = vector.extract_strided_slice %8 {offsets = [0, 640], sizes = [2, 32], strides = [1, 1]} : vector<2x1536xf32> to vector<2x32xf32>
    %171 = vector.shape_cast %170 : vector<2x32xf32> to vector<2x1x32xf32>
    %cst_65 = arith.constant 9.99999974E-6 : f32
    %172 = vector.broadcast %cst_65 : f32 to vector<2x1x32xf32>
    %173 = arith.addf %167, %172 : vector<2x1x32xf32>
    %174 = math.rsqrt %173 : vector<2x1x32xf32>
    %175 = arith.mulf %169, %174 : vector<2x1x32xf32>
    %176 = arith.mulf %158, %175 : vector<2x1x32xf32>
    %177 = arith.subf %171, %176 : vector<2x1x32xf32>
    %178 = vector.broadcast %175 : vector<2x1x32xf32> to vector<2x8x32xf32>
    %179 = arith.mulf %154, %178 : vector<2x8x32xf32>
    %180 = vector.broadcast %177 : vector<2x1x32xf32> to vector<2x8x32xf32>
    %181 = arith.addf %179, %180 : vector<2x8x32xf32>
    %cst_66 = arith.constant 2.000000e-01 : f32
    %182 = vector.broadcast %cst_66 : f32 to vector<2x8x32xf32>
    %183 = arith.mulf %182, %181 : vector<2x8x32xf32>
    %184 = arith.maximumf %181, %183 : vector<2x8x32xf32>
    %185 = vector.shape_cast %184 : vector<2x8x32xf32> to vector<16x32xf32>
    %c0_67 = arith.constant 0 : index
    %c0_68 = arith.constant 0 : index
    %186 = vector.load %arg16[%c0_67, %c0_68] : memref<32x32xf32, #tpu.memory_space<vmem>>, vector<32x32xf32>
    %cst_69 = arith.constant dense<0.000000e+00> : vector<16x32xf32>
    %187 = tpu.matmul %151, %186, %cst_69 {dimension_numbers = #tpu.dot_dimension_numbers<[1], [0], [0], [1], [0, 0, 1, 1], [], []>} : vector<16x32xf32>, vector<32x32xf32>, vector<16x32xf32> -> vector<16x32xf32>
    %188 = vector.shape_cast %187 : vector<16x32xf32> to vector<2x8x32xf32>
    %cst_70 = arith.constant dense<0.000000e+00> : vector<2x32xf32>
    %189 = vector.multi_reduction <add>, %188, %cst_70 [1] : vector<2x8x32xf32> to vector<2x32xf32>
    %190 = vector.shape_cast %189 : vector<2x32xf32> to vector<2x1x32xf32>
    %cst_71 = arith.constant 1.250000e-01 : f32
    %191 = vector.broadcast %cst_71 : f32 to vector<2x1x32xf32>
    %192 = arith.mulf %190, %191 : vector<2x1x32xf32>
    %193 = arith.mulf %188, %188 : vector<2x8x32xf32>
    %cst_72 = arith.constant dense<0.000000e+00> : vector<2x32xf32>
    %194 = vector.multi_reduction <add>, %193, %cst_72 [1] : vector<2x8x32xf32> to vector<2x32xf32>
    %195 = vector.shape_cast %194 : vector<2x32xf32> to vector<2x1x32xf32>
    %cst_73 = arith.constant 1.250000e-01 : f32
    %196 = vector.broadcast %cst_73 : f32 to vector<2x1x32xf32>
    %197 = arith.mulf %195, %196 : vector<2x1x32xf32>
    %198 = arith.mulf %192, %192 : vector<2x1x32xf32>
    %199 = arith.subf %197, %198 : vector<2x1x32xf32>
    %cst_74 = arith.constant 0.000000e+00 : f32
    %200 = vector.broadcast %cst_74 : f32 to vector<2x1x32xf32>
    %201 = arith.maximumf %199, %200 : vector<2x1x32xf32>
    %202 = vector.extract_strided_slice %15 {offsets = [0, 512], sizes = [2, 32], strides = [1, 1]} : vector<2x1536xf32> to vector<2x32xf32>
    %203 = vector.shape_cast %202 : vector<2x32xf32> to vector<2x1x32xf32>
    %204 = vector.extract_strided_slice %15 {offsets = [0, 640], sizes = [2, 32], strides = [1, 1]} : vector<2x1536xf32> to vector<2x32xf32>
    %205 = vector.shape_cast %204 : vector<2x32xf32> to vector<2x1x32xf32>
    %cst_75 = arith.constant 9.99999974E-6 : f32
    %206 = vector.broadcast %cst_75 : f32 to vector<2x1x32xf32>
    %207 = arith.addf %201, %206 : vector<2x1x32xf32>
    %208 = math.rsqrt %207 : vector<2x1x32xf32>
    %209 = arith.mulf %203, %208 : vector<2x1x32xf32>
    %210 = arith.mulf %192, %209 : vector<2x1x32xf32>
    %211 = arith.subf %205, %210 : vector<2x1x32xf32>
    %212 = vector.broadcast %209 : vector<2x1x32xf32> to vector<2x8x32xf32>
    %213 = arith.mulf %188, %212 : vector<2x8x32xf32>
    %214 = vector.broadcast %211 : vector<2x1x32xf32> to vector<2x8x32xf32>
    %215 = arith.addf %213, %214 : vector<2x8x32xf32>
    %cst_76 = arith.constant 2.000000e-01 : f32
    %216 = vector.broadcast %cst_76 : f32 to vector<2x8x32xf32>
    %217 = arith.mulf %216, %215 : vector<2x8x32xf32>
    %218 = arith.maximumf %215, %217 : vector<2x8x32xf32>
    %219 = vector.shape_cast %218 : vector<2x8x32xf32> to vector<16x32xf32>
    %c0_77 = arith.constant 0 : index
    %c0_78 = arith.constant 0 : index
    %220 = vector.load %arg11[%c0_77, %c0_78] : memref<32x64xf32, #tpu.memory_space<vmem>>, vector<32x64xf32>
    %cst_79 = arith.constant dense<0.000000e+00> : vector<16x64xf32>
    %221 = tpu.matmul %185, %220, %cst_79 {dimension_numbers = #tpu.dot_dimension_numbers<[1], [0], [0], [1], [0, 0, 1, 1], [], []>} : vector<16x32xf32>, vector<32x64xf32>, vector<16x64xf32> -> vector<16x64xf32>
    %222 = vector.shape_cast %221 : vector<16x64xf32> to vector<2x8x64xf32>
    %cst_80 = arith.constant dense<0.000000e+00> : vector<2x64xf32>
    %223 = vector.multi_reduction <add>, %222, %cst_80 [1] : vector<2x8x64xf32> to vector<2x64xf32>
    %224 = vector.shape_cast %223 : vector<2x64xf32> to vector<2x1x64xf32>
    %cst_81 = arith.constant 1.250000e-01 : f32
    %225 = vector.broadcast %cst_81 : f32 to vector<2x1x64xf32>
    %226 = arith.mulf %224, %225 : vector<2x1x64xf32>
    %227 = arith.mulf %222, %222 : vector<2x8x64xf32>
    %cst_82 = arith.constant dense<0.000000e+00> : vector<2x64xf32>
    %228 = vector.multi_reduction <add>, %227, %cst_82 [1] : vector<2x8x64xf32> to vector<2x64xf32>
    %229 = vector.shape_cast %228 : vector<2x64xf32> to vector<2x1x64xf32>
    %cst_83 = arith.constant 1.250000e-01 : f32
    %230 = vector.broadcast %cst_83 : f32 to vector<2x1x64xf32>
    %231 = arith.mulf %229, %230 : vector<2x1x64xf32>
    %232 = arith.mulf %226, %226 : vector<2x1x64xf32>
    %233 = arith.subf %231, %232 : vector<2x1x64xf32>
    %cst_84 = arith.constant 0.000000e+00 : f32
    %234 = vector.broadcast %cst_84 : f32 to vector<2x1x64xf32>
    %235 = arith.maximumf %233, %234 : vector<2x1x64xf32>
    %236 = vector.extract_strided_slice %8 {offsets = [0, 768], sizes = [2, 64], strides = [1, 1]} : vector<2x1536xf32> to vector<2x64xf32>
    %237 = vector.shape_cast %236 : vector<2x64xf32> to vector<2x1x64xf32>
    %238 = vector.extract_strided_slice %8 {offsets = [0, 896], sizes = [2, 64], strides = [1, 1]} : vector<2x1536xf32> to vector<2x64xf32>
    %239 = vector.shape_cast %238 : vector<2x64xf32> to vector<2x1x64xf32>
    %cst_85 = arith.constant 9.99999974E-6 : f32
    %240 = vector.broadcast %cst_85 : f32 to vector<2x1x64xf32>
    %241 = arith.addf %235, %240 : vector<2x1x64xf32>
    %242 = math.rsqrt %241 : vector<2x1x64xf32>
    %243 = arith.mulf %237, %242 : vector<2x1x64xf32>
    %244 = arith.mulf %226, %243 : vector<2x1x64xf32>
    %245 = arith.subf %239, %244 : vector<2x1x64xf32>
    %246 = vector.broadcast %243 : vector<2x1x64xf32> to vector<2x8x64xf32>
    %247 = arith.mulf %222, %246 : vector<2x8x64xf32>
    %248 = vector.broadcast %245 : vector<2x1x64xf32> to vector<2x8x64xf32>
    %249 = arith.addf %247, %248 : vector<2x8x64xf32>
    %cst_86 = arith.constant 2.000000e-01 : f32
    %250 = vector.broadcast %cst_86 : f32 to vector<2x8x64xf32>
    %251 = arith.mulf %250, %249 : vector<2x8x64xf32>
    %252 = arith.maximumf %249, %251 : vector<2x8x64xf32>
    %253 = vector.shape_cast %252 : vector<2x8x64xf32> to vector<16x64xf32>
    %c0_87 = arith.constant 0 : index
    %c0_88 = arith.constant 0 : index
    %254 = vector.load %arg17[%c0_87, %c0_88] : memref<32x64xf32, #tpu.memory_space<vmem>>, vector<32x64xf32>
    %cst_89 = arith.constant dense<0.000000e+00> : vector<16x64xf32>
    %255 = tpu.matmul %219, %254, %cst_89 {dimension_numbers = #tpu.dot_dimension_numbers<[1], [0], [0], [1], [0, 0, 1, 1], [], []>} : vector<16x32xf32>, vector<32x64xf32>, vector<16x64xf32> -> vector<16x64xf32>
    %256 = vector.shape_cast %255 : vector<16x64xf32> to vector<2x8x64xf32>
    %cst_90 = arith.constant dense<0.000000e+00> : vector<2x64xf32>
    %257 = vector.multi_reduction <add>, %256, %cst_90 [1] : vector<2x8x64xf32> to vector<2x64xf32>
    %258 = vector.shape_cast %257 : vector<2x64xf32> to vector<2x1x64xf32>
    %cst_91 = arith.constant 1.250000e-01 : f32
    %259 = vector.broadcast %cst_91 : f32 to vector<2x1x64xf32>
    %260 = arith.mulf %258, %259 : vector<2x1x64xf32>
    %261 = arith.mulf %256, %256 : vector<2x8x64xf32>
    %cst_92 = arith.constant dense<0.000000e+00> : vector<2x64xf32>
    %262 = vector.multi_reduction <add>, %261, %cst_92 [1] : vector<2x8x64xf32> to vector<2x64xf32>
    %263 = vector.shape_cast %262 : vector<2x64xf32> to vector<2x1x64xf32>
    %cst_93 = arith.constant 1.250000e-01 : f32
    %264 = vector.broadcast %cst_93 : f32 to vector<2x1x64xf32>
    %265 = arith.mulf %263, %264 : vector<2x1x64xf32>
    %266 = arith.mulf %260, %260 : vector<2x1x64xf32>
    %267 = arith.subf %265, %266 : vector<2x1x64xf32>
    %cst_94 = arith.constant 0.000000e+00 : f32
    %268 = vector.broadcast %cst_94 : f32 to vector<2x1x64xf32>
    %269 = arith.maximumf %267, %268 : vector<2x1x64xf32>
    %270 = vector.extract_strided_slice %15 {offsets = [0, 768], sizes = [2, 64], strides = [1, 1]} : vector<2x1536xf32> to vector<2x64xf32>
    %271 = vector.shape_cast %270 : vector<2x64xf32> to vector<2x1x64xf32>
    %272 = vector.extract_strided_slice %15 {offsets = [0, 896], sizes = [2, 64], strides = [1, 1]} : vector<2x1536xf32> to vector<2x64xf32>
    %273 = vector.shape_cast %272 : vector<2x64xf32> to vector<2x1x64xf32>
    %cst_95 = arith.constant 9.99999974E-6 : f32
    %274 = vector.broadcast %cst_95 : f32 to vector<2x1x64xf32>
    %275 = arith.addf %269, %274 : vector<2x1x64xf32>
    %276 = math.rsqrt %275 : vector<2x1x64xf32>
    %277 = arith.mulf %271, %276 : vector<2x1x64xf32>
    %278 = arith.mulf %260, %277 : vector<2x1x64xf32>
    %279 = arith.subf %273, %278 : vector<2x1x64xf32>
    %280 = vector.broadcast %277 : vector<2x1x64xf32> to vector<2x8x64xf32>
    %281 = arith.mulf %256, %280 : vector<2x8x64xf32>
    %282 = vector.broadcast %279 : vector<2x1x64xf32> to vector<2x8x64xf32>
    %283 = arith.addf %281, %282 : vector<2x8x64xf32>
    %cst_96 = arith.constant 2.000000e-01 : f32
    %284 = vector.broadcast %cst_96 : f32 to vector<2x8x64xf32>
    %285 = arith.mulf %284, %283 : vector<2x8x64xf32>
    %286 = arith.maximumf %283, %285 : vector<2x8x64xf32>
    %287 = vector.shape_cast %286 : vector<2x8x64xf32> to vector<16x64xf32>
    %c0_97 = arith.constant 0 : index
    %c0_98 = arith.constant 0 : index
    %288 = vector.load %arg12[%c0_97, %c0_98] : memref<64x64xf32, #tpu.memory_space<vmem>>, vector<64x64xf32>
    %cst_99 = arith.constant dense<0.000000e+00> : vector<16x64xf32>
    %289 = tpu.matmul %253, %288, %cst_99 {dimension_numbers = #tpu.dot_dimension_numbers<[1], [0], [0], [1], [0, 0, 1, 1], [], []>} : vector<16x64xf32>, vector<64x64xf32>, vector<16x64xf32> -> vector<16x64xf32>
    %290 = vector.shape_cast %289 : vector<16x64xf32> to vector<2x8x64xf32>
    %cst_100 = arith.constant dense<0.000000e+00> : vector<2x64xf32>
    %291 = vector.multi_reduction <add>, %290, %cst_100 [1] : vector<2x8x64xf32> to vector<2x64xf32>
    %292 = vector.shape_cast %291 : vector<2x64xf32> to vector<2x1x64xf32>
    %cst_101 = arith.constant 1.250000e-01 : f32
    %293 = vector.broadcast %cst_101 : f32 to vector<2x1x64xf32>
    %294 = arith.mulf %292, %293 : vector<2x1x64xf32>
    %295 = arith.mulf %290, %290 : vector<2x8x64xf32>
    %cst_102 = arith.constant dense<0.000000e+00> : vector<2x64xf32>
    %296 = vector.multi_reduction <add>, %295, %cst_102 [1] : vector<2x8x64xf32> to vector<2x64xf32>
    %297 = vector.shape_cast %296 : vector<2x64xf32> to vector<2x1x64xf32>
    %cst_103 = arith.constant 1.250000e-01 : f32
    %298 = vector.broadcast %cst_103 : f32 to vector<2x1x64xf32>
    %299 = arith.mulf %297, %298 : vector<2x1x64xf32>
    %300 = arith.mulf %294, %294 : vector<2x1x64xf32>
    %301 = arith.subf %299, %300 : vector<2x1x64xf32>
    %cst_104 = arith.constant 0.000000e+00 : f32
    %302 = vector.broadcast %cst_104 : f32 to vector<2x1x64xf32>
    %303 = arith.maximumf %301, %302 : vector<2x1x64xf32>
    %304 = vector.extract_strided_slice %8 {offsets = [0, 1024], sizes = [2, 64], strides = [1, 1]} : vector<2x1536xf32> to vector<2x64xf32>
    %305 = vector.shape_cast %304 : vector<2x64xf32> to vector<2x1x64xf32>
    %306 = vector.extract_strided_slice %8 {offsets = [0, 1152], sizes = [2, 64], strides = [1, 1]} : vector<2x1536xf32> to vector<2x64xf32>
    %307 = vector.shape_cast %306 : vector<2x64xf32> to vector<2x1x64xf32>
    %cst_105 = arith.constant 9.99999974E-6 : f32
    %308 = vector.broadcast %cst_105 : f32 to vector<2x1x64xf32>
    %309 = arith.addf %303, %308 : vector<2x1x64xf32>
    %310 = math.rsqrt %309 : vector<2x1x64xf32>
    %311 = arith.mulf %305, %310 : vector<2x1x64xf32>
    %312 = arith.mulf %294, %311 : vector<2x1x64xf32>
    %313 = arith.subf %307, %312 : vector<2x1x64xf32>
    %314 = vector.broadcast %311 : vector<2x1x64xf32> to vector<2x8x64xf32>
    %315 = arith.mulf %290, %314 : vector<2x8x64xf32>
    %316 = vector.broadcast %313 : vector<2x1x64xf32> to vector<2x8x64xf32>
    %317 = arith.addf %315, %316 : vector<2x8x64xf32>
    %cst_106 = arith.constant 2.000000e-01 : f32
    %318 = vector.broadcast %cst_106 : f32 to vector<2x8x64xf32>
    %319 = arith.mulf %318, %317 : vector<2x8x64xf32>
    %320 = arith.maximumf %317, %319 : vector<2x8x64xf32>
    %321 = vector.shape_cast %320 : vector<2x8x64xf32> to vector<16x64xf32>
    %c0_107 = arith.constant 0 : index
    %c0_108 = arith.constant 0 : index
    %322 = vector.load %arg18[%c0_107, %c0_108] : memref<64x64xf32, #tpu.memory_space<vmem>>, vector<64x64xf32>
    %cst_109 = arith.constant dense<0.000000e+00> : vector<16x64xf32>
    %323 = tpu.matmul %287, %322, %cst_109 {dimension_numbers = #tpu.dot_dimension_numbers<[1], [0], [0], [1], [0, 0, 1, 1], [], []>} : vector<16x64xf32>, vector<64x64xf32>, vector<16x64xf32> -> vector<16x64xf32>
    %324 = vector.shape_cast %323 : vector<16x64xf32> to vector<2x8x64xf32>
    %cst_110 = arith.constant dense<0.000000e+00> : vector<2x64xf32>
    %325 = vector.multi_reduction <add>, %324, %cst_110 [1] : vector<2x8x64xf32> to vector<2x64xf32>
    %326 = vector.shape_cast %325 : vector<2x64xf32> to vector<2x1x64xf32>
    %cst_111 = arith.constant 1.250000e-01 : f32
    %327 = vector.broadcast %cst_111 : f32 to vector<2x1x64xf32>
    %328 = arith.mulf %326, %327 : vector<2x1x64xf32>
    %329 = arith.mulf %324, %324 : vector<2x8x64xf32>
    %cst_112 = arith.constant dense<0.000000e+00> : vector<2x64xf32>
    %330 = vector.multi_reduction <add>, %329, %cst_112 [1] : vector<2x8x64xf32> to vector<2x64xf32>
    %331 = vector.shape_cast %330 : vector<2x64xf32> to vector<2x1x64xf32>
    %cst_113 = arith.constant 1.250000e-01 : f32
    %332 = vector.broadcast %cst_113 : f32 to vector<2x1x64xf32>
    %333 = arith.mulf %331, %332 : vector<2x1x64xf32>
    %334 = arith.mulf %328, %328 : vector<2x1x64xf32>
    %335 = arith.subf %333, %334 : vector<2x1x64xf32>
    %cst_114 = arith.constant 0.000000e+00 : f32
    %336 = vector.broadcast %cst_114 : f32 to vector<2x1x64xf32>
    %337 = arith.maximumf %335, %336 : vector<2x1x64xf32>
    %338 = vector.extract_strided_slice %15 {offsets = [0, 1024], sizes = [2, 64], strides = [1, 1]} : vector<2x1536xf32> to vector<2x64xf32>
    %339 = vector.shape_cast %338 : vector<2x64xf32> to vector<2x1x64xf32>
    %340 = vector.extract_strided_slice %15 {offsets = [0, 1152], sizes = [2, 64], strides = [1, 1]} : vector<2x1536xf32> to vector<2x64xf32>
    %341 = vector.shape_cast %340 : vector<2x64xf32> to vector<2x1x64xf32>
    %cst_115 = arith.constant 9.99999974E-6 : f32
    %342 = vector.broadcast %cst_115 : f32 to vector<2x1x64xf32>
    %343 = arith.addf %337, %342 : vector<2x1x64xf32>
    %344 = math.rsqrt %343 : vector<2x1x64xf32>
    %345 = arith.mulf %339, %344 : vector<2x1x64xf32>
    %346 = arith.mulf %328, %345 : vector<2x1x64xf32>
    %347 = arith.subf %341, %346 : vector<2x1x64xf32>
    %348 = vector.broadcast %345 : vector<2x1x64xf32> to vector<2x8x64xf32>
    %349 = arith.mulf %324, %348 : vector<2x8x64xf32>
    %350 = vector.broadcast %347 : vector<2x1x64xf32> to vector<2x8x64xf32>
    %351 = arith.addf %349, %350 : vector<2x8x64xf32>
    %cst_116 = arith.constant 2.000000e-01 : f32
    %352 = vector.broadcast %cst_116 : f32 to vector<2x8x64xf32>
    %353 = arith.mulf %352, %351 : vector<2x8x64xf32>
    %354 = arith.maximumf %351, %353 : vector<2x8x64xf32>
    %355 = vector.shape_cast %354 : vector<2x8x64xf32> to vector<16x64xf32>
    %c0_117 = arith.constant 0 : index
    %c0_118 = arith.constant 0 : index
    %356 = vector.load %arg13[%c0_117, %c0_118] : memref<64x128xf32, #tpu.memory_space<vmem>>, vector<64x128xf32>
    %cst_119 = arith.constant dense<0.000000e+00> : vector<16x128xf32>
    %357 = tpu.matmul %321, %356, %cst_119 {dimension_numbers = #tpu.dot_dimension_numbers<[1], [0], [0], [1], [0, 0, 1, 1], [], []>} : vector<16x64xf32>, vector<64x128xf32>, vector<16x128xf32> -> vector<16x128xf32>
    %358 = vector.shape_cast %357 : vector<16x128xf32> to vector<2x8x128xf32>
    %cst_120 = arith.constant dense<0.000000e+00> : vector<2x128xf32>
    %359 = vector.multi_reduction <add>, %358, %cst_120 [1] : vector<2x8x128xf32> to vector<2x128xf32>
    %360 = vector.shape_cast %359 : vector<2x128xf32> to vector<2x1x128xf32>
    %cst_121 = arith.constant 1.250000e-01 : f32
    %361 = vector.broadcast %cst_121 : f32 to vector<2x1x128xf32>
    %362 = arith.mulf %360, %361 : vector<2x1x128xf32>
    %363 = arith.mulf %358, %358 : vector<2x8x128xf32>
    %cst_122 = arith.constant dense<0.000000e+00> : vector<2x128xf32>
    %364 = vector.multi_reduction <add>, %363, %cst_122 [1] : vector<2x8x128xf32> to vector<2x128xf32>
    %365 = vector.shape_cast %364 : vector<2x128xf32> to vector<2x1x128xf32>
    %cst_123 = arith.constant 1.250000e-01 : f32
    %366 = vector.broadcast %cst_123 : f32 to vector<2x1x128xf32>
    %367 = arith.mulf %365, %366 : vector<2x1x128xf32>
    %368 = arith.mulf %362, %362 : vector<2x1x128xf32>
    %369 = arith.subf %367, %368 : vector<2x1x128xf32>
    %cst_124 = arith.constant 0.000000e+00 : f32
    %370 = vector.broadcast %cst_124 : f32 to vector<2x1x128xf32>
    %371 = arith.maximumf %369, %370 : vector<2x1x128xf32>
    %372 = vector.extract_strided_slice %8 {offsets = [0, 1280], sizes = [2, 128], strides = [1, 1]} : vector<2x1536xf32> to vector<2x128xf32>
    %373 = vector.shape_cast %372 : vector<2x128xf32> to vector<2x1x128xf32>
    %374 = vector.extract_strided_slice %8 {offsets = [0, 1408], sizes = [2, 128], strides = [1, 1]} : vector<2x1536xf32> to vector<2x128xf32>
    %375 = vector.shape_cast %374 : vector<2x128xf32> to vector<2x1x128xf32>
    %cst_125 = arith.constant 9.99999974E-6 : f32
    %376 = vector.broadcast %cst_125 : f32 to vector<2x1x128xf32>
    %377 = arith.addf %371, %376 : vector<2x1x128xf32>
    %378 = math.rsqrt %377 : vector<2x1x128xf32>
    %379 = arith.mulf %373, %378 : vector<2x1x128xf32>
    %380 = arith.mulf %362, %379 : vector<2x1x128xf32>
    %381 = arith.subf %375, %380 : vector<2x1x128xf32>
    %382 = vector.broadcast %379 : vector<2x1x128xf32> to vector<2x8x128xf32>
    %383 = arith.mulf %358, %382 : vector<2x8x128xf32>
    %384 = vector.broadcast %381 : vector<2x1x128xf32> to vector<2x8x128xf32>
    %385 = arith.addf %383, %384 : vector<2x8x128xf32>
    %cst_126 = arith.constant 2.000000e-01 : f32
    %386 = vector.broadcast %cst_126 : f32 to vector<2x8x128xf32>
    %387 = arith.mulf %386, %385 : vector<2x8x128xf32>
    %388 = arith.maximumf %385, %387 : vector<2x8x128xf32>
    %389 = vector.shape_cast %388 : vector<2x8x128xf32> to vector<16x128xf32>
    %c0_127 = arith.constant 0 : index
    %c0_128 = arith.constant 0 : index
    %390 = vector.load %arg19[%c0_127, %c0_128] : memref<64x128xf32, #tpu.memory_space<vmem>>, vector<64x128xf32>
    %cst_129 = arith.constant dense<0.000000e+00> : vector<16x128xf32>
    %391 = tpu.matmul %355, %390, %cst_129 {dimension_numbers = #tpu.dot_dimension_numbers<[1], [0], [0], [1], [0, 0, 1, 1], [], []>} : vector<16x64xf32>, vector<64x128xf32>, vector<16x128xf32> -> vector<16x128xf32>
    %392 = vector.shape_cast %391 : vector<16x128xf32> to vector<2x8x128xf32>
    %cst_130 = arith.constant dense<0.000000e+00> : vector<2x128xf32>
    %393 = vector.multi_reduction <add>, %392, %cst_130 [1] : vector<2x8x128xf32> to vector<2x128xf32>
    %394 = vector.shape_cast %393 : vector<2x128xf32> to vector<2x1x128xf32>
    %cst_131 = arith.constant 1.250000e-01 : f32
    %395 = vector.broadcast %cst_131 : f32 to vector<2x1x128xf32>
    %396 = arith.mulf %394, %395 : vector<2x1x128xf32>
    %397 = arith.mulf %392, %392 : vector<2x8x128xf32>
    %cst_132 = arith.constant dense<0.000000e+00> : vector<2x128xf32>
    %398 = vector.multi_reduction <add>, %397, %cst_132 [1] : vector<2x8x128xf32> to vector<2x128xf32>
    %399 = vector.shape_cast %398 : vector<2x128xf32> to vector<2x1x128xf32>
    %cst_133 = arith.constant 1.250000e-01 : f32
    %400 = vector.broadcast %cst_133 : f32 to vector<2x1x128xf32>
    %401 = arith.mulf %399, %400 : vector<2x1x128xf32>
    %402 = arith.mulf %396, %396 : vector<2x1x128xf32>
    %403 = arith.subf %401, %402 : vector<2x1x128xf32>
    %cst_134 = arith.constant 0.000000e+00 : f32
    %404 = vector.broadcast %cst_134 : f32 to vector<2x1x128xf32>
    %405 = arith.maximumf %403, %404 : vector<2x1x128xf32>
    %406 = vector.extract_strided_slice %15 {offsets = [0, 1280], sizes = [2, 128], strides = [1, 1]} : vector<2x1536xf32> to vector<2x128xf32>
    %407 = vector.shape_cast %406 : vector<2x128xf32> to vector<2x1x128xf32>
    %408 = vector.extract_strided_slice %15 {offsets = [0, 1408], sizes = [2, 128], strides = [1, 1]} : vector<2x1536xf32> to vector<2x128xf32>
    %409 = vector.shape_cast %408 : vector<2x128xf32> to vector<2x1x128xf32>
    %cst_135 = arith.constant 9.99999974E-6 : f32
    %410 = vector.broadcast %cst_135 : f32 to vector<2x1x128xf32>
    %411 = arith.addf %405, %410 : vector<2x1x128xf32>
    %412 = math.rsqrt %411 : vector<2x1x128xf32>
    %413 = arith.mulf %407, %412 : vector<2x1x128xf32>
    %414 = arith.mulf %396, %413 : vector<2x1x128xf32>
    %415 = arith.subf %409, %414 : vector<2x1x128xf32>
    %416 = vector.broadcast %413 : vector<2x1x128xf32> to vector<2x8x128xf32>
    %417 = arith.mulf %392, %416 : vector<2x8x128xf32>
    %418 = vector.broadcast %415 : vector<2x1x128xf32> to vector<2x8x128xf32>
    %419 = arith.addf %417, %418 : vector<2x8x128xf32>
    %cst_136 = arith.constant 2.000000e-01 : f32
    %420 = vector.broadcast %cst_136 : f32 to vector<2x8x128xf32>
    %421 = arith.mulf %420, %419 : vector<2x8x128xf32>
    %422 = arith.maximumf %419, %421 : vector<2x8x128xf32>
    %423 = vector.shape_cast %422 : vector<2x8x128xf32> to vector<16x128xf32>
    %424 = vector.shape_cast %389 : vector<16x128xf32> to vector<2x8x128xf32>
    %425 = vector.shape_cast %423 : vector<16x128xf32> to vector<2x8x128xf32>
    %426 = vector.extract_strided_slice %424 {offsets = [0, 0, 0], sizes = [1, 8, 128], strides = [1, 1, 1]} : vector<2x8x128xf32> to vector<1x8x128xf32>
    %427 = vector.shape_cast %426 : vector<1x8x128xf32> to vector<8x128xf32>
    %428 = vector.extract_strided_slice %425 {offsets = [0, 0, 0], sizes = [1, 8, 128], strides = [1, 1, 1]} : vector<2x8x128xf32> to vector<1x8x128xf32>
    %429 = vector.shape_cast %428 : vector<1x8x128xf32> to vector<8x128xf32>
    %cst_137 = arith.constant dense<0.000000e+00> : vector<8x8xf32>
    %430 = tpu.matmul %427, %429, %cst_137 {dimension_numbers = #tpu.dot_dimension_numbers<[1], [1], [0], [0], [0, 0, 1, 0], [], []>} : vector<8x128xf32>, vector<8x128xf32>, vector<8x8xf32> -> vector<8x8xf32>
    %431 = vector.extract_strided_slice %424 {offsets = [1, 0, 0], sizes = [1, 8, 128], strides = [1, 1, 1]} : vector<2x8x128xf32> to vector<1x8x128xf32>
    %432 = vector.shape_cast %431 : vector<1x8x128xf32> to vector<8x128xf32>
    %433 = vector.extract_strided_slice %425 {offsets = [1, 0, 0], sizes = [1, 8, 128], strides = [1, 1, 1]} : vector<2x8x128xf32> to vector<1x8x128xf32>
    %434 = vector.shape_cast %433 : vector<1x8x128xf32> to vector<8x128xf32>
    %cst_138 = arith.constant dense<0.000000e+00> : vector<8x8xf32>
    %435 = tpu.matmul %432, %434, %cst_138 {dimension_numbers = #tpu.dot_dimension_numbers<[1], [1], [0], [0], [0, 0, 1, 0], [], []>} : vector<8x128xf32>, vector<8x128xf32>, vector<8x8xf32> -> vector<8x8xf32>
    %436 = tpu.concatenate %430, %435 in 1 : vector<8x8xf32>, vector<8x8xf32> -> vector<8x16xf32>
    %c0_139 = arith.constant 0 : index
    %c0_140 = arith.constant 0 : index
    %c0_141 = arith.constant 0 : index
    %437 = vector.load %arg20[%c0_139, %c0_140, %c0_141] : memref<1x8x16xf32, #tpu.memory_space<vmem>>, vector<1x8x16xf32>
    %438 = vector.shape_cast %437 : vector<1x8x16xf32> to vector<8x16xf32>
    %439 = vector.shape_cast %436 : vector<8x16xf32> to vector<1x8x16xf32>
    tpu.vector_store %arg20[%c0_139, %c0_140, %c0_141], %439 {strides = array<i32>} : memref<1x8x16xf32, #tpu.memory_space<vmem>>, vector<1x8x16xf32>,
    return
  }
  func.func @transform_0(%arg0: i32) -> (i32, i32, i32) {
    %c0_i32 = arith.constant 0 : i32
    %c0_i32_0 = arith.constant 0 : i32
    %c0_i32_1 = arith.constant 0 : i32
    return %arg0, %c0_i32, %c0_i32_0 : i32, i32, i32
  }
  func.func @transform_1(%arg0: i32) -> (i32, i32, i32) {
    %c0_i32 = arith.constant 0 : i32
    %c0_i32_0 = arith.constant 0 : i32
    %c0_i32_1 = arith.constant 0 : i32
    return %arg0, %c0_i32, %c0_i32_0 : i32, i32, i32
  }
  func.func @transform_2(%arg0: i32) -> (i32, i32, i32) {
    %c0_i32 = arith.constant 0 : i32
    %c0_i32_0 = arith.constant 0 : i32
    %c0_i32_1 = arith.constant 0 : i32
    return %arg0, %c0_i32, %c0_i32_0 : i32, i32, i32
  }
  func.func @transform_3(%arg0: i32) -> (i32, i32) {
    %c0_i32 = arith.constant 0 : i32
    %c0_i32_0 = arith.constant 0 : i32
    %c0_i32_1 = arith.constant 0 : i32
    return %c0_i32, %c0_i32_0 : i32, i32
  }
  func.func @transform_4(%arg0: i32) -> (i32, i32) {
    %c0_i32 = arith.constant 0 : i32
    %c0_i32_0 = arith.constant 0 : i32
    %c0_i32_1 = arith.constant 0 : i32
    return %c0_i32, %c0_i32_0 : i32, i32
  }
  func.func @transform_5(%arg0: i32) -> (i32, i32) {
    %c0_i32 = arith.constant 0 : i32
    %c0_i32_0 = arith.constant 0 : i32
    %c0_i32_1 = arith.constant 0 : i32
    return %c0_i32, %c0_i32_0 : i32, i32
  }
  func.func @transform_6(%arg0: i32) -> (i32, i32) {
    %c0_i32 = arith.constant 0 : i32
    %c0_i32_0 = arith.constant 0 : i32
    %c0_i32_1 = arith.constant 0 : i32
    return %c0_i32, %c0_i32_0 : i32, i32
  }
  func.func @transform_7(%arg0: i32) -> (i32, i32) {
    %c0_i32 = arith.constant 0 : i32
    %c0_i32_0 = arith.constant 0 : i32
    %c0_i32_1 = arith.constant 0 : i32
    return %c0_i32, %c0_i32_0 : i32, i32
  }
  func.func @transform_8(%arg0: i32) -> (i32, i32) {
    %c0_i32 = arith.constant 0 : i32
    %c0_i32_0 = arith.constant 0 : i32
    %c0_i32_1 = arith.constant 0 : i32
    return %c0_i32, %c0_i32_0 : i32, i32
  }
  func.func @transform_9(%arg0: i32) -> (i32, i32) {
    %c0_i32 = arith.constant 0 : i32
    %c0_i32_0 = arith.constant 0 : i32
    %c0_i32_1 = arith.constant 0 : i32
    return %c0_i32, %c0_i32_0 : i32, i32
  }
  func.func @transform_10(%arg0: i32) -> (i32, i32) {
    %c0_i32 = arith.constant 0 : i32
    %c0_i32_0 = arith.constant 0 : i32
    %c0_i32_1 = arith.constant 0 : i32
    return %c0_i32, %c0_i32_0 : i32, i32
  }
  func.func @transform_11(%arg0: i32) -> (i32, i32) {
    %c0_i32 = arith.constant 0 : i32
    %c0_i32_0 = arith.constant 0 : i32
    %c0_i32_1 = arith.constant 0 : i32
    return %c0_i32, %c0_i32_0 : i32, i32
  }
  func.func @transform_12(%arg0: i32) -> (i32, i32) {
    %c0_i32 = arith.constant 0 : i32
    %c0_i32_0 = arith.constant 0 : i32
    %c0_i32_1 = arith.constant 0 : i32
    return %c0_i32, %c0_i32_0 : i32, i32
  }
  func.func @transform_13(%arg0: i32) -> (i32, i32) {
    %c0_i32 = arith.constant 0 : i32
    %c0_i32_0 = arith.constant 0 : i32
    %c0_i32_1 = arith.constant 0 : i32
    return %c0_i32, %c0_i32_0 : i32, i32
  }
  func.func @transform_14(%arg0: i32) -> (i32, i32) {
    %c0_i32 = arith.constant 0 : i32
    %c0_i32_0 = arith.constant 0 : i32
    %c0_i32_1 = arith.constant 0 : i32
    return %c0_i32, %c0_i32_0 : i32, i32
  }
  func.func @transform_15(%arg0: i32) -> (i32, i32) {
    %c0_i32 = arith.constant 0 : i32
    %c0_i32_0 = arith.constant 0 : i32
    %c0_i32_1 = arith.constant 0 : i32
    return %c0_i32, %c0_i32_0 : i32, i32
  }
  func.func @transform_16(%arg0: i32) -> (i32, i32) {
    %c0_i32 = arith.constant 0 : i32
    %c0_i32_0 = arith.constant 0 : i32
    %c0_i32_1 = arith.constant 0 : i32
    return %c0_i32, %c0_i32_0 : i32, i32
  }
  func.func @transform_17(%arg0: i32) -> (i32, i32) {
    %c0_i32 = arith.constant 0 : i32
    %c0_i32_0 = arith.constant 0 : i32
    %c0_i32_1 = arith.constant 0 : i32
    return %c0_i32, %c0_i32_0 : i32, i32
  }
  func.func @transform_18(%arg0: i32) -> (i32, i32) {
    %c0_i32 = arith.constant 0 : i32
    %c0_i32_0 = arith.constant 0 : i32
    %c0_i32_1 = arith.constant 0 : i32
    return %c0_i32, %c0_i32_0 : i32, i32
  }
  func.func @transform_19(%arg0: i32) -> (i32, i32, i32) {
    %c0_i32 = arith.constant 0 : i32
    %c0_i32_0 = arith.constant 0 : i32
    %c0_i32_1 = arith.constant 0 : i32
    return %arg0, %c0_i32, %c0_i32_0 : i32, i32, i32
  }
}

module attributes {stable_mosaic.version = 11 : i64} {
  func.func @_decoder2_kernel(%arg0: i32, %arg1: memref<2x8x16xf32, #tpu.memory_space<vmem>>, %arg2: memref<2x1x16xf32, #tpu.memory_space<vmem>>, %arg3: memref<2x1x16xf32, #tpu.memory_space<vmem>>, %arg4: memref<16x1536xf32, #tpu.memory_space<vmem>>, %arg5: memref<1x1536xf32, #tpu.memory_space<vmem>>, %arg6: memref<16x1536xf32, #tpu.memory_space<vmem>>, %arg7: memref<1x1536xf32, #tpu.memory_space<vmem>>, %arg8: memref<16x16xf32, #tpu.memory_space<vmem>>, %arg9: memref<16x32xf32, #tpu.memory_space<vmem>>, %arg10: memref<32x32xf32, #tpu.memory_space<vmem>>, %arg11: memref<32x64xf32, #tpu.memory_space<vmem>>, %arg12: memref<64x64xf32, #tpu.memory_space<vmem>>, %arg13: memref<64x128xf32, #tpu.memory_space<vmem>>, %arg14: memref<16x16xf32, #tpu.memory_space<vmem>>, %arg15: memref<16x32xf32, #tpu.memory_space<vmem>>, %arg16: memref<32x32xf32, #tpu.memory_space<vmem>>, %arg17: memref<32x64xf32, #tpu.memory_space<vmem>>, %arg18: memref<64x64xf32, #tpu.memory_space<vmem>>, %arg19: memref<64x128xf32, #tpu.memory_space<vmem>>, %arg20: memref<1x8x16xf32, #tpu.memory_space<vmem>>) attributes {dimension_semantics = [#tpu.dimension_semantics<parallel>], iteration_bounds = array<i64: 1>, scalar_prefetch = 0 : i64, scratch_operands = 0 : i64, tpu.core_type = #tpu.core_type<tc>, window_params = [{transform_indices = @transform_0, window_bounds = array<i64: 2, 8, 16>}, {transform_indices = @transform_1, window_bounds = array<i64: 2, 1, 16>}, {transform_indices = @transform_2, window_bounds = array<i64: 2, 1, 16>}, {pipeline_mode = #tpu.pipeline_mode<synchronous>, transform_indices = @transform_3, window_bounds = array<i64: 16, 1536>}, {pipeline_mode = #tpu.pipeline_mode<synchronous>, transform_indices = @transform_4, window_bounds = array<i64: 1, 1536>}, {pipeline_mode = #tpu.pipeline_mode<synchronous>, transform_indices = @transform_5, window_bounds = array<i64: 16, 1536>}, {pipeline_mode = #tpu.pipeline_mode<synchronous>, transform_indices = @transform_6, window_bounds = array<i64: 1, 1536>}, {pipeline_mode = #tpu.pipeline_mode<synchronous>, transform_indices = @transform_7, window_bounds = array<i64: 16, 16>}, {pipeline_mode = #tpu.pipeline_mode<synchronous>, transform_indices = @transform_8, window_bounds = array<i64: 16, 32>}, {pipeline_mode = #tpu.pipeline_mode<synchronous>, transform_indices = @transform_9, window_bounds = array<i64: 32, 32>}, {pipeline_mode = #tpu.pipeline_mode<synchronous>, transform_indices = @transform_10, window_bounds = array<i64: 32, 64>}, {pipeline_mode = #tpu.pipeline_mode<synchronous>, transform_indices = @transform_11, window_bounds = array<i64: 64, 64>}, {pipeline_mode = #tpu.pipeline_mode<synchronous>, transform_indices = @transform_12, window_bounds = array<i64: 64, 128>}, {pipeline_mode = #tpu.pipeline_mode<synchronous>, transform_indices = @transform_13, window_bounds = array<i64: 16, 16>}, {pipeline_mode = #tpu.pipeline_mode<synchronous>, transform_indices = @transform_14, window_bounds = array<i64: 16, 32>}, {pipeline_mode = #tpu.pipeline_mode<synchronous>, transform_indices = @transform_15, window_bounds = array<i64: 32, 32>}, {pipeline_mode = #tpu.pipeline_mode<synchronous>, transform_indices = @transform_16, window_bounds = array<i64: 32, 64>}, {pipeline_mode = #tpu.pipeline_mode<synchronous>, transform_indices = @transform_17, window_bounds = array<i64: 64, 64>}, {pipeline_mode = #tpu.pipeline_mode<synchronous>, transform_indices = @transform_18, window_bounds = array<i64: 64, 128>}, {transform_indices = @transform_19, window_bounds = array<i64: 1, 8, 16>}]} {
    %c0 = arith.constant 0 : index
    %c0_0 = arith.constant 0 : index
    %c0_1 = arith.constant 0 : index
    %0 = vector.load %arg1[%c0, %c0_0, %c0_1] : memref<2x8x16xf32, #tpu.memory_space<vmem>>, vector<2x8x16xf32>
    %1 = vector.shape_cast %0 : vector<2x8x16xf32> to vector<16x16xf32>
    %c0_2 = arith.constant 0 : index
    %c0_3 = arith.constant 0 : index
    %c0_4 = arith.constant 0 : index
    %2 = vector.load %arg2[%c0_2, %c0_3, %c0_4] : memref<2x1x16xf32, #tpu.memory_space<vmem>>, vector<2x1x16xf32>
    %3 = vector.shape_cast %2 : vector<2x1x16xf32> to vector<2x16xf32>
    %c0_5 = arith.constant 0 : index
    %c0_6 = arith.constant 0 : index
    %4 = vector.load %arg4[%c0_5, %c0_6] : memref<16x1536xf32, #tpu.memory_space<vmem>>, vector<16x1536xf32>
    %cst = arith.constant dense<0.000000e+00> : vector<2x1536xf32>
    %5 = tpu.matmul %3, %4, %cst {dimension_numbers = #tpu.dot_dimension_numbers<[1], [0], [0], [1], [0, 0, 1, 1], [], []>} : vector<2x16xf32>, vector<16x1536xf32>, vector<2x1536xf32> -> vector<2x1536xf32>
    %c0_7 = arith.constant 0 : index
    %c0_8 = arith.constant 0 : index
    %6 = vector.load %arg5[%c0_7, %c0_8] : memref<1x1536xf32, #tpu.memory_space<vmem>>, vector<1x1536xf32>
    %7 = vector.broadcast %6 : vector<1x1536xf32> to vector<2x1536xf32>
    %8 = arith.addf %5, %7 : vector<2x1536xf32>
    %c0_9 = arith.constant 0 : index
    %c0_10 = arith.constant 0 : index
    %c0_11 = arith.constant 0 : index
    %9 = vector.load %arg3[%c0_9, %c0_10, %c0_11] : memref<2x1x16xf32, #tpu.memory_space<vmem>>, vector<2x1x16xf32>
    %10 = vector.shape_cast %9 : vector<2x1x16xf32> to vector<2x16xf32>
    %c0_12 = arith.constant 0 : index
    %c0_13 = arith.constant 0 : index
    %11 = vector.load %arg6[%c0_12, %c0_13] : memref<16x1536xf32, #tpu.memory_space<vmem>>, vector<16x1536xf32>
    %cst_14 = arith.constant dense<0.000000e+00> : vector<2x1536xf32>
    %12 = tpu.matmul %10, %11, %cst_14 {dimension_numbers = #tpu.dot_dimension_numbers<[1], [0], [0], [1], [0, 0, 1, 1], [], []>} : vector<2x16xf32>, vector<16x1536xf32>, vector<2x1536xf32> -> vector<2x1536xf32>
    %c0_15 = arith.constant 0 : index
    %c0_16 = arith.constant 0 : index
    %13 = vector.load %arg7[%c0_15, %c0_16] : memref<1x1536xf32, #tpu.memory_space<vmem>>, vector<1x1536xf32>
    %14 = vector.broadcast %13 : vector<1x1536xf32> to vector<2x1536xf32>
    %15 = arith.addf %12, %14 : vector<2x1536xf32>
    %c0_17 = arith.constant 0 : index
    %c0_18 = arith.constant 0 : index
    %16 = vector.load %arg8[%c0_17, %c0_18] : memref<16x16xf32, #tpu.memory_space<vmem>>, vector<16x16xf32>
    %cst_19 = arith.constant dense<0.000000e+00> : vector<16x16xf32>
    %17 = tpu.matmul %1, %16, %cst_19 {dimension_numbers = #tpu.dot_dimension_numbers<[1], [0], [0], [1], [0, 0, 1, 1], [], []>} : vector<16x16xf32>, vector<16x16xf32>, vector<16x16xf32> -> vector<16x16xf32>
    %18 = vector.shape_cast %17 : vector<16x16xf32> to vector<2x8x16xf32>
    %cst_20 = arith.constant dense<0.000000e+00> : vector<2x16xf32>
    %19 = vector.multi_reduction <add>, %18, %cst_20 [1] : vector<2x8x16xf32> to vector<2x16xf32>
    %20 = vector.shape_cast %19 : vector<2x16xf32> to vector<2x1x16xf32>
    %cst_21 = arith.constant 1.250000e-01 : f32
    %21 = vector.broadcast %cst_21 : f32 to vector<2x1x16xf32>
    %22 = arith.mulf %20, %21 : vector<2x1x16xf32>
    %23 = arith.mulf %18, %18 : vector<2x8x16xf32>
    %cst_22 = arith.constant dense<0.000000e+00> : vector<2x16xf32>
    %24 = vector.multi_reduction <add>, %23, %cst_22 [1] : vector<2x8x16xf32> to vector<2x16xf32>
    %25 = vector.shape_cast %24 : vector<2x16xf32> to vector<2x1x16xf32>
    %cst_23 = arith.constant 1.250000e-01 : f32
    %26 = vector.broadcast %cst_23 : f32 to vector<2x1x16xf32>
    %27 = arith.mulf %25, %26 : vector<2x1x16xf32>
    %28 = arith.mulf %22, %22 : vector<2x1x16xf32>
    %29 = arith.subf %27, %28 : vector<2x1x16xf32>
    %cst_24 = arith.constant 0.000000e+00 : f32
    %30 = vector.broadcast %cst_24 : f32 to vector<2x1x16xf32>
    %31 = arith.maximumf %29, %30 : vector<2x1x16xf32>
    %32 = vector.extract_strided_slice %8 {offsets = [0, 0], sizes = [2, 16], strides = [1, 1]} : vector<2x1536xf32> to vector<2x16xf32>
    %33 = vector.shape_cast %32 : vector<2x16xf32> to vector<2x1x16xf32>
    %34 = vector.extract_strided_slice %8 {offsets = [0, 128], sizes = [2, 16], strides = [1, 1]} : vector<2x1536xf32> to vector<2x16xf32>
    %35 = vector.shape_cast %34 : vector<2x16xf32> to vector<2x1x16xf32>
    %cst_25 = arith.constant 9.99999974E-6 : f32
    %36 = vector.broadcast %cst_25 : f32 to vector<2x1x16xf32>
    %37 = arith.addf %31, %36 : vector<2x1x16xf32>
    %38 = math.rsqrt %37 : vector<2x1x16xf32>
    %39 = arith.mulf %33, %38 : vector<2x1x16xf32>
    %40 = arith.mulf %22, %39 : vector<2x1x16xf32>
    %41 = arith.subf %35, %40 : vector<2x1x16xf32>
    %42 = vector.broadcast %39 : vector<2x1x16xf32> to vector<2x8x16xf32>
    %43 = arith.mulf %18, %42 : vector<2x8x16xf32>
    %44 = vector.broadcast %41 : vector<2x1x16xf32> to vector<2x8x16xf32>
    %45 = arith.addf %43, %44 : vector<2x8x16xf32>
    %cst_26 = arith.constant 2.000000e-01 : f32
    %46 = vector.broadcast %cst_26 : f32 to vector<2x8x16xf32>
    %47 = arith.mulf %46, %45 : vector<2x8x16xf32>
    %48 = arith.maximumf %45, %47 : vector<2x8x16xf32>
    %49 = vector.shape_cast %48 : vector<2x8x16xf32> to vector<16x16xf32>
    %c0_27 = arith.constant 0 : index
    %c0_28 = arith.constant 0 : index
    %50 = vector.load %arg14[%c0_27, %c0_28] : memref<16x16xf32, #tpu.memory_space<vmem>>, vector<16x16xf32>
    %cst_29 = arith.constant dense<0.000000e+00> : vector<16x16xf32>
    %51 = tpu.matmul %1, %50, %cst_29 {dimension_numbers = #tpu.dot_dimension_numbers<[1], [0], [0], [1], [0, 0, 1, 1], [], []>} : vector<16x16xf32>, vector<16x16xf32>, vector<16x16xf32> -> vector<16x16xf32>
    %52 = vector.shape_cast %51 : vector<16x16xf32> to vector<2x8x16xf32>
    %cst_30 = arith.constant dense<0.000000e+00> : vector<2x16xf32>
    %53 = vector.multi_reduction <add>, %52, %cst_30 [1] : vector<2x8x16xf32> to vector<2x16xf32>
    %54 = vector.shape_cast %53 : vector<2x16xf32> to vector<2x1x16xf32>
    %cst_31 = arith.constant 1.250000e-01 : f32
    %55 = vector.broadcast %cst_31 : f32 to vector<2x1x16xf32>
    %56 = arith.mulf %54, %55 : vector<2x1x16xf32>
    %57 = arith.mulf %52, %52 : vector<2x8x16xf32>
    %cst_32 = arith.constant dense<0.000000e+00> : vector<2x16xf32>
    %58 = vector.multi_reduction <add>, %57, %cst_32 [1] : vector<2x8x16xf32> to vector<2x16xf32>
    %59 = vector.shape_cast %58 : vector<2x16xf32> to vector<2x1x16xf32>
    %cst_33 = arith.constant 1.250000e-01 : f32
    %60 = vector.broadcast %cst_33 : f32 to vector<2x1x16xf32>
    %61 = arith.mulf %59, %60 : vector<2x1x16xf32>
    %62 = arith.mulf %56, %56 : vector<2x1x16xf32>
    %63 = arith.subf %61, %62 : vector<2x1x16xf32>
    %cst_34 = arith.constant 0.000000e+00 : f32
    %64 = vector.broadcast %cst_34 : f32 to vector<2x1x16xf32>
    %65 = arith.maximumf %63, %64 : vector<2x1x16xf32>
    %66 = vector.extract_strided_slice %15 {offsets = [0, 0], sizes = [2, 16], strides = [1, 1]} : vector<2x1536xf32> to vector<2x16xf32>
    %67 = vector.shape_cast %66 : vector<2x16xf32> to vector<2x1x16xf32>
    %68 = vector.extract_strided_slice %15 {offsets = [0, 128], sizes = [2, 16], strides = [1, 1]} : vector<2x1536xf32> to vector<2x16xf32>
    %69 = vector.shape_cast %68 : vector<2x16xf32> to vector<2x1x16xf32>
    %cst_35 = arith.constant 9.99999974E-6 : f32
    %70 = vector.broadcast %cst_35 : f32 to vector<2x1x16xf32>
    %71 = arith.addf %65, %70 : vector<2x1x16xf32>
    %72 = math.rsqrt %71 : vector<2x1x16xf32>
    %73 = arith.mulf %67, %72 : vector<2x1x16xf32>
    %74 = arith.mulf %56, %73 : vector<2x1x16xf32>
    %75 = arith.subf %69, %74 : vector<2x1x16xf32>
    %76 = vector.broadcast %73 : vector<2x1x16xf32> to vector<2x8x16xf32>
    %77 = arith.mulf %52, %76 : vector<2x8x16xf32>
    %78 = vector.broadcast %75 : vector<2x1x16xf32> to vector<2x8x16xf32>
    %79 = arith.addf %77, %78 : vector<2x8x16xf32>
    %cst_36 = arith.constant 2.000000e-01 : f32
    %80 = vector.broadcast %cst_36 : f32 to vector<2x8x16xf32>
    %81 = arith.mulf %80, %79 : vector<2x8x16xf32>
    %82 = arith.maximumf %79, %81 : vector<2x8x16xf32>
    %83 = vector.shape_cast %82 : vector<2x8x16xf32> to vector<16x16xf32>
    %c0_37 = arith.constant 0 : index
    %c0_38 = arith.constant 0 : index
    %84 = vector.load %arg9[%c0_37, %c0_38] : memref<16x32xf32, #tpu.memory_space<vmem>>, vector<16x32xf32>
    %cst_39 = arith.constant dense<0.000000e+00> : vector<16x32xf32>
    %85 = tpu.matmul %49, %84, %cst_39 {dimension_numbers = #tpu.dot_dimension_numbers<[1], [0], [0], [1], [0, 0, 1, 1], [], []>} : vector<16x16xf32>, vector<16x32xf32>, vector<16x32xf32> -> vector<16x32xf32>
    %86 = vector.shape_cast %85 : vector<16x32xf32> to vector<2x8x32xf32>
    %cst_40 = arith.constant dense<0.000000e+00> : vector<2x32xf32>
    %87 = vector.multi_reduction <add>, %86, %cst_40 [1] : vector<2x8x32xf32> to vector<2x32xf32>
    %88 = vector.shape_cast %87 : vector<2x32xf32> to vector<2x1x32xf32>
    %cst_41 = arith.constant 1.250000e-01 : f32
    %89 = vector.broadcast %cst_41 : f32 to vector<2x1x32xf32>
    %90 = arith.mulf %88, %89 : vector<2x1x32xf32>
    %91 = arith.mulf %86, %86 : vector<2x8x32xf32>
    %cst_42 = arith.constant dense<0.000000e+00> : vector<2x32xf32>
    %92 = vector.multi_reduction <add>, %91, %cst_42 [1] : vector<2x8x32xf32> to vector<2x32xf32>
    %93 = vector.shape_cast %92 : vector<2x32xf32> to vector<2x1x32xf32>
    %cst_43 = arith.constant 1.250000e-01 : f32
    %94 = vector.broadcast %cst_43 : f32 to vector<2x1x32xf32>
    %95 = arith.mulf %93, %94 : vector<2x1x32xf32>
    %96 = arith.mulf %90, %90 : vector<2x1x32xf32>
    %97 = arith.subf %95, %96 : vector<2x1x32xf32>
    %cst_44 = arith.constant 0.000000e+00 : f32
    %98 = vector.broadcast %cst_44 : f32 to vector<2x1x32xf32>
    %99 = arith.maximumf %97, %98 : vector<2x1x32xf32>
    %100 = vector.extract_strided_slice %8 {offsets = [0, 256], sizes = [2, 32], strides = [1, 1]} : vector<2x1536xf32> to vector<2x32xf32>
    %101 = vector.shape_cast %100 : vector<2x32xf32> to vector<2x1x32xf32>
    %102 = vector.extract_strided_slice %8 {offsets = [0, 384], sizes = [2, 32], strides = [1, 1]} : vector<2x1536xf32> to vector<2x32xf32>
    %103 = vector.shape_cast %102 : vector<2x32xf32> to vector<2x1x32xf32>
    %cst_45 = arith.constant 9.99999974E-6 : f32
    %104 = vector.broadcast %cst_45 : f32 to vector<2x1x32xf32>
    %105 = arith.addf %99, %104 : vector<2x1x32xf32>
    %106 = math.rsqrt %105 : vector<2x1x32xf32>
    %107 = arith.mulf %101, %106 : vector<2x1x32xf32>
    %108 = arith.mulf %90, %107 : vector<2x1x32xf32>
    %109 = arith.subf %103, %108 : vector<2x1x32xf32>
    %110 = vector.broadcast %107 : vector<2x1x32xf32> to vector<2x8x32xf32>
    %111 = arith.mulf %86, %110 : vector<2x8x32xf32>
    %112 = vector.broadcast %109 : vector<2x1x32xf32> to vector<2x8x32xf32>
    %113 = arith.addf %111, %112 : vector<2x8x32xf32>
    %cst_46 = arith.constant 2.000000e-01 : f32
    %114 = vector.broadcast %cst_46 : f32 to vector<2x8x32xf32>
    %115 = arith.mulf %114, %113 : vector<2x8x32xf32>
    %116 = arith.maximumf %113, %115 : vector<2x8x32xf32>
    %117 = vector.shape_cast %116 : vector<2x8x32xf32> to vector<16x32xf32>
    %c0_47 = arith.constant 0 : index
    %c0_48 = arith.constant 0 : index
    %118 = vector.load %arg15[%c0_47, %c0_48] : memref<16x32xf32, #tpu.memory_space<vmem>>, vector<16x32xf32>
    %cst_49 = arith.constant dense<0.000000e+00> : vector<16x32xf32>
    %119 = tpu.matmul %83, %118, %cst_49 {dimension_numbers = #tpu.dot_dimension_numbers<[1], [0], [0], [1], [0, 0, 1, 1], [], []>} : vector<16x16xf32>, vector<16x32xf32>, vector<16x32xf32> -> vector<16x32xf32>
    %120 = vector.shape_cast %119 : vector<16x32xf32> to vector<2x8x32xf32>
    %cst_50 = arith.constant dense<0.000000e+00> : vector<2x32xf32>
    %121 = vector.multi_reduction <add>, %120, %cst_50 [1] : vector<2x8x32xf32> to vector<2x32xf32>
    %122 = vector.shape_cast %121 : vector<2x32xf32> to vector<2x1x32xf32>
    %cst_51 = arith.constant 1.250000e-01 : f32
    %123 = vector.broadcast %cst_51 : f32 to vector<2x1x32xf32>
    %124 = arith.mulf %122, %123 : vector<2x1x32xf32>
    %125 = arith.mulf %120, %120 : vector<2x8x32xf32>
    %cst_52 = arith.constant dense<0.000000e+00> : vector<2x32xf32>
    %126 = vector.multi_reduction <add>, %125, %cst_52 [1] : vector<2x8x32xf32> to vector<2x32xf32>
    %127 = vector.shape_cast %126 : vector<2x32xf32> to vector<2x1x32xf32>
    %cst_53 = arith.constant 1.250000e-01 : f32
    %128 = vector.broadcast %cst_53 : f32 to vector<2x1x32xf32>
    %129 = arith.mulf %127, %128 : vector<2x1x32xf32>
    %130 = arith.mulf %124, %124 : vector<2x1x32xf32>
    %131 = arith.subf %129, %130 : vector<2x1x32xf32>
    %cst_54 = arith.constant 0.000000e+00 : f32
    %132 = vector.broadcast %cst_54 : f32 to vector<2x1x32xf32>
    %133 = arith.maximumf %131, %132 : vector<2x1x32xf32>
    %134 = vector.extract_strided_slice %15 {offsets = [0, 256], sizes = [2, 32], strides = [1, 1]} : vector<2x1536xf32> to vector<2x32xf32>
    %135 = vector.shape_cast %134 : vector<2x32xf32> to vector<2x1x32xf32>
    %136 = vector.extract_strided_slice %15 {offsets = [0, 384], sizes = [2, 32], strides = [1, 1]} : vector<2x1536xf32> to vector<2x32xf32>
    %137 = vector.shape_cast %136 : vector<2x32xf32> to vector<2x1x32xf32>
    %cst_55 = arith.constant 9.99999974E-6 : f32
    %138 = vector.broadcast %cst_55 : f32 to vector<2x1x32xf32>
    %139 = arith.addf %133, %138 : vector<2x1x32xf32>
    %140 = math.rsqrt %139 : vector<2x1x32xf32>
    %141 = arith.mulf %135, %140 : vector<2x1x32xf32>
    %142 = arith.mulf %124, %141 : vector<2x1x32xf32>
    %143 = arith.subf %137, %142 : vector<2x1x32xf32>
    %144 = vector.broadcast %141 : vector<2x1x32xf32> to vector<2x8x32xf32>
    %145 = arith.mulf %120, %144 : vector<2x8x32xf32>
    %146 = vector.broadcast %143 : vector<2x1x32xf32> to vector<2x8x32xf32>
    %147 = arith.addf %145, %146 : vector<2x8x32xf32>
    %cst_56 = arith.constant 2.000000e-01 : f32
    %148 = vector.broadcast %cst_56 : f32 to vector<2x8x32xf32>
    %149 = arith.mulf %148, %147 : vector<2x8x32xf32>
    %150 = arith.maximumf %147, %149 : vector<2x8x32xf32>
    %151 = vector.shape_cast %150 : vector<2x8x32xf32> to vector<16x32xf32>
    %c0_57 = arith.constant 0 : index
    %c0_58 = arith.constant 0 : index
    %152 = vector.load %arg10[%c0_57, %c0_58] : memref<32x32xf32, #tpu.memory_space<vmem>>, vector<32x32xf32>
    %cst_59 = arith.constant dense<0.000000e+00> : vector<16x32xf32>
    %153 = tpu.matmul %117, %152, %cst_59 {dimension_numbers = #tpu.dot_dimension_numbers<[1], [0], [0], [1], [0, 0, 1, 1], [], []>} : vector<16x32xf32>, vector<32x32xf32>, vector<16x32xf32> -> vector<16x32xf32>
    %154 = vector.shape_cast %153 : vector<16x32xf32> to vector<2x8x32xf32>
    %cst_60 = arith.constant dense<0.000000e+00> : vector<2x32xf32>
    %155 = vector.multi_reduction <add>, %154, %cst_60 [1] : vector<2x8x32xf32> to vector<2x32xf32>
    %156 = vector.shape_cast %155 : vector<2x32xf32> to vector<2x1x32xf32>
    %cst_61 = arith.constant 1.250000e-01 : f32
    %157 = vector.broadcast %cst_61 : f32 to vector<2x1x32xf32>
    %158 = arith.mulf %156, %157 : vector<2x1x32xf32>
    %159 = arith.mulf %154, %154 : vector<2x8x32xf32>
    %cst_62 = arith.constant dense<0.000000e+00> : vector<2x32xf32>
    %160 = vector.multi_reduction <add>, %159, %cst_62 [1] : vector<2x8x32xf32> to vector<2x32xf32>
    %161 = vector.shape_cast %160 : vector<2x32xf32> to vector<2x1x32xf32>
    %cst_63 = arith.constant 1.250000e-01 : f32
    %162 = vector.broadcast %cst_63 : f32 to vector<2x1x32xf32>
    %163 = arith.mulf %161, %162 : vector<2x1x32xf32>
    %164 = arith.mulf %158, %158 : vector<2x1x32xf32>
    %165 = arith.subf %163, %164 : vector<2x1x32xf32>
    %cst_64 = arith.constant 0.000000e+00 : f32
    %166 = vector.broadcast %cst_64 : f32 to vector<2x1x32xf32>
    %167 = arith.maximumf %165, %166 : vector<2x1x32xf32>
    %168 = vector.extract_strided_slice %8 {offsets = [0, 512], sizes = [2, 32], strides = [1, 1]} : vector<2x1536xf32> to vector<2x32xf32>
    %169 = vector.shape_cast %168 : vector<2x32xf32> to vector<2x1x32xf32>
    %170 = vector.extract_strided_slice %8 {offsets = [0, 640], sizes = [2, 32], strides = [1, 1]} : vector<2x1536xf32> to vector<2x32xf32>
    %171 = vector.shape_cast %170 : vector<2x32xf32> to vector<2x1x32xf32>
    %cst_65 = arith.constant 9.99999974E-6 : f32
    %172 = vector.broadcast %cst_65 : f32 to vector<2x1x32xf32>
    %173 = arith.addf %167, %172 : vector<2x1x32xf32>
    %174 = math.rsqrt %173 : vector<2x1x32xf32>
    %175 = arith.mulf %169, %174 : vector<2x1x32xf32>
    %176 = arith.mulf %158, %175 : vector<2x1x32xf32>
    %177 = arith.subf %171, %176 : vector<2x1x32xf32>
    %178 = vector.broadcast %175 : vector<2x1x32xf32> to vector<2x8x32xf32>
    %179 = arith.mulf %154, %178 : vector<2x8x32xf32>
    %180 = vector.broadcast %177 : vector<2x1x32xf32> to vector<2x8x32xf32>
    %181 = arith.addf %179, %180 : vector<2x8x32xf32>
    %cst_66 = arith.constant 2.000000e-01 : f32
    %182 = vector.broadcast %cst_66 : f32 to vector<2x8x32xf32>
    %183 = arith.mulf %182, %181 : vector<2x8x32xf32>
    %184 = arith.maximumf %181, %183 : vector<2x8x32xf32>
    %185 = vector.shape_cast %184 : vector<2x8x32xf32> to vector<16x32xf32>
    %c0_67 = arith.constant 0 : index
    %c0_68 = arith.constant 0 : index
    %186 = vector.load %arg16[%c0_67, %c0_68] : memref<32x32xf32, #tpu.memory_space<vmem>>, vector<32x32xf32>
    %cst_69 = arith.constant dense<0.000000e+00> : vector<16x32xf32>
    %187 = tpu.matmul %151, %186, %cst_69 {dimension_numbers = #tpu.dot_dimension_numbers<[1], [0], [0], [1], [0, 0, 1, 1], [], []>} : vector<16x32xf32>, vector<32x32xf32>, vector<16x32xf32> -> vector<16x32xf32>
    %188 = vector.shape_cast %187 : vector<16x32xf32> to vector<2x8x32xf32>
    %cst_70 = arith.constant dense<0.000000e+00> : vector<2x32xf32>
    %189 = vector.multi_reduction <add>, %188, %cst_70 [1] : vector<2x8x32xf32> to vector<2x32xf32>
    %190 = vector.shape_cast %189 : vector<2x32xf32> to vector<2x1x32xf32>
    %cst_71 = arith.constant 1.250000e-01 : f32
    %191 = vector.broadcast %cst_71 : f32 to vector<2x1x32xf32>
    %192 = arith.mulf %190, %191 : vector<2x1x32xf32>
    %193 = arith.mulf %188, %188 : vector<2x8x32xf32>
    %cst_72 = arith.constant dense<0.000000e+00> : vector<2x32xf32>
    %194 = vector.multi_reduction <add>, %193, %cst_72 [1] : vector<2x8x32xf32> to vector<2x32xf32>
    %195 = vector.shape_cast %194 : vector<2x32xf32> to vector<2x1x32xf32>
    %cst_73 = arith.constant 1.250000e-01 : f32
    %196 = vector.broadcast %cst_73 : f32 to vector<2x1x32xf32>
    %197 = arith.mulf %195, %196 : vector<2x1x32xf32>
    %198 = arith.mulf %192, %192 : vector<2x1x32xf32>
    %199 = arith.subf %197, %198 : vector<2x1x32xf32>
    %cst_74 = arith.constant 0.000000e+00 : f32
    %200 = vector.broadcast %cst_74 : f32 to vector<2x1x32xf32>
    %201 = arith.maximumf %199, %200 : vector<2x1x32xf32>
    %202 = vector.extract_strided_slice %15 {offsets = [0, 512], sizes = [2, 32], strides = [1, 1]} : vector<2x1536xf32> to vector<2x32xf32>
    %203 = vector.shape_cast %202 : vector<2x32xf32> to vector<2x1x32xf32>
    %204 = vector.extract_strided_slice %15 {offsets = [0, 640], sizes = [2, 32], strides = [1, 1]} : vector<2x1536xf32> to vector<2x32xf32>
    %205 = vector.shape_cast %204 : vector<2x32xf32> to vector<2x1x32xf32>
    %cst_75 = arith.constant 9.99999974E-6 : f32
    %206 = vector.broadcast %cst_75 : f32 to vector<2x1x32xf32>
    %207 = arith.addf %201, %206 : vector<2x1x32xf32>
    %208 = math.rsqrt %207 : vector<2x1x32xf32>
    %209 = arith.mulf %203, %208 : vector<2x1x32xf32>
    %210 = arith.mulf %192, %209 : vector<2x1x32xf32>
    %211 = arith.subf %205, %210 : vector<2x1x32xf32>
    %212 = vector.broadcast %209 : vector<2x1x32xf32> to vector<2x8x32xf32>
    %213 = arith.mulf %188, %212 : vector<2x8x32xf32>
    %214 = vector.broadcast %211 : vector<2x1x32xf32> to vector<2x8x32xf32>
    %215 = arith.addf %213, %214 : vector<2x8x32xf32>
    %cst_76 = arith.constant 2.000000e-01 : f32
    %216 = vector.broadcast %cst_76 : f32 to vector<2x8x32xf32>
    %217 = arith.mulf %216, %215 : vector<2x8x32xf32>
    %218 = arith.maximumf %215, %217 : vector<2x8x32xf32>
    %219 = vector.shape_cast %218 : vector<2x8x32xf32> to vector<16x32xf32>
    %c0_77 = arith.constant 0 : index
    %c0_78 = arith.constant 0 : index
    %220 = vector.load %arg11[%c0_77, %c0_78] : memref<32x64xf32, #tpu.memory_space<vmem>>, vector<32x64xf32>
    %cst_79 = arith.constant dense<0.000000e+00> : vector<16x64xf32>
    %221 = tpu.matmul %185, %220, %cst_79 {dimension_numbers = #tpu.dot_dimension_numbers<[1], [0], [0], [1], [0, 0, 1, 1], [], []>} : vector<16x32xf32>, vector<32x64xf32>, vector<16x64xf32> -> vector<16x64xf32>
    %222 = vector.shape_cast %221 : vector<16x64xf32> to vector<2x8x64xf32>
    %cst_80 = arith.constant dense<0.000000e+00> : vector<2x64xf32>
    %223 = vector.multi_reduction <add>, %222, %cst_80 [1] : vector<2x8x64xf32> to vector<2x64xf32>
    %224 = vector.shape_cast %223 : vector<2x64xf32> to vector<2x1x64xf32>
    %cst_81 = arith.constant 1.250000e-01 : f32
    %225 = vector.broadcast %cst_81 : f32 to vector<2x1x64xf32>
    %226 = arith.mulf %224, %225 : vector<2x1x64xf32>
    %227 = arith.mulf %222, %222 : vector<2x8x64xf32>
    %cst_82 = arith.constant dense<0.000000e+00> : vector<2x64xf32>
    %228 = vector.multi_reduction <add>, %227, %cst_82 [1] : vector<2x8x64xf32> to vector<2x64xf32>
    %229 = vector.shape_cast %228 : vector<2x64xf32> to vector<2x1x64xf32>
    %cst_83 = arith.constant 1.250000e-01 : f32
    %230 = vector.broadcast %cst_83 : f32 to vector<2x1x64xf32>
    %231 = arith.mulf %229, %230 : vector<2x1x64xf32>
    %232 = arith.mulf %226, %226 : vector<2x1x64xf32>
    %233 = arith.subf %231, %232 : vector<2x1x64xf32>
    %cst_84 = arith.constant 0.000000e+00 : f32
    %234 = vector.broadcast %cst_84 : f32 to vector<2x1x64xf32>
    %235 = arith.maximumf %233, %234 : vector<2x1x64xf32>
    %236 = vector.extract_strided_slice %8 {offsets = [0, 768], sizes = [2, 64], strides = [1, 1]} : vector<2x1536xf32> to vector<2x64xf32>
    %237 = vector.shape_cast %236 : vector<2x64xf32> to vector<2x1x64xf32>
    %238 = vector.extract_strided_slice %8 {offsets = [0, 896], sizes = [2, 64], strides = [1, 1]} : vector<2x1536xf32> to vector<2x64xf32>
    %239 = vector.shape_cast %238 : vector<2x64xf32> to vector<2x1x64xf32>
    %cst_85 = arith.constant 9.99999974E-6 : f32
    %240 = vector.broadcast %cst_85 : f32 to vector<2x1x64xf32>
    %241 = arith.addf %235, %240 : vector<2x1x64xf32>
    %242 = math.rsqrt %241 : vector<2x1x64xf32>
    %243 = arith.mulf %237, %242 : vector<2x1x64xf32>
    %244 = arith.mulf %226, %243 : vector<2x1x64xf32>
    %245 = arith.subf %239, %244 : vector<2x1x64xf32>
    %246 = vector.broadcast %243 : vector<2x1x64xf32> to vector<2x8x64xf32>
    %247 = arith.mulf %222, %246 : vector<2x8x64xf32>
    %248 = vector.broadcast %245 : vector<2x1x64xf32> to vector<2x8x64xf32>
    %249 = arith.addf %247, %248 : vector<2x8x64xf32>
    %cst_86 = arith.constant 2.000000e-01 : f32
    %250 = vector.broadcast %cst_86 : f32 to vector<2x8x64xf32>
    %251 = arith.mulf %250, %249 : vector<2x8x64xf32>
    %252 = arith.maximumf %249, %251 : vector<2x8x64xf32>
    %253 = vector.shape_cast %252 : vector<2x8x64xf32> to vector<16x64xf32>
    %c0_87 = arith.constant 0 : index
    %c0_88 = arith.constant 0 : index
    %254 = vector.load %arg17[%c0_87, %c0_88] : memref<32x64xf32, #tpu.memory_space<vmem>>, vector<32x64xf32>
    %cst_89 = arith.constant dense<0.000000e+00> : vector<16x64xf32>
    %255 = tpu.matmul %219, %254, %cst_89 {dimension_numbers = #tpu.dot_dimension_numbers<[1], [0], [0], [1], [0, 0, 1, 1], [], []>} : vector<16x32xf32>, vector<32x64xf32>, vector<16x64xf32> -> vector<16x64xf32>
    %256 = vector.shape_cast %255 : vector<16x64xf32> to vector<2x8x64xf32>
    %cst_90 = arith.constant dense<0.000000e+00> : vector<2x64xf32>
    %257 = vector.multi_reduction <add>, %256, %cst_90 [1] : vector<2x8x64xf32> to vector<2x64xf32>
    %258 = vector.shape_cast %257 : vector<2x64xf32> to vector<2x1x64xf32>
    %cst_91 = arith.constant 1.250000e-01 : f32
    %259 = vector.broadcast %cst_91 : f32 to vector<2x1x64xf32>
    %260 = arith.mulf %258, %259 : vector<2x1x64xf32>
    %261 = arith.mulf %256, %256 : vector<2x8x64xf32>
    %cst_92 = arith.constant dense<0.000000e+00> : vector<2x64xf32>
    %262 = vector.multi_reduction <add>, %261, %cst_92 [1] : vector<2x8x64xf32> to vector<2x64xf32>
    %263 = vector.shape_cast %262 : vector<2x64xf32> to vector<2x1x64xf32>
    %cst_93 = arith.constant 1.250000e-01 : f32
    %264 = vector.broadcast %cst_93 : f32 to vector<2x1x64xf32>
    %265 = arith.mulf %263, %264 : vector<2x1x64xf32>
    %266 = arith.mulf %260, %260 : vector<2x1x64xf32>
    %267 = arith.subf %265, %266 : vector<2x1x64xf32>
    %cst_94 = arith.constant 0.000000e+00 : f32
    %268 = vector.broadcast %cst_94 : f32 to vector<2x1x64xf32>
    %269 = arith.maximumf %267, %268 : vector<2x1x64xf32>
    %270 = vector.extract_strided_slice %15 {offsets = [0, 768], sizes = [2, 64], strides = [1, 1]} : vector<2x1536xf32> to vector<2x64xf32>
    %271 = vector.shape_cast %270 : vector<2x64xf32> to vector<2x1x64xf32>
    %272 = vector.extract_strided_slice %15 {offsets = [0, 896], sizes = [2, 64], strides = [1, 1]} : vector<2x1536xf32> to vector<2x64xf32>
    %273 = vector.shape_cast %272 : vector<2x64xf32> to vector<2x1x64xf32>
    %cst_95 = arith.constant 9.99999974E-6 : f32
    %274 = vector.broadcast %cst_95 : f32 to vector<2x1x64xf32>
    %275 = arith.addf %269, %274 : vector<2x1x64xf32>
    %276 = math.rsqrt %275 : vector<2x1x64xf32>
    %277 = arith.mulf %271, %276 : vector<2x1x64xf32>
    %278 = arith.mulf %260, %277 : vector<2x1x64xf32>
    %279 = arith.subf %273, %278 : vector<2x1x64xf32>
    %280 = vector.broadcast %277 : vector<2x1x64xf32> to vector<2x8x64xf32>
    %281 = arith.mulf %256, %280 : vector<2x8x64xf32>
    %282 = vector.broadcast %279 : vector<2x1x64xf32> to vector<2x8x64xf32>
    %283 = arith.addf %281, %282 : vector<2x8x64xf32>
    %cst_96 = arith.constant 2.000000e-01 : f32
    %284 = vector.broadcast %cst_96 : f32 to vector<2x8x64xf32>
    %285 = arith.mulf %284, %283 : vector<2x8x64xf32>
    %286 = arith.maximumf %283, %285 : vector<2x8x64xf32>
    %287 = vector.shape_cast %286 : vector<2x8x64xf32> to vector<16x64xf32>
    %c0_97 = arith.constant 0 : index
    %c0_98 = arith.constant 0 : index
    %288 = vector.load %arg12[%c0_97, %c0_98] : memref<64x64xf32, #tpu.memory_space<vmem>>, vector<64x64xf32>
    %cst_99 = arith.constant dense<0.000000e+00> : vector<16x64xf32>
    %289 = tpu.matmul %253, %288, %cst_99 {dimension_numbers = #tpu.dot_dimension_numbers<[1], [0], [0], [1], [0, 0, 1, 1], [], []>} : vector<16x64xf32>, vector<64x64xf32>, vector<16x64xf32> -> vector<16x64xf32>
    %290 = vector.shape_cast %289 : vector<16x64xf32> to vector<2x8x64xf32>
    %cst_100 = arith.constant dense<0.000000e+00> : vector<2x64xf32>
    %291 = vector.multi_reduction <add>, %290, %cst_100 [1] : vector<2x8x64xf32> to vector<2x64xf32>
    %292 = vector.shape_cast %291 : vector<2x64xf32> to vector<2x1x64xf32>
    %cst_101 = arith.constant 1.250000e-01 : f32
    %293 = vector.broadcast %cst_101 : f32 to vector<2x1x64xf32>
    %294 = arith.mulf %292, %293 : vector<2x1x64xf32>
    %295 = arith.mulf %290, %290 : vector<2x8x64xf32>
    %cst_102 = arith.constant dense<0.000000e+00> : vector<2x64xf32>
    %296 = vector.multi_reduction <add>, %295, %cst_102 [1] : vector<2x8x64xf32> to vector<2x64xf32>
    %297 = vector.shape_cast %296 : vector<2x64xf32> to vector<2x1x64xf32>
    %cst_103 = arith.constant 1.250000e-01 : f32
    %298 = vector.broadcast %cst_103 : f32 to vector<2x1x64xf32>
    %299 = arith.mulf %297, %298 : vector<2x1x64xf32>
    %300 = arith.mulf %294, %294 : vector<2x1x64xf32>
    %301 = arith.subf %299, %300 : vector<2x1x64xf32>
    %cst_104 = arith.constant 0.000000e+00 : f32
    %302 = vector.broadcast %cst_104 : f32 to vector<2x1x64xf32>
    %303 = arith.maximumf %301, %302 : vector<2x1x64xf32>
    %304 = vector.extract_strided_slice %8 {offsets = [0, 1024], sizes = [2, 64], strides = [1, 1]} : vector<2x1536xf32> to vector<2x64xf32>
    %305 = vector.shape_cast %304 : vector<2x64xf32> to vector<2x1x64xf32>
    %306 = vector.extract_strided_slice %8 {offsets = [0, 1152], sizes = [2, 64], strides = [1, 1]} : vector<2x1536xf32> to vector<2x64xf32>
    %307 = vector.shape_cast %306 : vector<2x64xf32> to vector<2x1x64xf32>
    %cst_105 = arith.constant 9.99999974E-6 : f32
    %308 = vector.broadcast %cst_105 : f32 to vector<2x1x64xf32>
    %309 = arith.addf %303, %308 : vector<2x1x64xf32>
    %310 = math.rsqrt %309 : vector<2x1x64xf32>
    %311 = arith.mulf %305, %310 : vector<2x1x64xf32>
    %312 = arith.mulf %294, %311 : vector<2x1x64xf32>
    %313 = arith.subf %307, %312 : vector<2x1x64xf32>
    %314 = vector.broadcast %311 : vector<2x1x64xf32> to vector<2x8x64xf32>
    %315 = arith.mulf %290, %314 : vector<2x8x64xf32>
    %316 = vector.broadcast %313 : vector<2x1x64xf32> to vector<2x8x64xf32>
    %317 = arith.addf %315, %316 : vector<2x8x64xf32>
    %cst_106 = arith.constant 2.000000e-01 : f32
    %318 = vector.broadcast %cst_106 : f32 to vector<2x8x64xf32>
    %319 = arith.mulf %318, %317 : vector<2x8x64xf32>
    %320 = arith.maximumf %317, %319 : vector<2x8x64xf32>
    %321 = vector.shape_cast %320 : vector<2x8x64xf32> to vector<16x64xf32>
    %c0_107 = arith.constant 0 : index
    %c0_108 = arith.constant 0 : index
    %322 = vector.load %arg18[%c0_107, %c0_108] : memref<64x64xf32, #tpu.memory_space<vmem>>, vector<64x64xf32>
    %cst_109 = arith.constant dense<0.000000e+00> : vector<16x64xf32>
    %323 = tpu.matmul %287, %322, %cst_109 {dimension_numbers = #tpu.dot_dimension_numbers<[1], [0], [0], [1], [0, 0, 1, 1], [], []>} : vector<16x64xf32>, vector<64x64xf32>, vector<16x64xf32> -> vector<16x64xf32>
    %324 = vector.shape_cast %323 : vector<16x64xf32> to vector<2x8x64xf32>
    %cst_110 = arith.constant dense<0.000000e+00> : vector<2x64xf32>
    %325 = vector.multi_reduction <add>, %324, %cst_110 [1] : vector<2x8x64xf32> to vector<2x64xf32>
    %326 = vector.shape_cast %325 : vector<2x64xf32> to vector<2x1x64xf32>
    %cst_111 = arith.constant 1.250000e-01 : f32
    %327 = vector.broadcast %cst_111 : f32 to vector<2x1x64xf32>
    %328 = arith.mulf %326, %327 : vector<2x1x64xf32>
    %329 = arith.mulf %324, %324 : vector<2x8x64xf32>
    %cst_112 = arith.constant dense<0.000000e+00> : vector<2x64xf32>
    %330 = vector.multi_reduction <add>, %329, %cst_112 [1] : vector<2x8x64xf32> to vector<2x64xf32>
    %331 = vector.shape_cast %330 : vector<2x64xf32> to vector<2x1x64xf32>
    %cst_113 = arith.constant 1.250000e-01 : f32
    %332 = vector.broadcast %cst_113 : f32 to vector<2x1x64xf32>
    %333 = arith.mulf %331, %332 : vector<2x1x64xf32>
    %334 = arith.mulf %328, %328 : vector<2x1x64xf32>
    %335 = arith.subf %333, %334 : vector<2x1x64xf32>
    %cst_114 = arith.constant 0.000000e+00 : f32
    %336 = vector.broadcast %cst_114 : f32 to vector<2x1x64xf32>
    %337 = arith.maximumf %335, %336 : vector<2x1x64xf32>
    %338 = vector.extract_strided_slice %15 {offsets = [0, 1024], sizes = [2, 64], strides = [1, 1]} : vector<2x1536xf32> to vector<2x64xf32>
    %339 = vector.shape_cast %338 : vector<2x64xf32> to vector<2x1x64xf32>
    %340 = vector.extract_strided_slice %15 {offsets = [0, 1152], sizes = [2, 64], strides = [1, 1]} : vector<2x1536xf32> to vector<2x64xf32>
    %341 = vector.shape_cast %340 : vector<2x64xf32> to vector<2x1x64xf32>
    %cst_115 = arith.constant 9.99999974E-6 : f32
    %342 = vector.broadcast %cst_115 : f32 to vector<2x1x64xf32>
    %343 = arith.addf %337, %342 : vector<2x1x64xf32>
    %344 = math.rsqrt %343 : vector<2x1x64xf32>
    %345 = arith.mulf %339, %344 : vector<2x1x64xf32>
    %346 = arith.mulf %328, %345 : vector<2x1x64xf32>
    %347 = arith.subf %341, %346 : vector<2x1x64xf32>
    %348 = vector.broadcast %345 : vector<2x1x64xf32> to vector<2x8x64xf32>
    %349 = arith.mulf %324, %348 : vector<2x8x64xf32>
    %350 = vector.broadcast %347 : vector<2x1x64xf32> to vector<2x8x64xf32>
    %351 = arith.addf %349, %350 : vector<2x8x64xf32>
    %cst_116 = arith.constant 2.000000e-01 : f32
    %352 = vector.broadcast %cst_116 : f32 to vector<2x8x64xf32>
    %353 = arith.mulf %352, %351 : vector<2x8x64xf32>
    %354 = arith.maximumf %351, %353 : vector<2x8x64xf32>
    %355 = vector.shape_cast %354 : vector<2x8x64xf32> to vector<16x64xf32>
    %c0_117 = arith.constant 0 : index
    %c0_118 = arith.constant 0 : index
    %356 = vector.load %arg13[%c0_117, %c0_118] : memref<64x128xf32, #tpu.memory_space<vmem>>, vector<64x128xf32>
    %cst_119 = arith.constant dense<0.000000e+00> : vector<16x128xf32>
    %357 = tpu.matmul %321, %356, %cst_119 {dimension_numbers = #tpu.dot_dimension_numbers<[1], [0], [0], [1], [0, 0, 1, 1], [], []>} : vector<16x64xf32>, vector<64x128xf32>, vector<16x128xf32> -> vector<16x128xf32>
    %358 = vector.shape_cast %357 : vector<16x128xf32> to vector<2x8x128xf32>
    %cst_120 = arith.constant dense<0.000000e+00> : vector<2x128xf32>
    %359 = vector.multi_reduction <add>, %358, %cst_120 [1] : vector<2x8x128xf32> to vector<2x128xf32>
    %360 = vector.shape_cast %359 : vector<2x128xf32> to vector<2x1x128xf32>
    %cst_121 = arith.constant 1.250000e-01 : f32
    %361 = vector.broadcast %cst_121 : f32 to vector<2x1x128xf32>
    %362 = arith.mulf %360, %361 : vector<2x1x128xf32>
    %363 = arith.mulf %358, %358 : vector<2x8x128xf32>
    %cst_122 = arith.constant dense<0.000000e+00> : vector<2x128xf32>
    %364 = vector.multi_reduction <add>, %363, %cst_122 [1] : vector<2x8x128xf32> to vector<2x128xf32>
    %365 = vector.shape_cast %364 : vector<2x128xf32> to vector<2x1x128xf32>
    %cst_123 = arith.constant 1.250000e-01 : f32
    %366 = vector.broadcast %cst_123 : f32 to vector<2x1x128xf32>
    %367 = arith.mulf %365, %366 : vector<2x1x128xf32>
    %368 = arith.mulf %362, %362 : vector<2x1x128xf32>
    %369 = arith.subf %367, %368 : vector<2x1x128xf32>
    %cst_124 = arith.constant 0.000000e+00 : f32
    %370 = vector.broadcast %cst_124 : f32 to vector<2x1x128xf32>
    %371 = arith.maximumf %369, %370 : vector<2x1x128xf32>
    %372 = vector.extract_strided_slice %8 {offsets = [0, 1280], sizes = [2, 128], strides = [1, 1]} : vector<2x1536xf32> to vector<2x128xf32>
    %373 = vector.shape_cast %372 : vector<2x128xf32> to vector<2x1x128xf32>
    %374 = vector.extract_strided_slice %8 {offsets = [0, 1408], sizes = [2, 128], strides = [1, 1]} : vector<2x1536xf32> to vector<2x128xf32>
    %375 = vector.shape_cast %374 : vector<2x128xf32> to vector<2x1x128xf32>
    %cst_125 = arith.constant 9.99999974E-6 : f32
    %376 = vector.broadcast %cst_125 : f32 to vector<2x1x128xf32>
    %377 = arith.addf %371, %376 : vector<2x1x128xf32>
    %378 = math.rsqrt %377 : vector<2x1x128xf32>
    %379 = arith.mulf %373, %378 : vector<2x1x128xf32>
    %380 = arith.mulf %362, %379 : vector<2x1x128xf32>
    %381 = arith.subf %375, %380 : vector<2x1x128xf32>
    %382 = vector.broadcast %379 : vector<2x1x128xf32> to vector<2x8x128xf32>
    %383 = arith.mulf %358, %382 : vector<2x8x128xf32>
    %384 = vector.broadcast %381 : vector<2x1x128xf32> to vector<2x8x128xf32>
    %385 = arith.addf %383, %384 : vector<2x8x128xf32>
    %cst_126 = arith.constant 2.000000e-01 : f32
    %386 = vector.broadcast %cst_126 : f32 to vector<2x8x128xf32>
    %387 = arith.mulf %386, %385 : vector<2x8x128xf32>
    %388 = arith.maximumf %385, %387 : vector<2x8x128xf32>
    %389 = vector.shape_cast %388 : vector<2x8x128xf32> to vector<16x128xf32>
    %c0_127 = arith.constant 0 : index
    %c0_128 = arith.constant 0 : index
    %390 = vector.load %arg19[%c0_127, %c0_128] : memref<64x128xf32, #tpu.memory_space<vmem>>, vector<64x128xf32>
    %cst_129 = arith.constant dense<0.000000e+00> : vector<16x128xf32>
    %391 = tpu.matmul %355, %390, %cst_129 {dimension_numbers = #tpu.dot_dimension_numbers<[1], [0], [0], [1], [0, 0, 1, 1], [], []>} : vector<16x64xf32>, vector<64x128xf32>, vector<16x128xf32> -> vector<16x128xf32>
    %392 = vector.shape_cast %391 : vector<16x128xf32> to vector<2x8x128xf32>
    %cst_130 = arith.constant dense<0.000000e+00> : vector<2x128xf32>
    %393 = vector.multi_reduction <add>, %392, %cst_130 [1] : vector<2x8x128xf32> to vector<2x128xf32>
    %394 = vector.shape_cast %393 : vector<2x128xf32> to vector<2x1x128xf32>
    %cst_131 = arith.constant 1.250000e-01 : f32
    %395 = vector.broadcast %cst_131 : f32 to vector<2x1x128xf32>
    %396 = arith.mulf %394, %395 : vector<2x1x128xf32>
    %397 = arith.mulf %392, %392 : vector<2x8x128xf32>
    %cst_132 = arith.constant dense<0.000000e+00> : vector<2x128xf32>
    %398 = vector.multi_reduction <add>, %397, %cst_132 [1] : vector<2x8x128xf32> to vector<2x128xf32>
    %399 = vector.shape_cast %398 : vector<2x128xf32> to vector<2x1x128xf32>
    %cst_133 = arith.constant 1.250000e-01 : f32
    %400 = vector.broadcast %cst_133 : f32 to vector<2x1x128xf32>
    %401 = arith.mulf %399, %400 : vector<2x1x128xf32>
    %402 = arith.mulf %396, %396 : vector<2x1x128xf32>
    %403 = arith.subf %401, %402 : vector<2x1x128xf32>
    %cst_134 = arith.constant 0.000000e+00 : f32
    %404 = vector.broadcast %cst_134 : f32 to vector<2x1x128xf32>
    %405 = arith.maximumf %403, %404 : vector<2x1x128xf32>
    %406 = vector.extract_strided_slice %15 {offsets = [0, 1280], sizes = [2, 128], strides = [1, 1]} : vector<2x1536xf32> to vector<2x128xf32>
    %407 = vector.shape_cast %406 : vector<2x128xf32> to vector<2x1x128xf32>
    %408 = vector.extract_strided_slice %15 {offsets = [0, 1408], sizes = [2, 128], strides = [1, 1]} : vector<2x1536xf32> to vector<2x128xf32>
    %409 = vector.shape_cast %408 : vector<2x128xf32> to vector<2x1x128xf32>
    %cst_135 = arith.constant 9.99999974E-6 : f32
    %410 = vector.broadcast %cst_135 : f32 to vector<2x1x128xf32>
    %411 = arith.addf %405, %410 : vector<2x1x128xf32>
    %412 = math.rsqrt %411 : vector<2x1x128xf32>
    %413 = arith.mulf %407, %412 : vector<2x1x128xf32>
    %414 = arith.mulf %396, %413 : vector<2x1x128xf32>
    %415 = arith.subf %409, %414 : vector<2x1x128xf32>
    %416 = vector.broadcast %413 : vector<2x1x128xf32> to vector<2x8x128xf32>
    %417 = arith.mulf %392, %416 : vector<2x8x128xf32>
    %418 = vector.broadcast %415 : vector<2x1x128xf32> to vector<2x8x128xf32>
    %419 = arith.addf %417, %418 : vector<2x8x128xf32>
    %cst_136 = arith.constant 2.000000e-01 : f32
    %420 = vector.broadcast %cst_136 : f32 to vector<2x8x128xf32>
    %421 = arith.mulf %420, %419 : vector<2x8x128xf32>
    %422 = arith.maximumf %419, %421 : vector<2x8x128xf32>
    %423 = vector.shape_cast %422 : vector<2x8x128xf32> to vector<16x128xf32>
    %424 = vector.shape_cast %389 : vector<16x128xf32> to vector<2x8x128xf32>
    %425 = vector.shape_cast %423 : vector<16x128xf32> to vector<2x8x128xf32>
    %426 = vector.extract_strided_slice %424 {offsets = [0, 0, 0], sizes = [1, 8, 128], strides = [1, 1, 1]} : vector<2x8x128xf32> to vector<1x8x128xf32>
    %427 = vector.shape_cast %426 : vector<1x8x128xf32> to vector<8x128xf32>
    %428 = vector.extract_strided_slice %425 {offsets = [0, 0, 0], sizes = [1, 8, 128], strides = [1, 1, 1]} : vector<2x8x128xf32> to vector<1x8x128xf32>
    %429 = vector.shape_cast %428 : vector<1x8x128xf32> to vector<8x128xf32>
    %cst_137 = arith.constant dense<0.000000e+00> : vector<8x8xf32>
    %430 = tpu.matmul %427, %429, %cst_137 {dimension_numbers = #tpu.dot_dimension_numbers<[1], [1], [0], [0], [0, 0, 1, 0], [], []>} : vector<8x128xf32>, vector<8x128xf32>, vector<8x8xf32> -> vector<8x8xf32>
    %431 = vector.extract_strided_slice %424 {offsets = [1, 0, 0], sizes = [1, 8, 128], strides = [1, 1, 1]} : vector<2x8x128xf32> to vector<1x8x128xf32>
    %432 = vector.shape_cast %431 : vector<1x8x128xf32> to vector<8x128xf32>
    %433 = vector.extract_strided_slice %425 {offsets = [1, 0, 0], sizes = [1, 8, 128], strides = [1, 1, 1]} : vector<2x8x128xf32> to vector<1x8x128xf32>
    %434 = vector.shape_cast %433 : vector<1x8x128xf32> to vector<8x128xf32>
    %cst_138 = arith.constant dense<0.000000e+00> : vector<8x8xf32>
    %435 = tpu.matmul %432, %434, %cst_138 {dimension_numbers = #tpu.dot_dimension_numbers<[1], [1], [0], [0], [0, 0, 1, 0], [], []>} : vector<8x128xf32>, vector<8x128xf32>, vector<8x8xf32> -> vector<8x8xf32>
    %436 = tpu.concatenate %430, %435 in 1 : vector<8x8xf32>, vector<8x8xf32> -> vector<8x16xf32>
    %c0_139 = arith.constant 0 : index
    %c0_140 = arith.constant 0 : index
    %c0_141 = arith.constant 0 : index
    %437 = vector.load %arg20[%c0_139, %c0_140, %c0_141] : memref<1x8x16xf32, #tpu.memory_space<vmem>>, vector<1x8x16xf32>
    %438 = vector.shape_cast %437 : vector<1x8x16xf32> to vector<8x16xf32>
    %439 = vector.shape_cast %436 : vector<8x16xf32> to vector<1x8x16xf32>
    tpu.vector_store %arg20[%c0_139, %c0_140, %c0_141], %439 {strides = array<i32>} : memref<1x8x16xf32, #tpu.memory_space<vmem>>, vector<1x8x16xf32>,
    return
  }
  func.func @transform_0(%arg0: i32) -> (i32, i32, i32) {
    %c0_i32 = arith.constant 0 : i32
    %c0_i32_0 = arith.constant 0 : i32
    %c0_i32_1 = arith.constant 0 : i32
    return %arg0, %c0_i32, %c0_i32_0 : i32, i32, i32
  }
  func.func @transform_1(%arg0: i32) -> (i32, i32, i32) {
    %c0_i32 = arith.constant 0 : i32
    %c0_i32_0 = arith.constant 0 : i32
    %c0_i32_1 = arith.constant 0 : i32
    return %arg0, %c0_i32, %c0_i32_0 : i32, i32, i32
  }
  func.func @transform_2(%arg0: i32) -> (i32, i32, i32) {
    %c0_i32 = arith.constant 0 : i32
    %c0_i32_0 = arith.constant 0 : i32
    %c0_i32_1 = arith.constant 0 : i32
    return %arg0, %c0_i32, %c0_i32_0 : i32, i32, i32
  }
  func.func @transform_3(%arg0: i32) -> (i32, i32) {
    %c0_i32 = arith.constant 0 : i32
    %c0_i32_0 = arith.constant 0 : i32
    %c0_i32_1 = arith.constant 0 : i32
    return %c0_i32, %c0_i32_0 : i32, i32
  }
  func.func @transform_4(%arg0: i32) -> (i32, i32) {
    %c0_i32 = arith.constant 0 : i32
    %c0_i32_0 = arith.constant 0 : i32
    %c0_i32_1 = arith.constant 0 : i32
    return %c0_i32, %c0_i32_0 : i32, i32
  }
  func.func @transform_5(%arg0: i32) -> (i32, i32) {
    %c0_i32 = arith.constant 0 : i32
    %c0_i32_0 = arith.constant 0 : i32
    %c0_i32_1 = arith.constant 0 : i32
    return %c0_i32, %c0_i32_0 : i32, i32
  }
  func.func @transform_6(%arg0: i32) -> (i32, i32) {
    %c0_i32 = arith.constant 0 : i32
    %c0_i32_0 = arith.constant 0 : i32
    %c0_i32_1 = arith.constant 0 : i32
    return %c0_i32, %c0_i32_0 : i32, i32
  }
  func.func @transform_7(%arg0: i32) -> (i32, i32) {
    %c0_i32 = arith.constant 0 : i32
    %c0_i32_0 = arith.constant 0 : i32
    %c0_i32_1 = arith.constant 0 : i32
    return %c0_i32, %c0_i32_0 : i32, i32
  }
  func.func @transform_8(%arg0: i32) -> (i32, i32) {
    %c0_i32 = arith.constant 0 : i32
    %c0_i32_0 = arith.constant 0 : i32
    %c0_i32_1 = arith.constant 0 : i32
    return %c0_i32, %c0_i32_0 : i32, i32
  }
  func.func @transform_9(%arg0: i32) -> (i32, i32) {
    %c0_i32 = arith.constant 0 : i32
    %c0_i32_0 = arith.constant 0 : i32
    %c0_i32_1 = arith.constant 0 : i32
    return %c0_i32, %c0_i32_0 : i32, i32
  }
  func.func @transform_10(%arg0: i32) -> (i32, i32) {
    %c0_i32 = arith.constant 0 : i32
    %c0_i32_0 = arith.constant 0 : i32
    %c0_i32_1 = arith.constant 0 : i32
    return %c0_i32, %c0_i32_0 : i32, i32
  }
  func.func @transform_11(%arg0: i32) -> (i32, i32) {
    %c0_i32 = arith.constant 0 : i32
    %c0_i32_0 = arith.constant 0 : i32
    %c0_i32_1 = arith.constant 0 : i32
    return %c0_i32, %c0_i32_0 : i32, i32
  }
  func.func @transform_12(%arg0: i32) -> (i32, i32) {
    %c0_i32 = arith.constant 0 : i32
    %c0_i32_0 = arith.constant 0 : i32
    %c0_i32_1 = arith.constant 0 : i32
    return %c0_i32, %c0_i32_0 : i32, i32
  }
  func.func @transform_13(%arg0: i32) -> (i32, i32) {
    %c0_i32 = arith.constant 0 : i32
    %c0_i32_0 = arith.constant 0 : i32
    %c0_i32_1 = arith.constant 0 : i32
    return %c0_i32, %c0_i32_0 : i32, i32
  }
  func.func @transform_14(%arg0: i32) -> (i32, i32) {
    %c0_i32 = arith.constant 0 : i32
    %c0_i32_0 = arith.constant 0 : i32
    %c0_i32_1 = arith.constant 0 : i32
    return %c0_i32, %c0_i32_0 : i32, i32
  }
  func.func @transform_15(%arg0: i32) -> (i32, i32) {
    %c0_i32 = arith.constant 0 : i32
    %c0_i32_0 = arith.constant 0 : i32
    %c0_i32_1 = arith.constant 0 : i32
    return %c0_i32, %c0_i32_0 : i32, i32
  }
  func.func @transform_16(%arg0: i32) -> (i32, i32) {
    %c0_i32 = arith.constant 0 : i32
    %c0_i32_0 = arith.constant 0 : i32
    %c0_i32_1 = arith.constant 0 : i32
    return %c0_i32, %c0_i32_0 : i32, i32
  }
  func.func @transform_17(%arg0: i32) -> (i32, i32) {
    %c0_i32 = arith.constant 0 : i32
    %c0_i32_0 = arith.constant 0 : i32
    %c0_i32_1 = arith.constant 0 : i32
    return %c0_i32, %c0_i32_0 : i32, i32
  }
  func.func @transform_18(%arg0: i32) -> (i32, i32) {
    %c0_i32 = arith.constant 0 : i32
    %c0_i32_0 = arith.constant 0 : i32
    %c0_i32_1 = arith.constant 0 : i32
    return %c0_i32, %c0_i32_0 : i32, i32
  }
  func.func @transform_19(%arg0: i32) -> (i32, i32, i32) {
    %c0_i32 = arith.constant 0 : i32
    %c0_i32_0 = arith.constant 0 : i32
    %c0_i32_1 = arith.constant 0 : i32
    return %arg0, %c0_i32, %c0_i32_0 : i32, i32, i32
  }
}

</mosaic_0001>

<llo_original>
// kernel: decoder2_forward.1
$region0: #{decoder2_forward.1}
  #allocation0 [shape = 'u32[]', space=smem, size = 0x4, offset = 0x4, fixed_abs, tag = 'smem constant byte address 0x4 - core index']
  #allocation1 [shape = 'u32[144,128]{1,0:T(1,128)}', space=vmem, size = 0x12000, scoped, tag = 'internal scratch']
  %s0 = inlined_call_operand.vmem [shape: f32[2,8,16], index: 0, kind: input, shape index: {}]
  %s1 = inlined_call_operand.vmem [shape: f32[2,1,16], index: 1, kind: input, shape index: {}]
  %s2 = inlined_call_operand.vmem [shape: f32[2,1,16], index: 2, kind: input, shape index: {}]
  %s3 = inlined_call_operand.hbm [shape: f32[16,1536], index: 3, kind: input, shape index: {}]
  %s4 = inlined_call_operand.hbm [shape: f32[1,1536], index: 4, kind: input, shape index: {}]
  %s5 = inlined_call_operand.hbm [shape: f32[16,1536], index: 5, kind: input, shape index: {}]
  %s6 = inlined_call_operand.hbm [shape: f32[1,1536], index: 6, kind: input, shape index: {}]
  %s7 = inlined_call_operand.hbm [shape: f32[16,16], index: 7, kind: input, shape index: {}]
  %s8 = inlined_call_operand.hbm [shape: f32[16,32], index: 8, kind: input, shape index: {}]
  %s9 = inlined_call_operand.hbm [shape: f32[32,32], index: 9, kind: input, shape index: {}]
  %s10 = inlined_call_operand.hbm [shape: f32[32,64], index: 10, kind: input, shape index: {}]
  %s11 = inlined_call_operand.hbm [shape: f32[64,64], index: 11, kind: input, shape index: {}]
  %s12 = inlined_call_operand.hbm [shape: f32[64,128], index: 12, kind: input, shape index: {}]
  %s13 = inlined_call_operand.vmem [shape: f32[16,16], index: 13, kind: input, shape index: {}]
  %s14 = inlined_call_operand.hbm [shape: f32[16,32], index: 14, kind: input, shape index: {}]
  %s15 = inlined_call_operand.hbm [shape: f32[32,32], index: 15, kind: input, shape index: {}]
  %s16 = inlined_call_operand.hbm [shape: f32[32,64], index: 16, kind: input, shape index: {}]
  %s17 = inlined_call_operand.hbm [shape: f32[64,64], index: 17, kind: input, shape index: {}]
  %s18 = inlined_call_operand.hbm [shape: f32[64,128], index: 18, kind: input, shape index: {}]
  %s19 = inlined_call_operand.vmem [shape: f32[1,8,16], index: 19, kind: output, shape index: {}]
  %s20 = sld [smem:[#allocation0]]
  $region146: #{decoder2_forward.1} parent=0
    _
  %s22 = ssub.s32 1, %s20
  %s23 = scalar_select 0, %s22, %s20
  $region1: #{decoder2_forward.1} parent=0
    #allocation2 [shape = 'u8[98304]{0}', space=vmem, size = 0x18000, scoped, tag = 'input window, operand 3, single buffered']
    #allocation3 [shape = 's32[1]{0}', space=sflag, size = 0x4, scoped, tag = 'scoped memory for decoder2_forward.1']
    #allocation4 [shape = 'u8[6144]{0}', space=vmem, size = 0x1800, scoped, tag = 'input window, operand 4, single buffered']
    #allocation5 [shape = 's32[1]{0}', space=sflag, size = 0x4, scoped, tag = 'scoped memory for decoder2_forward.1']
    #allocation6 [shape = 'u8[98304]{0}', space=vmem, size = 0x18000, scoped, tag = 'input window, operand 5, single buffered']
    #allocation7 [shape = 'u8[6144]{0}', space=vmem, size = 0x1800, scoped, tag = 'input window, operand 6, single buffered']
    #allocation8 [shape = 's32[1]{0}', space=sflag, size = 0x4, scoped, tag = 'scoped memory for decoder2_forward.1']
    #allocation9 [shape = 'u8[8192]{0}', space=vmem, size = 0x2000, scoped, tag = 'input window, operand 7, single buffered']
    #allocation10 [shape = 'u8[8192]{0}', space=vmem, size = 0x2000, scoped, tag = 'input window, operand 8, single buffered']
    #allocation11 [shape = 's32[1]{0}', space=sflag, size = 0x4, scoped, tag = 'scoped memory for decoder2_forward.1']
    #allocation12 [shape = 'u8[16384]{0}', space=vmem, size = 0x4000, scoped, tag = 'input window, operand 9, single buffered']
    #allocation13 [shape = 'u8[16384]{0}', space=vmem, size = 0x4000, scoped, tag = 'input window, operand 10, single buffered']
    #allocation14 [shape = 's32[1]{0}', space=sflag, size = 0x4, scoped, tag = 'scoped memory for decoder2_forward.1']
    #allocation15 [shape = 'u8[32768]{0}', space=vmem, size = 0x8000, scoped, tag = 'input window, operand 11, single buffered']
    #allocation16 [shape = 'u8[32768]{0}', space=vmem, size = 0x8000, scoped, tag = 'input window, operand 12, single buffered']
    #allocation17 [shape = 's32[1]{0}', space=sflag, size = 0x4, scoped, tag = 'scoped memory for decoder2_forward.1']
    #allocation18 [shape = 'u8[8192]{0}', space=vmem, size = 0x2000, scoped, tag = 'input window, operand 14, single buffered']
    #allocation19 [shape = 'u8[16384]{0}', space=vmem, size = 0x4000, scoped, tag = 'input window, operand 15, single buffered']
    #allocation20 [shape = 's32[1]{0}', space=sflag, size = 0x4, scoped, tag = 'scoped memory for decoder2_forward.1']
    #allocation21 [shape = 'u8[16384]{0}', space=vmem, size = 0x4000, scoped, tag = 'input window, operand 16, single buffered']
    #allocation22 [shape = 'u8[32768]{0}', space=vmem, size = 0x8000, scoped, tag = 'input window, operand 17, single buffered']
    #allocation23 [shape = 's32[1]{0}', space=sflag, size = 0x4, scoped, tag = 'scoped memory for decoder2_forward.1']
    #allocation24 [shape = 'u8[32768]{0}', space=vmem, size = 0x8000, scoped, tag = 'input window, operand 18, single buffered']
    %24 = vsyncpa [#allocation3], 0
    %25 = vsyncpa [#allocation5], 0
    %26 = vsyncpa [#allocation8], 0
    %27 = vsyncpa [#allocation11], 0
    %28 = vsyncpa [#allocation14], 0
    %29 = vsyncpa [#allocation17], 0
    %30 = vsyncpa [#allocation20], 0
    %31 = vsyncpa [#allocation23], 0
    // Predicated region
    $region2: #{decoder2_forward.1} parent=1 // pred_check
      _
    $region3: #{decoder2_forward.1} parent=1 // pred_check_branch
      %33 = sbr.rel (0) target = $region5
    $region4: #{decoder2_forward.1} parent=1 // pred_region
      _
    $region5: #{decoder2_forward.1} parent=1 // pred_fallthru
      _
    // Predicated region
    $region6: #{decoder2_forward.1} parent=1 // pred_check
      _
    $region7: #{decoder2_forward.1} parent=1 // pred_check_branch
      %35 = sbr.rel (0) target = $region9
    $region8: #{decoder2_forward.1} parent=1 // pred_region
      _
    $region9: #{decoder2_forward.1} parent=1 // pred_fallthru
      _
    // Predicated region
    $region10: #{decoder2_forward.1} parent=1 // pred_check
      _
    $region11: #{decoder2_forward.1} parent=1 // pred_check_branch
      %37 = sbr.rel (0) target = $region13
    $region12: #{decoder2_forward.1} parent=1 // pred_region
      _
    $region13: #{decoder2_forward.1} parent=1 // pred_fallthru
      _
    // Predicated region
    $region14: #{decoder2_forward.1} parent=1 // pred_check
      _
    $region15: #{decoder2_forward.1} parent=1 // pred_check_branch
      %39 = sbr.rel (0) target = $region17
    $region16: #{decoder2_forward.1} parent=1 // pred_region
      %s41 = ssub.s32 3072, 3072
      %42 = vsyncadd [#allocation3], %s41
      %s43 = sshll.u32 [#allocation2], 4
      %s44 = int_to_ptr.vmem [resolvable:$true] %s43
      %49 = dma.hbm_to_vmem [thread:$0]  %s3, 3072, %s44, [#allocation3], 1536, 1536, 96
    $region17: #{decoder2_forward.1} parent=1 // pred_fallthru
      _
    // Predicated region
    $region18: #{decoder2_forward.1} parent=1 // pred_check
      _
    $region19: #{decoder2_forward.1} parent=1 // pred_check_branch
      %51 = sbr.rel (0) target = $region21
    $region20: #{decoder2_forward.1} parent=1 // pred_region
      %s53 = ssub.s32 192, 192
      %54 = vsyncadd [#allocation5], %s53
      %s56 = sshll.u32 [#allocation4], 4
      %s57 = int_to_ptr.vmem [resolvable:$true] %s56
      %59 = dma.hbm_to_vmem [thread:$0]  %s4, 192, %s57, [#allocation5]
    $region21: #{decoder2_forward.1} parent=1 // pred_fallthru
      _
    // Predicated region
    $region22: #{decoder2_forward.1} parent=1 // pred_check
      _
    $region23: #{decoder2_forward.1} parent=1 // pred_check_branch
      %61 = sbr.rel (0) target = $region25
    $region24: #{decoder2_forward.1} parent=1 // pred_region
      %s63 = ssub.s32 3072, 3072
      %64 = vsyncadd [#allocation5], %s63
      %s65 = sshll.u32 [#allocation6], 4
      %s66 = int_to_ptr.vmem [resolvable:$true] %s65
      %71 = dma.hbm_to_vmem [thread:$0]  %s5, 3072, %s66, [#allocation5], 1536, 1536, 96
    $region25: #{decoder2_forward.1} parent=1 // pred_fallthru
      _
    // Predicated region
    $region26: #{decoder2_forward.1} parent=1 // pred_check
      _
    $region27: #{decoder2_forward.1} parent=1 // pred_check_branch
      %73 = sbr.rel (0) target = $region29
    $region28: #{decoder2_forward.1} parent=1 // pred_region
      %s75 = ssub.s32 192, 192
      %76 = vsyncadd [#allocation8], %s75
      %s78 = sshll.u32 [#allocation7], 4
      %s79 = int_to_ptr.vmem [resolvable:$true] %s78
      %81 = dma.hbm_to_vmem [thread:$0]  %s6, 192, %s79, [#allocation8]
    $region29: #{decoder2_forward.1} parent=1 // pred_fallthru
      _
    // Predicated region
    $region30: #{decoder2_forward.1} parent=1 // pred_check
      _
    $region31: #{decoder2_forward.1} parent=1 // pred_check_branch
      %83 = sbr.rel (0) target = $region33
    $region32: #{decoder2_forward.1} parent=1 // pred_region
      %s85 = ssub.s32 256, 256
      %86 = vsyncadd [#allocation8], %s85
      %s87 = sshll.u32 [#allocation9], 4
      %s88 = int_to_ptr.vmem [resolvable:$true] %s87
      %93 = dma.hbm_to_vmem [thread:$0]  %s7, 256, %s88, [#allocation8], 128, 128, 8
    $region33: #{decoder2_forward.1} parent=1 // pred_fallthru
      _
    // Predicated region
    $region34: #{decoder2_forward.1} parent=1 // pred_check
      _
    $region35: #{decoder2_forward.1} parent=1 // pred_check_branch
      %95 = sbr.rel (0) target = $region37
    $region36: #{decoder2_forward.1} parent=1 // pred_region
      %s97 = ssub.s32 256, 256
      %98 = vsyncadd [#allocation11], %s97
      %s99 = sshll.u32 [#allocation10], 4
      %s100 = int_to_ptr.vmem [resolvable:$true] %s99
      %105 = dma.hbm_to_vmem [thread:$0]  %s8, 256, %s100, [#allocation11], 128, 128, 8
    $region37: #{decoder2_forward.1} parent=1 // pred_fallthru
      _
    // Predicated region
    $region38: #{decoder2_forward.1} parent=1 // pred_check
      _
    $region39: #{decoder2_forward.1} parent=1 // pred_check_branch
      %107 = sbr.rel (0) target = $region41
    $region40: #{decoder2_forward.1} parent=1 // pred_region
      %s109 = ssub.s32 512, 512
      %110 = vsyncadd [#allocation11], %s109
      %s111 = sshll.u32 [#allocation12], 4
      %s112 = int_to_ptr.vmem [resolvable:$true] %s111
      %117 = dma.hbm_to_vmem [thread:$0]  %s9, 512, %s112, [#allocation11], 128, 128, 8
    $region41: #{decoder2_forward.1} parent=1 // pred_fallthru
      _
    // Predicated region
    $region42: #{decoder2_forward.1} parent=1 // pred_check
      _
    $region43: #{decoder2_forward.1} parent=1 // pred_check_branch
      %119 = sbr.rel (0) target = $region45
    $region44: #{decoder2_forward.1} parent=1 // pred_region
      %s121 = ssub.s32 512, 512
      %122 = vsyncadd [#allocation14], %s121
      %s123 = sshll.u32 [#allocation13], 4
      %s124 = int_to_ptr.vmem [resolvable:$true] %s123
      %129 = dma.hbm_to_vmem [thread:$0]  %s10, 512, %s124, [#allocation14], 128, 128, 8
    $region45: #{decoder2_forward.1} parent=1 // pred_fallthru
      _
    // Predicated region
    $region46: #{decoder2_forward.1} parent=1 // pred_check
      _
    $region47: #{decoder2_forward.1} parent=1 // pred_check_branch
      %131 = sbr.rel (0) target = $region49
    $region48: #{decoder2_forward.1} parent=1 // pred_region
      %s133 = ssub.s32 1024, 1024
      %134 = vsyncadd [#allocation14], %s133
      %s135 = sshll.u32 [#allocation15], 4
      %s136 = int_to_ptr.vmem [resolvable:$true] %s135
      %141 = dma.hbm_to_vmem [thread:$0]  %s11, 1024, %s136, [#allocation14], 128, 128, 8
    $region49: #{decoder2_forward.1} parent=1 // pred_fallthru
      _
    // Predicated region
    $region50: #{decoder2_forward.1} parent=1 // pred_check
      _
    $region51: #{decoder2_forward.1} parent=1 // pred_check_branch
      %143 = sbr.rel (0) target = $region53
    $region52: #{decoder2_forward.1} parent=1 // pred_region
      %s145 = ssub.s32 1024, 1024
      %146 = vsyncadd [#allocation17], %s145
      %s147 = sshll.u32 [#allocation16], 4
      %s148 = int_to_ptr.vmem [resolvable:$true] %s147
      %153 = dma.hbm_to_vmem [thread:$0]  %s12, 1024, %s148, [#allocation17], 128, 128, 8
    $region53: #{decoder2_forward.1} parent=1 // pred_fallthru
      _
    // Predicated region
    $region54: #{decoder2_forward.1} parent=1 // pred_check
      _
    $region55: #{decoder2_forward.1} parent=1 // pred_check_branch
      %155 = sbr.rel (0) target = $region57
    $region56: #{decoder2_forward.1} parent=1 // pred_region
      _
    $region57: #{decoder2_forward.1} parent=1 // pred_fallthru
      _
    // Predicated region
    $region58: #{decoder2_forward.1} parent=1 // pred_check
      _
    $region59: #{decoder2_forward.1} parent=1 // pred_check_branch
      %157 = sbr.rel (0) target = $region61
    $region60: #{decoder2_forward.1} parent=1 // pred_region
      %s159 = ssub.s32 256, 256
      %160 = vsyncadd [#allocation17], %s159
      %s161 = sshll.u32 [#allocation18], 4
      %s162 = int_to_ptr.vmem [resolvable:$true] %s161
      %167 = dma.hbm_to_vmem [thread:$0]  %s14, 256, %s162, [#allocation17], 128, 128, 8
    $region61: #{decoder2_forward.1} parent=1 // pred_fallthru
      _
    // Predicated region
    $region62: #{decoder2_forward.1} parent=1 // pred_check
      _
    $region63: #{decoder2_forward.1} parent=1 // pred_check_branch
      %169 = sbr.rel (0) target = $region65
    $region64: #{decoder2_forward.1} parent=1 // pred_region
      %s171 = ssub.s32 512, 512
      %172 = vsyncadd [#allocation20], %s171
      %s173 = sshll.u32 [#allocation19], 4
      %s174 = int_to_ptr.vmem [resolvable:$true] %s173
      %179 = dma.hbm_to_vmem [thread:$0]  %s15, 512, %s174, [#allocation20], 128, 128, 8
    $region65: #{decoder2_forward.1} parent=1 // pred_fallthru
      _
    // Predicated region
    $region66: #{decoder2_forward.1} parent=1 // pred_check
      _
    $region67: #{decoder2_forward.1} parent=1 // pred_check_branch
      %181 = sbr.rel (0) target = $region69
    $region68: #{decoder2_forward.1} parent=1 // pred_region
      %s183 = ssub.s32 512, 512
      %184 = vsyncadd [#allocation20], %s183
      %s185 = sshll.u32 [#allocation21], 4
      %s186 = int_to_ptr.vmem [resolvable:$true] %s185
      %191 = dma.hbm_to_vmem [thread:$0]  %s16, 512, %s186, [#allocation20], 128, 128, 8
    $region69: #{decoder2_forward.1} parent=1 // pred_fallthru
      _
    // Predicated region
    $region70: #{decoder2_forward.1} parent=1 // pred_check
      _
    $region71: #{decoder2_forward.1} parent=1 // pred_check_branch
      %193 = sbr.rel (0) target = $region73
    $region72: #{decoder2_forward.1} parent=1 // pred_region
      %s195 = ssub.s32 1024, 1024
      %196 = vsyncadd [#allocation23], %s195
      %s197 = sshll.u32 [#allocation22], 4
      %s198 = int_to_ptr.vmem [resolvable:$true] %s197
      %203 = dma.hbm_to_vmem [thread:$0]  %s17, 1024, %s198, [#allocation23], 128, 128, 8
    $region73: #{decoder2_forward.1} parent=1 // pred_fallthru
      _
    // Predicated region
    $region74: #{decoder2_forward.1} parent=1 // pred_check
      _
    $region75: #{decoder2_forward.1} parent=1 // pred_check_branch
      %205 = sbr.rel (0) target = $region77
    $region76: #{decoder2_forward.1} parent=1 // pred_region
      %s207 = ssub.s32 1024, 1024
      %208 = vsyncadd [#allocation23], %s207
      %s209 = sshll.u32 [#allocation24], 4
      %s210 = int_to_ptr.vmem [resolvable:$true] %s209
      %215 = dma.hbm_to_vmem [thread:$0]  %s18, 1024, %s210, [#allocation23], 128, 128, 8
    $region77: #{decoder2_forward.1} parent=1 // pred_fallthru
      _
    // Predicated region
    $region78: #{decoder2_forward.1} parent=1 // pred_check
      _
    $region79: #{decoder2_forward.1} parent=1 // pred_check_branch
      %217 = sbr.rel (0) target = $region81
    $region80: #{decoder2_forward.1} parent=1 // pred_region
      %218 = dma.done [#allocation3], 3072
    $region81: #{decoder2_forward.1} parent=1 // pred_fallthru
      _
    // Predicated region
    $region82: #{decoder2_forward.1} parent=1 // pred_check
      _
    $region83: #{decoder2_forward.1} parent=1 // pred_check_branch
      %220 = sbr.rel (0) target = $region85
    $region84: #{decoder2_forward.1} parent=1 // pred_region
      %221 = dma.done [#allocation5], 192
    $region85: #{decoder2_forward.1} parent=1 // pred_fallthru
      _
    // Predicated region
    $region86: #{decoder2_forward.1} parent=1 // pred_check
      _
    $region87: #{decoder2_forward.1} parent=1 // pred_check_branch
      %223 = sbr.rel (0) target = $region89
    $region88: #{decoder2_forward.1} parent=1 // pred_region
      %224 = dma.done [#allocation5], 3072
    $region89: #{decoder2_forward.1} parent=1 // pred_fallthru
      _
    // Predicated region
    $region90: #{decoder2_forward.1} parent=1 // pred_check
      _
    $region91: #{decoder2_forward.1} parent=1 // pred_check_branch
      %226 = sbr.rel (0) target = $region93
    $region92: #{decoder2_forward.1} parent=1 // pred_region
      %227 = dma.done [#allocation8], 192
    $region93: #{decoder2_forward.1} parent=1 // pred_fallthru
      _
    // Predicated region
    $region94: #{decoder2_forward.1} parent=1 // pred_check
      _
    $region95: #{decoder2_forward.1} parent=1 // pred_check_branch
      %229 = sbr.rel (0) target = $region97
    $region96: #{decoder2_forward.1} parent=1 // pred_region
      %230 = dma.done [#allocation8], 256
    $region97: #{decoder2_forward.1} parent=1 // pred_fallthru
      _
    // Predicated region
    $region98: #{decoder2_forward.1} parent=1 // pred_check
      _
    $region99: #{decoder2_forward.1} parent=1 // pred_check_branch
      %232 = sbr.rel (0) target = $region101
    $region100: #{decoder2_forward.1} parent=1 // pred_region
      %233 = dma.done [#allocation11], 256
    $region101: #{decoder2_forward.1} parent=1 // pred_fallthru
      _
    // Predicated region
    $region102: #{decoder2_forward.1} parent=1 // pred_check
      _
    $region103: #{decoder2_forward.1} parent=1 // pred_check_branch
      %235 = sbr.rel (0) target = $region105
    $region104: #{decoder2_forward.1} parent=1 // pred_region
      %236 = dma.done [#allocation11], 512
    $region105: #{decoder2_forward.1} parent=1 // pred_fallthru
      _
    // Predicated region
    $region106: #{decoder2_forward.1} parent=1 // pred_check
      _
    $region107: #{decoder2_forward.1} parent=1 // pred_check_branch
      %238 = sbr.rel (0) target = $region109
    $region108: #{decoder2_forward.1} parent=1 // pred_region
      %239 = dma.done [#allocation14], 512
    $region109: #{decoder2_forward.1} parent=1 // pred_fallthru
      _
    // Predicated region
    $region110: #{decoder2_forward.1} parent=1 // pred_check
      _
    $region111: #{decoder2_forward.1} parent=1 // pred_check_branch
      %241 = sbr.rel (0) target = $region113
    $region112: #{decoder2_forward.1} parent=1 // pred_region
      %242 = dma.done [#allocation14], 1024
    $region113: #{decoder2_forward.1} parent=1 // pred_fallthru
      _
    // Predicated region
    $region114: #{decoder2_forward.1} parent=1 // pred_check
      _
    $region115: #{decoder2_forward.1} parent=1 // pred_check_branch
      %244 = sbr.rel (0) target = $region117
    $region116: #{decoder2_forward.1} parent=1 // pred_region
      %245 = dma.done [#allocation17], 1024
    $region117: #{decoder2_forward.1} parent=1 // pred_fallthru
      _
    // Predicated region
    $region118: #{decoder2_forward.1} parent=1 // pred_check
      _
    $region119: #{decoder2_forward.1} parent=1 // pred_check_branch
      %247 = sbr.rel (0) target = $region121
    $region120: #{decoder2_forward.1} parent=1 // pred_region
      %248 = dma.done [#allocation17], 256
    $region121: #{decoder2_forward.1} parent=1 // pred_fallthru
      _
    // Predicated region
    $region122: #{decoder2_forward.1} parent=1 // pred_check
      _
    $region123: #{decoder2_forward.1} parent=1 // pred_check_branch
      %250 = sbr.rel (0) target = $region125
    $region124: #{decoder2_forward.1} parent=1 // pred_region
      %251 = dma.done [#allocation20], 512
    $region125: #{decoder2_forward.1} parent=1 // pred_fallthru
      _
    // Predicated region
    $region126: #{decoder2_forward.1} parent=1 // pred_check
      _
    $region127: #{decoder2_forward.1} parent=1 // pred_check_branch
      %253 = sbr.rel (0) target = $region129
    $region128: #{decoder2_forward.1} parent=1 // pred_region
      %254 = dma.done [#allocation20], 512
    $region129: #{decoder2_forward.1} parent=1 // pred_fallthru
      _
    // Predicated region
    $region130: #{decoder2_forward.1} parent=1 // pred_check
      _
    $region131: #{decoder2_forward.1} parent=1 // pred_check_branch
      %256 = sbr.rel (0) target = $region133
    $region132: #{decoder2_forward.1} parent=1 // pred_region
      %257 = dma.done [#allocation23], 1024
    $region133: #{decoder2_forward.1} parent=1 // pred_fallthru
      _
    // Predicated region
    $region134: #{decoder2_forward.1} parent=1 // pred_check
      _
    $region135: #{decoder2_forward.1} parent=1 // pred_check_branch
      %259 = sbr.rel (0) target = $region137
    $region136: #{decoder2_forward.1} parent=1 // pred_region
      %260 = dma.done [#allocation23], 1024
    $region137: #{decoder2_forward.1} parent=1 // pred_fallthru
      _
    %v261 = vld [vmem:[%s0] sm:$0xff]
    %v262 = vld [vmem:[%s0 + $0x8] sm:$0xff]
    %v263 = vld [vmem:[%s1] sm:$0x1]
    %v264 = vld [vmem:[%s1 + $0x1] sm:$0x1]
    %v265 = vld [vmem:[#allocation2] sm:$0xff]
    %v266 = vld [vmem:[#allocation2 + $0x8] sm:$0xff]
    %v267 = vld [vmem:[#allocation2 + $0x10] sm:$0xff]
    %v268 = vld [vmem:[#allocation2 + $0x18] sm:$0xff]
    %v269 = vld [vmem:[#allocation2 + $0x20] sm:$0xff]
    %v270 = vld [vmem:[#allocation2 + $0x28] sm:$0xff]
    %v271 = vld [vmem:[#allocation2 + $0x30] sm:$0xff]
    %v272 = vld [vmem:[#allocation2 + $0x38] sm:$0xff]
    %v273 = vld [vmem:[#allocation2 + $0x40] sm:$0xff]
    %v274 = vld [vmem:[#allocation2 + $0x48] sm:$0xff]
    %v275 = vld [vmem:[#allocation2 + $0x50] sm:$0xff]
    %v276 = vld [vmem:[#allocation2 + $0x58] sm:$0xff]
    %v277 = vld [vmem:[#allocation2 + $0x60] sm:$0xff]
    %v278 = vld [vmem:[#allocation2 + $0x68] sm:$0xff]
    %v279 = vld [vmem:[#allocation2 + $0x70] sm:$0xff]
    %v280 = vld [vmem:[#allocation2 + $0x78] sm:$0xff]
    %v281 = vld [vmem:[#allocation2 + $0x80] sm:$0xff]
    %v282 = vld [vmem:[#allocation2 + $0x88] sm:$0xff]
    %v283 = vld [vmem:[#allocation2 + $0x90] sm:$0xff]
    %v284 = vld [vmem:[#allocation2 + $0x98] sm:$0xff]
    %v285 = vld [vmem:[#allocation2 + $0xa0] sm:$0xff]
    %v286 = vld [vmem:[#allocation2 + $0xa8] sm:$0xff]
    %v287 = vld [vmem:[#allocation2 + $0xb0] sm:$0xff]
    %v288 = vld [vmem:[#allocation2 + $0xb8] sm:$0xff]
    %v289 = vld [vmem:[#allocation4] sm:$0xff]
    %v290 = vld [vmem:[#allocation4 + $0x8] sm:$0xf]
    %v293 = vlaneseq
    %v294 = vshrl.u32 %v293, 7
    %v295 = vsub.s32 0, %v294
    %v296 = vrot.slane %v289, %v295
    %v297 = vlaneseq
    %v298 = vshrl.u32 %v297, 7
    %v299 = vsub.s32 1, %v298
    %v300 = vrot.slane %v289, %v299
    %v301 = vlaneseq
    %v302 = vshrl.u32 %v301, 7
    %v303 = vsub.s32 2, %v302
    %v304 = vrot.slane %v289, %v303
    %v305 = vlaneseq
    %v306 = vshrl.u32 %v305, 7
    %v307 = vsub.s32 3, %v306
    %v308 = vrot.slane %v289, %v307
    %v309 = vlaneseq
    %v310 = vshrl.u32 %v309, 7
    %v311 = vsub.s32 4, %v310
    %v312 = vrot.slane %v289, %v311
    %v313 = vlaneseq
    %v314 = vshrl.u32 %v313, 7
    %v315 = vsub.s32 5, %v314
    %v316 = vrot.slane %v289, %v315
    %v317 = vlaneseq
    %v318 = vshrl.u32 %v317, 7
    %v319 = vsub.s32 6, %v318
    %v320 = vrot.slane %v289, %v319
    %v321 = vlaneseq
    %v322 = vshrl.u32 %v321, 7
    %v323 = vsub.s32 7, %v322
    %v324 = vrot.slane %v289, %v323
    %v325 = vlaneseq
    %v326 = vshrl.u32 %v325, 7
    %v327 = vsub.s32 0, %v326
    %v328 = vrot.slane %v290, %v327
    %v329 = vlaneseq
    %v330 = vshrl.u32 %v329, 7
    %v331 = vsub.s32 1, %v330
    %v332 = vrot.slane %v290, %v331
    %v333 = vlaneseq
    %v334 = vshrl.u32 %v333, 7
    %v335 = vsub.s32 2, %v334
    %v336 = vrot.slane %v290, %v335
    %v337 = vlaneseq
    %v338 = vshrl.u32 %v337, 7
    %v339 = vsub.s32 3, %v338
    %v340 = vrot.slane %v290, %v339
    %v355 = vcombine.low %v263, %v264
    %v357 = vunpack.c.l.s4 1966171168
    %v358 = vunpack.c.0.s8 %v357
    %v359 = vlaneseq
    %v360 = vshrl.u32 %v359, 7
    %v361 = vsub.s32 %v358, %v360
    %v362 = vrot.slane %v355, %v361
    %v364 = vunpack.c.l.s4 1966171168
    %v365 = vunpack.c.0.s8 %v364
    %v366 = vlaneseq
    %v367 = vshrl.u32 %v366, 7
    %v368 = vsub.s32 %v365, %v367
    %v369 = vrot.slane %v362, %v368
    %vm370 = vcmask 130048
    %v371 = vsel %vm370, %v369, 0
    %373 = vmatprep.subr.mxu0 0.0
    %374 = vmatpush1.msra.mxu0 0.0
    %375 = vmatprep.subr.mxu0 0.0
    %376 = vmatpush1.msra.mxu0 0.0
    %377 = vmatprep.subr.mxu0 0.0
    %378 = vmatpush1.msra.mxu0 0.0
    %379 = vmatprep.subr.mxu0 0.0
    %380 = vmatpush1.msra.mxu0 0.0
    %381 = vmatprep.subr.mxu0 0.0
    %382 = vmatpush1.msra.mxu0 0.0
    %383 = vmatprep.subr.mxu0 0.0
    %384 = vmatpush1.msra.mxu0 0.0
    %385 = vmatprep.subr.mxu0 0.0
    %386 = vmatpush1.msra.mxu0 0.0
    %387 = vmatprep.subr.mxu0 0.0
    %388 = vmatpush1.msra.mxu0 0.0
    %389 = vmatprep.subr.mxu0 0.0
    %390 = vmatpush1.msra.mxu0 0.0
    %391 = vmatprep.subr.mxu0 0.0
    %392 = vmatpush1.msra.mxu0 0.0
    %393 = vmatprep.subr.mxu0 0.0
    %394 = vmatpush1.msra.mxu0 0.0
    %395 = vmatprep.subr.mxu0 0.0
    %396 = vmatpush1.msra.mxu0 0.0
    %397 = vmatprep.subr.mxu0 0.0
    %398 = vmatpush1.msra.mxu0 0.0
    %399 = vmatprep.subr.mxu0 0.0
    %400 = vmatpush1.msra.mxu0 0.0
    %401 = vmatprep.subr.mxu0 %v278
    %402 = vmatpush1.msra.mxu0 %v277
    %403 = vmatprep.subr.mxu0 %v266
    %404 = vmatpush1.msra.mxu0 %v265
    %405 = vmatprep.subr.mxu0 0.0
    %406 = vmatpush2.msra.mxu0 0.0
    %407 = vmatprep.subr.mxu0 0.0
    %408 = vmatpush2.msra.mxu0 0.0
    %409 = vmatprep.subr.mxu0 0.0
    %410 = vmatpush2.msra.mxu0 0.0
    %411 = vmatprep.subr.mxu0 0.0
    %412 = vmatpush2.msra.mxu0 0.0
    %413 = vmatprep.subr.mxu0 0.0
    %414 = vmatpush2.msra.mxu0 0.0
    %415 = vmatprep.subr.mxu0 0.0
    %416 = vmatpush2.msra.mxu0 0.0
    %417 = vmatprep.subr.mxu0 0.0
    %418 = vmatpush2.msra.mxu0 0.0
    %419 = vmatprep.subr.mxu0 0.0
    %420 = vmatpush2.msra.mxu0 0.0
    %421 = vmatprep.subr.mxu0 0.0
    %422 = vmatpush2.msra.mxu0 0.0
    %423 = vmatprep.subr.mxu0 0.0
    %424 = vmatpush2.msra.mxu0 0.0
    %425 = vmatprep.subr.mxu0 0.0
    %426 = vmatpush2.msra.mxu0 0.0
    %427 = vmatprep.subr.mxu0 0.0
    %428 = vmatpush2.msra.mxu0 0.0
    %429 = vmatprep.subr.mxu0 0.0
    %430 = vmatpush2.msra.mxu0 0.0
    %431 = vmatprep.subr.mxu0 0.0
    %432 = vmatpush2.msra.mxu0 0.0
    %433 = vmatprep.subr.mxu0 0.0
    %434 = vmatpush2.msra.mxu0 0.0
    %435 = vmatprep.subr.mxu0 0.0
    %436 = vmatpush2.msra.mxu0 0.0
    %437 = vmatprep.mubr.f32.mxu0 0.0
    %438 = vmatmul.mubr.f32.gmra.mxu0 %v371
    %v439 = vpop.f32.mrf.mxu0
    %v440 = vadd.f32 %v296, %v439
    %v441 = vpop.f32.mrf.mxu0
    %v442 = vadd.f32 %v300, %v441
    %443 = vdwg.mxu0
    %444 = vmatprep.subr.mxu0 0.0
    %445 = vmatpush1.msra.mxu0 0.0
    %446 = vmatprep.subr.mxu0 0.0
    %447 = vmatpush1.msra.mxu0 0.0
    %448 = vmatprep.subr.mxu0 0.0
    %449 = vmatpush1.msra.mxu0 0.0
    %450 = vmatprep.subr.mxu0 0.0
    %451 = vmatpush1.msra.mxu0 0.0
    %452 = vmatprep.subr.mxu0 0.0
    %453 = vmatpush1.msra.mxu0 0.0
    %454 = vmatprep.subr.mxu0 0.0
    %455 = vmatpush1.msra.mxu0 0.0
    %456 = vmatprep.subr.mxu0 0.0
    %457 = vmatpush1.msra.mxu0 0.0
    %458 = vmatprep.subr.mxu0 0.0
    %459 = vmatpush1.msra.mxu0 0.0
    %460 = vmatprep.subr.mxu0 0.0
    %461 = vmatpush1.msra.mxu0 0.0
    %462 = vmatprep.subr.mxu0 0.0
    %463 = vmatpush1.msra.mxu0 0.0
    %464 = vmatprep.subr.mxu0 0.0
    %465 = vmatpush1.msra.mxu0 0.0
    %466 = vmatprep.subr.mxu0 0.0
    %467 = vmatpush1.msra.mxu0 0.0
    %468 = vmatprep.subr.mxu0 0.0
    %469 = vmatpush1.msra.mxu0 0.0
    %470 = vmatprep.subr.mxu0 0.0
    %471 = vmatpush1.msra.mxu0 0.0
    %472 = vmatprep.subr.mxu0 %v280
    %473 = vmatpush1.msra.mxu0 %v279
    %474 = vmatprep.subr.mxu0 %v268
    %475 = vmatpush1.msra.mxu0 %v267
    %476 = vmatprep.subr.mxu0 0.0
    %477 = vmatpush2.msra.mxu0 0.0
    %478 = vmatprep.subr.mxu0 0.0
    %479 = vmatpush2.msra.mxu0 0.0
    %480 = vmatprep.subr.mxu0 0.0
    %481 = vmatpush2.msra.mxu0 0.0
    %482 = vmatprep.subr.mxu0 0.0
    %483 = vmatpush2.msra.mxu0 0.0
    %484 = vmatprep.subr.mxu0 0.0
    %485 = vmatpush2.msra.mxu0 0.0
    %486 = vmatprep.subr.mxu0 0.0
    %487 = vmatpush2.msra.mxu0 0.0
    %488 = vmatprep.subr.mxu0 0.0
    %489 = vmatpush2.msra.mxu0 0.0
    %490 = vmatprep.subr.mxu0 0.0
    %491 = vmatpush2.msra.mxu0 0.0
    %492 = vmatprep.subr.mxu0 0.0
    %493 = vmatpush2.msra.mxu0 0.0
    %494 = vmatprep.subr.mxu0 0.0
    %495 = vmatpush2.msra.mxu0 0.0
    %496 = vmatprep.subr.mxu0 0.0
    %497 = vmatpush2.msra.mxu0 0.0
    %498 = vmatprep.subr.mxu0 0.0
    %499 = vmatpush2.msra.mxu0 0.0
    %500 = vmatprep.subr.mxu0 0.0
    %501 = vmatpush2.msra.mxu0 0.0
    %502 = vmatprep.subr.mxu0 0.0
    %503 = vmatpush2.msra.mxu0 0.0
    %504 = vmatprep.subr.mxu0 0.0
    %505 = vmatpush2.msra.mxu0 0.0
    %506 = vmatprep.subr.mxu0 0.0
    %507 = vmatpush2.msra.mxu0 0.0
    %508 = vmatprep.mubr.f32.mxu0 0.0
    %509 = vmatmul.mubr.f32.gmra.mxu0 %v371
    %v510 = vpop.f32.mrf.mxu0
    %v511 = vadd.f32 %v304, %v510
    %v512 = vpop.f32.mrf.mxu0
    %v513 = vadd.f32 %v308, %v512
    %514 = vdwg.mxu0
    %515 = vmatprep.subr.mxu0 0.0
    %516 = vmatpush1.msra.mxu0 0.0
    %517 = vmatprep.subr.mxu0 0.0
    %518 = vmatpush1.msra.mxu0 0.0
    %519 = vmatprep.subr.mxu0 0.0
    %520 = vmatpush1.msra.mxu0 0.0
    %521 = vmatprep.subr.mxu0 0.0
    %522 = vmatpush1.msra.mxu0 0.0
    %523 = vmatprep.subr.mxu0 0.0
    %524 = vmatpush1.msra.mxu0 0.0
    %525 = vmatprep.subr.mxu0 0.0
    %526 = vmatpush1.msra.mxu0 0.0
    %527 = vmatprep.subr.mxu0 0.0
    %528 = vmatpush1.msra.mxu0 0.0
    %529 = vmatprep.subr.mxu0 0.0
    %530 = vmatpush1.msra.mxu0 0.0
    %531 = vmatprep.subr.mxu0 0.0
    %532 = vmatpush1.msra.mxu0 0.0
    %533 = vmatprep.subr.mxu0 0.0
    %534 = vmatpush1.msra.mxu0 0.0
    %535 = vmatprep.subr.mxu0 0.0
    %536 = vmatpush1.msra.mxu0 0.0
    %537 = vmatprep.subr.mxu0 0.0
    %538 = vmatpush1.msra.mxu0 0.0
    %539 = vmatprep.subr.mxu0 0.0
    %540 = vmatpush1.msra.mxu0 0.0
    %541 = vmatprep.subr.mxu0 0.0
    %542 = vmatpush1.msra.mxu0 0.0
    %543 = vmatprep.subr.mxu0 %v282
    %544 = vmatpush1.msra.mxu0 %v281
    %545 = vmatprep.subr.mxu0 %v270
    %546 = vmatpush1.msra.mxu0 %v269
    %547 = vmatprep.subr.mxu0 0.0
    %548 = vmatpush2.msra.mxu0 0.0
    %549 = vmatprep.subr.mxu0 0.0
    %550 = vmatpush2.msra.mxu0 0.0
    %551 = vmatprep.subr.mxu0 0.0
    %552 = vmatpush2.msra.mxu0 0.0
    %553 = vmatprep.subr.mxu0 0.0
    %554 = vmatpush2.msra.mxu0 0.0
    %555 = vmatprep.subr.mxu0 0.0
    %556 = vmatpush2.msra.mxu0 0.0
    %557 = vmatprep.subr.mxu0 0.0
    %558 = vmatpush2.msra.mxu0 0.0
    %559 = vmatprep.subr.mxu0 0.0
    %560 = vmatpush2.msra.mxu0 0.0
    %561 = vmatprep.subr.mxu0 0.0
    %562 = vmatpush2.msra.mxu0 0.0
    %563 = vmatprep.subr.mxu0 0.0
    %564 = vmatpush2.msra.mxu0 0.0
    %565 = vmatprep.subr.mxu0 0.0
    %566 = vmatpush2.msra.mxu0 0.0
    %567 = vmatprep.subr.mxu0 0.0
    %568 = vmatpush2.msra.mxu0 0.0
    %569 = vmatprep.subr.mxu0 0.0
    %570 = vmatpush2.msra.mxu0 0.0
    %571 = vmatprep.subr.mxu0 0.0
    %572 = vmatpush2.msra.mxu0 0.0
    %573 = vmatprep.subr.mxu0 0.0
    %574 = vmatpush2.msra.mxu0 0.0
    %575 = vmatprep.subr.mxu0 0.0
    %576 = vmatpush2.msra.mxu0 0.0
    %577 = vmatprep.subr.mxu0 0.0
    %578 = vmatpush2.msra.mxu0 0.0
    %579 = vmatprep.mubr.f32.mxu0 0.0
    %580 = vmatmul.mubr.f32.gmra.mxu0 %v371
    %v581 = vpop.f32.mrf.mxu0
    %v582 = vadd.f32 %v312, %v581
    %v583 = vpop.f32.mrf.mxu0
    %v584 = vadd.f32 %v316, %v583
    %585 = vdwg.mxu0
    %586 = vmatprep.subr.mxu0 0.0
    %587 = vmatpush1.msra.mxu0 0.0
    %588 = vmatprep.subr.mxu0 0.0
    %589 = vmatpush1.msra.mxu0 0.0
    %590 = vmatprep.subr.mxu0 0.0
    %591 = vmatpush1.msra.mxu0 0.0
    %592 = vmatprep.subr.mxu0 0.0
    %593 = vmatpush1.msra.mxu0 0.0
    %594 = vmatprep.subr.mxu0 0.0
    %595 = vmatpush1.msra.mxu0 0.0
    %596 = vmatprep.subr.mxu0 0.0
    %597 = vmatpush1.msra.mxu0 0.0
    %598 = vmatprep.subr.mxu0 0.0
    %599 = vmatpush1.msra.mxu0 0.0
    %600 = vmatprep.subr.mxu0 0.0
    %601 = vmatpush1.msra.mxu0 0.0
    %602 = vmatprep.subr.mxu0 0.0
    %603 = vmatpush1.msra.mxu0 0.0
    %604 = vmatprep.subr.mxu0 0.0
    %605 = vmatpush1.msra.mxu0 0.0
    %606 = vmatprep.subr.mxu0 0.0
    %607 = vmatpush1.msra.mxu0 0.0
    %608 = vmatprep.subr.mxu0 0.0
    %609 = vmatpush1.msra.mxu0 0.0
    %610 = vmatprep.subr.mxu0 0.0
    %611 = vmatpush1.msra.mxu0 0.0
    %612 = vmatprep.subr.mxu0 0.0
    %613 = vmatpush1.msra.mxu0 0.0
    %614 = vmatprep.subr.mxu0 %v284
    %615 = vmatpush1.msra.mxu0 %v283
    %616 = vmatprep.subr.mxu0 %v272
    %617 = vmatpush1.msra.mxu0 %v271
    %618 = vmatprep.subr.mxu0 0.0
    %619 = vmatpush2.msra.mxu0 0.0
    %620 = vmatprep.subr.mxu0 0.0
    %621 = vmatpush2.msra.mxu0 0.0
    %622 = vmatprep.subr.mxu0 0.0
    %623 = vmatpush2.msra.mxu0 0.0
    %624 = vmatprep.subr.mxu0 0.0
    %625 = vmatpush2.msra.mxu0 0.0
    %626 = vmatprep.subr.mxu0 0.0
    %627 = vmatpush2.msra.mxu0 0.0
    %628 = vmatprep.subr.mxu0 0.0
    %629 = vmatpush2.msra.mxu0 0.0
    %630 = vmatprep.subr.mxu0 0.0
    %631 = vmatpush2.msra.mxu0 0.0
    %632 = vmatprep.subr.mxu0 0.0
    %633 = vmatpush2.msra.mxu0 0.0
    %634 = vmatprep.subr.mxu0 0.0
    %635 = vmatpush2.msra.mxu0 0.0
    %636 = vmatprep.subr.mxu0 0.0
    %637 = vmatpush2.msra.mxu0 0.0
    %638 = vmatprep.subr.mxu0 0.0
    %639 = vmatpush2.msra.mxu0 0.0
    %640 = vmatprep.subr.mxu0 0.0
    %641 = vmatpush2.msra.mxu0 0.0
    %642 = vmatprep.subr.mxu0 0.0
    %643 = vmatpush2.msra.mxu0 0.0
    %644 = vmatprep.subr.mxu0 0.0
    %645 = vmatpush2.msra.mxu0 0.0
    %646 = vmatprep.subr.mxu0 0.0
    %647 = vmatpush2.msra.mxu0 0.0
    %648 = vmatprep.subr.mxu0 0.0
    %649 = vmatpush2.msra.mxu0 0.0
    %650 = vmatprep.mubr.f32.mxu0 0.0
    %651 = vmatmul.mubr.f32.gmra.mxu0 %v371
    %v652 = vpop.f32.mrf.mxu0
    %v653 = vadd.f32 %v320, %v652
    %v654 = vpop.f32.mrf.mxu0
    %v655 = vadd.f32 %v324, %v654
    %656 = vdwg.mxu0
    %657 = vmatprep.subr.mxu0 0.0
    %658 = vmatpush1.msra.mxu0 0.0
    %659 = vmatprep.subr.mxu0 0.0
    %660 = vmatpush1.msra.mxu0 0.0
    %661 = vmatprep.subr.mxu0 0.0
    %662 = vmatpush1.msra.mxu0 0.0
    %663 = vmatprep.subr.mxu0 0.0
    %664 = vmatpush1.msra.mxu0 0.0
    %665 = vmatprep.subr.mxu0 0.0
    %666 = vmatpush1.msra.mxu0 0.0
    %667 = vmatprep.subr.mxu0 0.0
    %668 = vmatpush1.msra.mxu0 0.0
    %669 = vmatprep.subr.mxu0 0.0
    %670 = vmatpush1.msra.mxu0 0.0
    %671 = vmatprep.subr.mxu0 0.0
    %672 = vmatpush1.msra.mxu0 0.0
    %673 = vmatprep.subr.mxu0 0.0
    %674 = vmatpush1.msra.mxu0 0.0
    %675 = vmatprep.subr.mxu0 0.0
    %676 = vmatpush1.msra.mxu0 0.0
    %677 = vmatprep.subr.mxu0 0.0
    %678 = vmatpush1.msra.mxu0 0.0
    %679 = vmatprep.subr.mxu0 0.0
    %680 = vmatpush1.msra.mxu0 0.0
    %681 = vmatprep.subr.mxu0 0.0
    %682 = vmatpush1.msra.mxu0 0.0
    %683 = vmatprep.subr.mxu0 0.0
    %684 = vmatpush1.msra.mxu0 0.0
    %685 = vmatprep.subr.mxu0 %v286
    %686 = vmatpush1.msra.mxu0 %v285
    %687 = vmatprep.subr.mxu0 %v274
    %688 = vmatpush1.msra.mxu0 %v273
    %689 = vmatprep.subr.mxu0 0.0
    %690 = vmatpush2.msra.mxu0 0.0
    %691 = vmatprep.subr.mxu0 0.0
    %692 = vmatpush2.msra.mxu0 0.0
    %693 = vmatprep.subr.mxu0 0.0
    %694 = vmatpush2.msra.mxu0 0.0
    %695 = vmatprep.subr.mxu0 0.0
    %696 = vmatpush2.msra.mxu0 0.0
    %697 = vmatprep.subr.mxu0 0.0
    %698 = vmatpush2.msra.mxu0 0.0
    %699 = vmatprep.subr.mxu0 0.0
    %700 = vmatpush2.msra.mxu0 0.0
    %701 = vmatprep.subr.mxu0 0.0
    %702 = vmatpush2.msra.mxu0 0.0
    %703 = vmatprep.subr.mxu0 0.0
    %704 = vmatpush2.msra.mxu0 0.0
    %705 = vmatprep.subr.mxu0 0.0
    %706 = vmatpush2.msra.mxu0 0.0
    %707 = vmatprep.subr.mxu0 0.0
    %708 = vmatpush2.msra.mxu0 0.0
    %709 = vmatprep.subr.mxu0 0.0
    %710 = vmatpush2.msra.mxu0 0.0
    %711 = vmatprep.subr.mxu0 0.0
    %712 = vmatpush2.msra.mxu0 0.0
    %713 = vmatprep.subr.mxu0 0.0
    %714 = vmatpush2.msra.mxu0 0.0
    %715 = vmatprep.subr.mxu0 0.0
    %716 = vmatpush2.msra.mxu0 0.0
    %717 = vmatprep.subr.mxu0 0.0
    %718 = vmatpush2.msra.mxu0 0.0
    %719 = vmatprep.subr.mxu0 0.0
    %720 = vmatpush2.msra.mxu0 0.0
    %721 = vmatprep.mubr.f32.mxu0 0.0
    %722 = vmatmul.mubr.f32.gmra.mxu0 %v371
    %v723 = vpop.f32.mrf.mxu0
    %v724 = vadd.f32 %v328, %v723
    %v725 = vpop.f32.mrf.mxu0
    %v726 = vadd.f32 %v332, %v725
    %727 = vdwg.mxu0
    %728 = vmatprep.subr.mxu0 0.0
    %729 = vmatpush1.msra.mxu0 0.0
    %730 = vmatprep.subr.mxu0 0.0
    %731 = vmatpush1.msra.mxu0 0.0
    %732 = vmatprep.subr.mxu0 0.0
    %733 = vmatpush1.msra.mxu0 0.0
    %734 = vmatprep.subr.mxu0 0.0
    %735 = vmatpush1.msra.mxu0 0.0
    %736 = vmatprep.subr.mxu0 0.0
    %737 = vmatpush1.msra.mxu0 0.0
    %738 = vmatprep.subr.mxu0 0.0
    %739 = vmatpush1.msra.mxu0 0.0
    %740 = vmatprep.subr.mxu0 0.0
    %741 = vmatpush1.msra.mxu0 0.0
    %742 = vmatprep.subr.mxu0 0.0
    %743 = vmatpush1.msra.mxu0 0.0
    %744 = vmatprep.subr.mxu0 0.0
    %745 = vmatpush1.msra.mxu0 0.0
    %746 = vmatprep.subr.mxu0 0.0
    %747 = vmatpush1.msra.mxu0 0.0
    %748 = vmatprep.subr.mxu0 0.0
    %749 = vmatpush1.msra.mxu0 0.0
    %750 = vmatprep.subr.mxu0 0.0
    %751 = vmatpush1.msra.mxu0 0.0
    %752 = vmatprep.subr.mxu0 0.0
    %753 = vmatpush1.msra.mxu0 0.0
    %754 = vmatprep.subr.mxu0 0.0
    %755 = vmatpush1.msra.mxu0 0.0
    %756 = vmatprep.subr.mxu0 %v288
    %757 = vmatpush1.msra.mxu0 %v287
    %758 = vmatprep.subr.mxu0 %v276
    %759 = vmatpush1.msra.mxu0 %v275
    %760 = vmatprep.subr.mxu0 0.0
    %761 = vmatpush2.msra.mxu0 0.0
    %762 = vmatprep.subr.mxu0 0.0
    %763 = vmatpush2.msra.mxu0 0.0
    %764 = vmatprep.subr.mxu0 0.0
    %765 = vmatpush2.msra.mxu0 0.0
    %766 = vmatprep.subr.mxu0 0.0
    %767 = vmatpush2.msra.mxu0 0.0
    %768 = vmatprep.subr.mxu0 0.0
    %769 = vmatpush2.msra.mxu0 0.0
    %770 = vmatprep.subr.mxu0 0.0
    %771 = vmatpush2.msra.mxu0 0.0
    %772 = vmatprep.subr.mxu0 0.0
    %773 = vmatpush2.msra.mxu0 0.0
    %774 = vmatprep.subr.mxu0 0.0
    %775 = vmatpush2.msra.mxu0 0.0
    %776 = vmatprep.subr.mxu0 0.0
    %777 = vmatpush2.msra.mxu0 0.0
    %778 = vmatprep.subr.mxu0 0.0
    %779 = vmatpush2.msra.mxu0 0.0
    %780 = vmatprep.subr.mxu0 0.0
    %781 = vmatpush2.msra.mxu0 0.0
    %782 = vmatprep.subr.mxu0 0.0
    %783 = vmatpush2.msra.mxu0 0.0
    %784 = vmatprep.subr.mxu0 0.0
    %785 = vmatpush2.msra.mxu0 0.0
    %786 = vmatprep.subr.mxu0 0.0
    %787 = vmatpush2.msra.mxu0 0.0
    %788 = vmatprep.subr.mxu0 0.0
    %789 = vmatpush2.msra.mxu0 0.0
    %790 = vmatprep.subr.mxu0 0.0
    %791 = vmatpush2.msra.mxu0 0.0
    %792 = vmatprep.mubr.f32.mxu0 0.0
    %793 = vmatmul.mubr.f32.gmra.mxu0 %v371
    %v794 = vpop.f32.mrf.mxu0
    %v795 = vadd.f32 %v336, %v794
    %v796 = vpop.f32.mrf.mxu0
    %v797 = vadd.f32 %v340, %v796
    %798 = vdwg.mxu0
    %v799 = vld [vmem:[%s2] sm:$0x1]
    %v800 = vld [vmem:[%s2 + $0x1] sm:$0x1]
    %v801 = vld [vmem:[#allocation6] sm:$0xff]
    %v802 = vld [vmem:[#allocation6 + $0x8] sm:$0xff]
    %v803 = vld [vmem:[#allocation6 + $0x10] sm:$0xff]
    %v804 = vld [vmem:[#allocation6 + $0x18] sm:$0xff]
    %v805 = vld [vmem:[#allocation6 + $0x20] sm:$0xff]
    %v806 = vld [vmem:[#allocation6 + $0x28] sm:$0xff]
    %v807 = vld [vmem:[#allocation6 + $0x30] sm:$0xff]
    %v808 = vld [vmem:[#allocation6 + $0x38] sm:$0xff]
    %v809 = vld [vmem:[#allocation6 + $0x40] sm:$0xff]
    %v810 = vld [vmem:[#allocation6 + $0x48] sm:$0xff]
    %v811 = vld [vmem:[#allocation6 + $0x50] sm:$0xff]
    %v812 = vld [vmem:[#allocation6 + $0x58] sm:$0xff]
    %v813 = vld [vmem:[#allocation6 + $0x60] sm:$0xff]
    %v814 = vld [vmem:[#allocation6 + $0x68] sm:$0xff]
    %v815 = vld [vmem:[#allocation6 + $0x70] sm:$0xff]
    %v816 = vld [vmem:[#allocation6 + $0x78] sm:$0xff]
    %v817 = vld [vmem:[#allocation6 + $0x80] sm:$0xff]
    %v818 = vld [vmem:[#allocation6 + $0x88] sm:$0xff]
    %v819 = vld [vmem:[#allocation6 + $0x90] sm:$0xff]
    %v820 = vld [vmem:[#allocation6 + $0x98] sm:$0xff]
    %v821 = vld [vmem:[#allocation6 + $0xa0] sm:$0xff]
    %v822 = vld [vmem:[#allocation6 + $0xa8] sm:$0xff]
    %v823 = vld [vmem:[#allocation6 + $0xb0] sm:$0xff]
    %v824 = vld [vmem:[#allocation6 + $0xb8] sm:$0xff]
    %v825 = vld [vmem:[#allocation7] sm:$0xff]
    %v826 = vld [vmem:[#allocation7 + $0x8] sm:$0xf]
    %v829 = vlaneseq
    %v830 = vshrl.u32 %v829, 7
    %v831 = vsub.s32 0, %v830
    %v832 = vrot.slane %v825, %v831
    %v833 = vlaneseq
    %v834 = vshrl.u32 %v833, 7
    %v835 = vsub.s32 1, %v834
    %v836 = vrot.slane %v825, %v835
    %v837 = vlaneseq
    %v838 = vshrl.u32 %v837, 7
    %v839 = vsub.s32 2, %v838
    %v840 = vrot.slane %v825, %v839
    %v841 = vlaneseq
    %v842 = vshrl.u32 %v841, 7
    %v843 = vsub.s32 3, %v842
    %v844 = vrot.slane %v825, %v843
    %v845 = vlaneseq
    %v846 = vshrl.u32 %v845, 7
    %v847 = vsub.s32 4, %v846
    %v848 = vrot.slane %v825, %v847
    %v849 = vlaneseq
    %v850 = vshrl.u32 %v849, 7
    %v851 = vsub.s32 5, %v850
    %v852 = vrot.slane %v825, %v851
    %v853 = vlaneseq
    %v854 = vshrl.u32 %v853, 7
    %v855 = vsub.s32 6, %v854
    %v856 = vrot.slane %v825, %v855
    %v857 = vlaneseq
    %v858 = vshrl.u32 %v857, 7
    %v859 = vsub.s32 7, %v858
    %v860 = vrot.slane %v825, %v859
    %v861 = vlaneseq
    %v862 = vshrl.u32 %v861, 7
    %v863 = vsub.s32 0, %v862
    %v864 = vrot.slane %v826, %v863
    %v865 = vlaneseq
    %v866 = vshrl.u32 %v865, 7
    %v867 = vsub.s32 1, %v866
    %v868 = vrot.slane %v826, %v867
    %v869 = vlaneseq
    %v870 = vshrl.u32 %v869, 7
    %v871 = vsub.s32 2, %v870
    %v872 = vrot.slane %v826, %v871
    %v873 = vlaneseq
    %v874 = vshrl.u32 %v873, 7
    %v875 = vsub.s32 3, %v874
    %v876 = vrot.slane %v826, %v875
    %v891 = vcombine.low %v799, %v800
    %v893 = vunpack.c.l.s4 1966171168
    %v894 = vunpack.c.0.s8 %v893
    %v895 = vlaneseq
    %v896 = vshrl.u32 %v895, 7
    %v897 = vsub.s32 %v894, %v896
    %v898 = vrot.slane %v891, %v897
    %v900 = vunpack.c.l.s4 1966171168
    %v901 = vunpack.c.0.s8 %v900
    %v902 = vlaneseq
    %v903 = vshrl.u32 %v902, 7
    %v904 = vsub.s32 %v901, %v903
    %v905 = vrot.slane %v898, %v904
    %v906 = vsel %vm370, %v905, 0
    %908 = vmatprep.subr.mxu0 0.0
    %909 = vmatpush1.msra.mxu0 0.0
    %910 = vmatprep.subr.mxu0 0.0
    %911 = vmatpush1.msra.mxu0 0.0
    %912 = vmatprep.subr.mxu0 0.0
    %913 = vmatpush1.msra.mxu0 0.0
    %914 = vmatprep.subr.mxu0 0.0
    %915 = vmatpush1.msra.mxu0 0.0
    %916 = vmatprep.subr.mxu0 0.0
    %917 = vmatpush1.msra.mxu0 0.0
    %918 = vmatprep.subr.mxu0 0.0
    %919 = vmatpush1.msra.mxu0 0.0
    %920 = vmatprep.subr.mxu0 0.0
    %921 = vmatpush1.msra.mxu0 0.0
    %922 = vmatprep.subr.mxu0 0.0
    %923 = vmatpush1.msra.mxu0 0.0
    %924 = vmatprep.subr.mxu0 0.0
    %925 = vmatpush1.msra.mxu0 0.0
    %926 = vmatprep.subr.mxu0 0.0
    %927 = vmatpush1.msra.mxu0 0.0
    %928 = vmatprep.subr.mxu0 0.0
    %929 = vmatpush1.msra.mxu0 0.0
    %930 = vmatprep.subr.mxu0 0.0
    %931 = vmatpush1.msra.mxu0 0.0
    %932 = vmatprep.subr.mxu0 0.0
    %933 = vmatpush1.msra.mxu0 0.0
    %934 = vmatprep.subr.mxu0 0.0
    %935 = vmatpush1.msra.mxu0 0.0
    %936 = vmatprep.subr.mxu0 %v814
    %937 = vmatpush1.msra.mxu0 %v813
    %938 = vmatprep.subr.mxu0 %v802
    %939 = vmatpush1.msra.mxu0 %v801
    %940 = vmatprep.subr.mxu0 0.0
    %941 = vmatpush2.msra.mxu0 0.0
    %942 = vmatprep.subr.mxu0 0.0
    %943 = vmatpush2.msra.mxu0 0.0
    %944 = vmatprep.subr.mxu0 0.0
    %945 = vmatpush2.msra.mxu0 0.0
    %946 = vmatprep.subr.mxu0 0.0
    %947 = vmatpush2.msra.mxu0 0.0
    %948 = vmatprep.subr.mxu0 0.0
    %949 = vmatpush2.msra.mxu0 0.0
    %950 = vmatprep.subr.mxu0 0.0
    %951 = vmatpush2.msra.mxu0 0.0
    %952 = vmatprep.subr.mxu0 0.0
    %953 = vmatpush2.msra.mxu0 0.0
    %954 = vmatprep.subr.mxu0 0.0
    %955 = vmatpush2.msra.mxu0 0.0
    %956 = vmatprep.subr.mxu0 0.0
    %957 = vmatpush2.msra.mxu0 0.0
    %958 = vmatprep.subr.mxu0 0.0
    %959 = vmatpush2.msra.mxu0 0.0
    %960 = vmatprep.subr.mxu0 0.0
    %961 = vmatpush2.msra.mxu0 0.0
    %962 = vmatprep.subr.mxu0 0.0
    %963 = vmatpush2.msra.mxu0 0.0
    %964 = vmatprep.subr.mxu0 0.0
    %965 = vmatpush2.msra.mxu0 0.0
    %966 = vmatprep.subr.mxu0 0.0
    %967 = vmatpush2.msra.mxu0 0.0
    %968 = vmatprep.subr.mxu0 0.0
    %969 = vmatpush2.msra.mxu0 0.0
    %970 = vmatprep.subr.mxu0 0.0
    %971 = vmatpush2.msra.mxu0 0.0
    %972 = vmatprep.mubr.f32.mxu0 0.0
    %973 = vmatmul.mubr.f32.gmra.mxu0 %v906
    %v974 = vpop.f32.mrf.mxu0
    %v975 = vadd.f32 %v832, %v974
    %v976 = vpop.f32.mrf.mxu0
    %v977 = vadd.f32 %v836, %v976
    %978 = vdwg.mxu0
    %979 = vmatprep.subr.mxu0 0.0
    %980 = vmatpush1.msra.mxu0 0.0
    %981 = vmatprep.subr.mxu0 0.0
    %982 = vmatpush1.msra.mxu0 0.0
    %983 = vmatprep.subr.mxu0 0.0
    %984 = vmatpush1.msra.mxu0 0.0
    %985 = vmatprep.subr.mxu0 0.0
    %986 = vmatpush1.msra.mxu0 0.0
    %987 = vmatprep.subr.mxu0 0.0
    %988 = vmatpush1.msra.mxu0 0.0
    %989 = vmatprep.subr.mxu0 0.0
    %990 = vmatpush1.msra.mxu0 0.0
    %991 = vmatprep.subr.mxu0 0.0
    %992 = vmatpush1.msra.mxu0 0.0
    %993 = vmatprep.subr.mxu0 0.0
    %994 = vmatpush1.msra.mxu0 0.0
    %995 = vmatprep.subr.mxu0 0.0
    %996 = vmatpush1.msra.mxu0 0.0
    %997 = vmatprep.subr.mxu0 0.0
    %998 = vmatpush1.msra.mxu0 0.0
    %999 = vmatprep.subr.mxu0 0.0
    %1000 = vmatpush1.msra.mxu0 0.0
    %1001 = vmatprep.subr.mxu0 0.0
    %1002 = vmatpush1.msra.mxu0 0.0
    %1003 = vmatprep.subr.mxu0 0.0
    %1004 = vmatpush1.msra.mxu0 0.0
    %1005 = vmatprep.subr.mxu0 0.0
    %1006 = vmatpush1.msra.mxu0 0.0
    %1007 = vmatprep.subr.mxu0 %v816
    %1008 = vmatpush1.msra.mxu0 %v815
    %1009 = vmatprep.subr.mxu0 %v804
    %1010 = vmatpush1.msra.mxu0 %v803
    %1011 = vmatprep.subr.mxu0 0.0
    %1012 = vmatpush2.msra.mxu0 0.0
    %1013 = vmatprep.subr.mxu0 0.0
    %1014 = vmatpush2.msra.mxu0 0.0
    %1015 = vmatprep.subr.mxu0 0.0
    %1016 = vmatpush2.msra.mxu0 0.0
    %1017 = vmatprep.subr.mxu0 0.0
    %1018 = vmatpush2.msra.mxu0 0.0
    %1019 = vmatprep.subr.mxu0 0.0
    %1020 = vmatpush2.msra.mxu0 0.0
    %1021 = vmatprep.subr.mxu0 0.0
    %1022 = vmatpush2.msra.mxu0 0.0
    %1023 = vmatprep.subr.mxu0 0.0
    %1024 = vmatpush2.msra.mxu0 0.0
    %1025 = vmatprep.subr.mxu0 0.0
    %1026 = vmatpush2.msra.mxu0 0.0
    %1027 = vmatprep.subr.mxu0 0.0
    %1028 = vmatpush2.msra.mxu0 0.0
    %1029 = vmatprep.subr.mxu0 0.0
    %1030 = vmatpush2.msra.mxu0 0.0
    %1031 = vmatprep.subr.mxu0 0.0
    %1032 = vmatpush2.msra.mxu0 0.0
    %1033 = vmatprep.subr.mxu0 0.0
    %1034 = vmatpush2.msra.mxu0 0.0
    %1035 = vmatprep.subr.mxu0 0.0
    %1036 = vmatpush2.msra.mxu0 0.0
    %1037 = vmatprep.subr.mxu0 0.0
    %1038 = vmatpush2.msra.mxu0 0.0
    %1039 = vmatprep.subr.mxu0 0.0
    %1040 = vmatpush2.msra.mxu0 0.0
    %1041 = vmatprep.subr.mxu0 0.0
    %1042 = vmatpush2.msra.mxu0 0.0
    %1043 = vmatprep.mubr.f32.mxu0 0.0
    %1044 = vmatmul.mubr.f32.gmra.mxu0 %v906
    %v1045 = vpop.f32.mrf.mxu0
    %v1046 = vadd.f32 %v840, %v1045
    %v1047 = vpop.f32.mrf.mxu0
    %v1048 = vadd.f32 %v844, %v1047
    %1049 = vdwg.mxu0
    %1050 = vmatprep.subr.mxu0 0.0
    %1051 = vmatpush1.msra.mxu0 0.0
    %1052 = vmatprep.subr.mxu0 0.0
    %1053 = vmatpush1.msra.mxu0 0.0
    %1054 = vmatprep.subr.mxu0 0.0
    %1055 = vmatpush1.msra.mxu0 0.0
    %1056 = vmatprep.subr.mxu0 0.0
    %1057 = vmatpush1.msra.mxu0 0.0
    %1058 = vmatprep.subr.mxu0 0.0
    %1059 = vmatpush1.msra.mxu0 0.0
    %1060 = vmatprep.subr.mxu0 0.0
    %1061 = vmatpush1.msra.mxu0 0.0
    %1062 = vmatprep.subr.mxu0 0.0
    %1063 = vmatpush1.msra.mxu0 0.0
    %1064 = vmatprep.subr.mxu0 0.0
    %1065 = vmatpush1.msra.mxu0 0.0
    %1066 = vmatprep.subr.mxu0 0.0
    %1067 = vmatpush1.msra.mxu0 0.0
    %1068 = vmatprep.subr.mxu0 0.0
    %1069 = vmatpush1.msra.mxu0 0.0
    %1070 = vmatprep.subr.mxu0 0.0
    %1071 = vmatpush1.msra.mxu0 0.0
    %1072 = vmatprep.subr.mxu0 0.0
    %1073 = vmatpush1.msra.mxu0 0.0
    %1074 = vmatprep.subr.mxu0 0.0
    %1075 = vmatpush1.msra.mxu0 0.0
    %1076 = vmatprep.subr.mxu0 0.0
    %1077 = vmatpush1.msra.mxu0 0.0
    %1078 = vmatprep.subr.mxu0 %v818
    %1079 = vmatpush1.msra.mxu0 %v817
    %1080 = vmatprep.subr.mxu0 %v806
    %1081 = vmatpush1.msra.mxu0 %v805
    %1082 = vmatprep.subr.mxu0 0.0
    %1083 = vmatpush2.msra.mxu0 0.0
    %1084 = vmatprep.subr.mxu0 0.0
    %1085 = vmatpush2.msra.mxu0 0.0
    %1086 = vmatprep.subr.mxu0 0.0
    %1087 = vmatpush2.msra.mxu0 0.0
    %1088 = vmatprep.subr.mxu0 0.0
    %1089 = vmatpush2.msra.mxu0 0.0
    %1090 = vmatprep.subr.mxu0 0.0
    %1091 = vmatpush2.msra.mxu0 0.0
    %1092 = vmatprep.subr.mxu0 0.0
    %1093 = vmatpush2.msra.mxu0 0.0
    %1094 = vmatprep.subr.mxu0 0.0
    %1095 = vmatpush2.msra.mxu0 0.0
    %1096 = vmatprep.subr.mxu0 0.0
    %1097 = vmatpush2.msra.mxu0 0.0
    %1098 = vmatprep.subr.mxu0 0.0
    %1099 = vmatpush2.msra.mxu0 0.0
    %1100 = vmatprep.subr.mxu0 0.0
    %1101 = vmatpush2.msra.mxu0 0.0
    %1102 = vmatprep.subr.mxu0 0.0
    %1103 = vmatpush2.msra.mxu0 0.0
    %1104 = vmatprep.subr.mxu0 0.0
    %1105 = vmatpush2.msra.mxu0 0.0
    %1106 = vmatprep.subr.mxu0 0.0
    %1107 = vmatpush2.msra.mxu0 0.0
    %1108 = vmatprep.subr.mxu0 0.0
    %1109 = vmatpush2.msra.mxu0 0.0
    %1110 = vmatprep.subr.mxu0 0.0
    %1111 = vmatpush2.msra.mxu0 0.0
    %1112 = vmatprep.subr.mxu0 0.0
    %1113 = vmatpush2.msra.mxu0 0.0
    %1114 = vmatprep.mubr.f32.mxu0 0.0
    %1115 = vmatmul.mubr.f32.gmra.mxu0 %v906
    %v1116 = vpop.f32.mrf.mxu0
    %v1117 = vadd.f32 %v848, %v1116
    %v1118 = vpop.f32.mrf.mxu0
    %v1119 = vadd.f32 %v852, %v1118
    %1120 = vdwg.mxu0
    %1121 = vmatprep.subr.mxu0 0.0
    %1122 = vmatpush1.msra.mxu0 0.0
    %1123 = vmatprep.subr.mxu0 0.0
    %1124 = vmatpush1.msra.mxu0 0.0
    %1125 = vmatprep.subr.mxu0 0.0
    %1126 = vmatpush1.msra.mxu0 0.0
    %1127 = vmatprep.subr.mxu0 0.0
    %1128 = vmatpush1.msra.mxu0 0.0
    %1129 = vmatprep.subr.mxu0 0.0
    %1130 = vmatpush1.msra.mxu0 0.0
    %1131 = vmatprep.subr.mxu0 0.0
    %1132 = vmatpush1.msra.mxu0 0.0
    %1133 = vmatprep.subr.mxu0 0.0
    %1134 = vmatpush1.msra.mxu0 0.0
    %1135 = vmatprep.subr.mxu0 0.0
    %1136 = vmatpush1.msra.mxu0 0.0
    %1137 = vmatprep.subr.mxu0 0.0
    %1138 = vmatpush1.msra.mxu0 0.0
    %1139 = vmatprep.subr.mxu0 0.0
    %1140 = vmatpush1.msra.mxu0 0.0
    %1141 = vmatprep.subr.mxu0 0.0
    %1142 = vmatpush1.msra.mxu0 0.0
    %1143 = vmatprep.subr.mxu0 0.0
    %1144 = vmatpush1.msra.mxu0 0.0
    %1145 = vmatprep.subr.mxu0 0.0
    %1146 = vmatpush1.msra.mxu0 0.0
    %1147 = vmatprep.subr.mxu0 0.0
    %1148 = vmatpush1.msra.mxu0 0.0
    %1149 = vmatprep.subr.mxu0 %v820
    %1150 = vmatpush1.msra.mxu0 %v819
    %1151 = vmatprep.subr.mxu0 %v808
    %1152 = vmatpush1.msra.mxu0 %v807
    %1153 = vmatprep.subr.mxu0 0.0
    %1154 = vmatpush2.msra.mxu0 0.0
    %1155 = vmatprep.subr.mxu0 0.0
    %1156 = vmatpush2.msra.mxu0 0.0
    %1157 = vmatprep.subr.mxu0 0.0
    %1158 = vmatpush2.msra.mxu0 0.0
    %1159 = vmatprep.subr.mxu0 0.0
    %1160 = vmatpush2.msra.mxu0 0.0
    %1161 = vmatprep.subr.mxu0 0.0
    %1162 = vmatpush2.msra.mxu0 0.0
    %1163 = vmatprep.subr.mxu0 0.0
    %1164 = vmatpush2.msra.mxu0 0.0
    %1165 = vmatprep.subr.mxu0 0.0
    %1166 = vmatpush2.msra.mxu0 0.0
    %1167 = vmatprep.subr.mxu0 0.0
    %1168 = vmatpush2.msra.mxu0 0.0
    %1169 = vmatprep.subr.mxu0 0.0
    %1170 = vmatpush2.msra.mxu0 0.0
    %1171 = vmatprep.subr.mxu0 0.0
    %1172 = vmatpush2.msra.mxu0 0.0
    %1173 = vmatprep.subr.mxu0 0.0
    %1174 = vmatpush2.msra.mxu0 0.0
    %1175 = vmatprep.subr.mxu0 0.0
    %1176 = vmatpush2.msra.mxu0 0.0
    %1177 = vmatprep.subr.mxu0 0.0
    %1178 = vmatpush2.msra.mxu0 0.0
    %1179 = vmatprep.subr.mxu0 0.0
    %1180 = vmatpush2.msra.mxu0 0.0
    %1181 = vmatprep.subr.mxu0 0.0
    %1182 = vmatpush2.msra.mxu0 0.0
    %1183 = vmatprep.subr.mxu0 0.0
    %1184 = vmatpush2.msra.mxu0 0.0
    %1185 = vmatprep.mubr.f32.mxu0 0.0
    %1186 = vmatmul.mubr.f32.gmra.mxu0 %v906
    %v1187 = vpop.f32.mrf.mxu0
    %v1188 = vadd.f32 %v856, %v1187
    %v1189 = vpop.f32.mrf.mxu0
    %v1190 = vadd.f32 %v860, %v1189
    %1191 = vdwg.mxu0
    %1192 = vmatprep.subr.mxu0 0.0
    %1193 = vmatpush1.msra.mxu0 0.0
    %1194 = vmatprep.subr.mxu0 0.0
    %1195 = vmatpush1.msra.mxu0 0.0
    %1196 = vmatprep.subr.mxu0 0.0
    %1197 = vmatpush1.msra.mxu0 0.0
    %1198 = vmatprep.subr.mxu0 0.0
    %1199 = vmatpush1.msra.mxu0 0.0
    %1200 = vmatprep.subr.mxu0 0.0
    %1201 = vmatpush1.msra.mxu0 0.0
    %1202 = vmatprep.subr.mxu0 0.0
    %1203 = vmatpush1.msra.mxu0 0.0
    %1204 = vmatprep.subr.mxu0 0.0
    %1205 = vmatpush1.msra.mxu0 0.0
    %1206 = vmatprep.subr.mxu0 0.0
    %1207 = vmatpush1.msra.mxu0 0.0
    %1208 = vmatprep.subr.mxu0 0.0
    %1209 = vmatpush1.msra.mxu0 0.0
    %1210 = vmatprep.subr.mxu0 0.0
    %1211 = vmatpush1.msra.mxu0 0.0
    %1212 = vmatprep.subr.mxu0 0.0
    %1213 = vmatpush1.msra.mxu0 0.0
    %1214 = vmatprep.subr.mxu0 0.0
    %1215 = vmatpush1.msra.mxu0 0.0
    %1216 = vmatprep.subr.mxu0 0.0
    %1217 = vmatpush1.msra.mxu0 0.0
    %1218 = vmatprep.subr.mxu0 0.0
    %1219 = vmatpush1.msra.mxu0 0.0
    %1220 = vmatprep.subr.mxu0 %v822
    %1221 = vmatpush1.msra.mxu0 %v821
    %1222 = vmatprep.subr.mxu0 %v810
    %1223 = vmatpush1.msra.mxu0 %v809
    %1224 = vmatprep.subr.mxu0 0.0
    %1225 = vmatpush2.msra.mxu0 0.0
    %1226 = vmatprep.subr.mxu0 0.0
    %1227 = vmatpush2.msra.mxu0 0.0
    %1228 = vmatprep.subr.mxu0 0.0
    %1229 = vmatpush2.msra.mxu0 0.0
    %1230 = vmatprep.subr.mxu0 0.0
    %1231 = vmatpush2.msra.mxu0 0.0
    %1232 = vmatprep.subr.mxu0 0.0
    %1233 = vmatpush2.msra.mxu0 0.0
    %1234 = vmatprep.subr.mxu0 0.0
    %1235 = vmatpush2.msra.mxu0 0.0
    %1236 = vmatprep.subr.mxu0 0.0
    %1237 = vmatpush2.msra.mxu0 0.0
    %1238 = vmatprep.subr.mxu0 0.0
    %1239 = vmatpush2.msra.mxu0 0.0
    %1240 = vmatprep.subr.mxu0 0.0
    %1241 = vmatpush2.msra.mxu0 0.0
    %1242 = vmatprep.subr.mxu0 0.0
    %1243 = vmatpush2.msra.mxu0 0.0
    %1244 = vmatprep.subr.mxu0 0.0
    %1245 = vmatpush2.msra.mxu0 0.0
    %1246 = vmatprep.subr.mxu0 0.0
    %1247 = vmatpush2.msra.mxu0 0.0
    %1248 = vmatprep.subr.mxu0 0.0
    %1249 = vmatpush2.msra.mxu0 0.0
    %1250 = vmatprep.subr.mxu0 0.0
    %1251 = vmatpush2.msra.mxu0 0.0
    %1252 = vmatprep.subr.mxu0 0.0
    %1253 = vmatpush2.msra.mxu0 0.0
    %1254 = vmatprep.subr.mxu0 0.0
    %1255 = vmatpush2.msra.mxu0 0.0
    %1256 = vmatprep.mubr.f32.mxu0 0.0
    %1257 = vmatmul.mubr.f32.gmra.mxu0 %v906
    %v1258 = vpop.f32.mrf.mxu0
    %v1259 = vadd.f32 %v864, %v1258
    %v1260 = vpop.f32.mrf.mxu0
    %v1261 = vadd.f32 %v868, %v1260
    %1262 = vdwg.mxu0
    %1263 = vmatprep.subr.mxu0 0.0
    %1264 = vmatpush1.msra.mxu0 0.0
    %1265 = vmatprep.subr.mxu0 0.0
    %1266 = vmatpush1.msra.mxu0 0.0
    %1267 = vmatprep.subr.mxu0 0.0
    %1268 = vmatpush1.msra.mxu0 0.0
    %1269 = vmatprep.subr.mxu0 0.0
    %1270 = vmatpush1.msra.mxu0 0.0
    %1271 = vmatprep.subr.mxu0 0.0
    %1272 = vmatpush1.msra.mxu0 0.0
    %1273 = vmatprep.subr.mxu0 0.0
    %1274 = vmatpush1.msra.mxu0 0.0
    %1275 = vmatprep.subr.mxu0 0.0
    %1276 = vmatpush1.msra.mxu0 0.0
    %1277 = vmatprep.subr.mxu0 0.0
    %1278 = vmatpush1.msra.mxu0 0.0
    %1279 = vmatprep.subr.mxu0 0.0
    %1280 = vmatpush1.msra.mxu0 0.0
    %1281 = vmatprep.subr.mxu0 0.0
    %1282 = vmatpush1.msra.mxu0 0.0
    %1283 = vmatprep.subr.mxu0 0.0
    %1284 = vmatpush1.msra.mxu0 0.0
    %1285 = vmatprep.subr.mxu0 0.0
    %1286 = vmatpush1.msra.mxu0 0.0
    %1287 = vmatprep.subr.mxu0 0.0
    %1288 = vmatpush1.msra.mxu0 0.0
    %1289 = vmatprep.subr.mxu0 0.0
    %1290 = vmatpush1.msra.mxu0 0.0
    %1291 = vmatprep.subr.mxu0 %v824
    %1292 = vmatpush1.msra.mxu0 %v823
    %1293 = vmatprep.subr.mxu0 %v812
    %1294 = vmatpush1.msra.mxu0 %v811
    %1295 = vmatprep.subr.mxu0 0.0
    %1296 = vmatpush2.msra.mxu0 0.0
    %1297 = vmatprep.subr.mxu0 0.0
    %1298 = vmatpush2.msra.mxu0 0.0
    %1299 = vmatprep.subr.mxu0 0.0
    %1300 = vmatpush2.msra.mxu0 0.0
    %1301 = vmatprep.subr.mxu0 0.0
    %1302 = vmatpush2.msra.mxu0 0.0
    %1303 = vmatprep.subr.mxu0 0.0
    %1304 = vmatpush2.msra.mxu0 0.0
    %1305 = vmatprep.subr.mxu0 0.0
    %1306 = vmatpush2.msra.mxu0 0.0
    %1307 = vmatprep.subr.mxu0 0.0
    %1308 = vmatpush2.msra.mxu0 0.0
    %1309 = vmatprep.subr.mxu0 0.0
    %1310 = vmatpush2.msra.mxu0 0.0
    %1311 = vmatprep.subr.mxu0 0.0
    %1312 = vmatpush2.msra.mxu0 0.0
    %1313 = vmatprep.subr.mxu0 0.0
    %1314 = vmatpush2.msra.mxu0 0.0
    %1315 = vmatprep.subr.mxu0 0.0
    %1316 = vmatpush2.msra.mxu0 0.0
    %1317 = vmatprep.subr.mxu0 0.0
    %1318 = vmatpush2.msra.mxu0 0.0
    %1319 = vmatprep.subr.mxu0 0.0
    %1320 = vmatpush2.msra.mxu0 0.0
    %1321 = vmatprep.subr.mxu0 0.0
    %1322 = vmatpush2.msra.mxu0 0.0
    %1323 = vmatprep.subr.mxu0 0.0
    %1324 = vmatpush2.msra.mxu0 0.0
    %1325 = vmatprep.subr.mxu0 0.0
    %1326 = vmatpush2.msra.mxu0 0.0
    %1327 = vmatprep.mubr.f32.mxu0 0.0
    %1328 = vmatmul.mubr.f32.gmra.mxu0 %v906
    %v1329 = vpop.f32.mrf.mxu0
    %v1330 = vadd.f32 %v872, %v1329
    %v1331 = vpop.f32.mrf.mxu0
    %v1332 = vadd.f32 %v876, %v1331
    %1333 = vdwg.mxu0
    %v1334 = vld [vmem:[#allocation9] sm:$0xff]
    %v1335 = vld [vmem:[#allocation9 + $0x8] sm:$0xff]
    %v1337 = vsel %vm370, %v261, 0
    %v1340 = vsel %vm370, %v262, 0
    %1342 = vmatprep.subr.mxu0 0.0
    %1343 = vmatpush1.msra.mxu0 0.0
    %1344 = vmatprep.subr.mxu0 0.0
    %1345 = vmatpush1.msra.mxu0 0.0
    %1346 = vmatprep.subr.mxu0 0.0
    %1347 = vmatpush1.msra.mxu0 0.0
    %1348 = vmatprep.subr.mxu0 0.0
    %1349 = vmatpush1.msra.mxu0 0.0
    %1350 = vmatprep.subr.mxu0 0.0
    %1351 = vmatpush1.msra.mxu0 0.0
    %1352 = vmatprep.subr.mxu0 0.0
    %1353 = vmatpush1.msra.mxu0 0.0
    %1354 = vmatprep.subr.mxu0 0.0
    %1355 = vmatpush1.msra.mxu0 0.0
    %1356 = vmatprep.subr.mxu0 0.0
    %1357 = vmatpush1.msra.mxu0 0.0
    %1358 = vmatprep.subr.mxu0 0.0
    %1359 = vmatpush1.msra.mxu0 0.0
    %1360 = vmatprep.subr.mxu0 0.0
    %1361 = vmatpush1.msra.mxu0 0.0
    %1362 = vmatprep.subr.mxu0 0.0
    %1363 = vmatpush1.msra.mxu0 0.0
    %1364 = vmatprep.subr.mxu0 0.0
    %1365 = vmatpush1.msra.mxu0 0.0
    %1366 = vmatprep.subr.mxu0 0.0
    %1367 = vmatpush1.msra.mxu0 0.0
    %1368 = vmatprep.subr.mxu0 0.0
    %1369 = vmatpush1.msra.mxu0 0.0
    %1370 = vmatprep.subr.mxu0 0.0
    %1371 = vmatpush1.msra.mxu0 %v1335
    %1372 = vmatprep.subr.mxu0 0.0
    %1373 = vmatpush1.msra.mxu0 %v1334
    %1374 = vmatprep.subr.mxu0 0.0
    %1375 = vmatpush2.msra.mxu0 0.0
    %1376 = vmatprep.subr.mxu0 0.0
    %1377 = vmatpush2.msra.mxu0 0.0
    %1378 = vmatprep.subr.mxu0 0.0
    %1379 = vmatpush2.msra.mxu0 0.0
    %1380 = vmatprep.subr.mxu0 0.0
    %1381 = vmatpush2.msra.mxu0 0.0
    %1382 = vmatprep.subr.mxu0 0.0
    %1383 = vmatpush2.msra.mxu0 0.0
    %1384 = vmatprep.subr.mxu0 0.0
    %1385 = vmatpush2.msra.mxu0 0.0
    %1386 = vmatprep.subr.mxu0 0.0
    %1387 = vmatpush2.msra.mxu0 0.0
    %1388 = vmatprep.subr.mxu0 0.0
    %1389 = vmatpush2.msra.mxu0 0.0
    %1390 = vmatprep.subr.mxu0 0.0
    %1391 = vmatpush2.msra.mxu0 0.0
    %1392 = vmatprep.subr.mxu0 0.0
    %1393 = vmatpush2.msra.mxu0 0.0
    %1394 = vmatprep.subr.mxu0 0.0
    %1395 = vmatpush2.msra.mxu0 0.0
    %1396 = vmatprep.subr.mxu0 0.0
    %1397 = vmatpush2.msra.mxu0 0.0
    %1398 = vmatprep.subr.mxu0 0.0
    %1399 = vmatpush2.msra.mxu0 0.0
    %1400 = vmatprep.subr.mxu0 0.0
    %1401 = vmatpush2.msra.mxu0 0.0
    %1402 = vmatprep.subr.mxu0 0.0
    %1403 = vmatpush2.msra.mxu0 0.0
    %1404 = vmatprep.subr.mxu0 0.0
    %1405 = vmatpush2.msra.mxu0 0.0
    %1406 = vmatprep.mubr.f32.mxu0 0.0
    %1407 = vmatmul.mubr.f32.gmra.mxu0 %v1337
    %v1408 = vpop.f32.mrf.mxu0
    %v1409 = vadd.f32 0.0, %v1408
    %v1410 = vpop.f32.mrf.mxu0
    %1411 = vmatprep.mubr.f32.mxu0 0.0
    %1412 = vmatmul.mubr.f32.gmra.mxu0 %v1340
    %v1413 = vpop.f32.mrf.mxu0
    %v1414 = vadd.f32 0.0, %v1413
    %v1415 = vpop.f32.mrf.mxu0
    %1416 = vdwg.mxu0
    %v1417 = vsel %vm370, %v1409, 0.0
    %v1418 = vrot.slane %v1417, 4
    %v1419 = vadd.f32 %v1417, %v1418
    %v1420 = vrot.slane %v1419, 2
    %v1421 = vadd.f32 %v1419, %v1420
    %v1422 = vrot.slane %v1421, 1
    %v1423 = vadd.f32 %v1421, %v1422
    %v1424 = vsel %vm370, %v1414, 0.0
    %v1425 = vrot.slane %v1424, 4
    %v1426 = vadd.f32 %v1424, %v1425
    %v1427 = vrot.slane %v1426, 2
    %v1428 = vadd.f32 %v1426, %v1427
    %v1429 = vrot.slane %v1428, 1
    %v1430 = vadd.f32 %v1428, %v1429
    %v1431 = vmul.f32 %v1423, 0.125
    %v1432 = vmul.f32 %v1430, 0.125
    %v1433 = vmul.f32 %v1409, %v1409
    %v1434 = vmul.f32 %v1414, %v1414
    %v1435 = vsel %vm370, %v1433, 0.0
    %v1436 = vrot.slane %v1435, 4
    %v1437 = vadd.f32 %v1435, %v1436
    %v1438 = vrot.slane %v1437, 2
    %v1439 = vadd.f32 %v1437, %v1438
    %v1440 = vrot.slane %v1439, 1
    %v1441 = vadd.f32 %v1439, %v1440
    %v1442 = vsel %vm370, %v1434, 0.0
    %v1443 = vrot.slane %v1442, 4
    %v1444 = vadd.f32 %v1442, %v1443
    %v1445 = vrot.slane %v1444, 2
    %v1446 = vadd.f32 %v1444, %v1445
    %v1447 = vrot.slane %v1446, 1
    %v1448 = vadd.f32 %v1446, %v1447
    %v1449 = vmul.f32 %v1441, 0.125
    %v1450 = vmul.f32 %v1448, 0.125
    %v1451 = vmul.f32 %v1431, %v1431
    %v1452 = vmul.f32 %v1432, %v1432
    %v1453 = vsub.f32 %v1449, %v1451
    %v1454 = vsub.f32 %v1450, %v1452
    %v1455 = vmax.f32 %v1453, 0.0
    %v1456 = vmax.f32 %v1454, 0.0
    %v1459 = vunpack.c.l.s4 1966171168
    %v1460 = vunpack.c.0.s8 %v1459
    %v1461 = vlaneseq
    %v1462 = vshrl.u32 %v1461, 7
    %v1463 = vsub.s32 %v1460, %v1462
    %v1464 = vrot.slane %v440, %v1463
    %v1465 = vcombine.high %v1464, %v1464
    %v1467 = vunpack.c.l.s4 1966171168
    %v1468 = vunpack.c.0.s8 %v1467
    %v1469 = vlaneseq
    %v1470 = vshrl.u32 %v1469, 7
    %v1471 = vsub.s32 %v1468, %v1470
    %v1472 = vrot.slane %v1464, %v1471
    %v1474 = vunpack.c.l.s4 1966171168
    %v1475 = vunpack.c.0.s8 %v1474
    %v1476 = vlaneseq
    %v1477 = vshrl.u32 %v1476, 7
    %v1478 = vsub.s32 %v1475, %v1477
    %v1479 = vrot.slane %v1465, %v1478
    %v1484 = vunpack.c.l.s4 1966171168
    %v1485 = vunpack.c.0.s8 %v1484
    %v1486 = vlaneseq
    %v1487 = vshrl.u32 %v1486, 7
    %v1488 = vsub.s32 %v1485, %v1487
    %v1489 = vrot.slane %v442, %v1488
    %v1490 = vcombine.high %v1489, %v1489
    %v1492 = vunpack.c.l.s4 1966171168
    %v1493 = vunpack.c.0.s8 %v1492
    %v1494 = vlaneseq
    %v1495 = vshrl.u32 %v1494, 7
    %v1496 = vsub.s32 %v1493, %v1495
    %v1497 = vrot.slane %v1489, %v1496
    %v1499 = vunpack.c.l.s4 1966171168
    %v1500 = vunpack.c.0.s8 %v1499
    %v1501 = vlaneseq
    %v1502 = vshrl.u32 %v1501, 7
    %v1503 = vsub.s32 %v1500, %v1502
    %v1504 = vrot.slane %v1490, %v1503
    %v1507 = vadd.f32 %v1455, 1e-05
    %v1508 = vadd.f32 %v1456, 1e-05
    %v1509 = vrsqrt.pop %v1507
    %v1510 = vrsqrt.pop %v1508
    %v1511 = vmul.f32 %v1472, %v1509
    %v1512 = vmul.f32 %v1479, %v1510
    %v1513 = vmul.f32 %v1431, %v1511
    %v1514 = vmul.f32 %v1432, %v1512
    %v1515 = vsub.f32 %v1497, %v1513
    %v1516 = vsub.f32 %v1504, %v1514
    %v1519 = vlaneseq
    %v1520 = vshrl.u32 %v1519, 7
    %v1521 = vsub.s32 0, %v1520
    %v1522 = vrot.slane %v1511, %v1521
    %v1523 = vlaneseq
    %v1524 = vshrl.u32 %v1523, 7
    %v1525 = vsub.s32 0, %v1524
    %v1526 = vrot.slane %v1512, %v1525
    %v1529 = vmul.f32 %v1409, %v1522
    %v1530 = vmul.f32 %v1414, %v1526
    %v1533 = vlaneseq
    %v1534 = vshrl.u32 %v1533, 7
    %v1535 = vsub.s32 0, %v1534
    %v1536 = vrot.slane %v1515, %v1535
    %v1537 = vlaneseq
    %v1538 = vshrl.u32 %v1537, 7
    %v1539 = vsub.s32 0, %v1538
    %v1540 = vrot.slane %v1516, %v1539
    %v1543 = vadd.f32 %v1529, %v1536
    %v1544 = vadd.f32 %v1530, %v1540
    %v1545 = vmul.f32 %v1543, 0.2
    %v1546 = vmul.f32 %v1544, 0.2
    %v1547 = vmax.f32 %v1543, %v1545
    %v1548 = vmax.f32 %v1544, %v1546
    %v1549 = vld [vmem:[%s13] sm:$0xff]
    %v1550 = vld [vmem:[%s13 + $0x8] sm:$0xff]
    %1551 = vmatprep.subr.mxu0 0.0
    %1552 = vmatpush1.msra.mxu0 0.0
    %1553 = vmatprep.subr.mxu0 0.0
    %1554 = vmatpush1.msra.mxu0 0.0
    %1555 = vmatprep.subr.mxu0 0.0
    %1556 = vmatpush1.msra.mxu0 0.0
    %1557 = vmatprep.subr.mxu0 0.0
    %1558 = vmatpush1.msra.mxu0 0.0
    %1559 = vmatprep.subr.mxu0 0.0
    %1560 = vmatpush1.msra.mxu0 0.0
    %1561 = vmatprep.subr.mxu0 0.0
    %1562 = vmatpush1.msra.mxu0 0.0
    %1563 = vmatprep.subr.mxu0 0.0
    %1564 = vmatpush1.msra.mxu0 0.0
    %1565 = vmatprep.subr.mxu0 0.0
    %1566 = vmatpush1.msra.mxu0 0.0
    %1567 = vmatprep.subr.mxu0 0.0
    %1568 = vmatpush1.msra.mxu0 0.0
    %1569 = vmatprep.subr.mxu0 0.0
    %1570 = vmatpush1.msra.mxu0 0.0
    %1571 = vmatprep.subr.mxu0 0.0
    %1572 = vmatpush1.msra.mxu0 0.0
    %1573 = vmatprep.subr.mxu0 0.0
    %1574 = vmatpush1.msra.mxu0 0.0
    %1575 = vmatprep.subr.mxu0 0.0
    %1576 = vmatpush1.msra.mxu0 0.0
    %1577 = vmatprep.subr.mxu0 0.0
    %1578 = vmatpush1.msra.mxu0 0.0
    %1579 = vmatprep.subr.mxu0 0.0
    %1580 = vmatpush1.msra.mxu0 %v1550
    %1581 = vmatprep.subr.mxu0 0.0
    %1582 = vmatpush1.msra.mxu0 %v1549
    %1583 = vmatprep.subr.mxu0 0.0
    %1584 = vmatpush2.msra.mxu0 0.0
    %1585 = vmatprep.subr.mxu0 0.0
    %1586 = vmatpush2.msra.mxu0 0.0
    %1587 = vmatprep.subr.mxu0 0.0
    %1588 = vmatpush2.msra.mxu0 0.0
    %1589 = vmatprep.subr.mxu0 0.0
    %1590 = vmatpush2.msra.mxu0 0.0
    %1591 = vmatprep.subr.mxu0 0.0
    %1592 = vmatpush2.msra.mxu0 0.0
    %1593 = vmatprep.subr.mxu0 0.0
    %1594 = vmatpush2.msra.mxu0 0.0
    %1595 = vmatprep.subr.mxu0 0.0
    %1596 = vmatpush2.msra.mxu0 0.0
    %1597 = vmatprep.subr.mxu0 0.0
    %1598 = vmatpush2.msra.mxu0 0.0
    %1599 = vmatprep.subr.mxu0 0.0
    %1600 = vmatpush2.msra.mxu0 0.0
    %1601 = vmatprep.subr.mxu0 0.0
    %1602 = vmatpush2.msra.mxu0 0.0
    %1603 = vmatprep.subr.mxu0 0.0
    %1604 = vmatpush2.msra.mxu0 0.0
    %1605 = vmatprep.subr.mxu0 0.0
    %1606 = vmatpush2.msra.mxu0 0.0
    %1607 = vmatprep.subr.mxu0 0.0
    %1608 = vmatpush2.msra.mxu0 0.0
    %1609 = vmatprep.subr.mxu0 0.0
    %1610 = vmatpush2.msra.mxu0 0.0
    %1611 = vmatprep.subr.mxu0 0.0
    %1612 = vmatpush2.msra.mxu0 0.0
    %1613 = vmatprep.subr.mxu0 0.0
    %1614 = vmatpush2.msra.mxu0 0.0
    %1615 = vmatprep.mubr.f32.mxu0 0.0
    %1616 = vmatmul.mubr.f32.gmra.mxu0 %v1337
    %v1617 = vpop.f32.mrf.mxu0
    %v1618 = vadd.f32 0.0, %v1617
    %v1619 = vpop.f32.mrf.mxu0
    %1620 = vmatprep.mubr.f32.mxu0 0.0
    %1621 = vmatmul.mubr.f32.gmra.mxu0 %v1340
    %v1622 = vpop.f32.mrf.mxu0
    %v1623 = vadd.f32 0.0, %v1622
    %v1624 = vpop.f32.mrf.mxu0
    %1625 = vdwg.mxu0
    %v1626 = vsel %vm370, %v1618, 0.0
    %v1627 = vrot.slane %v1626, 4
    %v1628 = vadd.f32 %v1626, %v1627
    %v1629 = vrot.slane %v1628, 2
    %v1630 = vadd.f32 %v1628, %v1629
    %v1631 = vrot.slane %v1630, 1
    %v1632 = vadd.f32 %v1630, %v1631
    %v1633 = vsel %vm370, %v1623, 0.0
    %v1634 = vrot.slane %v1633, 4
    %v1635 = vadd.f32 %v1633, %v1634
    %v1636 = vrot.slane %v1635, 2
    %v1637 = vadd.f32 %v1635, %v1636
    %v1638 = vrot.slane %v1637, 1
    %v1639 = vadd.f32 %v1637, %v1638
    %v1640 = vmul.f32 %v1632, 0.125
    %v1641 = vmul.f32 %v1639, 0.125
    %v1642 = vmul.f32 %v1618, %v1618
    %v1643 = vmul.f32 %v1623, %v1623
    %v1644 = vsel %vm370, %v1642, 0.0
    %v1645 = vrot.slane %v1644, 4
    %v1646 = vadd.f32 %v1644, %v1645
    %v1647 = vrot.slane %v1646, 2
    %v1648 = vadd.f32 %v1646, %v1647
    %v1649 = vrot.slane %v1648, 1
    %v1650 = vadd.f32 %v1648, %v1649
    %v1651 = vsel %vm370, %v1643, 0.0
    %v1652 = vrot.slane %v1651, 4
    %v1653 = vadd.f32 %v1651, %v1652
    %v1654 = vrot.slane %v1653, 2
    %v1655 = vadd.f32 %v1653, %v1654
    %v1656 = vrot.slane %v1655, 1
    %v1657 = vadd.f32 %v1655, %v1656
    %v1658 = vmul.f32 %v1650, 0.125
    %v1659 = vmul.f32 %v1657, 0.125
    %v1660 = vmul.f32 %v1640, %v1640
    %v1661 = vmul.f32 %v1641, %v1641
    %v1662 = vsub.f32 %v1658, %v1660
    %v1663 = vsub.f32 %v1659, %v1661
    %v1664 = vmax.f32 %v1662, 0.0
    %v1665 = vmax.f32 %v1663, 0.0
    %v1668 = vunpack.c.l.s4 1966171168
    %v1669 = vunpack.c.0.s8 %v1668
    %v1670 = vlaneseq
    %v1671 = vshrl.u32 %v1670, 7
    %v1672 = vsub.s32 %v1669, %v1671
    %v1673 = vrot.slane %v975, %v1672
    %v1674 = vcombine.high %v1673, %v1673
    %v1676 = vunpack.c.l.s4 1966171168
    %v1677 = vunpack.c.0.s8 %v1676
    %v1678 = vlaneseq
    %v1679 = vshrl.u32 %v1678, 7
    %v1680 = vsub.s32 %v1677, %v1679
    %v1681 = vrot.slane %v1673, %v1680
    %v1683 = vunpack.c.l.s4 1966171168
    %v1684 = vunpack.c.0.s8 %v1683
    %v1685 = vlaneseq
    %v1686 = vshrl.u32 %v1685, 7
    %v1687 = vsub.s32 %v1684, %v1686
    %v1688 = vrot.slane %v1674, %v1687
    %v1693 = vunpack.c.l.s4 1966171168
    %v1694 = vunpack.c.0.s8 %v1693
    %v1695 = vlaneseq
    %v1696 = vshrl.u32 %v1695, 7
    %v1697 = vsub.s32 %v1694, %v1696
    %v1698 = vrot.slane %v977, %v1697
    %v1699 = vcombine.high %v1698, %v1698
    %v1701 = vunpack.c.l.s4 1966171168
    %v1702 = vunpack.c.0.s8 %v1701
    %v1703 = vlaneseq
    %v1704 = vshrl.u32 %v1703, 7
    %v1705 = vsub.s32 %v1702, %v1704
    %v1706 = vrot.slane %v1698, %v1705
    %v1708 = vunpack.c.l.s4 1966171168
    %v1709 = vunpack.c.0.s8 %v1708
    %v1710 = vlaneseq
    %v1711 = vshrl.u32 %v1710, 7
    %v1712 = vsub.s32 %v1709, %v1711
    %v1713 = vrot.slane %v1699, %v1712
    %v1716 = vadd.f32 %v1664, 1e-05
    %v1717 = vadd.f32 %v1665, 1e-05
    %v1718 = vrsqrt.pop %v1716
    %v1719 = vrsqrt.pop %v1717
    %v1720 = vmul.f32 %v1681, %v1718
    %v1721 = vmul.f32 %v1688, %v1719
    %v1722 = vmul.f32 %v1640, %v1720
    %v1723 = vmul.f32 %v1641, %v1721
    %v1724 = vsub.f32 %v1706, %v1722
    %v1725 = vsub.f32 %v1713, %v1723
    %v1728 = vlaneseq
    %v1729 = vshrl.u32 %v1728, 7
    %v1730 = vsub.s32 0, %v1729
    %v1731 = vrot.slane %v1720, %v1730
    %v1732 = vlaneseq
    %v1733 = vshrl.u32 %v1732, 7
    %v1734 = vsub.s32 0, %v1733
    %v1735 = vrot.slane %v1721, %v1734
    %v1738 = vmul.f32 %v1618, %v1731
    %v1739 = vmul.f32 %v1623, %v1735
    %v1742 = vlaneseq
    %v1743 = vshrl.u32 %v1742, 7
    %v1744 = vsub.s32 0, %v1743
    %v1745 = vrot.slane %v1724, %v1744
    %v1746 = vlaneseq
    %v1747 = vshrl.u32 %v1746, 7
    %v1748 = vsub.s32 0, %v1747
    %v1749 = vrot.slane %v1725, %v1748
    %v1752 = vadd.f32 %v1738, %v1745
    %v1753 = vadd.f32 %v1739, %v1749
    %v1754 = vmul.f32 %v1752, 0.2
    %v1755 = vmul.f32 %v1753, 0.2
    %v1756 = vmax.f32 %v1752, %v1754
    %v1757 = vmax.f32 %v1753, %v1755
    %v1758 = vld [vmem:[#allocation10] sm:$0xff]
    %v1759 = vld [vmem:[#allocation10 + $0x8] sm:$0xff]
    %v1761 = vsel %vm370, %v1547, 0
    %v1764 = vsel %vm370, %v1548, 0
    %1766 = vmatprep.subr.mxu0 0.0
    %1767 = vmatpush1.msra.mxu0 0.0
    %1768 = vmatprep.subr.mxu0 0.0
    %1769 = vmatpush1.msra.mxu0 0.0
    %1770 = vmatprep.subr.mxu0 0.0
    %1771 = vmatpush1.msra.mxu0 0.0
    %1772 = vmatprep.subr.mxu0 0.0
    %1773 = vmatpush1.msra.mxu0 0.0
    %1774 = vmatprep.subr.mxu0 0.0
    %1775 = vmatpush1.msra.mxu0 0.0
    %1776 = vmatprep.subr.mxu0 0.0
    %1777 = vmatpush1.msra.mxu0 0.0
    %1778 = vmatprep.subr.mxu0 0.0
    %1779 = vmatpush1.msra.mxu0 0.0
    %1780 = vmatprep.subr.mxu0 0.0
    %1781 = vmatpush1.msra.mxu0 0.0
    %1782 = vmatprep.subr.mxu0 0.0
    %1783 = vmatpush1.msra.mxu0 0.0
    %1784 = vmatprep.subr.mxu0 0.0
    %1785 = vmatpush1.msra.mxu0 0.0
    %1786 = vmatprep.subr.mxu0 0.0
    %1787 = vmatpush1.msra.mxu0 0.0
    %1788 = vmatprep.subr.mxu0 0.0
    %1789 = vmatpush1.msra.mxu0 0.0
    %1790 = vmatprep.subr.mxu0 0.0
    %1791 = vmatpush1.msra.mxu0 0.0
    %1792 = vmatprep.subr.mxu0 0.0
    %1793 = vmatpush1.msra.mxu0 0.0
    %1794 = vmatprep.subr.mxu0 0.0
    %1795 = vmatpush1.msra.mxu0 %v1759
    %1796 = vmatprep.subr.mxu0 0.0
    %1797 = vmatpush1.msra.mxu0 %v1758
    %1798 = vmatprep.subr.mxu0 0.0
    %1799 = vmatpush2.msra.mxu0 0.0
    %1800 = vmatprep.subr.mxu0 0.0
    %1801 = vmatpush2.msra.mxu0 0.0
    %1802 = vmatprep.subr.mxu0 0.0
    %1803 = vmatpush2.msra.mxu0 0.0
    %1804 = vmatprep.subr.mxu0 0.0
    %1805 = vmatpush2.msra.mxu0 0.0
    %1806 = vmatprep.subr.mxu0 0.0
    %1807 = vmatpush2.msra.mxu0 0.0
    %1808 = vmatprep.subr.mxu0 0.0
    %1809 = vmatpush2.msra.mxu0 0.0
    %1810 = vmatprep.subr.mxu0 0.0
    %1811 = vmatpush2.msra.mxu0 0.0
    %1812 = vmatprep.subr.mxu0 0.0
    %1813 = vmatpush2.msra.mxu0 0.0
    %1814 = vmatprep.subr.mxu0 0.0
    %1815 = vmatpush2.msra.mxu0 0.0
    %1816 = vmatprep.subr.mxu0 0.0
    %1817 = vmatpush2.msra.mxu0 0.0
    %1818 = vmatprep.subr.mxu0 0.0
    %1819 = vmatpush2.msra.mxu0 0.0
    %1820 = vmatprep.subr.mxu0 0.0
    %1821 = vmatpush2.msra.mxu0 0.0
    %1822 = vmatprep.subr.mxu0 0.0
    %1823 = vmatpush2.msra.mxu0 0.0
    %1824 = vmatprep.subr.mxu0 0.0
    %1825 = vmatpush2.msra.mxu0 0.0
    %1826 = vmatprep.subr.mxu0 0.0
    %1827 = vmatpush2.msra.mxu0 0.0
    %1828 = vmatprep.subr.mxu0 0.0
    %1829 = vmatpush2.msra.mxu0 0.0
    %1830 = vmatprep.mubr.f32.mxu0 0.0
    %1831 = vmatmul.mubr.f32.gmra.mxu0 %v1761
    %v1832 = vpop.f32.mrf.mxu0
    %v1833 = vadd.f32 0.0, %v1832
    %v1834 = vpop.f32.mrf.mxu0
    %1835 = vmatprep.mubr.f32.mxu0 0.0
    %1836 = vmatmul.mubr.f32.gmra.mxu0 %v1764
    %v1837 = vpop.f32.mrf.mxu0
    %v1838 = vadd.f32 0.0, %v1837
    %v1839 = vpop.f32.mrf.mxu0
    %1840 = vdwg.mxu0
    %vm1841 = vcmask 261120
    %v1842 = vsel %vm1841, %v1833, 0.0
    %v1843 = vrot.slane %v1842, 4
    %v1844 = vadd.f32 %v1842, %v1843
    %v1845 = vrot.slane %v1844, 2
    %v1846 = vadd.f32 %v1844, %v1845
    %v1847 = vrot.slane %v1846, 1
    %v1848 = vadd.f32 %v1846, %v1847
    %v1849 = vsel %vm1841, %v1838, 0.0
    %v1850 = vrot.slane %v1849, 4
    %v1851 = vadd.f32 %v1849, %v1850
    %v1852 = vrot.slane %v1851, 2
    %v1853 = vadd.f32 %v1851, %v1852
    %v1854 = vrot.slane %v1853, 1
    %v1855 = vadd.f32 %v1853, %v1854
    %v1856 = vmul.f32 %v1848, 0.125
    %v1857 = vmul.f32 %v1855, 0.125
    %v1858 = vmul.f32 %v1833, %v1833
    %v1859 = vmul.f32 %v1838, %v1838
    %v1860 = vsel %vm1841, %v1858, 0.0
    %v1861 = vrot.slane %v1860, 4
    %v1862 = vadd.f32 %v1860, %v1861
    %v1863 = vrot.slane %v1862, 2
    %v1864 = vadd.f32 %v1862, %v1863
    %v1865 = vrot.slane %v1864, 1
    %v1866 = vadd.f32 %v1864, %v1865
    %v1867 = vsel %vm1841, %v1859, 0.0
    %v1868 = vrot.slane %v1867, 4
    %v1869 = vadd.f32 %v1867, %v1868
    %v1870 = vrot.slane %v1869, 2
    %v1871 = vadd.f32 %v1869, %v1870
    %v1872 = vrot.slane %v1871, 1
    %v1873 = vadd.f32 %v1871, %v1872
    %v1874 = vmul.f32 %v1866, 0.125
    %v1875 = vmul.f32 %v1873, 0.125
    %v1876 = vmul.f32 %v1856, %v1856
    %v1877 = vmul.f32 %v1857, %v1857
    %v1878 = vsub.f32 %v1874, %v1876
    %v1879 = vsub.f32 %v1875, %v1877
    %v1880 = vmax.f32 %v1878, 0.0
    %v1881 = vmax.f32 %v1879, 0.0
    %v1884 = vunpack.c.l.s4 1966171168
    %v1885 = vunpack.c.0.s8 %v1884
    %v1886 = vlaneseq
    %v1887 = vshrl.u32 %v1886, 7
    %v1888 = vsub.s32 %v1885, %v1887
    %v1889 = vrot.slane %v511, %v1888
    %v1890 = vcombine.high %v1889, %v1889
    %v1892 = vunpack.c.l.s4 1966171168
    %v1893 = vunpack.c.0.s8 %v1892
    %v1894 = vlaneseq
    %v1895 = vshrl.u32 %v1894, 7
    %v1896 = vsub.s32 %v1893, %v1895
    %v1897 = vrot.slane %v1889, %v1896
    %v1899 = vunpack.c.l.s4 1966171168
    %v1900 = vunpack.c.0.s8 %v1899
    %v1901 = vlaneseq
    %v1902 = vshrl.u32 %v1901, 7
    %v1903 = vsub.s32 %v1900, %v1902
    %v1904 = vrot.slane %v1890, %v1903
    %v1909 = vunpack.c.l.s4 1966171168
    %v1910 = vunpack.c.0.s8 %v1909
    %v1911 = vlaneseq
    %v1912 = vshrl.u32 %v1911, 7
    %v1913 = vsub.s32 %v1910, %v1912
    %v1914 = vrot.slane %v513, %v1913
    %v1915 = vcombine.high %v1914, %v1914
    %v1917 = vunpack.c.l.s4 1966171168
    %v1918 = vunpack.c.0.s8 %v1917
    %v1919 = vlaneseq
    %v1920 = vshrl.u32 %v1919, 7
    %v1921 = vsub.s32 %v1918, %v1920
    %v1922 = vrot.slane %v1914, %v1921
    %v1924 = vunpack.c.l.s4 1966171168
    %v1925 = vunpack.c.0.s8 %v1924
    %v1926 = vlaneseq
    %v1927 = vshrl.u32 %v1926, 7
    %v1928 = vsub.s32 %v1925, %v1927
    %v1929 = vrot.slane %v1915, %v1928
    %v1932 = vadd.f32 %v1880, 1e-05
    %v1933 = vadd.f32 %v1881, 1e-05
    %v1934 = vrsqrt.pop %v1932
    %v1935 = vrsqrt.pop %v1933
    %v1936 = vmul.f32 %v1897, %v1934
    %v1937 = vmul.f32 %v1904, %v1935
    %v1938 = vmul.f32 %v1856, %v1936
    %v1939 = vmul.f32 %v1857, %v1937
    %v1940 = vsub.f32 %v1922, %v1938
    %v1941 = vsub.f32 %v1929, %v1939
    %v1944 = vlaneseq
    %v1945 = vshrl.u32 %v1944, 7
    %v1946 = vsub.s32 0, %v1945
    %v1947 = vrot.slane %v1936, %v1946
    %v1948 = vlaneseq
    %v1949 = vshrl.u32 %v1948, 7
    %v1950 = vsub.s32 0, %v1949
    %v1951 = vrot.slane %v1937, %v1950
    %v1954 = vmul.f32 %v1833, %v1947
    %v1955 = vmul.f32 %v1838, %v1951
    %v1958 = vlaneseq
    %v1959 = vshrl.u32 %v1958, 7
    %v1960 = vsub.s32 0, %v1959
    %v1961 = vrot.slane %v1940, %v1960
    %v1962 = vlaneseq
    %v1963 = vshrl.u32 %v1962, 7
    %v1964 = vsub.s32 0, %v1963
    %v1965 = vrot.slane %v1941, %v1964
    %v1968 = vadd.f32 %v1954, %v1961
    %v1969 = vadd.f32 %v1955, %v1965
    %v1970 = vmul.f32 %v1968, 0.2
    %v1971 = vmul.f32 %v1969, 0.2
    %v1972 = vmax.f32 %v1968, %v1970
    %v1973 = vmax.f32 %v1969, %v1971
    %v1974 = vld [vmem:[#allocation18] sm:$0xff]
    %v1975 = vld [vmem:[#allocation18 + $0x8] sm:$0xff]
    %v1977 = vsel %vm370, %v1756, 0
    %v1980 = vsel %vm370, %v1757, 0
    %1982 = vmatprep.subr.mxu0 0.0
    %1983 = vmatpush1.msra.mxu0 0.0
    %1984 = vmatprep.subr.mxu0 0.0
    %1985 = vmatpush1.msra.mxu0 0.0
    %1986 = vmatprep.subr.mxu0 0.0
    %1987 = vmatpush1.msra.mxu0 0.0
    %1988 = vmatprep.subr.mxu0 0.0
    %1989 = vmatpush1.msra.mxu0 0.0
    %1990 = vmatprep.subr.mxu0 0.0
    %1991 = vmatpush1.msra.mxu0 0.0
    %1992 = vmatprep.subr.mxu0 0.0
    %1993 = vmatpush1.msra.mxu0 0.0
    %1994 = vmatprep.subr.mxu0 0.0
    %1995 = vmatpush1.msra.mxu0 0.0
    %1996 = vmatprep.subr.mxu0 0.0
    %1997 = vmatpush1.msra.mxu0 0.0
    %1998 = vmatprep.subr.mxu0 0.0
    %1999 = vmatpush1.msra.mxu0 0.0
    %2000 = vmatprep.subr.mxu0 0.0
    %2001 = vmatpush1.msra.mxu0 0.0
    %2002 = vmatprep.subr.mxu0 0.0
    %2003 = vmatpush1.msra.mxu0 0.0
    %2004 = vmatprep.subr.mxu0 0.0
    %2005 = vmatpush1.msra.mxu0 0.0
    %2006 = vmatprep.subr.mxu0 0.0
    %2007 = vmatpush1.msra.mxu0 0.0
    %2008 = vmatprep.subr.mxu0 0.0
    %2009 = vmatpush1.msra.mxu0 0.0
    %2010 = vmatprep.subr.mxu0 0.0
    %2011 = vmatpush1.msra.mxu0 %v1975
    %2012 = vmatprep.subr.mxu0 0.0
    %2013 = vmatpush1.msra.mxu0 %v1974
    %2014 = vmatprep.subr.mxu0 0.0
    %2015 = vmatpush2.msra.mxu0 0.0
    %2016 = vmatprep.subr.mxu0 0.0
    %2017 = vmatpush2.msra.mxu0 0.0
    %2018 = vmatprep.subr.mxu0 0.0
    %2019 = vmatpush2.msra.mxu0 0.0
    %2020 = vmatprep.subr.mxu0 0.0
    %2021 = vmatpush2.msra.mxu0 0.0
    %2022 = vmatprep.subr.mxu0 0.0
    %2023 = vmatpush2.msra.mxu0 0.0
    %2024 = vmatprep.subr.mxu0 0.0
    %2025 = vmatpush2.msra.mxu0 0.0
    %2026 = vmatprep.subr.mxu0 0.0
    %2027 = vmatpush2.msra.mxu0 0.0
    %2028 = vmatprep.subr.mxu0 0.0
    %2029 = vmatpush2.msra.mxu0 0.0
    %2030 = vmatprep.subr.mxu0 0.0
    %2031 = vmatpush2.msra.mxu0 0.0
    %2032 = vmatprep.subr.mxu0 0.0
    %2033 = vmatpush2.msra.mxu0 0.0
    %2034 = vmatprep.subr.mxu0 0.0
    %2035 = vmatpush2.msra.mxu0 0.0
    %2036 = vmatprep.subr.mxu0 0.0
    %2037 = vmatpush2.msra.mxu0 0.0
    %2038 = vmatprep.subr.mxu0 0.0
    %2039 = vmatpush2.msra.mxu0 0.0
    %2040 = vmatprep.subr.mxu0 0.0
    %2041 = vmatpush2.msra.mxu0 0.0
    %2042 = vmatprep.subr.mxu0 0.0
    %2043 = vmatpush2.msra.mxu0 0.0
    %2044 = vmatprep.subr.mxu0 0.0
    %2045 = vmatpush2.msra.mxu0 0.0
    %2046 = vmatprep.mubr.f32.mxu0 0.0
    %2047 = vmatmul.mubr.f32.gmra.mxu0 %v1977
    %v2048 = vpop.f32.mrf.mxu0
    %v2049 = vadd.f32 0.0, %v2048
    %v2050 = vpop.f32.mrf.mxu0
    %2051 = vmatprep.mubr.f32.mxu0 0.0
    %2052 = vmatmul.mubr.f32.gmra.mxu0 %v1980
    %v2053 = vpop.f32.mrf.mxu0
    %v2054 = vadd.f32 0.0, %v2053
    %v2055 = vpop.f32.mrf.mxu0
    %2056 = vdwg.mxu0
    %v2057 = vsel %vm1841, %v2049, 0.0
    %v2058 = vrot.slane %v2057, 4
    %v2059 = vadd.f32 %v2057, %v2058
    %v2060 = vrot.slane %v2059, 2
    %v2061 = vadd.f32 %v2059, %v2060
    %v2062 = vrot.slane %v2061, 1
    %v2063 = vadd.f32 %v2061, %v2062
    %v2064 = vsel %vm1841, %v2054, 0.0
    %v2065 = vrot.slane %v2064, 4
    %v2066 = vadd.f32 %v2064, %v2065
    %v2067 = vrot.slane %v2066, 2
    %v2068 = vadd.f32 %v2066, %v2067
    %v2069 = vrot.slane %v2068, 1
    %v2070 = vadd.f32 %v2068, %v2069
    %v2071 = vmul.f32 %v2063, 0.125
    %v2072 = vmul.f32 %v2070, 0.125
    %v2073 = vmul.f32 %v2049, %v2049
    %v2074 = vmul.f32 %v2054, %v2054
    %v2075 = vsel %vm1841, %v2073, 0.0
    %v2076 = vrot.slane %v2075, 4
    %v2077 = vadd.f32 %v2075, %v2076
    %v2078 = vrot.slane %v2077, 2
    %v2079 = vadd.f32 %v2077, %v2078
    %v2080 = vrot.slane %v2079, 1
    %v2081 = vadd.f32 %v2079, %v2080
    %v2082 = vsel %vm1841, %v2074, 0.0
    %v2083 = vrot.slane %v2082, 4
    %v2084 = vadd.f32 %v2082, %v2083
    %v2085 = vrot.slane %v2084, 2
    %v2086 = vadd.f32 %v2084, %v2085
    %v2087 = vrot.slane %v2086, 1
    %v2088 = vadd.f32 %v2086, %v2087
    %v2089 = vmul.f32 %v2081, 0.125
    %v2090 = vmul.f32 %v2088, 0.125
    %v2091 = vmul.f32 %v2071, %v2071
    %v2092 = vmul.f32 %v2072, %v2072
    %v2093 = vsub.f32 %v2089, %v2091
    %v2094 = vsub.f32 %v2090, %v2092
    %v2095 = vmax.f32 %v2093, 0.0
    %v2096 = vmax.f32 %v2094, 0.0
    %v2099 = vunpack.c.l.s4 1966171168
    %v2100 = vunpack.c.0.s8 %v2099
    %v2101 = vlaneseq
    %v2102 = vshrl.u32 %v2101, 7
    %v2103 = vsub.s32 %v2100, %v2102
    %v2104 = vrot.slane %v1046, %v2103
    %v2105 = vcombine.high %v2104, %v2104
    %v2107 = vunpack.c.l.s4 1966171168
    %v2108 = vunpack.c.0.s8 %v2107
    %v2109 = vlaneseq
    %v2110 = vshrl.u32 %v2109, 7
    %v2111 = vsub.s32 %v2108, %v2110
    %v2112 = vrot.slane %v2104, %v2111
    %v2114 = vunpack.c.l.s4 1966171168
    %v2115 = vunpack.c.0.s8 %v2114
    %v2116 = vlaneseq
    %v2117 = vshrl.u32 %v2116, 7
    %v2118 = vsub.s32 %v2115, %v2117
    %v2119 = vrot.slane %v2105, %v2118
    %v2124 = vunpack.c.l.s4 1966171168
    %v2125 = vunpack.c.0.s8 %v2124
    %v2126 = vlaneseq
    %v2127 = vshrl.u32 %v2126, 7
    %v2128 = vsub.s32 %v2125, %v2127
    %v2129 = vrot.slane %v1048, %v2128
    %v2130 = vcombine.high %v2129, %v2129
    %v2132 = vunpack.c.l.s4 1966171168
    %v2133 = vunpack.c.0.s8 %v2132
    %v2134 = vlaneseq
    %v2135 = vshrl.u32 %v2134, 7
    %v2136 = vsub.s32 %v2133, %v2135
    %v2137 = vrot.slane %v2129, %v2136
    %v2139 = vunpack.c.l.s4 1966171168
    %v2140 = vunpack.c.0.s8 %v2139
    %v2141 = vlaneseq
    %v2142 = vshrl.u32 %v2141, 7
    %v2143 = vsub.s32 %v2140, %v2142
    %v2144 = vrot.slane %v2130, %v2143
    %v2147 = vadd.f32 %v2095, 1e-05
    %v2148 = vadd.f32 %v2096, 1e-05
    %v2149 = vrsqrt.pop %v2147
    %v2150 = vrsqrt.pop %v2148
    %v2151 = vmul.f32 %v2112, %v2149
    %v2152 = vmul.f32 %v2119, %v2150
    %v2153 = vmul.f32 %v2071, %v2151
    %v2154 = vmul.f32 %v2072, %v2152
    %v2155 = vsub.f32 %v2137, %v2153
    %v2156 = vsub.f32 %v2144, %v2154
    %v2159 = vlaneseq
    %v2160 = vshrl.u32 %v2159, 7
    %v2161 = vsub.s32 0, %v2160
    %v2162 = vrot.slane %v2151, %v2161
    %v2163 = vlaneseq
    %v2164 = vshrl.u32 %v2163, 7
    %v2165 = vsub.s32 0, %v2164
    %v2166 = vrot.slane %v2152, %v2165
    %v2169 = vmul.f32 %v2049, %v2162
    %v2170 = vmul.f32 %v2054, %v2166
    %v2173 = vlaneseq
    %v2174 = vshrl.u32 %v2173, 7
    %v2175 = vsub.s32 0, %v2174
    %v2176 = vrot.slane %v2155, %v2175
    %v2177 = vlaneseq
    %v2178 = vshrl.u32 %v2177, 7
    %v2179 = vsub.s32 0, %v2178
    %v2180 = vrot.slane %v2156, %v2179
    %v2183 = vadd.f32 %v2169, %v2176
    %v2184 = vadd.f32 %v2170, %v2180
    %v2185 = vmul.f32 %v2183, 0.2
    %v2186 = vmul.f32 %v2184, 0.2
    %v2187 = vmax.f32 %v2183, %v2185
    %v2188 = vmax.f32 %v2184, %v2186
    %v2189 = vld [vmem:[#allocation12] sm:$0xff]
    %v2190 = vld [vmem:[#allocation12 + $0x8] sm:$0xff]
    %v2191 = vld [vmem:[#allocation12 + $0x10] sm:$0xff]
    %v2192 = vld [vmem:[#allocation12 + $0x18] sm:$0xff]
    %v2194 = vsel %vm1841, %v1972, 0
    %v2197 = vsel %vm1841, %v1973, 0
    %2199 = vmatprep.subr.mxu0 0.0
    %2200 = vmatpush1.msra.mxu0 0.0
    %2201 = vmatprep.subr.mxu0 0.0
    %2202 = vmatpush1.msra.mxu0 0.0
    %2203 = vmatprep.subr.mxu0 0.0
    %2204 = vmatpush1.msra.mxu0 0.0
    %2205 = vmatprep.subr.mxu0 0.0
    %2206 = vmatpush1.msra.mxu0 0.0
    %2207 = vmatprep.subr.mxu0 0.0
    %2208 = vmatpush1.msra.mxu0 0.0
    %2209 = vmatprep.subr.mxu0 0.0
    %2210 = vmatpush1.msra.mxu0 0.0
    %2211 = vmatprep.subr.mxu0 0.0
    %2212 = vmatpush1.msra.mxu0 0.0
    %2213 = vmatprep.subr.mxu0 0.0
    %2214 = vmatpush1.msra.mxu0 0.0
    %2215 = vmatprep.subr.mxu0 0.0
    %2216 = vmatpush1.msra.mxu0 0.0
    %2217 = vmatprep.subr.mxu0 0.0
    %2218 = vmatpush1.msra.mxu0 0.0
    %2219 = vmatprep.subr.mxu0 0.0
    %2220 = vmatpush1.msra.mxu0 0.0
    %2221 = vmatprep.subr.mxu0 0.0
    %2222 = vmatpush1.msra.mxu0 0.0
    %2223 = vmatprep.subr.mxu0 0.0
    %2224 = vmatpush1.msra.mxu0 %v2192
    %2225 = vmatprep.subr.mxu0 0.0
    %2226 = vmatpush1.msra.mxu0 %v2191
    %2227 = vmatprep.subr.mxu0 0.0
    %2228 = vmatpush1.msra.mxu0 %v2190
    %2229 = vmatprep.subr.mxu0 0.0
    %2230 = vmatpush1.msra.mxu0 %v2189
    %2231 = vmatprep.subr.mxu0 0.0
    %2232 = vmatpush2.msra.mxu0 0.0
    %2233 = vmatprep.subr.mxu0 0.0
    %2234 = vmatpush2.msra.mxu0 0.0
    %2235 = vmatprep.subr.mxu0 0.0
    %2236 = vmatpush2.msra.mxu0 0.0
    %2237 = vmatprep.subr.mxu0 0.0
    %2238 = vmatpush2.msra.mxu0 0.0
    %2239 = vmatprep.subr.mxu0 0.0
    %2240 = vmatpush2.msra.mxu0 0.0
    %2241 = vmatprep.subr.mxu0 0.0
    %2242 = vmatpush2.msra.mxu0 0.0
    %2243 = vmatprep.subr.mxu0 0.0
    %2244 = vmatpush2.msra.mxu0 0.0
    %2245 = vmatprep.subr.mxu0 0.0
    %2246 = vmatpush2.msra.mxu0 0.0
    %2247 = vmatprep.subr.mxu0 0.0
    %2248 = vmatpush2.msra.mxu0 0.0
    %2249 = vmatprep.subr.mxu0 0.0
    %2250 = vmatpush2.msra.mxu0 0.0
    %2251 = vmatprep.subr.mxu0 0.0
    %2252 = vmatpush2.msra.mxu0 0.0
    %2253 = vmatprep.subr.mxu0 0.0
    %2254 = vmatpush2.msra.mxu0 0.0
    %2255 = vmatprep.subr.mxu0 0.0
    %2256 = vmatpush2.msra.mxu0 0.0
    %2257 = vmatprep.subr.mxu0 0.0
    %2258 = vmatpush2.msra.mxu0 0.0
    %2259 = vmatprep.subr.mxu0 0.0
    %2260 = vmatpush2.msra.mxu0 0.0
    %2261 = vmatprep.subr.mxu0 0.0
    %2262 = vmatpush2.msra.mxu0 0.0
    %2263 = vmatprep.mubr.f32.mxu0 0.0
    %2264 = vmatmul.mubr.f32.gmra.mxu0 %v2194
    %v2265 = vpop.f32.mrf.mxu0
    %v2266 = vadd.f32 0.0, %v2265
    %v2267 = vpop.f32.mrf.mxu0
    %2268 = vmatprep.mubr.f32.mxu0 0.0
    %2269 = vmatmul.mubr.f32.gmra.mxu0 %v2197
    %v2270 = vpop.f32.mrf.mxu0
    %v2271 = vadd.f32 0.0, %v2270
    %v2272 = vpop.f32.mrf.mxu0
    %2273 = vdwg.mxu0
    %v2274 = vsel %vm1841, %v2266, 0.0
    %v2275 = vrot.slane %v2274, 4
    %v2276 = vadd.f32 %v2274, %v2275
    %v2277 = vrot.slane %v2276, 2
    %v2278 = vadd.f32 %v2276, %v2277
    %v2279 = vrot.slane %v2278, 1
    %v2280 = vadd.f32 %v2278, %v2279
    %v2281 = vsel %vm1841, %v2271, 0.0
    %v2282 = vrot.slane %v2281, 4
    %v2283 = vadd.f32 %v2281, %v2282
    %v2284 = vrot.slane %v2283, 2
    %v2285 = vadd.f32 %v2283, %v2284
    %v2286 = vrot.slane %v2285, 1
    %v2287 = vadd.f32 %v2285, %v2286
    %v2288 = vmul.f32 %v2280, 0.125
    %v2289 = vmul.f32 %v2287, 0.125
    %v2290 = vmul.f32 %v2266, %v2266
    %v2291 = vmul.f32 %v2271, %v2271
    %v2292 = vsel %vm1841, %v2290, 0.0
    %v2293 = vrot.slane %v2292, 4
    %v2294 = vadd.f32 %v2292, %v2293
    %v2295 = vrot.slane %v2294, 2
    %v2296 = vadd.f32 %v2294, %v2295
    %v2297 = vrot.slane %v2296, 1
    %v2298 = vadd.f32 %v2296, %v2297
    %v2299 = vsel %vm1841, %v2291, 0.0
    %v2300 = vrot.slane %v2299, 4
    %v2301 = vadd.f32 %v2299, %v2300
    %v2302 = vrot.slane %v2301, 2
    %v2303 = vadd.f32 %v2301, %v2302
    %v2304 = vrot.slane %v2303, 1
    %v2305 = vadd.f32 %v2303, %v2304
    %v2306 = vmul.f32 %v2298, 0.125
    %v2307 = vmul.f32 %v2305, 0.125
    %v2308 = vmul.f32 %v2288, %v2288
    %v2309 = vmul.f32 %v2289, %v2289
    %v2310 = vsub.f32 %v2306, %v2308
    %v2311 = vsub.f32 %v2307, %v2309
    %v2312 = vmax.f32 %v2310, 0.0
    %v2313 = vmax.f32 %v2311, 0.0
    %v2316 = vunpack.c.l.s4 1966171168
    %v2317 = vunpack.c.0.s8 %v2316
    %v2318 = vlaneseq
    %v2319 = vshrl.u32 %v2318, 7
    %v2320 = vsub.s32 %v2317, %v2319
    %v2321 = vrot.slane %v582, %v2320
    %v2322 = vcombine.high %v2321, %v2321
    %v2324 = vunpack.c.l.s4 1966171168
    %v2325 = vunpack.c.0.s8 %v2324
    %v2326 = vlaneseq
    %v2327 = vshrl.u32 %v2326, 7
    %v2328 = vsub.s32 %v2325, %v2327
    %v2329 = vrot.slane %v2321, %v2328
    %v2331 = vunpack.c.l.s4 1966171168
    %v2332 = vunpack.c.0.s8 %v2331
    %v2333 = vlaneseq
    %v2334 = vshrl.u32 %v2333, 7
    %v2335 = vsub.s32 %v2332, %v2334
    %v2336 = vrot.slane %v2322, %v2335
    %v2341 = vunpack.c.l.s4 1966171168
    %v2342 = vunpack.c.0.s8 %v2341
    %v2343 = vlaneseq
    %v2344 = vshrl.u32 %v2343, 7
    %v2345 = vsub.s32 %v2342, %v2344
    %v2346 = vrot.slane %v584, %v2345
    %v2347 = vcombine.high %v2346, %v2346
    %v2349 = vunpack.c.l.s4 1966171168
    %v2350 = vunpack.c.0.s8 %v2349
    %v2351 = vlaneseq
    %v2352 = vshrl.u32 %v2351, 7
    %v2353 = vsub.s32 %v2350, %v2352
    %v2354 = vrot.slane %v2346, %v2353
    %v2356 = vunpack.c.l.s4 1966171168
    %v2357 = vunpack.c.0.s8 %v2356
    %v2358 = vlaneseq
    %v2359 = vshrl.u32 %v2358, 7
    %v2360 = vsub.s32 %v2357, %v2359
    %v2361 = vrot.slane %v2347, %v2360
    %v2364 = vadd.f32 %v2312, 1e-05
    %v2365 = vadd.f32 %v2313, 1e-05
    %v2366 = vrsqrt.pop %v2364
    %v2367 = vrsqrt.pop %v2365
    %v2368 = vmul.f32 %v2329, %v2366
    %v2369 = vmul.f32 %v2336, %v2367
    %v2370 = vmul.f32 %v2288, %v2368
    %v2371 = vmul.f32 %v2289, %v2369
    %v2372 = vsub.f32 %v2354, %v2370
    %v2373 = vsub.f32 %v2361, %v2371
    %v2376 = vlaneseq
    %v2377 = vshrl.u32 %v2376, 7
    %v2378 = vsub.s32 0, %v2377
    %v2379 = vrot.slane %v2368, %v2378
    %v2380 = vlaneseq
    %v2381 = vshrl.u32 %v2380, 7
    %v2382 = vsub.s32 0, %v2381
    %v2383 = vrot.slane %v2369, %v2382
    %v2386 = vmul.f32 %v2266, %v2379
    %v2387 = vmul.f32 %v2271, %v2383
    %v2390 = vlaneseq
    %v2391 = vshrl.u32 %v2390, 7
    %v2392 = vsub.s32 0, %v2391
    %v2393 = vrot.slane %v2372, %v2392
    %v2394 = vlaneseq
    %v2395 = vshrl.u32 %v2394, 7
    %v2396 = vsub.s32 0, %v2395
    %v2397 = vrot.slane %v2373, %v2396
    %v2400 = vadd.f32 %v2386, %v2393
    %v2401 = vadd.f32 %v2387, %v2397
    %v2402 = vmul.f32 %v2400, 0.2
    %v2403 = vmul.f32 %v2401, 0.2
    %v2404 = vmax.f32 %v2400, %v2402
    %v2405 = vmax.f32 %v2401, %v2403
    %v2406 = vld [vmem:[#allocation19] sm:$0xff]
    %v2407 = vld [vmem:[#allocation19 + $0x8] sm:$0xff]
    %v2408 = vld [vmem:[#allocation19 + $0x10] sm:$0xff]
    %v2409 = vld [vmem:[#allocation19 + $0x18] sm:$0xff]
    %v2411 = vsel %vm1841, %v2187, 0
    %v2414 = vsel %vm1841, %v2188, 0
    %2416 = vmatprep.subr.mxu0 0.0
    %2417 = vmatpush1.msra.mxu0 0.0
    %2418 = vmatprep.subr.mxu0 0.0
    %2419 = vmatpush1.msra.mxu0 0.0
    %2420 = vmatprep.subr.mxu0 0.0
    %2421 = vmatpush1.msra.mxu0 0.0
    %2422 = vmatprep.subr.mxu0 0.0
    %2423 = vmatpush1.msra.mxu0 0.0
    %2424 = vmatprep.subr.mxu0 0.0
    %2425 = vmatpush1.msra.mxu0 0.0
    %2426 = vmatprep.subr.mxu0 0.0
    %2427 = vmatpush1.msra.mxu0 0.0
    %2428 = vmatprep.subr.mxu0 0.0
    %2429 = vmatpush1.msra.mxu0 0.0
    %2430 = vmatprep.subr.mxu0 0.0
    %2431 = vmatpush1.msra.mxu0 0.0
    %2432 = vmatprep.subr.mxu0 0.0
    %2433 = vmatpush1.msra.mxu0 0.0
    %2434 = vmatprep.subr.mxu0 0.0
    %2435 = vmatpush1.msra.mxu0 0.0
    %2436 = vmatprep.subr.mxu0 0.0
    %2437 = vmatpush1.msra.mxu0 0.0
    %2438 = vmatprep.subr.mxu0 0.0
    %2439 = vmatpush1.msra.mxu0 0.0
    %2440 = vmatprep.subr.mxu0 0.0
    %2441 = vmatpush1.msra.mxu0 %v2409
    %2442 = vmatprep.subr.mxu0 0.0
    %2443 = vmatpush1.msra.mxu0 %v2408
    %2444 = vmatprep.subr.mxu0 0.0
    %2445 = vmatpush1.msra.mxu0 %v2407
    %2446 = vmatprep.subr.mxu0 0.0
    %2447 = vmatpush1.msra.mxu0 %v2406
    %2448 = vmatprep.subr.mxu0 0.0
    %2449 = vmatpush2.msra.mxu0 0.0
    %2450 = vmatprep.subr.mxu0 0.0
    %2451 = vmatpush2.msra.mxu0 0.0
    %2452 = vmatprep.subr.mxu0 0.0
    %2453 = vmatpush2.msra.mxu0 0.0
    %2454 = vmatprep.subr.mxu0 0.0
    %2455 = vmatpush2.msra.mxu0 0.0
    %2456 = vmatprep.subr.mxu0 0.0
    %2457 = vmatpush2.msra.mxu0 0.0
    %2458 = vmatprep.subr.mxu0 0.0
    %2459 = vmatpush2.msra.mxu0 0.0
    %2460 = vmatprep.subr.mxu0 0.0
    %2461 = vmatpush2.msra.mxu0 0.0
    %2462 = vmatprep.subr.mxu0 0.0
    %2463 = vmatpush2.msra.mxu0 0.0
    %2464 = vmatprep.subr.mxu0 0.0
    %2465 = vmatpush2.msra.mxu0 0.0
    %2466 = vmatprep.subr.mxu0 0.0
    %2467 = vmatpush2.msra.mxu0 0.0
    %2468 = vmatprep.subr.mxu0 0.0
    %2469 = vmatpush2.msra.mxu0 0.0
    %2470 = vmatprep.subr.mxu0 0.0
    %2471 = vmatpush2.msra.mxu0 0.0
    %2472 = vmatprep.subr.mxu0 0.0
    %2473 = vmatpush2.msra.mxu0 0.0
    %2474 = vmatprep.subr.mxu0 0.0
    %2475 = vmatpush2.msra.mxu0 0.0
    %2476 = vmatprep.subr.mxu0 0.0
    %2477 = vmatpush2.msra.mxu0 0.0
    %2478 = vmatprep.subr.mxu0 0.0
    %2479 = vmatpush2.msra.mxu0 0.0
    %2480 = vmatprep.mubr.f32.mxu0 0.0
    %2481 = vmatmul.mubr.f32.gmra.mxu0 %v2411
    %v2482 = vpop.f32.mrf.mxu0
    %v2483 = vadd.f32 0.0, %v2482
    %v2484 = vpop.f32.mrf.mxu0
    %2485 = vmatprep.mubr.f32.mxu0 0.0
    %2486 = vmatmul.mubr.f32.gmra.mxu0 %v2414
    %v2487 = vpop.f32.mrf.mxu0
    %v2488 = vadd.f32 0.0, %v2487
    %v2489 = vpop.f32.mrf.mxu0
    %2490 = vdwg.mxu0
    %v2491 = vsel %vm1841, %v2483, 0.0
    %v2492 = vrot.slane %v2491, 4
    %v2493 = vadd.f32 %v2491, %v2492
    %v2494 = vrot.slane %v2493, 2
    %v2495 = vadd.f32 %v2493, %v2494
    %v2496 = vrot.slane %v2495, 1
    %v2497 = vadd.f32 %v2495, %v2496
    %v2498 = vsel %vm1841, %v2488, 0.0
    %v2499 = vrot.slane %v2498, 4
    %v2500 = vadd.f32 %v2498, %v2499
    %v2501 = vrot.slane %v2500, 2
    %v2502 = vadd.f32 %v2500, %v2501
    %v2503 = vrot.slane %v2502, 1
    %v2504 = vadd.f32 %v2502, %v2503
    %v2505 = vmul.f32 %v2497, 0.125
    %v2506 = vmul.f32 %v2504, 0.125
    %v2507 = vmul.f32 %v2483, %v2483
    %v2508 = vmul.f32 %v2488, %v2488
    %v2509 = vsel %vm1841, %v2507, 0.0
    %v2510 = vrot.slane %v2509, 4
    %v2511 = vadd.f32 %v2509, %v2510
    %v2512 = vrot.slane %v2511, 2
    %v2513 = vadd.f32 %v2511, %v2512
    %v2514 = vrot.slane %v2513, 1
    %v2515 = vadd.f32 %v2513, %v2514
    %v2516 = vsel %vm1841, %v2508, 0.0
    %v2517 = vrot.slane %v2516, 4
    %v2518 = vadd.f32 %v2516, %v2517
    %v2519 = vrot.slane %v2518, 2
    %v2520 = vadd.f32 %v2518, %v2519
    %v2521 = vrot.slane %v2520, 1
    %v2522 = vadd.f32 %v2520, %v2521
    %v2523 = vmul.f32 %v2515, 0.125
    %v2524 = vmul.f32 %v2522, 0.125
    %v2525 = vmul.f32 %v2505, %v2505
    %v2526 = vmul.f32 %v2506, %v2506
    %v2527 = vsub.f32 %v2523, %v2525
    %v2528 = vsub.f32 %v2524, %v2526
    %v2529 = vmax.f32 %v2527, 0.0
    %v2530 = vmax.f32 %v2528, 0.0
    %v2533 = vunpack.c.l.s4 1966171168
    %v2534 = vunpack.c.0.s8 %v2533
    %v2535 = vlaneseq
    %v2536 = vshrl.u32 %v2535, 7
    %v2537 = vsub.s32 %v2534, %v2536
    %v2538 = vrot.slane %v1117, %v2537
    %v2539 = vcombine.high %v2538, %v2538
    %v2541 = vunpack.c.l.s4 1966171168
    %v2542 = vunpack.c.0.s8 %v2541
    %v2543 = vlaneseq
    %v2544 = vshrl.u32 %v2543, 7
    %v2545 = vsub.s32 %v2542, %v2544
    %v2546 = vrot.slane %v2538, %v2545
    %v2548 = vunpack.c.l.s4 1966171168
    %v2549 = vunpack.c.0.s8 %v2548
    %v2550 = vlaneseq
    %v2551 = vshrl.u32 %v2550, 7
    %v2552 = vsub.s32 %v2549, %v2551
    %v2553 = vrot.slane %v2539, %v2552
    %v2558 = vunpack.c.l.s4 1966171168
    %v2559 = vunpack.c.0.s8 %v2558
    %v2560 = vlaneseq
    %v2561 = vshrl.u32 %v2560, 7
    %v2562 = vsub.s32 %v2559, %v2561
    %v2563 = vrot.slane %v1119, %v2562
    %v2564 = vcombine.high %v2563, %v2563
    %v2566 = vunpack.c.l.s4 1966171168
    %v2567 = vunpack.c.0.s8 %v2566
    %v2568 = vlaneseq
    %v2569 = vshrl.u32 %v2568, 7
    %v2570 = vsub.s32 %v2567, %v2569
    %v2571 = vrot.slane %v2563, %v2570
    %v2573 = vunpack.c.l.s4 1966171168
    %v2574 = vunpack.c.0.s8 %v2573
    %v2575 = vlaneseq
    %v2576 = vshrl.u32 %v2575, 7
    %v2577 = vsub.s32 %v2574, %v2576
    %v2578 = vrot.slane %v2564, %v2577
    %v2581 = vadd.f32 %v2529, 1e-05
    %v2582 = vadd.f32 %v2530, 1e-05
    %v2583 = vrsqrt.pop %v2581
    %v2584 = vrsqrt.pop %v2582
    %v2585 = vmul.f32 %v2546, %v2583
    %v2586 = vmul.f32 %v2553, %v2584
    %v2587 = vmul.f32 %v2505, %v2585
    %v2588 = vmul.f32 %v2506, %v2586
    %v2589 = vsub.f32 %v2571, %v2587
    %v2590 = vsub.f32 %v2578, %v2588
    %v2593 = vlaneseq
    %v2594 = vshrl.u32 %v2593, 7
    %v2595 = vsub.s32 0, %v2594
    %v2596 = vrot.slane %v2585, %v2595
    %v2597 = vlaneseq
    %v2598 = vshrl.u32 %v2597, 7
    %v2599 = vsub.s32 0, %v2598
    %v2600 = vrot.slane %v2586, %v2599
    %v2603 = vmul.f32 %v2483, %v2596
    %v2604 = vmul.f32 %v2488, %v2600
    %v2607 = vlaneseq
    %v2608 = vshrl.u32 %v2607, 7
    %v2609 = vsub.s32 0, %v2608
    %v2610 = vrot.slane %v2589, %v2609
    %v2611 = vlaneseq
    %v2612 = vshrl.u32 %v2611, 7
    %v2613 = vsub.s32 0, %v2612
    %v2614 = vrot.slane %v2590, %v2613
    %v2617 = vadd.f32 %v2603, %v2610
    %v2618 = vadd.f32 %v2604, %v2614
    %v2619 = vmul.f32 %v2617, 0.2
    %v2620 = vmul.f32 %v2618, 0.2
    %v2621 = vmax.f32 %v2617, %v2619
    %v2622 = vmax.f32 %v2618, %v2620
    %v2623 = vld [vmem:[#allocation13] sm:$0xff]
    %v2624 = vld [vmem:[#allocation13 + $0x8] sm:$0xff]
    %v2625 = vld [vmem:[#allocation13 + $0x10] sm:$0xff]
    %v2626 = vld [vmem:[#allocation13 + $0x18] sm:$0xff]
    %v2628 = vsel %vm1841, %v2404, 0
    %v2631 = vsel %vm1841, %v2405, 0
    %2633 = vmatprep.subr.mxu0 0.0
    %2634 = vmatpush1.msra.mxu0 0.0
    %2635 = vmatprep.subr.mxu0 0.0
    %2636 = vmatpush1.msra.mxu0 0.0
    %2637 = vmatprep.subr.mxu0 0.0
    %2638 = vmatpush1.msra.mxu0 0.0
    %2639 = vmatprep.subr.mxu0 0.0
    %2640 = vmatpush1.msra.mxu0 0.0
    %2641 = vmatprep.subr.mxu0 0.0
    %2642 = vmatpush1.msra.mxu0 0.0
    %2643 = vmatprep.subr.mxu0 0.0
    %2644 = vmatpush1.msra.mxu0 0.0
    %2645 = vmatprep.subr.mxu0 0.0
    %2646 = vmatpush1.msra.mxu0 0.0
    %2647 = vmatprep.subr.mxu0 0.0
    %2648 = vmatpush1.msra.mxu0 0.0
    %2649 = vmatprep.subr.mxu0 0.0
    %2650 = vmatpush1.msra.mxu0 0.0
    %2651 = vmatprep.subr.mxu0 0.0
    %2652 = vmatpush1.msra.mxu0 0.0
    %2653 = vmatprep.subr.mxu0 0.0
    %2654 = vmatpush1.msra.mxu0 0.0
    %2655 = vmatprep.subr.mxu0 0.0
    %2656 = vmatpush1.msra.mxu0 0.0
    %2657 = vmatprep.subr.mxu0 0.0
    %2658 = vmatpush1.msra.mxu0 %v2626
    %2659 = vmatprep.subr.mxu0 0.0
    %2660 = vmatpush1.msra.mxu0 %v2625
    %2661 = vmatprep.subr.mxu0 0.0
    %2662 = vmatpush1.msra.mxu0 %v2624
    %2663 = vmatprep.subr.mxu0 0.0
    %2664 = vmatpush1.msra.mxu0 %v2623
    %2665 = vmatprep.subr.mxu0 0.0
    %2666 = vmatpush2.msra.mxu0 0.0
    %2667 = vmatprep.subr.mxu0 0.0
    %2668 = vmatpush2.msra.mxu0 0.0
    %2669 = vmatprep.subr.mxu0 0.0
    %2670 = vmatpush2.msra.mxu0 0.0
    %2671 = vmatprep.subr.mxu0 0.0
    %2672 = vmatpush2.msra.mxu0 0.0
    %2673 = vmatprep.subr.mxu0 0.0
    %2674 = vmatpush2.msra.mxu0 0.0
    %2675 = vmatprep.subr.mxu0 0.0
    %2676 = vmatpush2.msra.mxu0 0.0
    %2677 = vmatprep.subr.mxu0 0.0
    %2678 = vmatpush2.msra.mxu0 0.0
    %2679 = vmatprep.subr.mxu0 0.0
    %2680 = vmatpush2.msra.mxu0 0.0
    %2681 = vmatprep.subr.mxu0 0.0
    %2682 = vmatpush2.msra.mxu0 0.0
    %2683 = vmatprep.subr.mxu0 0.0
    %2684 = vmatpush2.msra.mxu0 0.0
    %2685 = vmatprep.subr.mxu0 0.0
    %2686 = vmatpush2.msra.mxu0 0.0
    %2687 = vmatprep.subr.mxu0 0.0
    %2688 = vmatpush2.msra.mxu0 0.0
    %2689 = vmatprep.subr.mxu0 0.0
    %2690 = vmatpush2.msra.mxu0 0.0
    %2691 = vmatprep.subr.mxu0 0.0
    %2692 = vmatpush2.msra.mxu0 0.0
    %2693 = vmatprep.subr.mxu0 0.0
    %2694 = vmatpush2.msra.mxu0 0.0
    %2695 = vmatprep.subr.mxu0 0.0
    %2696 = vmatpush2.msra.mxu0 0.0
    %2697 = vmatprep.mubr.f32.mxu0 0.0
    %2698 = vmatmul.mubr.f32.gmra.mxu0 %v2628
    %v2699 = vpop.f32.mrf.mxu0
    %v2700 = vadd.f32 0.0, %v2699
    %v2701 = vpop.f32.mrf.mxu0
    %2702 = vmatprep.mubr.f32.mxu0 0.0
    %2703 = vmatmul.mubr.f32.gmra.mxu0 %v2631
    %v2704 = vpop.f32.mrf.mxu0
    %v2705 = vadd.f32 0.0, %v2704
    %v2706 = vpop.f32.mrf.mxu0
    %2707 = vdwg.mxu0
    %vm2708 = vcmask 523264
    %v2709 = vsel %vm2708, %v2700, 0.0
    %v2710 = vrot.slane %v2709, 4
    %v2711 = vadd.f32 %v2709, %v2710
    %v2712 = vrot.slane %v2711, 2
    %v2713 = vadd.f32 %v2711, %v2712
    %v2714 = vrot.slane %v2713, 1
    %v2715 = vadd.f32 %v2713, %v2714
    %v2716 = vsel %vm2708, %v2705, 0.0
    %v2717 = vrot.slane %v2716, 4
    %v2718 = vadd.f32 %v2716, %v2717
    %v2719 = vrot.slane %v2718, 2
    %v2720 = vadd.f32 %v2718, %v2719
    %v2721 = vrot.slane %v2720, 1
    %v2722 = vadd.f32 %v2720, %v2721
    %v2723 = vmul.f32 %v2715, 0.125
    %v2724 = vmul.f32 %v2722, 0.125
    %v2725 = vmul.f32 %v2700, %v2700
    %v2726 = vmul.f32 %v2705, %v2705
    %v2727 = vsel %vm2708, %v2725, 0.0
    %v2728 = vrot.slane %v2727, 4
    %v2729 = vadd.f32 %v2727, %v2728
    %v2730 = vrot.slane %v2729, 2
    %v2731 = vadd.f32 %v2729, %v2730
    %v2732 = vrot.slane %v2731, 1
    %v2733 = vadd.f32 %v2731, %v2732
    %v2734 = vsel %vm2708, %v2726, 0.0
    %v2735 = vrot.slane %v2734, 4
    %v2736 = vadd.f32 %v2734, %v2735
    %v2737 = vrot.slane %v2736, 2
    %v2738 = vadd.f32 %v2736, %v2737
    %v2739 = vrot.slane %v2738, 1
    %v2740 = vadd.f32 %v2738, %v2739
    %v2741 = vmul.f32 %v2733, 0.125
    %v2742 = vmul.f32 %v2740, 0.125
    %v2743 = vmul.f32 %v2723, %v2723
    %v2744 = vmul.f32 %v2724, %v2724
    %v2745 = vsub.f32 %v2741, %v2743
    %v2746 = vsub.f32 %v2742, %v2744
    %v2747 = vmax.f32 %v2745, 0.0
    %v2748 = vmax.f32 %v2746, 0.0
    %v2751 = vunpack.c.l.s4 1966171168
    %v2752 = vunpack.c.0.s8 %v2751
    %v2753 = vlaneseq
    %v2754 = vshrl.u32 %v2753, 7
    %v2755 = vsub.s32 %v2752, %v2754
    %v2756 = vrot.slane %v653, %v2755
    %v2757 = vcombine.high %v2756, %v2756
    %v2759 = vunpack.c.l.s4 1966171168
    %v2760 = vunpack.c.0.s8 %v2759
    %v2761 = vlaneseq
    %v2762 = vshrl.u32 %v2761, 7
    %v2763 = vsub.s32 %v2760, %v2762
    %v2764 = vrot.slane %v2756, %v2763
    %v2766 = vunpack.c.l.s4 1966171168
    %v2767 = vunpack.c.0.s8 %v2766
    %v2768 = vlaneseq
    %v2769 = vshrl.u32 %v2768, 7
    %v2770 = vsub.s32 %v2767, %v2769
    %v2771 = vrot.slane %v2757, %v2770
    %v2776 = vunpack.c.l.s4 1966171168
    %v2777 = vunpack.c.0.s8 %v2776
    %v2778 = vlaneseq
    %v2779 = vshrl.u32 %v2778, 7
    %v2780 = vsub.s32 %v2777, %v2779
    %v2781 = vrot.slane %v655, %v2780
    %v2782 = vcombine.high %v2781, %v2781
    %v2784 = vunpack.c.l.s4 1966171168
    %v2785 = vunpack.c.0.s8 %v2784
    %v2786 = vlaneseq
    %v2787 = vshrl.u32 %v2786, 7
    %v2788 = vsub.s32 %v2785, %v2787
    %v2789 = vrot.slane %v2781, %v2788
    %v2791 = vunpack.c.l.s4 1966171168
    %v2792 = vunpack.c.0.s8 %v2791
    %v2793 = vlaneseq
    %v2794 = vshrl.u32 %v2793, 7
    %v2795 = vsub.s32 %v2792, %v2794
    %v2796 = vrot.slane %v2782, %v2795
    %v2799 = vadd.f32 %v2747, 1e-05
    %v2800 = vadd.f32 %v2748, 1e-05
    %v2801 = vrsqrt.pop %v2799
    %v2802 = vrsqrt.pop %v2800
    %v2803 = vmul.f32 %v2764, %v2801
    %v2804 = vmul.f32 %v2771, %v2802
    %v2805 = vmul.f32 %v2723, %v2803
    %v2806 = vmul.f32 %v2724, %v2804
    %v2807 = vsub.f32 %v2789, %v2805
    %v2808 = vsub.f32 %v2796, %v2806
    %v2811 = vlaneseq
    %v2812 = vshrl.u32 %v2811, 7
    %v2813 = vsub.s32 0, %v2812
    %v2814 = vrot.slane %v2803, %v2813
    %v2815 = vlaneseq
    %v2816 = vshrl.u32 %v2815, 7
    %v2817 = vsub.s32 0, %v2816
    %v2818 = vrot.slane %v2804, %v2817
    %v2821 = vmul.f32 %v2700, %v2814
    %v2822 = vmul.f32 %v2705, %v2818
    %v2825 = vlaneseq
    %v2826 = vshrl.u32 %v2825, 7
    %v2827 = vsub.s32 0, %v2826
    %v2828 = vrot.slane %v2807, %v2827
    %v2829 = vlaneseq
    %v2830 = vshrl.u32 %v2829, 7
    %v2831 = vsub.s32 0, %v2830
    %v2832 = vrot.slane %v2808, %v2831
    %v2835 = vadd.f32 %v2821, %v2828
    %v2836 = vadd.f32 %v2822, %v2832
    %v2837 = vmul.f32 %v2835, 0.2
    %v2838 = vmul.f32 %v2836, 0.2
    %v2839 = vmax.f32 %v2835, %v2837
    %v2840 = vmax.f32 %v2836, %v2838
    %v2841 = vld [vmem:[#allocation21] sm:$0xff]
    %v2842 = vld [vmem:[#allocation21 + $0x8] sm:$0xff]
    %v2843 = vld [vmem:[#allocation21 + $0x10] sm:$0xff]
    %v2844 = vld [vmem:[#allocation21 + $0x18] sm:$0xff]
    %v2846 = vsel %vm1841, %v2621, 0
    %v2849 = vsel %vm1841, %v2622, 0
    %2851 = vmatprep.subr.mxu0 0.0
    %2852 = vmatpush1.msra.mxu0 0.0
    %2853 = vmatprep.subr.mxu0 0.0
    %2854 = vmatpush1.msra.mxu0 0.0
    %2855 = vmatprep.subr.mxu0 0.0
    %2856 = vmatpush1.msra.mxu0 0.0
    %2857 = vmatprep.subr.mxu0 0.0
    %2858 = vmatpush1.msra.mxu0 0.0
    %2859 = vmatprep.subr.mxu0 0.0
    %2860 = vmatpush1.msra.mxu0 0.0
    %2861 = vmatprep.subr.mxu0 0.0
    %2862 = vmatpush1.msra.mxu0 0.0
    %2863 = vmatprep.subr.mxu0 0.0
    %2864 = vmatpush1.msra.mxu0 0.0
    %2865 = vmatprep.subr.mxu0 0.0
    %2866 = vmatpush1.msra.mxu0 0.0
    %2867 = vmatprep.subr.mxu0 0.0
    %2868 = vmatpush1.msra.mxu0 0.0
    %2869 = vmatprep.subr.mxu0 0.0
    %2870 = vmatpush1.msra.mxu0 0.0
    %2871 = vmatprep.subr.mxu0 0.0
    %2872 = vmatpush1.msra.mxu0 0.0
    %2873 = vmatprep.subr.mxu0 0.0
    %2874 = vmatpush1.msra.mxu0 0.0
    %2875 = vmatprep.subr.mxu0 0.0
    %2876 = vmatpush1.msra.mxu0 %v2844
    %2877 = vmatprep.subr.mxu0 0.0
    %2878 = vmatpush1.msra.mxu0 %v2843
    %2879 = vmatprep.subr.mxu0 0.0
    %2880 = vmatpush1.msra.mxu0 %v2842
    %2881 = vmatprep.subr.mxu0 0.0
    %2882 = vmatpush1.msra.mxu0 %v2841
    %2883 = vmatprep.subr.mxu0 0.0
    %2884 = vmatpush2.msra.mxu0 0.0
    %2885 = vmatprep.subr.mxu0 0.0
    %2886 = vmatpush2.msra.mxu0 0.0
    %2887 = vmatprep.subr.mxu0 0.0
    %2888 = vmatpush2.msra.mxu0 0.0
    %2889 = vmatprep.subr.mxu0 0.0
    %2890 = vmatpush2.msra.mxu0 0.0
    %2891 = vmatprep.subr.mxu0 0.0
    %2892 = vmatpush2.msra.mxu0 0.0
    %2893 = vmatprep.subr.mxu0 0.0
    %2894 = vmatpush2.msra.mxu0 0.0
    %2895 = vmatprep.subr.mxu0 0.0
    %2896 = vmatpush2.msra.mxu0 0.0
    %2897 = vmatprep.subr.mxu0 0.0
    %2898 = vmatpush2.msra.mxu0 0.0
    %2899 = vmatprep.subr.mxu0 0.0
    %2900 = vmatpush2.msra.mxu0 0.0
    %2901 = vmatprep.subr.mxu0 0.0
    %2902 = vmatpush2.msra.mxu0 0.0
    %2903 = vmatprep.subr.mxu0 0.0
    %2904 = vmatpush2.msra.mxu0 0.0
    %2905 = vmatprep.subr.mxu0 0.0
    %2906 = vmatpush2.msra.mxu0 0.0
    %2907 = vmatprep.subr.mxu0 0.0
    %2908 = vmatpush2.msra.mxu0 0.0
    %2909 = vmatprep.subr.mxu0 0.0
    %2910 = vmatpush2.msra.mxu0 0.0
    %2911 = vmatprep.subr.mxu0 0.0
    %2912 = vmatpush2.msra.mxu0 0.0
    %2913 = vmatprep.subr.mxu0 0.0
    %2914 = vmatpush2.msra.mxu0 0.0
    %2915 = vmatprep.mubr.f32.mxu0 0.0
    %2916 = vmatmul.mubr.f32.gmra.mxu0 %v2846
    %v2917 = vpop.f32.mrf.mxu0
    %v2918 = vadd.f32 0.0, %v2917
    %v2919 = vpop.f32.mrf.mxu0
    %2920 = vmatprep.mubr.f32.mxu0 0.0
    %2921 = vmatmul.mubr.f32.gmra.mxu0 %v2849
    %v2922 = vpop.f32.mrf.mxu0
    %v2923 = vadd.f32 0.0, %v2922
    %v2924 = vpop.f32.mrf.mxu0
    %2925 = vdwg.mxu0
    %v2926 = vsel %vm2708, %v2918, 0.0
    %v2927 = vrot.slane %v2926, 4
    %v2928 = vadd.f32 %v2926, %v2927
    %v2929 = vrot.slane %v2928, 2
    %v2930 = vadd.f32 %v2928, %v2929
    %v2931 = vrot.slane %v2930, 1
    %v2932 = vadd.f32 %v2930, %v2931
    %v2933 = vsel %vm2708, %v2923, 0.0
    %v2934 = vrot.slane %v2933, 4
    %v2935 = vadd.f32 %v2933, %v2934
    %v2936 = vrot.slane %v2935, 2
    %v2937 = vadd.f32 %v2935, %v2936
    %v2938 = vrot.slane %v2937, 1
    %v2939 = vadd.f32 %v2937, %v2938
    %v2940 = vmul.f32 %v2932, 0.125
    %v2941 = vmul.f32 %v2939, 0.125
    %v2942 = vmul.f32 %v2918, %v2918
    %v2943 = vmul.f32 %v2923, %v2923
    %v2944 = vsel %vm2708, %v2942, 0.0
    %v2945 = vrot.slane %v2944, 4
    %v2946 = vadd.f32 %v2944, %v2945
    %v2947 = vrot.slane %v2946, 2
    %v2948 = vadd.f32 %v2946, %v2947
    %v2949 = vrot.slane %v2948, 1
    %v2950 = vadd.f32 %v2948, %v2949
    %v2951 = vsel %vm2708, %v2943, 0.0
    %v2952 = vrot.slane %v2951, 4
    %v2953 = vadd.f32 %v2951, %v2952
    %v2954 = vrot.slane %v2953, 2
    %v2955 = vadd.f32 %v2953, %v2954
    %v2956 = vrot.slane %v2955, 1
    %v2957 = vadd.f32 %v2955, %v2956
    %v2958 = vmul.f32 %v2950, 0.125
    %v2959 = vmul.f32 %v2957, 0.125
    %v2960 = vmul.f32 %v2940, %v2940
    %v2961 = vmul.f32 %v2941, %v2941
    %v2962 = vsub.f32 %v2958, %v2960
    %v2963 = vsub.f32 %v2959, %v2961
    %v2964 = vmax.f32 %v2962, 0.0
    %v2965 = vmax.f32 %v2963, 0.0
    %v2968 = vunpack.c.l.s4 1966171168
    %v2969 = vunpack.c.0.s8 %v2968
    %v2970 = vlaneseq
    %v2971 = vshrl.u32 %v2970, 7
    %v2972 = vsub.s32 %v2969, %v2971
    %v2973 = vrot.slane %v1188, %v2972
    %v2974 = vcombine.high %v2973, %v2973
    %v2976 = vunpack.c.l.s4 1966171168
    %v2977 = vunpack.c.0.s8 %v2976
    %v2978 = vlaneseq
    %v2979 = vshrl.u32 %v2978, 7
    %v2980 = vsub.s32 %v2977, %v2979
    %v2981 = vrot.slane %v2973, %v2980
    %v2983 = vunpack.c.l.s4 1966171168
    %v2984 = vunpack.c.0.s8 %v2983
    %v2985 = vlaneseq
    %v2986 = vshrl.u32 %v2985, 7
    %v2987 = vsub.s32 %v2984, %v2986
    %v2988 = vrot.slane %v2974, %v2987
    %v2993 = vunpack.c.l.s4 1966171168
    %v2994 = vunpack.c.0.s8 %v2993
    %v2995 = vlaneseq
    %v2996 = vshrl.u32 %v2995, 7
    %v2997 = vsub.s32 %v2994, %v2996
    %v2998 = vrot.slane %v1190, %v2997
    %v2999 = vcombine.high %v2998, %v2998
    %v3001 = vunpack.c.l.s4 1966171168
    %v3002 = vunpack.c.0.s8 %v3001
    %v3003 = vlaneseq
    %v3004 = vshrl.u32 %v3003, 7
    %v3005 = vsub.s32 %v3002, %v3004
    %v3006 = vrot.slane %v2998, %v3005
    %v3008 = vunpack.c.l.s4 1966171168
    %v3009 = vunpack.c.0.s8 %v3008
    %v3010 = vlaneseq
    %v3011 = vshrl.u32 %v3010, 7
    %v3012 = vsub.s32 %v3009, %v3011
    %v3013 = vrot.slane %v2999, %v3012
    %v3016 = vadd.f32 %v2964, 1e-05
    %v3017 = vadd.f32 %v2965, 1e-05
    %v3018 = vrsqrt.pop %v3016
    %v3019 = vrsqrt.pop %v3017
    %v3020 = vmul.f32 %v2981, %v3018
    %v3021 = vmul.f32 %v2988, %v3019
    %v3022 = vmul.f32 %v2940, %v3020
    %v3023 = vmul.f32 %v2941, %v3021
    %v3024 = vsub.f32 %v3006, %v3022
    %v3025 = vsub.f32 %v3013, %v3023
    %v3028 = vlaneseq
    %v3029 = vshrl.u32 %v3028, 7
    %v3030 = vsub.s32 0, %v3029
    %v3031 = vrot.slane %v3020, %v3030
    %v3032 = vlaneseq
    %v3033 = vshrl.u32 %v3032, 7
    %v3034 = vsub.s32 0, %v3033
    %v3035 = vrot.slane %v3021, %v3034
    %v3038 = vmul.f32 %v2918, %v3031
    %v3039 = vmul.f32 %v2923, %v3035
    %v3042 = vlaneseq
    %v3043 = vshrl.u32 %v3042, 7
    %v3044 = vsub.s32 0, %v3043
    %v3045 = vrot.slane %v3024, %v3044
    %v3046 = vlaneseq
    %v3047 = vshrl.u32 %v3046, 7
    %v3048 = vsub.s32 0, %v3047
    %v3049 = vrot.slane %v3025, %v3048
    %v3052 = vadd.f32 %v3038, %v3045
    %v3053 = vadd.f32 %v3039, %v3049
    %v3054 = vmul.f32 %v3052, 0.2
    %v3055 = vmul.f32 %v3053, 0.2
    %v3056 = vmax.f32 %v3052, %v3054
    %v3057 = vmax.f32 %v3053, %v3055
    %v3058 = vld [vmem:[#allocation15] sm:$0xff]
    %v3059 = vld [vmem:[#allocation15 + $0x8] sm:$0xff]
    %v3060 = vld [vmem:[#allocation15 + $0x10] sm:$0xff]
    %v3061 = vld [vmem:[#allocation15 + $0x18] sm:$0xff]
    %v3062 = vld [vmem:[#allocation15 + $0x20] sm:$0xff]
    %v3063 = vld [vmem:[#allocation15 + $0x28] sm:$0xff]
    %v3064 = vld [vmem:[#allocation15 + $0x30] sm:$0xff]
    %v3065 = vld [vmem:[#allocation15 + $0x38] sm:$0xff]
    %v3067 = vsel %vm2708, %v2839, 0
    %v3070 = vsel %vm2708, %v2840, 0
    %3072 = vmatprep.subr.mxu0 0.0
    %3073 = vmatpush1.msra.mxu0 0.0
    %3074 = vmatprep.subr.mxu0 0.0
    %3075 = vmatpush1.msra.mxu0 0.0
    %3076 = vmatprep.subr.mxu0 0.0
    %3077 = vmatpush1.msra.mxu0 0.0
    %3078 = vmatprep.subr.mxu0 0.0
    %3079 = vmatpush1.msra.mxu0 0.0
    %3080 = vmatprep.subr.mxu0 0.0
    %3081 = vmatpush1.msra.mxu0 0.0
    %3082 = vmatprep.subr.mxu0 0.0
    %3083 = vmatpush1.msra.mxu0 0.0
    %3084 = vmatprep.subr.mxu0 0.0
    %3085 = vmatpush1.msra.mxu0 0.0
    %3086 = vmatprep.subr.mxu0 0.0
    %3087 = vmatpush1.msra.mxu0 0.0
    %3088 = vmatprep.subr.mxu0 0.0
    %3089 = vmatpush1.msra.mxu0 %v3065
    %3090 = vmatprep.subr.mxu0 0.0
    %3091 = vmatpush1.msra.mxu0 %v3064
    %3092 = vmatprep.subr.mxu0 0.0
    %3093 = vmatpush1.msra.mxu0 %v3063
    %3094 = vmatprep.subr.mxu0 0.0
    %3095 = vmatpush1.msra.mxu0 %v3062
    %3096 = vmatprep.subr.mxu0 0.0
    %3097 = vmatpush1.msra.mxu0 %v3061
    %3098 = vmatprep.subr.mxu0 0.0
    %3099 = vmatpush1.msra.mxu0 %v3060
    %3100 = vmatprep.subr.mxu0 0.0
    %3101 = vmatpush1.msra.mxu0 %v3059
    %3102 = vmatprep.subr.mxu0 0.0
    %3103 = vmatpush1.msra.mxu0 %v3058
    %3104 = vmatprep.subr.mxu0 0.0
    %3105 = vmatpush2.msra.mxu0 0.0
    %3106 = vmatprep.subr.mxu0 0.0
    %3107 = vmatpush2.msra.mxu0 0.0
    %3108 = vmatprep.subr.mxu0 0.0
    %3109 = vmatpush2.msra.mxu0 0.0
    %3110 = vmatprep.subr.mxu0 0.0
    %3111 = vmatpush2.msra.mxu0 0.0
    %3112 = vmatprep.subr.mxu0 0.0
    %3113 = vmatpush2.msra.mxu0 0.0
    %3114 = vmatprep.subr.mxu0 0.0
    %3115 = vmatpush2.msra.mxu0 0.0
    %3116 = vmatprep.subr.mxu0 0.0
    %3117 = vmatpush2.msra.mxu0 0.0
    %3118 = vmatprep.subr.mxu0 0.0
    %3119 = vmatpush2.msra.mxu0 0.0
    %3120 = vmatprep.subr.mxu0 0.0
    %3121 = vmatpush2.msra.mxu0 0.0
    %3122 = vmatprep.subr.mxu0 0.0
    %3123 = vmatpush2.msra.mxu0 0.0
    %3124 = vmatprep.subr.mxu0 0.0
    %3125 = vmatpush2.msra.mxu0 0.0
    %3126 = vmatprep.subr.mxu0 0.0
    %3127 = vmatpush2.msra.mxu0 0.0
    %3128 = vmatprep.subr.mxu0 0.0
    %3129 = vmatpush2.msra.mxu0 0.0
    %3130 = vmatprep.subr.mxu0 0.0
    %3131 = vmatpush2.msra.mxu0 0.0
    %3132 = vmatprep.subr.mxu0 0.0
    %3133 = vmatpush2.msra.mxu0 0.0
    %3134 = vmatprep.subr.mxu0 0.0
    %3135 = vmatpush2.msra.mxu0 0.0
    %3136 = vmatprep.mubr.f32.mxu0 0.0
    %3137 = vmatmul.mubr.f32.gmra.mxu0 %v3067
    %v3138 = vpop.f32.mrf.mxu0
    %v3139 = vadd.f32 0.0, %v3138
    %v3140 = vpop.f32.mrf.mxu0
    %3141 = vmatprep.mubr.f32.mxu0 0.0
    %3142 = vmatmul.mubr.f32.gmra.mxu0 %v3070
    %v3143 = vpop.f32.mrf.mxu0
    %v3144 = vadd.f32 0.0, %v3143
    %v3145 = vpop.f32.mrf.mxu0
    %3146 = vdwg.mxu0
    %v3147 = vsel %vm2708, %v3139, 0.0
    %v3148 = vrot.slane %v3147, 4
    %v3149 = vadd.f32 %v3147, %v3148
    %v3150 = vrot.slane %v3149, 2
    %v3151 = vadd.f32 %v3149, %v3150
    %v3152 = vrot.slane %v3151, 1
    %v3153 = vadd.f32 %v3151, %v3152
    %v3154 = vsel %vm2708, %v3144, 0.0
    %v3155 = vrot.slane %v3154, 4
    %v3156 = vadd.f32 %v3154, %v3155
    %v3157 = vrot.slane %v3156, 2
    %v3158 = vadd.f32 %v3156, %v3157
    %v3159 = vrot.slane %v3158, 1
    %v3160 = vadd.f32 %v3158, %v3159
    %v3161 = vmul.f32 %v3153, 0.125
    %v3162 = vmul.f32 %v3160, 0.125
    %v3163 = vmul.f32 %v3139, %v3139
    %v3164 = vmul.f32 %v3144, %v3144
    %v3165 = vsel %vm2708, %v3163, 0.0
    %v3166 = vrot.slane %v3165, 4
    %v3167 = vadd.f32 %v3165, %v3166
    %v3168 = vrot.slane %v3167, 2
    %v3169 = vadd.f32 %v3167, %v3168
    %v3170 = vrot.slane %v3169, 1
    %v3171 = vadd.f32 %v3169, %v3170
    %v3172 = vsel %vm2708, %v3164, 0.0
    %v3173 = vrot.slane %v3172, 4
    %v3174 = vadd.f32 %v3172, %v3173
    %v3175 = vrot.slane %v3174, 2
    %v3176 = vadd.f32 %v3174, %v3175
    %v3177 = vrot.slane %v3176, 1
    %v3178 = vadd.f32 %v3176, %v3177
    %v3179 = vmul.f32 %v3171, 0.125
    %v3180 = vmul.f32 %v3178, 0.125
    %v3181 = vmul.f32 %v3161, %v3161
    %v3182 = vmul.f32 %v3162, %v3162
    %v3183 = vsub.f32 %v3179, %v3181
    %v3184 = vsub.f32 %v3180, %v3182
    %v3185 = vmax.f32 %v3183, 0.0
    %v3186 = vmax.f32 %v3184, 0.0
    %v3189 = vunpack.c.l.s4 1966171168
    %v3190 = vunpack.c.0.s8 %v3189
    %v3191 = vlaneseq
    %v3192 = vshrl.u32 %v3191, 7
    %v3193 = vsub.s32 %v3190, %v3192
    %v3194 = vrot.slane %v724, %v3193
    %v3195 = vcombine.high %v3194, %v3194
    %v3197 = vunpack.c.l.s4 1966171168
    %v3198 = vunpack.c.0.s8 %v3197
    %v3199 = vlaneseq
    %v3200 = vshrl.u32 %v3199, 7
    %v3201 = vsub.s32 %v3198, %v3200
    %v3202 = vrot.slane %v3194, %v3201
    %v3204 = vunpack.c.l.s4 1966171168
    %v3205 = vunpack.c.0.s8 %v3204
    %v3206 = vlaneseq
    %v3207 = vshrl.u32 %v3206, 7
    %v3208 = vsub.s32 %v3205, %v3207
    %v3209 = vrot.slane %v3195, %v3208
    %v3214 = vunpack.c.l.s4 1966171168
    %v3215 = vunpack.c.0.s8 %v3214
    %v3216 = vlaneseq
    %v3217 = vshrl.u32 %v3216, 7
    %v3218 = vsub.s32 %v3215, %v3217
    %v3219 = vrot.slane %v726, %v3218
    %v3220 = vcombine.high %v3219, %v3219
    %v3222 = vunpack.c.l.s4 1966171168
    %v3223 = vunpack.c.0.s8 %v3222
    %v3224 = vlaneseq
    %v3225 = vshrl.u32 %v3224, 7
    %v3226 = vsub.s32 %v3223, %v3225
    %v3227 = vrot.slane %v3219, %v3226
    %v3229 = vunpack.c.l.s4 1966171168
    %v3230 = vunpack.c.0.s8 %v3229
    %v3231 = vlaneseq
    %v3232 = vshrl.u32 %v3231, 7
    %v3233 = vsub.s32 %v3230, %v3232
    %v3234 = vrot.slane %v3220, %v3233
    %v3237 = vadd.f32 %v3185, 1e-05
    %v3238 = vadd.f32 %v3186, 1e-05
    %v3239 = vrsqrt.pop %v3237
    %v3240 = vrsqrt.pop %v3238
    %v3241 = vmul.f32 %v3202, %v3239
    %v3242 = vmul.f32 %v3209, %v3240
    %v3243 = vmul.f32 %v3161, %v3241
    %v3244 = vmul.f32 %v3162, %v3242
    %v3245 = vsub.f32 %v3227, %v3243
    %v3246 = vsub.f32 %v3234, %v3244
    %v3249 = vlaneseq
    %v3250 = vshrl.u32 %v3249, 7
    %v3251 = vsub.s32 0, %v3250
    %v3252 = vrot.slane %v3241, %v3251
    %v3253 = vlaneseq
    %v3254 = vshrl.u32 %v3253, 7
    %v3255 = vsub.s32 0, %v3254
    %v3256 = vrot.slane %v3242, %v3255
    %v3259 = vmul.f32 %v3139, %v3252
    %v3260 = vmul.f32 %v3144, %v3256
    %v3263 = vlaneseq
    %v3264 = vshrl.u32 %v3263, 7
    %v3265 = vsub.s32 0, %v3264
    %v3266 = vrot.slane %v3245, %v3265
    %v3267 = vlaneseq
    %v3268 = vshrl.u32 %v3267, 7
    %v3269 = vsub.s32 0, %v3268
    %v3270 = vrot.slane %v3246, %v3269
    %v3273 = vadd.f32 %v3259, %v3266
    %v3274 = vadd.f32 %v3260, %v3270
    %v3275 = vmul.f32 %v3273, 0.2
    %v3276 = vmul.f32 %v3274, 0.2
    %v3277 = vmax.f32 %v3273, %v3275
    %v3278 = vmax.f32 %v3274, %v3276
    %v3279 = vld [vmem:[#allocation22] sm:$0xff]
    %v3280 = vld [vmem:[#allocation22 + $0x8] sm:$0xff]
    %v3281 = vld [vmem:[#allocation22 + $0x10] sm:$0xff]
    %v3282 = vld [vmem:[#allocation22 + $0x18] sm:$0xff]
    %v3283 = vld [vmem:[#allocation22 + $0x20] sm:$0xff]
    %v3284 = vld [vmem:[#allocation22 + $0x28] sm:$0xff]
    %v3285 = vld [vmem:[#allocation22 + $0x30] sm:$0xff]
    %v3286 = vld [vmem:[#allocation22 + $0x38] sm:$0xff]
    %v3288 = vsel %vm2708, %v3056, 0
    %v3291 = vsel %vm2708, %v3057, 0
    %3293 = vmatprep.subr.mxu0 0.0
    %3294 = vmatpush1.msra.mxu0 0.0
    %3295 = vmatprep.subr.mxu0 0.0
    %3296 = vmatpush1.msra.mxu0 0.0
    %3297 = vmatprep.subr.mxu0 0.0
    %3298 = vmatpush1.msra.mxu0 0.0
    %3299 = vmatprep.subr.mxu0 0.0
    %3300 = vmatpush1.msra.mxu0 0.0
    %3301 = vmatprep.subr.mxu0 0.0
    %3302 = vmatpush1.msra.mxu0 0.0
    %3303 = vmatprep.subr.mxu0 0.0
    %3304 = vmatpush1.msra.mxu0 0.0
    %3305 = vmatprep.subr.mxu0 0.0
    %3306 = vmatpush1.msra.mxu0 0.0
    %3307 = vmatprep.subr.mxu0 0.0
    %3308 = vmatpush1.msra.mxu0 0.0
    %3309 = vmatprep.subr.mxu0 0.0
    %3310 = vmatpush1.msra.mxu0 %v3286
    %3311 = vmatprep.subr.mxu0 0.0
    %3312 = vmatpush1.msra.mxu0 %v3285
    %3313 = vmatprep.subr.mxu0 0.0
    %3314 = vmatpush1.msra.mxu0 %v3284
    %3315 = vmatprep.subr.mxu0 0.0
    %3316 = vmatpush1.msra.mxu0 %v3283
    %3317 = vmatprep.subr.mxu0 0.0
    %3318 = vmatpush1.msra.mxu0 %v3282
    %3319 = vmatprep.subr.mxu0 0.0
    %3320 = vmatpush1.msra.mxu0 %v3281
    %3321 = vmatprep.subr.mxu0 0.0
    %3322 = vmatpush1.msra.mxu0 %v3280
    %3323 = vmatprep.subr.mxu0 0.0
    %3324 = vmatpush1.msra.mxu0 %v3279
    %3325 = vmatprep.subr.mxu0 0.0
    %3326 = vmatpush2.msra.mxu0 0.0
    %3327 = vmatprep.subr.mxu0 0.0
    %3328 = vmatpush2.msra.mxu0 0.0
    %3329 = vmatprep.subr.mxu0 0.0
    %3330 = vmatpush2.msra.mxu0 0.0
    %3331 = vmatprep.subr.mxu0 0.0
    %3332 = vmatpush2.msra.mxu0 0.0
    %3333 = vmatprep.subr.mxu0 0.0
    %3334 = vmatpush2.msra.mxu0 0.0
    %3335 = vmatprep.subr.mxu0 0.0
    %3336 = vmatpush2.msra.mxu0 0.0
    %3337 = vmatprep.subr.mxu0 0.0
    %3338 = vmatpush2.msra.mxu0 0.0
    %3339 = vmatprep.subr.mxu0 0.0
    %3340 = vmatpush2.msra.mxu0 0.0
    %3341 = vmatprep.subr.mxu0 0.0
    %3342 = vmatpush2.msra.mxu0 0.0
    %3343 = vmatprep.subr.mxu0 0.0
    %3344 = vmatpush2.msra.mxu0 0.0
    %3345 = vmatprep.subr.mxu0 0.0
    %3346 = vmatpush2.msra.mxu0 0.0
    %3347 = vmatprep.subr.mxu0 0.0
    %3348 = vmatpush2.msra.mxu0 0.0
    %3349 = vmatprep.subr.mxu0 0.0
    %3350 = vmatpush2.msra.mxu0 0.0
    %3351 = vmatprep.subr.mxu0 0.0
    %3352 = vmatpush2.msra.mxu0 0.0
    %3353 = vmatprep.subr.mxu0 0.0
    %3354 = vmatpush2.msra.mxu0 0.0
    %3355 = vmatprep.subr.mxu0 0.0
    %3356 = vmatpush2.msra.mxu0 0.0
    %3357 = vmatprep.mubr.f32.mxu0 0.0
    %3358 = vmatmul.mubr.f32.gmra.mxu0 %v3288
    %v3359 = vpop.f32.mrf.mxu0
    %v3360 = vadd.f32 0.0, %v3359
    %v3361 = vpop.f32.mrf.mxu0
    %3362 = vmatprep.mubr.f32.mxu0 0.0
    %3363 = vmatmul.mubr.f32.gmra.mxu0 %v3291
    %v3364 = vpop.f32.mrf.mxu0
    %v3365 = vadd.f32 0.0, %v3364
    %v3366 = vpop.f32.mrf.mxu0
    %3367 = vdwg.mxu0
    %v3368 = vsel %vm2708, %v3360, 0.0
    %v3369 = vrot.slane %v3368, 4
    %v3370 = vadd.f32 %v3368, %v3369
    %v3371 = vrot.slane %v3370, 2
    %v3372 = vadd.f32 %v3370, %v3371
    %v3373 = vrot.slane %v3372, 1
    %v3374 = vadd.f32 %v3372, %v3373
    %v3375 = vsel %vm2708, %v3365, 0.0
    %v3376 = vrot.slane %v3375, 4
    %v3377 = vadd.f32 %v3375, %v3376
    %v3378 = vrot.slane %v3377, 2
    %v3379 = vadd.f32 %v3377, %v3378
    %v3380 = vrot.slane %v3379, 1
    %v3381 = vadd.f32 %v3379, %v3380
    %v3382 = vmul.f32 %v3374, 0.125
    %v3383 = vmul.f32 %v3381, 0.125
    %v3384 = vmul.f32 %v3360, %v3360
    %v3385 = vmul.f32 %v3365, %v3365
    %v3386 = vsel %vm2708, %v3384, 0.0
    %v3387 = vrot.slane %v3386, 4
    %v3388 = vadd.f32 %v3386, %v3387
    %v3389 = vrot.slane %v3388, 2
    %v3390 = vadd.f32 %v3388, %v3389
    %v3391 = vrot.slane %v3390, 1
    %v3392 = vadd.f32 %v3390, %v3391
    %v3393 = vsel %vm2708, %v3385, 0.0
    %v3394 = vrot.slane %v3393, 4
    %v3395 = vadd.f32 %v3393, %v3394
    %v3396 = vrot.slane %v3395, 2
    %v3397 = vadd.f32 %v3395, %v3396
    %v3398 = vrot.slane %v3397, 1
    %v3399 = vadd.f32 %v3397, %v3398
    %v3400 = vmul.f32 %v3392, 0.125
    %v3401 = vmul.f32 %v3399, 0.125
    %v3402 = vmul.f32 %v3382, %v3382
    %v3403 = vmul.f32 %v3383, %v3383
    %v3404 = vsub.f32 %v3400, %v3402
    %v3405 = vsub.f32 %v3401, %v3403
    %v3406 = vmax.f32 %v3404, 0.0
    %v3407 = vmax.f32 %v3405, 0.0
    %v3410 = vunpack.c.l.s4 1966171168
    %v3411 = vunpack.c.0.s8 %v3410
    %v3412 = vlaneseq
    %v3413 = vshrl.u32 %v3412, 7
    %v3414 = vsub.s32 %v3411, %v3413
    %v3415 = vrot.slane %v1259, %v3414
    %v3416 = vcombine.high %v3415, %v3415
    %v3418 = vunpack.c.l.s4 1966171168
    %v3419 = vunpack.c.0.s8 %v3418
    %v3420 = vlaneseq
    %v3421 = vshrl.u32 %v3420, 7
    %v3422 = vsub.s32 %v3419, %v3421
    %v3423 = vrot.slane %v3415, %v3422
    %v3425 = vunpack.c.l.s4 1966171168
    %v3426 = vunpack.c.0.s8 %v3425
    %v3427 = vlaneseq
    %v3428 = vshrl.u32 %v3427, 7
    %v3429 = vsub.s32 %v3426, %v3428
    %v3430 = vrot.slane %v3416, %v3429
    %v3435 = vunpack.c.l.s4 1966171168
    %v3436 = vunpack.c.0.s8 %v3435
    %v3437 = vlaneseq
    %v3438 = vshrl.u32 %v3437, 7
    %v3439 = vsub.s32 %v3436, %v3438
    %v3440 = vrot.slane %v1261, %v3439
    %v3441 = vcombine.high %v3440, %v3440
    %v3443 = vunpack.c.l.s4 1966171168
    %v3444 = vunpack.c.0.s8 %v3443
    %v3445 = vlaneseq
    %v3446 = vshrl.u32 %v3445, 7
    %v3447 = vsub.s32 %v3444, %v3446
    %v3448 = vrot.slane %v3440, %v3447
    %v3450 = vunpack.c.l.s4 1966171168
    %v3451 = vunpack.c.0.s8 %v3450
    %v3452 = vlaneseq
    %v3453 = vshrl.u32 %v3452, 7
    %v3454 = vsub.s32 %v3451, %v3453
    %v3455 = vrot.slane %v3441, %v3454
    %v3458 = vadd.f32 %v3406, 1e-05
    %v3459 = vadd.f32 %v3407, 1e-05
    %v3460 = vrsqrt.pop %v3458
    %v3461 = vrsqrt.pop %v3459
    %v3462 = vmul.f32 %v3423, %v3460
    %v3463 = vmul.f32 %v3430, %v3461
    %v3464 = vmul.f32 %v3382, %v3462
    %v3465 = vmul.f32 %v3383, %v3463
    %v3466 = vsub.f32 %v3448, %v3464
    %v3467 = vsub.f32 %v3455, %v3465
    %v3470 = vlaneseq
    %v3471 = vshrl.u32 %v3470, 7
    %v3472 = vsub.s32 0, %v3471
    %v3473 = vrot.slane %v3462, %v3472
    %v3474 = vlaneseq
    %v3475 = vshrl.u32 %v3474, 7
    %v3476 = vsub.s32 0, %v3475
    %v3477 = vrot.slane %v3463, %v3476
    %v3480 = vmul.f32 %v3360, %v3473
    %v3481 = vmul.f32 %v3365, %v3477
    %v3484 = vlaneseq
    %v3485 = vshrl.u32 %v3484, 7
    %v3486 = vsub.s32 0, %v3485
    %v3487 = vrot.slane %v3466, %v3486
    %v3488 = vlaneseq
    %v3489 = vshrl.u32 %v3488, 7
    %v3490 = vsub.s32 0, %v3489
    %v3491 = vrot.slane %v3467, %v3490
    %v3494 = vadd.f32 %v3480, %v3487
    %v3495 = vadd.f32 %v3481, %v3491
    %v3496 = vmul.f32 %v3494, 0.2
    %v3497 = vmul.f32 %v3495, 0.2
    %v3498 = vmax.f32 %v3494, %v3496
    %v3499 = vmax.f32 %v3495, %v3497
    %v3500 = vld [vmem:[#allocation16] sm:$0xff]
    %v3501 = vld [vmem:[#allocation16 + $0x8] sm:$0xff]
    %v3502 = vld [vmem:[#allocation16 + $0x10] sm:$0xff]
    %v3503 = vld [vmem:[#allocation16 + $0x18] sm:$0xff]
    %v3504 = vld [vmem:[#allocation16 + $0x20] sm:$0xff]
    %v3505 = vld [vmem:[#allocation16 + $0x28] sm:$0xff]
    %v3506 = vld [vmem:[#allocation16 + $0x30] sm:$0xff]
    %v3507 = vld [vmem:[#allocation16 + $0x38] sm:$0xff]
    %v3509 = vsel %vm2708, %v3277, 0
    %v3512 = vsel %vm2708, %v3278, 0
    %3514 = vmatprep.subr.mxu0 0.0
    %3515 = vmatpush1.msra.mxu0 0.0
    %3516 = vmatprep.subr.mxu0 0.0
    %3517 = vmatpush1.msra.mxu0 0.0
    %3518 = vmatprep.subr.mxu0 0.0
    %3519 = vmatpush1.msra.mxu0 0.0
    %3520 = vmatprep.subr.mxu0 0.0
    %3521 = vmatpush1.msra.mxu0 0.0
    %3522 = vmatprep.subr.mxu0 0.0
    %3523 = vmatpush1.msra.mxu0 0.0
    %3524 = vmatprep.subr.mxu0 0.0
    %3525 = vmatpush1.msra.mxu0 0.0
    %3526 = vmatprep.subr.mxu0 0.0
    %3527 = vmatpush1.msra.mxu0 0.0
    %3528 = vmatprep.subr.mxu0 0.0
    %3529 = vmatpush1.msra.mxu0 0.0
    %3530 = vmatprep.subr.mxu0 0.0
    %3531 = vmatpush1.msra.mxu0 %v3507
    %3532 = vmatprep.subr.mxu0 0.0
    %3533 = vmatpush1.msra.mxu0 %v3506
    %3534 = vmatprep.subr.mxu0 0.0
    %3535 = vmatpush1.msra.mxu0 %v3505
    %3536 = vmatprep.subr.mxu0 0.0
    %3537 = vmatpush1.msra.mxu0 %v3504
    %3538 = vmatprep.subr.mxu0 0.0
    %3539 = vmatpush1.msra.mxu0 %v3503
    %3540 = vmatprep.subr.mxu0 0.0
    %3541 = vmatpush1.msra.mxu0 %v3502
    %3542 = vmatprep.subr.mxu0 0.0
    %3543 = vmatpush1.msra.mxu0 %v3501
    %3544 = vmatprep.subr.mxu0 0.0
    %3545 = vmatpush1.msra.mxu0 %v3500
    %3546 = vmatprep.subr.mxu0 0.0
    %3547 = vmatpush2.msra.mxu0 0.0
    %3548 = vmatprep.subr.mxu0 0.0
    %3549 = vmatpush2.msra.mxu0 0.0
    %3550 = vmatprep.subr.mxu0 0.0
    %3551 = vmatpush2.msra.mxu0 0.0
    %3552 = vmatprep.subr.mxu0 0.0
    %3553 = vmatpush2.msra.mxu0 0.0
    %3554 = vmatprep.subr.mxu0 0.0
    %3555 = vmatpush2.msra.mxu0 0.0
    %3556 = vmatprep.subr.mxu0 0.0
    %3557 = vmatpush2.msra.mxu0 0.0
    %3558 = vmatprep.subr.mxu0 0.0
    %3559 = vmatpush2.msra.mxu0 0.0
    %3560 = vmatprep.subr.mxu0 0.0
    %3561 = vmatpush2.msra.mxu0 0.0
    %3562 = vmatprep.subr.mxu0 0.0
    %3563 = vmatpush2.msra.mxu0 0.0
    %3564 = vmatprep.subr.mxu0 0.0
    %3565 = vmatpush2.msra.mxu0 0.0
    %3566 = vmatprep.subr.mxu0 0.0
    %3567 = vmatpush2.msra.mxu0 0.0
    %3568 = vmatprep.subr.mxu0 0.0
    %3569 = vmatpush2.msra.mxu0 0.0
    %3570 = vmatprep.subr.mxu0 0.0
    %3571 = vmatpush2.msra.mxu0 0.0
    %3572 = vmatprep.subr.mxu0 0.0
    %3573 = vmatpush2.msra.mxu0 0.0
    %3574 = vmatprep.subr.mxu0 0.0
    %3575 = vmatpush2.msra.mxu0 0.0
    %3576 = vmatprep.subr.mxu0 0.0
    %3577 = vmatpush2.msra.mxu0 0.0
    %3578 = vmatprep.mubr.f32.mxu0 0.0
    %3579 = vmatmul.mubr.f32.gmra.mxu0 %v3509
    %v3580 = vpop.f32.mrf.mxu0
    %v3581 = vadd.f32 0.0, %v3580
    %v3582 = vpop.f32.mrf.mxu0
    %3583 = vmatprep.mubr.f32.mxu0 0.0
    %3584 = vmatmul.mubr.f32.gmra.mxu0 %v3512
    %v3585 = vpop.f32.mrf.mxu0
    %v3586 = vadd.f32 0.0, %v3585
    %v3587 = vpop.f32.mrf.mxu0
    %3588 = vdwg.mxu0
    %v3589 = vrot.slane %v3581, 4
    %v3590 = vadd.f32 %v3581, %v3589
    %v3591 = vrot.slane %v3590, 2
    %v3592 = vadd.f32 %v3590, %v3591
    %v3593 = vrot.slane %v3592, 1
    %v3594 = vadd.f32 %v3592, %v3593
    %v3595 = vrot.slane %v3586, 4
    %v3596 = vadd.f32 %v3586, %v3595
    %v3597 = vrot.slane %v3596, 2
    %v3598 = vadd.f32 %v3596, %v3597
    %v3599 = vrot.slane %v3598, 1
    %v3600 = vadd.f32 %v3598, %v3599
    %v3601 = vmul.f32 %v3594, 0.125
    %v3602 = vmul.f32 %v3600, 0.125
    %v3603 = vmul.f32 %v3581, %v3581
    %v3604 = vmul.f32 %v3586, %v3586
    %v3605 = vrot.slane %v3603, 4
    %v3606 = vadd.f32 %v3603, %v3605
    %v3607 = vrot.slane %v3606, 2
    %v3608 = vadd.f32 %v3606, %v3607
    %v3609 = vrot.slane %v3608, 1
    %v3610 = vadd.f32 %v3608, %v3609
    %v3611 = vrot.slane %v3604, 4
    %v3612 = vadd.f32 %v3604, %v3611
    %v3613 = vrot.slane %v3612, 2
    %v3614 = vadd.f32 %v3612, %v3613
    %v3615 = vrot.slane %v3614, 1
    %v3616 = vadd.f32 %v3614, %v3615
    %v3617 = vmul.f32 %v3610, 0.125
    %v3618 = vmul.f32 %v3616, 0.125
    %v3619 = vmul.f32 %v3601, %v3601
    %v3620 = vmul.f32 %v3602, %v3602
    %v3621 = vsub.f32 %v3617, %v3619
    %v3622 = vsub.f32 %v3618, %v3620
    %v3623 = vmax.f32 %v3621, 0.0
    %v3624 = vmax.f32 %v3622, 0.0
    %v3627 = vunpack.c.l.s4 1966171168
    %v3628 = vunpack.c.0.s8 %v3627
    %v3629 = vlaneseq
    %v3630 = vshrl.u32 %v3629, 7
    %v3631 = vsub.s32 %v3628, %v3630
    %v3632 = vrot.slane %v795, %v3631
    %v3633 = vcombine.high %v3632, %v3632
    %v3635 = vunpack.c.l.s4 1966171168
    %v3636 = vunpack.c.0.s8 %v3635
    %v3637 = vlaneseq
    %v3638 = vshrl.u32 %v3637, 7
    %v3639 = vsub.s32 %v3636, %v3638
    %v3640 = vrot.slane %v3632, %v3639
    %v3642 = vunpack.c.l.s4 1966171168
    %v3643 = vunpack.c.0.s8 %v3642
    %v3644 = vlaneseq
    %v3645 = vshrl.u32 %v3644, 7
    %v3646 = vsub.s32 %v3643, %v3645
    %v3647 = vrot.slane %v3633, %v3646
    %v3652 = vunpack.c.l.s4 1966171168
    %v3653 = vunpack.c.0.s8 %v3652
    %v3654 = vlaneseq
    %v3655 = vshrl.u32 %v3654, 7
    %v3656 = vsub.s32 %v3653, %v3655
    %v3657 = vrot.slane %v797, %v3656
    %v3658 = vcombine.high %v3657, %v3657
    %v3660 = vunpack.c.l.s4 1966171168
    %v3661 = vunpack.c.0.s8 %v3660
    %v3662 = vlaneseq
    %v3663 = vshrl.u32 %v3662, 7
    %v3664 = vsub.s32 %v3661, %v3663
    %v3665 = vrot.slane %v3657, %v3664
    %v3667 = vunpack.c.l.s4 1966171168
    %v3668 = vunpack.c.0.s8 %v3667
    %v3669 = vlaneseq
    %v3670 = vshrl.u32 %v3669, 7
    %v3671 = vsub.s32 %v3668, %v3670
    %v3672 = vrot.slane %v3658, %v3671
    %v3675 = vadd.f32 %v3623, 1e-05
    %v3676 = vadd.f32 %v3624, 1e-05
    %v3677 = vrsqrt.pop %v3675
    %v3678 = vrsqrt.pop %v3676
    %v3679 = vmul.f32 %v3640, %v3677
    %v3680 = vmul.f32 %v3647, %v3678
    %v3681 = vmul.f32 %v3601, %v3679
    %v3682 = vmul.f32 %v3602, %v3680
    %v3683 = vsub.f32 %v3665, %v3681
    %v3684 = vsub.f32 %v3672, %v3682
    %v3687 = vlaneseq
    %v3688 = vshrl.u32 %v3687, 7
    %v3689 = vsub.s32 0, %v3688
    %v3690 = vrot.slane %v3679, %v3689
    %v3691 = vlaneseq
    %v3692 = vshrl.u32 %v3691, 7
    %v3693 = vsub.s32 0, %v3692
    %v3694 = vrot.slane %v3680, %v3693
    %v3697 = vmul.f32 %v3581, %v3690
    %v3698 = vmul.f32 %v3586, %v3694
    %v3701 = vlaneseq
    %v3702 = vshrl.u32 %v3701, 7
    %v3703 = vsub.s32 0, %v3702
    %v3704 = vrot.slane %v3683, %v3703
    %v3705 = vlaneseq
    %v3706 = vshrl.u32 %v3705, 7
    %v3707 = vsub.s32 0, %v3706
    %v3708 = vrot.slane %v3684, %v3707
    %v3711 = vadd.f32 %v3697, %v3704
    %v3712 = vadd.f32 %v3698, %v3708
    %v3713 = vmul.f32 %v3711, 0.2
    %v3714 = vmul.f32 %v3712, 0.2
    %v3715 = vmax.f32 %v3711, %v3713
    %v3716 = vmax.f32 %v3712, %v3714
    %v3717 = vld [vmem:[#allocation24] sm:$0xff]
    %v3718 = vld [vmem:[#allocation24 + $0x8] sm:$0xff]
    %v3719 = vld [vmem:[#allocation24 + $0x10] sm:$0xff]
    %v3720 = vld [vmem:[#allocation24 + $0x18] sm:$0xff]
    %v3721 = vld [vmem:[#allocation24 + $0x20] sm:$0xff]
    %v3722 = vld [vmem:[#allocation24 + $0x28] sm:$0xff]
    %v3723 = vld [vmem:[#allocation24 + $0x30] sm:$0xff]
    %v3724 = vld [vmem:[#allocation24 + $0x38] sm:$0xff]
    %v3726 = vsel %vm2708, %v3498, 0
    %v3729 = vsel %vm2708, %v3499, 0
    %3731 = vmatprep.subr.mxu0 0.0
    %3732 = vmatpush1.msra.mxu0 0.0
    %3733 = vmatprep.subr.mxu0 0.0
    %3734 = vmatpush1.msra.mxu0 0.0
    %3735 = vmatprep.subr.mxu0 0.0
    %3736 = vmatpush1.msra.mxu0 0.0
    %3737 = vmatprep.subr.mxu0 0.0
    %3738 = vmatpush1.msra.mxu0 0.0
    %3739 = vmatprep.subr.mxu0 0.0
    %3740 = vmatpush1.msra.mxu0 0.0
    %3741 = vmatprep.subr.mxu0 0.0
    %3742 = vmatpush1.msra.mxu0 0.0
    %3743 = vmatprep.subr.mxu0 0.0
    %3744 = vmatpush1.msra.mxu0 0.0
    %3745 = vmatprep.subr.mxu0 0.0
    %3746 = vmatpush1.msra.mxu0 0.0
    %3747 = vmatprep.subr.mxu0 0.0
    %3748 = vmatpush1.msra.mxu0 %v3724
    %3749 = vmatprep.subr.mxu0 0.0
    %3750 = vmatpush1.msra.mxu0 %v3723
    %3751 = vmatprep.subr.mxu0 0.0
    %3752 = vmatpush1.msra.mxu0 %v3722
    %3753 = vmatprep.subr.mxu0 0.0
    %3754 = vmatpush1.msra.mxu0 %v3721
    %3755 = vmatprep.subr.mxu0 0.0
    %3756 = vmatpush1.msra.mxu0 %v3720
    %3757 = vmatprep.subr.mxu0 0.0
    %3758 = vmatpush1.msra.mxu0 %v3719
    %3759 = vmatprep.subr.mxu0 0.0
    %3760 = vmatpush1.msra.mxu0 %v3718
    %3761 = vmatprep.subr.mxu0 0.0
    %3762 = vmatpush1.msra.mxu0 %v3717
    %3763 = vmatprep.subr.mxu0 0.0
    %3764 = vmatpush2.msra.mxu0 0.0
    %3765 = vmatprep.subr.mxu0 0.0
    %3766 = vmatpush2.msra.mxu0 0.0
    %3767 = vmatprep.subr.mxu0 0.0
    %3768 = vmatpush2.msra.mxu0 0.0
    %3769 = vmatprep.subr.mxu0 0.0
    %3770 = vmatpush2.msra.mxu0 0.0
    %3771 = vmatprep.subr.mxu0 0.0
    %3772 = vmatpush2.msra.mxu0 0.0
    %3773 = vmatprep.subr.mxu0 0.0
    %3774 = vmatpush2.msra.mxu0 0.0
    %3775 = vmatprep.subr.mxu0 0.0
    %3776 = vmatpush2.msra.mxu0 0.0
    %3777 = vmatprep.subr.mxu0 0.0
    %3778 = vmatpush2.msra.mxu0 0.0
    %3779 = vmatprep.subr.mxu0 0.0
    %3780 = vmatpush2.msra.mxu0 0.0
    %3781 = vmatprep.subr.mxu0 0.0
    %3782 = vmatpush2.msra.mxu0 0.0
    %3783 = vmatprep.subr.mxu0 0.0
    %3784 = vmatpush2.msra.mxu0 0.0
    %3785 = vmatprep.subr.mxu0 0.0
    %3786 = vmatpush2.msra.mxu0 0.0
    %3787 = vmatprep.subr.mxu0 0.0
    %3788 = vmatpush2.msra.mxu0 0.0
    %3789 = vmatprep.subr.mxu0 0.0
    %3790 = vmatpush2.msra.mxu0 0.0
    %3791 = vmatprep.subr.mxu0 0.0
    %3792 = vmatpush2.msra.mxu0 0.0
    %3793 = vmatprep.subr.mxu0 0.0
    %3794 = vmatpush2.msra.mxu0 0.0
    %3795 = vmatprep.mubr.f32.mxu0 0.0
    %3796 = vmatmul.mubr.f32.gmra.mxu0 %v3726
    %v3797 = vpop.f32.mrf.mxu0
    %v3798 = vadd.f32 0.0, %v3797
    %v3799 = vpop.f32.mrf.mxu0
    %3800 = vmatprep.mubr.f32.mxu0 0.0
    %3801 = vmatmul.mubr.f32.gmra.mxu0 %v3729
    %v3802 = vpop.f32.mrf.mxu0
    %v3803 = vadd.f32 0.0, %v3802
    %v3804 = vpop.f32.mrf.mxu0
    %3805 = vdwg.mxu0
    %v3806 = vrot.slane %v3798, 4
    %v3807 = vadd.f32 %v3798, %v3806
    %v3808 = vrot.slane %v3807, 2
    %v3809 = vadd.f32 %v3807, %v3808
    %v3810 = vrot.slane %v3809, 1
    %v3811 = vadd.f32 %v3809, %v3810
    %v3812 = vrot.slane %v3803, 4
    %v3813 = vadd.f32 %v3803, %v3812
    %v3814 = vrot.slane %v3813, 2
    %v3815 = vadd.f32 %v3813, %v3814
    %v3816 = vrot.slane %v3815, 1
    %v3817 = vadd.f32 %v3815, %v3816
    %v3818 = vmul.f32 %v3811, 0.125
    %v3819 = vmul.f32 %v3817, 0.125
    %v3820 = vmul.f32 %v3798, %v3798
    %v3821 = vmul.f32 %v3803, %v3803
    %v3822 = vrot.slane %v3820, 4
    %v3823 = vadd.f32 %v3820, %v3822
    %v3824 = vrot.slane %v3823, 2
    %v3825 = vadd.f32 %v3823, %v3824
    %v3826 = vrot.slane %v3825, 1
    %v3827 = vadd.f32 %v3825, %v3826
    %v3828 = vrot.slane %v3821, 4
    %v3829 = vadd.f32 %v3821, %v3828
    %v3830 = vrot.slane %v3829, 2
    %v3831 = vadd.f32 %v3829, %v3830
    %v3832 = vrot.slane %v3831, 1
    %v3833 = vadd.f32 %v3831, %v3832
    %v3834 = vmul.f32 %v3827, 0.125
    %v3835 = vmul.f32 %v3833, 0.125
    %v3836 = vmul.f32 %v3818, %v3818
    %v3837 = vmul.f32 %v3819, %v3819
    %v3838 = vsub.f32 %v3834, %v3836
    %v3839 = vsub.f32 %v3835, %v3837
    %v3840 = vmax.f32 %v3838, 0.0
    %v3841 = vmax.f32 %v3839, 0.0
    %v3844 = vunpack.c.l.s4 1966171168
    %v3845 = vunpack.c.0.s8 %v3844
    %v3846 = vlaneseq
    %v3847 = vshrl.u32 %v3846, 7
    %v3848 = vsub.s32 %v3845, %v3847
    %v3849 = vrot.slane %v1330, %v3848
    %v3850 = vcombine.high %v3849, %v3849
    %v3852 = vunpack.c.l.s4 1966171168
    %v3853 = vunpack.c.0.s8 %v3852
    %v3854 = vlaneseq
    %v3855 = vshrl.u32 %v3854, 7
    %v3856 = vsub.s32 %v3853, %v3855
    %v3857 = vrot.slane %v3849, %v3856
    %v3859 = vunpack.c.l.s4 1966171168
    %v3860 = vunpack.c.0.s8 %v3859
    %v3861 = vlaneseq
    %v3862 = vshrl.u32 %v3861, 7
    %v3863 = vsub.s32 %v3860, %v3862
    %v3864 = vrot.slane %v3850, %v3863
    %v3869 = vunpack.c.l.s4 1966171168
    %v3870 = vunpack.c.0.s8 %v3869
    %v3871 = vlaneseq
    %v3872 = vshrl.u32 %v3871, 7
    %v3873 = vsub.s32 %v3870, %v3872
    %v3874 = vrot.slane %v1332, %v3873
    %v3875 = vcombine.high %v3874, %v3874
    %v3877 = vunpack.c.l.s4 1966171168
    %v3878 = vunpack.c.0.s8 %v3877
    %v3879 = vlaneseq
    %v3880 = vshrl.u32 %v3879, 7
    %v3881 = vsub.s32 %v3878, %v3880
    %v3882 = vrot.slane %v3874, %v3881
    %v3884 = vunpack.c.l.s4 1966171168
    %v3885 = vunpack.c.0.s8 %v3884
    %v3886 = vlaneseq
    %v3887 = vshrl.u32 %v3886, 7
    %v3888 = vsub.s32 %v3885, %v3887
    %v3889 = vrot.slane %v3875, %v3888
    %v3892 = vadd.f32 %v3840, 1e-05
    %v3893 = vadd.f32 %v3841, 1e-05
    %v3894 = vrsqrt.pop %v3892
    %v3895 = vrsqrt.pop %v3893
    %v3896 = vmul.f32 %v3857, %v3894
    %v3897 = vmul.f32 %v3864, %v3895
    %v3898 = vmul.f32 %v3818, %v3896
    %v3899 = vmul.f32 %v3819, %v3897
    %v3900 = vsub.f32 %v3882, %v3898
    %v3901 = vsub.f32 %v3889, %v3899
    %v3904 = vlaneseq
    %v3905 = vshrl.u32 %v3904, 7
    %v3906 = vsub.s32 0, %v3905
    %v3907 = vrot.slane %v3896, %v3906
    %v3908 = vlaneseq
    %v3909 = vshrl.u32 %v3908, 7
    %v3910 = vsub.s32 0, %v3909
    %v3911 = vrot.slane %v3897, %v3910
    %v3914 = vmul.f32 %v3798, %v3907
    %v3915 = vmul.f32 %v3803, %v3911
    %v3918 = vlaneseq
    %v3919 = vshrl.u32 %v3918, 7
    %v3920 = vsub.s32 0, %v3919
    %v3921 = vrot.slane %v3900, %v3920
    %v3922 = vlaneseq
    %v3923 = vshrl.u32 %v3922, 7
    %v3924 = vsub.s32 0, %v3923
    %v3925 = vrot.slane %v3901, %v3924
    %v3928 = vadd.f32 %v3914, %v3921
    %v3929 = vadd.f32 %v3915, %v3925
    %v3930 = vmul.f32 %v3928, 0.2
    %v3931 = vmul.f32 %v3929, 0.2
    %v3932 = vmax.f32 %v3928, %v3930
    %v3933 = vmax.f32 %v3929, %v3931
    %3934 = vmatprep.subr.mxu0 0.0
    %3935 = vmatpush1.xpose.msra.mxu0 0.0
    %3936 = vmatprep.subr.mxu0 0.0
    %3937 = vmatpush1.xpose.msra.mxu0 0.0
    %3938 = vmatprep.subr.mxu0 0.0
    %3939 = vmatpush1.xpose.msra.mxu0 0.0
    %3940 = vmatprep.subr.mxu0 0.0
    %3941 = vmatpush1.xpose.msra.mxu0 0.0
    %3942 = vmatprep.subr.mxu0 0.0
    %3943 = vmatpush1.xpose.msra.mxu0 0.0
    %3944 = vmatprep.subr.mxu0 0.0
    %3945 = vmatpush1.xpose.msra.mxu0 0.0
    %3946 = vmatprep.subr.mxu0 0.0
    %3947 = vmatpush1.xpose.msra.mxu0 0.0
    %3948 = vmatprep.subr.mxu0 0.0
    %3949 = vmatpush1.xpose.msra.mxu0 0.0
    %3950 = vmatprep.subr.mxu0 0.0
    %3951 = vmatpush1.xpose.msra.mxu0 0.0
    %3952 = vmatprep.subr.mxu0 0.0
    %3953 = vmatpush1.xpose.msra.mxu0 0.0
    %3954 = vmatprep.subr.mxu0 0.0
    %3955 = vmatpush1.xpose.msra.mxu0 0.0
    %3956 = vmatprep.subr.mxu0 0.0
    %3957 = vmatpush1.xpose.msra.mxu0 0.0
    %3958 = vmatprep.subr.mxu0 0.0
    %3959 = vmatpush1.xpose.msra.mxu0 0.0
    %3960 = vmatprep.subr.mxu0 0.0
    %3961 = vmatpush1.xpose.msra.mxu0 0.0
    %3962 = vmatprep.subr.mxu0 0.0
    %3963 = vmatpush1.xpose.msra.mxu0 0.0
    %3964 = vmatprep.subr.mxu0 0.0
    %3965 = vmatpush1.xpose.msra.mxu0 %v3932
    %3966 = vmatprep.subr.mxu0 0.0
    %3967 = vmatpush2.xpose.msra.mxu0 0.0
    %3968 = vmatprep.subr.mxu0 0.0
    %3969 = vmatpush2.xpose.msra.mxu0 0.0
    %3970 = vmatprep.subr.mxu0 0.0
    %3971 = vmatpush2.xpose.msra.mxu0 0.0
    %3972 = vmatprep.subr.mxu0 0.0
    %3973 = vmatpush2.xpose.msra.mxu0 0.0
    %3974 = vmatprep.subr.mxu0 0.0
    %3975 = vmatpush2.xpose.msra.mxu0 0.0
    %3976 = vmatprep.subr.mxu0 0.0
    %3977 = vmatpush2.xpose.msra.mxu0 0.0
    %3978 = vmatprep.subr.mxu0 0.0
    %3979 = vmatpush2.xpose.msra.mxu0 0.0
    %3980 = vmatprep.subr.mxu0 0.0
    %3981 = vmatpush2.xpose.msra.mxu0 0.0
    %3982 = vmatprep.subr.mxu0 0.0
    %3983 = vmatpush2.xpose.msra.mxu0 0.0
    %3984 = vmatprep.subr.mxu0 0.0
    %3985 = vmatpush2.xpose.msra.mxu0 0.0
    %3986 = vmatprep.subr.mxu0 0.0
    %3987 = vmatpush2.xpose.msra.mxu0 0.0
    %3988 = vmatprep.subr.mxu0 0.0
    %3989 = vmatpush2.xpose.msra.mxu0 0.0
    %3990 = vmatprep.subr.mxu0 0.0
    %3991 = vmatpush2.xpose.msra.mxu0 0.0
    %3992 = vmatprep.subr.mxu0 0.0
    %3993 = vmatpush2.xpose.msra.mxu0 0.0
    %3994 = vmatprep.subr.mxu0 0.0
    %3995 = vmatpush2.xpose.msra.mxu0 0.0
    %3996 = vmatprep.subr.mxu0 0.0
    %3997 = vmatpush2.xpose.msra.mxu0 0.0
    %3998 = vmatprep.mubr.f32.mxu0 0.0
    %3999 = vmatmul.mubr.f32.gmra.mxu0 %v3715
    %v4000 = vpop.f32.mrf.mxu0
    %v4001 = vadd.f32 0.0, %v4000
    %v4002 = vpop.f32.mrf.mxu0
    %4003 = vdwg.mxu0
    %4004 = vmatprep.subr.mxu0 0.0
    %4005 = vmatpush1.xpose.msra.mxu0 0.0
    %4006 = vmatprep.subr.mxu0 0.0
    %4007 = vmatpush1.xpose.msra.mxu0 0.0
    %4008 = vmatprep.subr.mxu0 0.0
    %4009 = vmatpush1.xpose.msra.mxu0 0.0
    %4010 = vmatprep.subr.mxu0 0.0
    %4011 = vmatpush1.xpose.msra.mxu0 0.0
    %4012 = vmatprep.subr.mxu0 0.0
    %4013 = vmatpush1.xpose.msra.mxu0 0.0
    %4014 = vmatprep.subr.mxu0 0.0
    %4015 = vmatpush1.xpose.msra.mxu0 0.0
    %4016 = vmatprep.subr.mxu0 0.0
    %4017 = vmatpush1.xpose.msra.mxu0 0.0
    %4018 = vmatprep.subr.mxu0 0.0
    %4019 = vmatpush1.xpose.msra.mxu0 0.0
    %4020 = vmatprep.subr.mxu0 0.0
    %4021 = vmatpush1.xpose.msra.mxu0 0.0
    %4022 = vmatprep.subr.mxu0 0.0
    %4023 = vmatpush1.xpose.msra.mxu0 0.0
    %4024 = vmatprep.subr.mxu0 0.0
    %4025 = vmatpush1.xpose.msra.mxu0 0.0
    %4026 = vmatprep.subr.mxu0 0.0
    %4027 = vmatpush1.xpose.msra.mxu0 0.0
    %4028 = vmatprep.subr.mxu0 0.0
    %4029 = vmatpush1.xpose.msra.mxu0 0.0
    %4030 = vmatprep.subr.mxu0 0.0
    %4031 = vmatpush1.xpose.msra.mxu0 0.0
    %4032 = vmatprep.subr.mxu0 0.0
    %4033 = vmatpush1.xpose.msra.mxu0 0.0
    %4034 = vmatprep.subr.mxu0 0.0
    %4035 = vmatpush1.xpose.msra.mxu0 %v3933
    %4036 = vmatprep.subr.mxu0 0.0
    %4037 = vmatpush2.xpose.msra.mxu0 0.0
    %4038 = vmatprep.subr.mxu0 0.0
    %4039 = vmatpush2.xpose.msra.mxu0 0.0
    %4040 = vmatprep.subr.mxu0 0.0
    %4041 = vmatpush2.xpose.msra.mxu0 0.0
    %4042 = vmatprep.subr.mxu0 0.0
    %4043 = vmatpush2.xpose.msra.mxu0 0.0
    %4044 = vmatprep.subr.mxu0 0.0
    %4045 = vmatpush2.xpose.msra.mxu0 0.0
    %4046 = vmatprep.subr.mxu0 0.0
    %4047 = vmatpush2.xpose.msra.mxu0 0.0
    %4048 = vmatprep.subr.mxu0 0.0
    %4049 = vmatpush2.xpose.msra.mxu0 0.0
    %4050 = vmatprep.subr.mxu0 0.0
    %4051 = vmatpush2.xpose.msra.mxu0 0.0
    %4052 = vmatprep.subr.mxu0 0.0
    %4053 = vmatpush2.xpose.msra.mxu0 0.0
    %4054 = vmatprep.subr.mxu0 0.0
    %4055 = vmatpush2.xpose.msra.mxu0 0.0
    %4056 = vmatprep.subr.mxu0 0.0
    %4057 = vmatpush2.xpose.msra.mxu0 0.0
    %4058 = vmatprep.subr.mxu0 0.0
    %4059 = vmatpush2.xpose.msra.mxu0 0.0
    %4060 = vmatprep.subr.mxu0 0.0
    %4061 = vmatpush2.xpose.msra.mxu0 0.0
    %4062 = vmatprep.subr.mxu0 0.0
    %4063 = vmatpush2.xpose.msra.mxu0 0.0
    %4064 = vmatprep.subr.mxu0 0.0
    %4065 = vmatpush2.xpose.msra.mxu0 0.0
    %4066 = vmatprep.subr.mxu0 0.0
    %4067 = vmatpush2.xpose.msra.mxu0 0.0
    %4068 = vmatprep.mubr.f32.mxu0 0.0
    %4069 = vmatmul.mubr.f32.gmra.mxu0 %v3716
    %v4070 = vpop.f32.mrf.mxu0
    %v4071 = vadd.f32 0.0, %v4070
    %v4072 = vpop.f32.mrf.mxu0
    %4073 = vdwg.mxu0
    %4075 = vrot.lane.b32.xlu0 %v4071, 8
    %v4076 = vpop.permute.xlu0 %4075
    %vm4078 = vcmask 64512
    %v4079 = vsel %vm4078, %v4001, %v4076
    %4080 = vst.msk [vmem:[%s19] sm:$0xff] %vm370, %v4079
    // Predicated region
    $region138: #{decoder2_forward.1} parent=1 // pred_check
      _
    $region139: #{decoder2_forward.1} parent=1 // pred_check_branch
      %4082 = sbr.rel (0) target = $region141
    $region140: #{decoder2_forward.1} parent=1 // pred_region
      _
    $region141: #{decoder2_forward.1} parent=1 // pred_fallthru
      _
    // Predicated region
    $region142: #{decoder2_forward.1} parent=1 // pred_check
      _
    $region143: #{decoder2_forward.1} parent=1 // pred_check_branch
      %4084 = sbr.rel (0) target = $region145
    $region144: #{decoder2_forward.1} parent=1 // pred_region
      _
    $region145: #{decoder2_forward.1} parent=1 // pred_fallthru
      _
    %4085 = vsyncpa [#allocation3], 1
    %4086 = vsyncpa [#allocation5], 1
    %4087 = vsyncpa [#allocation8], 1
    %4088 = vsyncpa [#allocation11], 1
    %4089 = vsyncpa [#allocation14], 1
    %4090 = vsyncpa [#allocation17], 1
    %4091 = vsyncpa [#allocation20], 1
    %4092 = vsyncpa [#allocation23], 1

// kernel: decoder2_forward.1
$region0: #{decoder2_forward.1}
  #allocation0 [shape = 'u32[]', space=smem, size = 0x4, offset = 0x4, fixed_abs, tag = 'smem constant byte address 0x4 - core index']
  #allocation1 [shape = 'u32[144,128]{1,0:T(1,128)}', space=vmem, size = 0x12000, scoped, tag = 'internal scratch']
  %s0 = inlined_call_operand.vmem [shape: f32[2,8,16], index: 0, kind: input, shape index: {}]
  %s1 = inlined_call_operand.vmem [shape: f32[2,1,16], index: 1, kind: input, shape index: {}]
  %s2 = inlined_call_operand.vmem [shape: f32[2,1,16], index: 2, kind: input, shape index: {}]
  %s3 = inlined_call_operand.hbm [shape: f32[16,1536], index: 3, kind: input, shape index: {}]
  %s4 = inlined_call_operand.hbm [shape: f32[1,1536], index: 4, kind: input, shape index: {}]
  %s5 = inlined_call_operand.hbm [shape: f32[16,1536], index: 5, kind: input, shape index: {}]
  %s6 = inlined_call_operand.hbm [shape: f32[1,1536], index: 6, kind: input, shape index: {}]
  %s7 = inlined_call_operand.hbm [shape: f32[16,16], index: 7, kind: input, shape index: {}]
  %s8 = inlined_call_operand.hbm [shape: f32[16,32], index: 8, kind: input, shape index: {}]
  %s9 = inlined_call_operand.hbm [shape: f32[32,32], index: 9, kind: input, shape index: {}]
  %s10 = inlined_call_operand.hbm [shape: f32[32,64], index: 10, kind: input, shape index: {}]
  %s11 = inlined_call_operand.hbm [shape: f32[64,64], index: 11, kind: input, shape index: {}]
  %s12 = inlined_call_operand.hbm [shape: f32[64,128], index: 12, kind: input, shape index: {}]
  %s13 = inlined_call_operand.vmem [shape: f32[16,16], index: 13, kind: input, shape index: {}]
  %s14 = inlined_call_operand.hbm [shape: f32[16,32], index: 14, kind: input, shape index: {}]
  %s15 = inlined_call_operand.hbm [shape: f32[32,32], index: 15, kind: input, shape index: {}]
  %s16 = inlined_call_operand.hbm [shape: f32[32,64], index: 16, kind: input, shape index: {}]
  %s17 = inlined_call_operand.hbm [shape: f32[64,64], index: 17, kind: input, shape index: {}]
  %s18 = inlined_call_operand.hbm [shape: f32[64,128], index: 18, kind: input, shape index: {}]
  %s19 = inlined_call_operand.vmem [shape: f32[1,8,16], index: 19, kind: output, shape index: {}]
  %s20 = sld [smem:[#allocation0]]
  $region146: #{decoder2_forward.1} parent=0
    _
  %s22 = ssub.s32 1, %s20
  %s23 = scalar_select 0, %s22, %s20
  $region1: #{decoder2_forward.1} parent=0
    #allocation2 [shape = 'u8[98304]{0}', space=vmem, size = 0x18000, scoped, tag = 'input window, operand 3, single buffered']
    #allocation3 [shape = 's32[1]{0}', space=sflag, size = 0x4, scoped, tag = 'scoped memory for decoder2_forward.1']
    #allocation4 [shape = 'u8[6144]{0}', space=vmem, size = 0x1800, scoped, tag = 'input window, operand 4, single buffered']
    #allocation5 [shape = 's32[1]{0}', space=sflag, size = 0x4, scoped, tag = 'scoped memory for decoder2_forward.1']
    #allocation6 [shape = 'u8[98304]{0}', space=vmem, size = 0x18000, scoped, tag = 'input window, operand 5, single buffered']
    #allocation7 [shape = 'u8[6144]{0}', space=vmem, size = 0x1800, scoped, tag = 'input window, operand 6, single buffered']
    #allocation8 [shape = 's32[1]{0}', space=sflag, size = 0x4, scoped, tag = 'scoped memory for decoder2_forward.1']
    #allocation9 [shape = 'u8[8192]{0}', space=vmem, size = 0x2000, scoped, tag = 'input window, operand 7, single buffered']
    #allocation10 [shape = 'u8[8192]{0}', space=vmem, size = 0x2000, scoped, tag = 'input window, operand 8, single buffered']
    #allocation11 [shape = 's32[1]{0}', space=sflag, size = 0x4, scoped, tag = 'scoped memory for decoder2_forward.1']
    #allocation12 [shape = 'u8[16384]{0}', space=vmem, size = 0x4000, scoped, tag = 'input window, operand 9, single buffered']
    #allocation13 [shape = 'u8[16384]{0}', space=vmem, size = 0x4000, scoped, tag = 'input window, operand 10, single buffered']
    #allocation14 [shape = 's32[1]{0}', space=sflag, size = 0x4, scoped, tag = 'scoped memory for decoder2_forward.1']
    #allocation15 [shape = 'u8[32768]{0}', space=vmem, size = 0x8000, scoped, tag = 'input window, operand 11, single buffered']
    #allocation16 [shape = 'u8[32768]{0}', space=vmem, size = 0x8000, scoped, tag = 'input window, operand 12, single buffered']
    #allocation17 [shape = 's32[1]{0}', space=sflag, size = 0x4, scoped, tag = 'scoped memory for decoder2_forward.1']
    #allocation18 [shape = 'u8[8192]{0}', space=vmem, size = 0x2000, scoped, tag = 'input window, operand 14, single buffered']
    #allocation19 [shape = 'u8[16384]{0}', space=vmem, size = 0x4000, scoped, tag = 'input window, operand 15, single buffered']
    #allocation20 [shape = 's32[1]{0}', space=sflag, size = 0x4, scoped, tag = 'scoped memory for decoder2_forward.1']
    #allocation21 [shape = 'u8[16384]{0}', space=vmem, size = 0x4000, scoped, tag = 'input window, operand 16, single buffered']
    #allocation22 [shape = 'u8[32768]{0}', space=vmem, size = 0x8000, scoped, tag = 'input window, operand 17, single buffered']
    #allocation23 [shape = 's32[1]{0}', space=sflag, size = 0x4, scoped, tag = 'scoped memory for decoder2_forward.1']
    #allocation24 [shape = 'u8[32768]{0}', space=vmem, size = 0x8000, scoped, tag = 'input window, operand 18, single buffered']
    %24 = vsyncpa [#allocation3], 0
    %25 = vsyncpa [#allocation5], 0
    %26 = vsyncpa [#allocation8], 0
    %27 = vsyncpa [#allocation11], 0
    %28 = vsyncpa [#allocation14], 0
    %29 = vsyncpa [#allocation17], 0
    %30 = vsyncpa [#allocation20], 0
    %31 = vsyncpa [#allocation23], 0
    // Predicated region
    $region2: #{decoder2_forward.1} parent=1 // pred_check
      _
    $region3: #{decoder2_forward.1} parent=1 // pred_check_branch
      %33 = sbr.rel (0) target = $region5
    $region4: #{decoder2_forward.1} parent=1 // pred_region
      _
    $region5: #{decoder2_forward.1} parent=1 // pred_fallthru
      _
    // Predicated region
    $region6: #{decoder2_forward.1} parent=1 // pred_check
      _
    $region7: #{decoder2_forward.1} parent=1 // pred_check_branch
      %35 = sbr.rel (0) target = $region9
    $region8: #{decoder2_forward.1} parent=1 // pred_region
      _
    $region9: #{decoder2_forward.1} parent=1 // pred_fallthru
      _
    // Predicated region
    $region10: #{decoder2_forward.1} parent=1 // pred_check
      _
    $region11: #{decoder2_forward.1} parent=1 // pred_check_branch
      %37 = sbr.rel (0) target = $region13
    $region12: #{decoder2_forward.1} parent=1 // pred_region
      _
    $region13: #{decoder2_forward.1} parent=1 // pred_fallthru
      _
    // Predicated region
    $region14: #{decoder2_forward.1} parent=1 // pred_check
      _
    $region15: #{decoder2_forward.1} parent=1 // pred_check_branch
      %39 = sbr.rel (0) target = $region17
    $region16: #{decoder2_forward.1} parent=1 // pred_region
      %s41 = ssub.s32 3072, 3072
      %42 = vsyncadd [#allocation3], %s41
      %s43 = sshll.u32 [#allocation2], 4
      %s44 = int_to_ptr.vmem [resolvable:$true] %s43
      %49 = dma.hbm_to_vmem [thread:$0]  %s3, 3072, %s44, [#allocation3], 1536, 1536, 96
    $region17: #{decoder2_forward.1} parent=1 // pred_fallthru
      _
    // Predicated region
    $region18: #{decoder2_forward.1} parent=1 // pred_check
      _
    $region19: #{decoder2_forward.1} parent=1 // pred_check_branch
      %51 = sbr.rel (0) target = $region21
    $region20: #{decoder2_forward.1} parent=1 // pred_region
      %s53 = ssub.s32 192, 192
      %54 = vsyncadd [#allocation5], %s53
      %s56 = sshll.u32 [#allocation4], 4
      %s57 = int_to_ptr.vmem [resolvable:$true] %s56
      %59 = dma.hbm_to_vmem [thread:$0]  %s4, 192, %s57, [#allocation5]
    $region21: #{decoder2_forward.1} parent=1 // pred_fallthru
      _
    // Predicated region
    $region22: #{decoder2_forward.1} parent=1 // pred_check
      _
    $region23: #{decoder2_forward.1} parent=1 // pred_check_branch
      %61 = sbr.rel (0) target = $region25
    $region24: #{decoder2_forward.1} parent=1 // pred_region
      %s63 = ssub.s32 3072, 3072
      %64 = vsyncadd [#allocation5], %s63
      %s65 = sshll.u32 [#allocation6], 4
      %s66 = int_to_ptr.vmem [resolvable:$true] %s65
      %71 = dma.hbm_to_vmem [thread:$0]  %s5, 3072, %s66, [#allocation5], 1536, 1536, 96
    $region25: #{decoder2_forward.1} parent=1 // pred_fallthru
      _
    // Predicated region
    $region26: #{decoder2_forward.1} parent=1 // pred_check
      _
    $region27: #{decoder2_forward.1} parent=1 // pred_check_branch
      %73 = sbr.rel (0) target = $region29
    $region28: #{decoder2_forward.1} parent=1 // pred_region
      %s75 = ssub.s32 192, 192
      %76 = vsyncadd [#allocation8], %s75
      %s78 = sshll.u32 [#allocation7], 4
      %s79 = int_to_ptr.vmem [resolvable:$true] %s78
      %81 = dma.hbm_to_vmem [thread:$0]  %s6, 192, %s79, [#allocation8]
    $region29: #{decoder2_forward.1} parent=1 // pred_fallthru
      _
    // Predicated region
    $region30: #{decoder2_forward.1} parent=1 // pred_check
      _
    $region31: #{decoder2_forward.1} parent=1 // pred_check_branch
      %83 = sbr.rel (0) target = $region33
    $region32: #{decoder2_forward.1} parent=1 // pred_region
      %s85 = ssub.s32 256, 256
      %86 = vsyncadd [#allocation8], %s85
      %s87 = sshll.u32 [#allocation9], 4
      %s88 = int_to_ptr.vmem [resolvable:$true] %s87
      %93 = dma.hbm_to_vmem [thread:$0]  %s7, 256, %s88, [#allocation8], 128, 128, 8
    $region33: #{decoder2_forward.1} parent=1 // pred_fallthru
      _
    // Predicated region
    $region34: #{decoder2_forward.1} parent=1 // pred_check
      _
    $region35: #{decoder2_forward.1} parent=1 // pred_check_branch
      %95 = sbr.rel (0) target = $region37
    $region36: #{decoder2_forward.1} parent=1 // pred_region
      %s97 = ssub.s32 256, 256
      %98 = vsyncadd [#allocation11], %s97
      %s99 = sshll.u32 [#allocation10], 4
      %s100 = int_to_ptr.vmem [resolvable:$true] %s99
      %105 = dma.hbm_to_vmem [thread:$0]  %s8, 256, %s100, [#allocation11], 128, 128, 8
    $region37: #{decoder2_forward.1} parent=1 // pred_fallthru
      _
    // Predicated region
    $region38: #{decoder2_forward.1} parent=1 // pred_check
      _
    $region39: #{decoder2_forward.1} parent=1 // pred_check_branch
      %107 = sbr.rel (0) target = $region41
    $region40: #{decoder2_forward.1} parent=1 // pred_region
      %s109 = ssub.s32 512, 512
      %110 = vsyncadd [#allocation11], %s109
      %s111 = sshll.u32 [#allocation12], 4
      %s112 = int_to_ptr.vmem [resolvable:$true] %s111
      %117 = dma.hbm_to_vmem [thread:$0]  %s9, 512, %s112, [#allocation11], 128, 128, 8
    $region41: #{decoder2_forward.1} parent=1 // pred_fallthru
      _
    // Predicated region
    $region42: #{decoder2_forward.1} parent=1 // pred_check
      _
    $region43: #{decoder2_forward.1} parent=1 // pred_check_branch
      %119 = sbr.rel (0) target = $region45
    $region44: #{decoder2_forward.1} parent=1 // pred_region
      %s121 = ssub.s32 512, 512
      %122 = vsyncadd [#allocation14], %s121
      %s123 = sshll.u32 [#allocation13], 4
      %s124 = int_to_ptr.vmem [resolvable:$true] %s123
      %129 = dma.hbm_to_vmem [thread:$0]  %s10, 512, %s124, [#allocation14], 128, 128, 8
    $region45: #{decoder2_forward.1} parent=1 // pred_fallthru
      _
    // Predicated region
    $region46: #{decoder2_forward.1} parent=1 // pred_check
      _
    $region47: #{decoder2_forward.1} parent=1 // pred_check_branch
      %131 = sbr.rel (0) target = $region49
    $region48: #{decoder2_forward.1} parent=1 // pred_region
      %s133 = ssub.s32 1024, 1024
      %134 = vsyncadd [#allocation14], %s133
      %s135 = sshll.u32 [#allocation15], 4
      %s136 = int_to_ptr.vmem [resolvable:$true] %s135
      %141 = dma.hbm_to_vmem [thread:$0]  %s11, 1024, %s136, [#allocation14], 128, 128, 8
    $region49: #{decoder2_forward.1} parent=1 // pred_fallthru
      _
    // Predicated region
    $region50: #{decoder2_forward.1} parent=1 // pred_check
      _
    $region51: #{decoder2_forward.1} parent=1 // pred_check_branch
      %143 = sbr.rel (0) target = $region53
    $region52: #{decoder2_forward.1} parent=1 // pred_region
      %s145 = ssub.s32 1024, 1024
      %146 = vsyncadd [#allocation17], %s145
      %s147 = sshll.u32 [#allocation16], 4
      %s148 = int_to_ptr.vmem [resolvable:$true] %s147
      %153 = dma.hbm_to_vmem [thread:$0]  %s12, 1024, %s148, [#allocation17], 128, 128, 8
    $region53: #{decoder2_forward.1} parent=1 // pred_fallthru
      _
    // Predicated region
    $region54: #{decoder2_forward.1} parent=1 // pred_check
      _
    $region55: #{decoder2_forward.1} parent=1 // pred_check_branch
      %155 = sbr.rel (0) target = $region57
    $region56: #{decoder2_forward.1} parent=1 // pred_region
      _
    $region57: #{decoder2_forward.1} parent=1 // pred_fallthru
      _
    // Predicated region
    $region58: #{decoder2_forward.1} parent=1 // pred_check
      _
    $region59: #{decoder2_forward.1} parent=1 // pred_check_branch
      %157 = sbr.rel (0) target = $region61
    $region60: #{decoder2_forward.1} parent=1 // pred_region
      %s159 = ssub.s32 256, 256
      %160 = vsyncadd [#allocation17], %s159
      %s161 = sshll.u32 [#allocation18], 4
      %s162 = int_to_ptr.vmem [resolvable:$true] %s161
      %167 = dma.hbm_to_vmem [thread:$0]  %s14, 256, %s162, [#allocation17], 128, 128, 8
    $region61: #{decoder2_forward.1} parent=1 // pred_fallthru
      _
    // Predicated region
    $region62: #{decoder2_forward.1} parent=1 // pred_check
      _
    $region63: #{decoder2_forward.1} parent=1 // pred_check_branch
      %169 = sbr.rel (0) target = $region65
    $region64: #{decoder2_forward.1} parent=1 // pred_region
      %s171 = ssub.s32 512, 512
      %172 = vsyncadd [#allocation20], %s171
      %s173 = sshll.u32 [#allocation19], 4
      %s174 = int_to_ptr.vmem [resolvable:$true] %s173
      %179 = dma.hbm_to_vmem [thread:$0]  %s15, 512, %s174, [#allocation20], 128, 128, 8
    $region65: #{decoder2_forward.1} parent=1 // pred_fallthru
      _
    // Predicated region
    $region66: #{decoder2_forward.1} parent=1 // pred_check
      _
    $region67: #{decoder2_forward.1} parent=1 // pred_check_branch
      %181 = sbr.rel (0) target = $region69
    $region68: #{decoder2_forward.1} parent=1 // pred_region
      %s183 = ssub.s32 512, 512
      %184 = vsyncadd [#allocation20], %s183
      %s185 = sshll.u32 [#allocation21], 4
      %s186 = int_to_ptr.vmem [resolvable:$true] %s185
      %191 = dma.hbm_to_vmem [thread:$0]  %s16, 512, %s186, [#allocation20], 128, 128, 8
    $region69: #{decoder2_forward.1} parent=1 // pred_fallthru
      _
    // Predicated region
    $region70: #{decoder2_forward.1} parent=1 // pred_check
      _
    $region71: #{decoder2_forward.1} parent=1 // pred_check_branch
      %193 = sbr.rel (0) target = $region73
    $region72: #{decoder2_forward.1} parent=1 // pred_region
      %s195 = ssub.s32 1024, 1024
      %196 = vsyncadd [#allocation23], %s195
      %s197 = sshll.u32 [#allocation22], 4
      %s198 = int_to_ptr.vmem [resolvable:$true] %s197
      %203 = dma.hbm_to_vmem [thread:$0]  %s17, 1024, %s198, [#allocation23], 128, 128, 8
    $region73: #{decoder2_forward.1} parent=1 // pred_fallthru
      _
    // Predicated region
    $region74: #{decoder2_forward.1} parent=1 // pred_check
      _
    $region75: #{decoder2_forward.1} parent=1 // pred_check_branch
      %205 = sbr.rel (0) target = $region77
    $region76: #{decoder2_forward.1} parent=1 // pred_region
      %s207 = ssub.s32 1024, 1024
      %208 = vsyncadd [#allocation23], %s207
      %s209 = sshll.u32 [#allocation24], 4
      %s210 = int_to_ptr.vmem [resolvable:$true] %s209
      %215 = dma.hbm_to_vmem [thread:$0]  %s18, 1024, %s210, [#allocation23], 128, 128, 8
    $region77: #{decoder2_forward.1} parent=1 // pred_fallthru
      _
    // Predicated region
    $region78: #{decoder2_forward.1} parent=1 // pred_check
      _
    $region79: #{decoder2_forward.1} parent=1 // pred_check_branch
      %217 = sbr.rel (0) target = $region81
    $region80: #{decoder2_forward.1} parent=1 // pred_region
      %218 = dma.done [#allocation3], 3072
    $region81: #{decoder2_forward.1} parent=1 // pred_fallthru
      _
    // Predicated region
    $region82: #{decoder2_forward.1} parent=1 // pred_check
      _
    $region83: #{decoder2_forward.1} parent=1 // pred_check_branch
      %220 = sbr.rel (0) target = $region85
    $region84: #{decoder2_forward.1} parent=1 // pred_region
      %221 = dma.done [#allocation5], 192
    $region85: #{decoder2_forward.1} parent=1 // pred_fallthru
      _
    // Predicated region
    $region86: #{decoder2_forward.1} parent=1 // pred_check
      _
    $region87: #{decoder2_forward.1} parent=1 // pred_check_branch
      %223 = sbr.rel (0) target = $region89
    $region88: #{decoder2_forward.1} parent=1 // pred_region
      %224 = dma.done [#allocation5], 3072
    $region89: #{decoder2_forward.1} parent=1 // pred_fallthru
      _
    // Predicated region
    $region90: #{decoder2_forward.1} parent=1 // pred_check
      _
    $region91: #{decoder2_forward.1} parent=1 // pred_check_branch
      %226 = sbr.rel (0) target = $region93
    $region92: #{decoder2_forward.1} parent=1 // pred_region
      %227 = dma.done [#allocation8], 192
    $region93: #{decoder2_forward.1} parent=1 // pred_fallthru
      _
    // Predicated region
    $region94: #{decoder2_forward.1} parent=1 // pred_check
      _
    $region95: #{decoder2_forward.1} parent=1 // pred_check_branch
      %229 = sbr.rel (0) target = $region97
    $region96: #{decoder2_forward.1} parent=1 // pred_region
      %230 = dma.done [#allocation8], 256
    $region97: #{decoder2_forward.1} parent=1 // pred_fallthru
      _
    // Predicated region
    $region98: #{decoder2_forward.1} parent=1 // pred_check
      _
    $region99: #{decoder2_forward.1} parent=1 // pred_check_branch
      %232 = sbr.rel (0) target = $region101
    $region100: #{decoder2_forward.1} parent=1 // pred_region
      %233 = dma.done [#allocation11], 256
    $region101: #{decoder2_forward.1} parent=1 // pred_fallthru
      _
    // Predicated region
    $region102: #{decoder2_forward.1} parent=1 // pred_check
      _
    $region103: #{decoder2_forward.1} parent=1 // pred_check_branch
      %235 = sbr.rel (0) target = $region105
    $region104: #{decoder2_forward.1} parent=1 // pred_region
      %236 = dma.done [#allocation11], 512
    $region105: #{decoder2_forward.1} parent=1 // pred_fallthru
      _
    // Predicated region
    $region106: #{decoder2_forward.1} parent=1 // pred_check
      _
    $region107: #{decoder2_forward.1} parent=1 // pred_check_branch
      %238 = sbr.rel (0) target = $region109
    $region108: #{decoder2_forward.1} parent=1 // pred_region
      %239 = dma.done [#allocation14], 512
    $region109: #{decoder2_forward.1} parent=1 // pred_fallthru
      _
    // Predicated region
    $region110: #{decoder2_forward.1} parent=1 // pred_check
      _
    $region111: #{decoder2_forward.1} parent=1 // pred_check_branch
      %241 = sbr.rel (0) target = $region113
    $region112: #{decoder2_forward.1} parent=1 // pred_region
      %242 = dma.done [#allocation14], 1024
    $region113: #{decoder2_forward.1} parent=1 // pred_fallthru
      _
    // Predicated region
    $region114: #{decoder2_forward.1} parent=1 // pred_check
      _
    $region115: #{decoder2_forward.1} parent=1 // pred_check_branch
      %244 = sbr.rel (0) target = $region117
    $region116: #{decoder2_forward.1} parent=1 // pred_region
      %245 = dma.done [#allocation17], 1024
    $region117: #{decoder2_forward.1} parent=1 // pred_fallthru
      _
    // Predicated region
    $region118: #{decoder2_forward.1} parent=1 // pred_check
      _
    $region119: #{decoder2_forward.1} parent=1 // pred_check_branch
      %247 = sbr.rel (0) target = $region121
    $region120: #{decoder2_forward.1} parent=1 // pred_region
      %248 = dma.done [#allocation17], 256
    $region121: #{decoder2_forward.1} parent=1 // pred_fallthru
      _
    // Predicated region
    $region122: #{decoder2_forward.1} parent=1 // pred_check
      _
    $region123: #{decoder2_forward.1} parent=1 // pred_check_branch
      %250 = sbr.rel (0) target = $region125
    $region124: #{decoder2_forward.1} parent=1 // pred_region
      %251 = dma.done [#allocation20], 512
    $region125: #{decoder2_forward.1} parent=1 // pred_fallthru
      _
    // Predicated region
    $region126: #{decoder2_forward.1} parent=1 // pred_check
      _
    $region127: #{decoder2_forward.1} parent=1 // pred_check_branch
      %253 = sbr.rel (0) target = $region129
    $region128: #{decoder2_forward.1} parent=1 // pred_region
      %254 = dma.done [#allocation20], 512
    $region129: #{decoder2_forward.1} parent=1 // pred_fallthru
      _
    // Predicated region
    $region130: #{decoder2_forward.1} parent=1 // pred_check
      _
    $region131: #{decoder2_forward.1} parent=1 // pred_check_branch
      %256 = sbr.rel (0) target = $region133
    $region132: #{decoder2_forward.1} parent=1 // pred_region
      %257 = dma.done [#allocation23], 1024
    $region133: #{decoder2_forward.1} parent=1 // pred_fallthru
      _
    // Predicated region
    $region134: #{decoder2_forward.1} parent=1 // pred_check
      _
    $region135: #{decoder2_forward.1} parent=1 // pred_check_branch
      %259 = sbr.rel (0) target = $region137
    $region136: #{decoder2_forward.1} parent=1 // pred_region
      %260 = dma.done [#allocation23], 1024
    $region137: #{decoder2_forward.1} parent=1 // pred_fallthru
      _
    %v261 = vld [vmem:[%s0] sm:$0xff]
    %v262 = vld [vmem:[%s0 + $0x8] sm:$0xff]
    %v263 = vld [vmem:[%s1] sm:$0x1]
    %v264 = vld [vmem:[%s1 + $0x1] sm:$0x1]
    %v265 = vld [vmem:[#allocation2] sm:$0xff]
    %v266 = vld [vmem:[#allocation2 + $0x8] sm:$0xff]
    %v267 = vld [vmem:[#allocation2 + $0x10] sm:$0xff]
    %v268 = vld [vmem:[#allocation2 + $0x18] sm:$0xff]
    %v269 = vld [vmem:[#allocation2 + $0x20] sm:$0xff]
    %v270 = vld [vmem:[#allocation2 + $0x28] sm:$0xff]
    %v271 = vld [vmem:[#allocation2 + $0x30] sm:$0xff]
    %v272 = vld [vmem:[#allocation2 + $0x38] sm:$0xff]
    %v273 = vld [vmem:[#allocation2 + $0x40] sm:$0xff]
    %v274 = vld [vmem:[#allocation2 + $0x48] sm:$0xff]
    %v275 = vld [vmem:[#allocation2 + $0x50] sm:$0xff]
    %v276 = vld [vmem:[#allocation2 + $0x58] sm:$0xff]
    %v277 = vld [vmem:[#allocation2 + $0x60] sm:$0xff]
    %v278 = vld [vmem:[#allocation2 + $0x68] sm:$0xff]
    %v279 = vld [vmem:[#allocation2 + $0x70] sm:$0xff]
    %v280 = vld [vmem:[#allocation2 + $0x78] sm:$0xff]
    %v281 = vld [vmem:[#allocation2 + $0x80] sm:$0xff]
    %v282 = vld [vmem:[#allocation2 + $0x88] sm:$0xff]
    %v283 = vld [vmem:[#allocation2 + $0x90] sm:$0xff]
    %v284 = vld [vmem:[#allocation2 + $0x98] sm:$0xff]
    %v285 = vld [vmem:[#allocation2 + $0xa0] sm:$0xff]
    %v286 = vld [vmem:[#allocation2 + $0xa8] sm:$0xff]
    %v287 = vld [vmem:[#allocation2 + $0xb0] sm:$0xff]
    %v288 = vld [vmem:[#allocation2 + $0xb8] sm:$0xff]
    %v289 = vld [vmem:[#allocation4] sm:$0xff]
    %v290 = vld [vmem:[#allocation4 + $0x8] sm:$0xf]
    %v293 = vlaneseq
    %v294 = vshrl.u32 %v293, 7
    %v295 = vsub.s32 0, %v294
    %v296 = vrot.slane %v289, %v295
    %v297 = vlaneseq
    %v298 = vshrl.u32 %v297, 7
    %v299 = vsub.s32 1, %v298
    %v300 = vrot.slane %v289, %v299
    %v301 = vlaneseq
    %v302 = vshrl.u32 %v301, 7
    %v303 = vsub.s32 2, %v302
    %v304 = vrot.slane %v289, %v303
    %v305 = vlaneseq
    %v306 = vshrl.u32 %v305, 7
    %v307 = vsub.s32 3, %v306
    %v308 = vrot.slane %v289, %v307
    %v309 = vlaneseq
    %v310 = vshrl.u32 %v309, 7
    %v311 = vsub.s32 4, %v310
    %v312 = vrot.slane %v289, %v311
    %v313 = vlaneseq
    %v314 = vshrl.u32 %v313, 7
    %v315 = vsub.s32 5, %v314
    %v316 = vrot.slane %v289, %v315
    %v317 = vlaneseq
    %v318 = vshrl.u32 %v317, 7
    %v319 = vsub.s32 6, %v318
    %v320 = vrot.slane %v289, %v319
    %v321 = vlaneseq
    %v322 = vshrl.u32 %v321, 7
    %v323 = vsub.s32 7, %v322
    %v324 = vrot.slane %v289, %v323
    %v325 = vlaneseq
    %v326 = vshrl.u32 %v325, 7
    %v327 = vsub.s32 0, %v326
    %v328 = vrot.slane %v290, %v327
    %v329 = vlaneseq
    %v330 = vshrl.u32 %v329, 7
    %v331 = vsub.s32 1, %v330
    %v332 = vrot.slane %v290, %v331
    %v333 = vlaneseq
    %v334 = vshrl.u32 %v333, 7
    %v335 = vsub.s32 2, %v334
    %v336 = vrot.slane %v290, %v335
    %v337 = vlaneseq
    %v338 = vshrl.u32 %v337, 7
    %v339 = vsub.s32 3, %v338
    %v340 = vrot.slane %v290, %v339
    %v355 = vcombine.low %v263, %v264
    %v357 = vunpack.c.l.s4 1966171168
    %v358 = vunpack.c.0.s8 %v357
    %v359 = vlaneseq
    %v360 = vshrl.u32 %v359, 7
    %v361 = vsub.s32 %v358, %v360
    %v362 = vrot.slane %v355, %v361
    %v364 = vunpack.c.l.s4 1966171168
    %v365 = vunpack.c.0.s8 %v364
    %v366 = vlaneseq
    %v367 = vshrl.u32 %v366, 7
    %v368 = vsub.s32 %v365, %v367
    %v369 = vrot.slane %v362, %v368
    %vm370 = vcmask 130048
    %v371 = vsel %vm370, %v369, 0
    %373 = vmatprep.subr.mxu0 0.0
    %374 = vmatpush1.msra.mxu0 0.0
    %375 = vmatprep.subr.mxu0 0.0
    %376 = vmatpush1.msra.mxu0 0.0
    %377 = vmatprep.subr.mxu0 0.0
    %378 = vmatpush1.msra.mxu0 0.0
    %379 = vmatprep.subr.mxu0 0.0
    %380 = vmatpush1.msra.mxu0 0.0
    %381 = vmatprep.subr.mxu0 0.0
    %382 = vmatpush1.msra.mxu0 0.0
    %383 = vmatprep.subr.mxu0 0.0
    %384 = vmatpush1.msra.mxu0 0.0
    %385 = vmatprep.subr.mxu0 0.0
    %386 = vmatpush1.msra.mxu0 0.0
    %387 = vmatprep.subr.mxu0 0.0
    %388 = vmatpush1.msra.mxu0 0.0
    %389 = vmatprep.subr.mxu0 0.0
    %390 = vmatpush1.msra.mxu0 0.0
    %391 = vmatprep.subr.mxu0 0.0
    %392 = vmatpush1.msra.mxu0 0.0
    %393 = vmatprep.subr.mxu0 0.0
    %394 = vmatpush1.msra.mxu0 0.0
    %395 = vmatprep.subr.mxu0 0.0
    %396 = vmatpush1.msra.mxu0 0.0
    %397 = vmatprep.subr.mxu0 0.0
    %398 = vmatpush1.msra.mxu0 0.0
    %399 = vmatprep.subr.mxu0 0.0
    %400 = vmatpush1.msra.mxu0 0.0
    %401 = vmatprep.subr.mxu0 %v278
    %402 = vmatpush1.msra.mxu0 %v277
    %403 = vmatprep.subr.mxu0 %v266
    %404 = vmatpush1.msra.mxu0 %v265
    %405 = vmatprep.subr.mxu0 0.0
    %406 = vmatpush2.msra.mxu0 0.0
    %407 = vmatprep.subr.mxu0 0.0
    %408 = vmatpush2.msra.mxu0 0.0
    %409 = vmatprep.subr.mxu0 0.0
    %410 = vmatpush2.msra.mxu0 0.0
    %411 = vmatprep.subr.mxu0 0.0
    %412 = vmatpush2.msra.mxu0 0.0
    %413 = vmatprep.subr.mxu0 0.0
    %414 = vmatpush2.msra.mxu0 0.0
    %415 = vmatprep.subr.mxu0 0.0
    %416 = vmatpush2.msra.mxu0 0.0
    %417 = vmatprep.subr.mxu0 0.0
    %418 = vmatpush2.msra.mxu0 0.0
    %419 = vmatprep.subr.mxu0 0.0
    %420 = vmatpush2.msra.mxu0 0.0
    %421 = vmatprep.subr.mxu0 0.0
    %422 = vmatpush2.msra.mxu0 0.0
    %423 = vmatprep.subr.mxu0 0.0
    %424 = vmatpush2.msra.mxu0 0.0
    %425 = vmatprep.subr.mxu0 0.0
    %426 = vmatpush2.msra.mxu0 0.0
    %427 = vmatprep.subr.mxu0 0.0
    %428 = vmatpush2.msra.mxu0 0.0
    %429 = vmatprep.subr.mxu0 0.0
    %430 = vmatpush2.msra.mxu0 0.0
    %431 = vmatprep.subr.mxu0 0.0
    %432 = vmatpush2.msra.mxu0 0.0
    %433 = vmatprep.subr.mxu0 0.0
    %434 = vmatpush2.msra.mxu0 0.0
    %435 = vmatprep.subr.mxu0 0.0
    %436 = vmatpush2.msra.mxu0 0.0
    %437 = vmatprep.mubr.f32.mxu0 0.0
    %438 = vmatmul.mubr.f32.gmra.mxu0 %v371
    %v439 = vpop.f32.mrf.mxu0
    %v440 = vadd.f32 %v296, %v439
    %v441 = vpop.f32.mrf.mxu0
    %v442 = vadd.f32 %v300, %v441
    %443 = vdwg.mxu0
    %444 = vmatprep.subr.mxu0 0.0
    %445 = vmatpush1.msra.mxu0 0.0
    %446 = vmatprep.subr.mxu0 0.0
    %447 = vmatpush1.msra.mxu0 0.0
    %448 = vmatprep.subr.mxu0 0.0
    %449 = vmatpush1.msra.mxu0 0.0
    %450 = vmatprep.subr.mxu0 0.0
    %451 = vmatpush1.msra.mxu0 0.0
    %452 = vmatprep.subr.mxu0 0.0
    %453 = vmatpush1.msra.mxu0 0.0
    %454 = vmatprep.subr.mxu0 0.0
    %455 = vmatpush1.msra.mxu0 0.0
    %456 = vmatprep.subr.mxu0 0.0
    %457 = vmatpush1.msra.mxu0 0.0
    %458 = vmatprep.subr.mxu0 0.0
    %459 = vmatpush1.msra.mxu0 0.0
    %460 = vmatprep.subr.mxu0 0.0
    %461 = vmatpush1.msra.mxu0 0.0
    %462 = vmatprep.subr.mxu0 0.0
    %463 = vmatpush1.msra.mxu0 0.0
    %464 = vmatprep.subr.mxu0 0.0
    %465 = vmatpush1.msra.mxu0 0.0
    %466 = vmatprep.subr.mxu0 0.0
    %467 = vmatpush1.msra.mxu0 0.0
    %468 = vmatprep.subr.mxu0 0.0
    %469 = vmatpush1.msra.mxu0 0.0
    %470 = vmatprep.subr.mxu0 0.0
    %471 = vmatpush1.msra.mxu0 0.0
    %472 = vmatprep.subr.mxu0 %v280
    %473 = vmatpush1.msra.mxu0 %v279
    %474 = vmatprep.subr.mxu0 %v268
    %475 = vmatpush1.msra.mxu0 %v267
    %476 = vmatprep.subr.mxu0 0.0
    %477 = vmatpush2.msra.mxu0 0.0
    %478 = vmatprep.subr.mxu0 0.0
    %479 = vmatpush2.msra.mxu0 0.0
    %480 = vmatprep.subr.mxu0 0.0
    %481 = vmatpush2.msra.mxu0 0.0
    %482 = vmatprep.subr.mxu0 0.0
    %483 = vmatpush2.msra.mxu0 0.0
    %484 = vmatprep.subr.mxu0 0.0
    %485 = vmatpush2.msra.mxu0 0.0
    %486 = vmatprep.subr.mxu0 0.0
    %487 = vmatpush2.msra.mxu0 0.0
    %488 = vmatprep.subr.mxu0 0.0
    %489 = vmatpush2.msra.mxu0 0.0
    %490 = vmatprep.subr.mxu0 0.0
    %491 = vmatpush2.msra.mxu0 0.0
    %492 = vmatprep.subr.mxu0 0.0
    %493 = vmatpush2.msra.mxu0 0.0
    %494 = vmatprep.subr.mxu0 0.0
    %495 = vmatpush2.msra.mxu0 0.0
    %496 = vmatprep.subr.mxu0 0.0
    %497 = vmatpush2.msra.mxu0 0.0
    %498 = vmatprep.subr.mxu0 0.0
    %499 = vmatpush2.msra.mxu0 0.0
    %500 = vmatprep.subr.mxu0 0.0
    %501 = vmatpush2.msra.mxu0 0.0
    %502 = vmatprep.subr.mxu0 0.0
    %503 = vmatpush2.msra.mxu0 0.0
    %504 = vmatprep.subr.mxu0 0.0
    %505 = vmatpush2.msra.mxu0 0.0
    %506 = vmatprep.subr.mxu0 0.0
    %507 = vmatpush2.msra.mxu0 0.0
    %508 = vmatprep.mubr.f32.mxu0 0.0
    %509 = vmatmul.mubr.f32.gmra.mxu0 %v371
    %v510 = vpop.f32.mrf.mxu0
    %v511 = vadd.f32 %v304, %v510
    %v512 = vpop.f32.mrf.mxu0
    %v513 = vadd.f32 %v308, %v512
    %514 = vdwg.mxu0
    %515 = vmatprep.subr.mxu0 0.0
    %516 = vmatpush1.msra.mxu0 0.0
    %517 = vmatprep.subr.mxu0 0.0
    %518 = vmatpush1.msra.mxu0 0.0
    %519 = vmatprep.subr.mxu0 0.0
    %520 = vmatpush1.msra.mxu0 0.0
    %521 = vmatprep.subr.mxu0 0.0
    %522 = vmatpush1.msra.mxu0 0.0
    %523 = vmatprep.subr.mxu0 0.0
    %524 = vmatpush1.msra.mxu0 0.0
    %525 = vmatprep.subr.mxu0 0.0
    %526 = vmatpush1.msra.mxu0 0.0
    %527 = vmatprep.subr.mxu0 0.0
    %528 = vmatpush1.msra.mxu0 0.0
    %529 = vmatprep.subr.mxu0 0.0
    %530 = vmatpush1.msra.mxu0 0.0
    %531 = vmatprep.subr.mxu0 0.0
    %532 = vmatpush1.msra.mxu0 0.0
    %533 = vmatprep.subr.mxu0 0.0
    %534 = vmatpush1.msra.mxu0 0.0
    %535 = vmatprep.subr.mxu0 0.0
    %536 = vmatpush1.msra.mxu0 0.0
    %537 = vmatprep.subr.mxu0 0.0
    %538 = vmatpush1.msra.mxu0 0.0
    %539 = vmatprep.subr.mxu0 0.0
    %540 = vmatpush1.msra.mxu0 0.0
    %541 = vmatprep.subr.mxu0 0.0
    %542 = vmatpush1.msra.mxu0 0.0
    %543 = vmatprep.subr.mxu0 %v282
    %544 = vmatpush1.msra.mxu0 %v281
    %545 = vmatprep.subr.mxu0 %v270
    %546 = vmatpush1.msra.mxu0 %v269
    %547 = vmatprep.subr.mxu0 0.0
    %548 = vmatpush2.msra.mxu0 0.0
    %549 = vmatprep.subr.mxu0 0.0
    %550 = vmatpush2.msra.mxu0 0.0
    %551 = vmatprep.subr.mxu0 0.0
    %552 = vmatpush2.msra.mxu0 0.0
    %553 = vmatprep.subr.mxu0 0.0
    %554 = vmatpush2.msra.mxu0 0.0
    %555 = vmatprep.subr.mxu0 0.0
    %556 = vmatpush2.msra.mxu0 0.0
    %557 = vmatprep.subr.mxu0 0.0
    %558 = vmatpush2.msra.mxu0 0.0
    %559 = vmatprep.subr.mxu0 0.0
    %560 = vmatpush2.msra.mxu0 0.0
    %561 = vmatprep.subr.mxu0 0.0
    %562 = vmatpush2.msra.mxu0 0.0
    %563 = vmatprep.subr.mxu0 0.0
    %564 = vmatpush2.msra.mxu0 0.0
    %565 = vmatprep.subr.mxu0 0.0
    %566 = vmatpush2.msra.mxu0 0.0
    %567 = vmatprep.subr.mxu0 0.0
    %568 = vmatpush2.msra.mxu0 0.0
    %569 = vmatprep.subr.mxu0 0.0
    %570 = vmatpush2.msra.mxu0 0.0
    %571 = vmatprep.subr.mxu0 0.0
    %572 = vmatpush2.msra.mxu0 0.0
    %573 = vmatprep.subr.mxu0 0.0
    %574 = vmatpush2.msra.mxu0 0.0
    %575 = vmatprep.subr.mxu0 0.0
    %576 = vmatpush2.msra.mxu0 0.0
    %577 = vmatprep.subr.mxu0 0.0
    %578 = vmatpush2.msra.mxu0 0.0
    %579 = vmatprep.mubr.f32.mxu0 0.0
    %580 = vmatmul.mubr.f32.gmra.mxu0 %v371
    %v581 = vpop.f32.mrf.mxu0
    %v582 = vadd.f32 %v312, %v581
    %v583 = vpop.f32.mrf.mxu0
    %v584 = vadd.f32 %v316, %v583
    %585 = vdwg.mxu0
    %586 = vmatprep.subr.mxu0 0.0
    %587 = vmatpush1.msra.mxu0 0.0
    %588 = vmatprep.subr.mxu0 0.0
    %589 = vmatpush1.msra.mxu0 0.0
    %590 = vmatprep.subr.mxu0 0.0
    %591 = vmatpush1.msra.mxu0 0.0
    %592 = vmatprep.subr.mxu0 0.0
    %593 = vmatpush1.msra.mxu0 0.0
    %594 = vmatprep.subr.mxu0 0.0
    %595 = vmatpush1.msra.mxu0 0.0
    %596 = vmatprep.subr.mxu0 0.0
    %597 = vmatpush1.msra.mxu0 0.0
    %598 = vmatprep.subr.mxu0 0.0
    %599 = vmatpush1.msra.mxu0 0.0
    %600 = vmatprep.subr.mxu0 0.0
    %601 = vmatpush1.msra.mxu0 0.0
    %602 = vmatprep.subr.mxu0 0.0
    %603 = vmatpush1.msra.mxu0 0.0
    %604 = vmatprep.subr.mxu0 0.0
    %605 = vmatpush1.msra.mxu0 0.0
    %606 = vmatprep.subr.mxu0 0.0
    %607 = vmatpush1.msra.mxu0 0.0
    %608 = vmatprep.subr.mxu0 0.0
    %609 = vmatpush1.msra.mxu0 0.0
    %610 = vmatprep.subr.mxu0 0.0
    %611 = vmatpush1.msra.mxu0 0.0
    %612 = vmatprep.subr.mxu0 0.0
    %613 = vmatpush1.msra.mxu0 0.0
    %614 = vmatprep.subr.mxu0 %v284
    %615 = vmatpush1.msra.mxu0 %v283
    %616 = vmatprep.subr.mxu0 %v272
    %617 = vmatpush1.msra.mxu0 %v271
    %618 = vmatprep.subr.mxu0 0.0
    %619 = vmatpush2.msra.mxu0 0.0
    %620 = vmatprep.subr.mxu0 0.0
    %621 = vmatpush2.msra.mxu0 0.0
    %622 = vmatprep.subr.mxu0 0.0
    %623 = vmatpush2.msra.mxu0 0.0
    %624 = vmatprep.subr.mxu0 0.0
    %625 = vmatpush2.msra.mxu0 0.0
    %626 = vmatprep.subr.mxu0 0.0
    %627 = vmatpush2.msra.mxu0 0.0
    %628 = vmatprep.subr.mxu0 0.0
    %629 = vmatpush2.msra.mxu0 0.0
    %630 = vmatprep.subr.mxu0 0.0
    %631 = vmatpush2.msra.mxu0 0.0
    %632 = vmatprep.subr.mxu0 0.0
    %633 = vmatpush2.msra.mxu0 0.0
    %634 = vmatprep.subr.mxu0 0.0
    %635 = vmatpush2.msra.mxu0 0.0
    %636 = vmatprep.subr.mxu0 0.0
    %637 = vmatpush2.msra.mxu0 0.0
    %638 = vmatprep.subr.mxu0 0.0
    %639 = vmatpush2.msra.mxu0 0.0
    %640 = vmatprep.subr.mxu0 0.0
    %641 = vmatpush2.msra.mxu0 0.0
    %642 = vmatprep.subr.mxu0 0.0
    %643 = vmatpush2.msra.mxu0 0.0
    %644 = vmatprep.subr.mxu0 0.0
    %645 = vmatpush2.msra.mxu0 0.0
    %646 = vmatprep.subr.mxu0 0.0
    %647 = vmatpush2.msra.mxu0 0.0
    %648 = vmatprep.subr.mxu0 0.0
    %649 = vmatpush2.msra.mxu0 0.0
    %650 = vmatprep.mubr.f32.mxu0 0.0
    %651 = vmatmul.mubr.f32.gmra.mxu0 %v371
    %v652 = vpop.f32.mrf.mxu0
    %v653 = vadd.f32 %v320, %v652
    %v654 = vpop.f32.mrf.mxu0
    %v655 = vadd.f32 %v324, %v654
    %656 = vdwg.mxu0
    %657 = vmatprep.subr.mxu0 0.0
    %658 = vmatpush1.msra.mxu0 0.0
    %659 = vmatprep.subr.mxu0 0.0
    %660 = vmatpush1.msra.mxu0 0.0
    %661 = vmatprep.subr.mxu0 0.0
    %662 = vmatpush1.msra.mxu0 0.0
    %663 = vmatprep.subr.mxu0 0.0
    %664 = vmatpush1.msra.mxu0 0.0
    %665 = vmatprep.subr.mxu0 0.0
    %666 = vmatpush1.msra.mxu0 0.0
    %667 = vmatprep.subr.mxu0 0.0
    %668 = vmatpush1.msra.mxu0 0.0
    %669 = vmatprep.subr.mxu0 0.0
    %670 = vmatpush1.msra.mxu0 0.0
    %671 = vmatprep.subr.mxu0 0.0
    %672 = vmatpush1.msra.mxu0 0.0
    %673 = vmatprep.subr.mxu0 0.0
    %674 = vmatpush1.msra.mxu0 0.0
    %675 = vmatprep.subr.mxu0 0.0
    %676 = vmatpush1.msra.mxu0 0.0
    %677 = vmatprep.subr.mxu0 0.0
    %678 = vmatpush1.msra.mxu0 0.0
    %679 = vmatprep.subr.mxu0 0.0
    %680 = vmatpush1.msra.mxu0 0.0
    %681 = vmatprep.subr.mxu0 0.0
    %682 = vmatpush1.msra.mxu0 0.0
    %683 = vmatprep.subr.mxu0 0.0
    %684 = vmatpush1.msra.mxu0 0.0
    %685 = vmatprep.subr.mxu0 %v286
    %686 = vmatpush1.msra.mxu0 %v285
    %687 = vmatprep.subr.mxu0 %v274
    %688 = vmatpush1.msra.mxu0 %v273
    %689 = vmatprep.subr.mxu0 0.0
    %690 = vmatpush2.msra.mxu0 0.0
    %691 = vmatprep.subr.mxu0 0.0
    %692 = vmatpush2.msra.mxu0 0.0
    %693 = vmatprep.subr.mxu0 0.0
    %694 = vmatpush2.msra.mxu0 0.0
    %695 = vmatprep.subr.mxu0 0.0
    %696 = vmatpush2.msra.mxu0 0.0
    %697 = vmatprep.subr.mxu0 0.0
    %698 = vmatpush2.msra.mxu0 0.0
    %699 = vmatprep.subr.mxu0 0.0
    %700 = vmatpush2.msra.mxu0 0.0
    %701 = vmatprep.subr.mxu0 0.0
    %702 = vmatpush2.msra.mxu0 0.0
    %703 = vmatprep.subr.mxu0 0.0
    %704 = vmatpush2.msra.mxu0 0.0
    %705 = vmatprep.subr.mxu0 0.0
    %706 = vmatpush2.msra.mxu0 0.0
    %707 = vmatprep.subr.mxu0 0.0
    %708 = vmatpush2.msra.mxu0 0.0
    %709 = vmatprep.subr.mxu0 0.0
    %710 = vmatpush2.msra.mxu0 0.0
    %711 = vmatprep.subr.mxu0 0.0
    %712 = vmatpush2.msra.mxu0 0.0
    %713 = vmatprep.subr.mxu0 0.0
    %714 = vmatpush2.msra.mxu0 0.0
    %715 = vmatprep.subr.mxu0 0.0
    %716 = vmatpush2.msra.mxu0 0.0
    %717 = vmatprep.subr.mxu0 0.0
    %718 = vmatpush2.msra.mxu0 0.0
    %719 = vmatprep.subr.mxu0 0.0
    %720 = vmatpush2.msra.mxu0 0.0
    %721 = vmatprep.mubr.f32.mxu0 0.0
    %722 = vmatmul.mubr.f32.gmra.mxu0 %v371
    %v723 = vpop.f32.mrf.mxu0
    %v724 = vadd.f32 %v328, %v723
    %v725 = vpop.f32.mrf.mxu0
    %v726 = vadd.f32 %v332, %v725
    %727 = vdwg.mxu0
    %728 = vmatprep.subr.mxu0 0.0
    %729 = vmatpush1.msra.mxu0 0.0
    %730 = vmatprep.subr.mxu0 0.0
    %731 = vmatpush1.msra.mxu0 0.0
    %732 = vmatprep.subr.mxu0 0.0
    %733 = vmatpush1.msra.mxu0 0.0
    %734 = vmatprep.subr.mxu0 0.0
    %735 = vmatpush1.msra.mxu0 0.0
    %736 = vmatprep.subr.mxu0 0.0
    %737 = vmatpush1.msra.mxu0 0.0
    %738 = vmatprep.subr.mxu0 0.0
    %739 = vmatpush1.msra.mxu0 0.0
    %740 = vmatprep.subr.mxu0 0.0
    %741 = vmatpush1.msra.mxu0 0.0
    %742 = vmatprep.subr.mxu0 0.0
    %743 = vmatpush1.msra.mxu0 0.0
    %744 = vmatprep.subr.mxu0 0.0
    %745 = vmatpush1.msra.mxu0 0.0
    %746 = vmatprep.subr.mxu0 0.0
    %747 = vmatpush1.msra.mxu0 0.0
    %748 = vmatprep.subr.mxu0 0.0
    %749 = vmatpush1.msra.mxu0 0.0
    %750 = vmatprep.subr.mxu0 0.0
    %751 = vmatpush1.msra.mxu0 0.0
    %752 = vmatprep.subr.mxu0 0.0
    %753 = vmatpush1.msra.mxu0 0.0
    %754 = vmatprep.subr.mxu0 0.0
    %755 = vmatpush1.msra.mxu0 0.0
    %756 = vmatprep.subr.mxu0 %v288
    %757 = vmatpush1.msra.mxu0 %v287
    %758 = vmatprep.subr.mxu0 %v276
    %759 = vmatpush1.msra.mxu0 %v275
    %760 = vmatprep.subr.mxu0 0.0
    %761 = vmatpush2.msra.mxu0 0.0
    %762 = vmatprep.subr.mxu0 0.0
    %763 = vmatpush2.msra.mxu0 0.0
    %764 = vmatprep.subr.mxu0 0.0
    %765 = vmatpush2.msra.mxu0 0.0
    %766 = vmatprep.subr.mxu0 0.0
    %767 = vmatpush2.msra.mxu0 0.0
    %768 = vmatprep.subr.mxu0 0.0
    %769 = vmatpush2.msra.mxu0 0.0
    %770 = vmatprep.subr.mxu0 0.0
    %771 = vmatpush2.msra.mxu0 0.0
    %772 = vmatprep.subr.mxu0 0.0
    %773 = vmatpush2.msra.mxu0 0.0
    %774 = vmatprep.subr.mxu0 0.0
    %775 = vmatpush2.msra.mxu0 0.0
    %776 = vmatprep.subr.mxu0 0.0
    %777 = vmatpush2.msra.mxu0 0.0
    %778 = vmatprep.subr.mxu0 0.0
    %779 = vmatpush2.msra.mxu0 0.0
    %780 = vmatprep.subr.mxu0 0.0
    %781 = vmatpush2.msra.mxu0 0.0
    %782 = vmatprep.subr.mxu0 0.0
    %783 = vmatpush2.msra.mxu0 0.0
    %784 = vmatprep.subr.mxu0 0.0
    %785 = vmatpush2.msra.mxu0 0.0
    %786 = vmatprep.subr.mxu0 0.0
    %787 = vmatpush2.msra.mxu0 0.0
    %788 = vmatprep.subr.mxu0 0.0
    %789 = vmatpush2.msra.mxu0 0.0
    %790 = vmatprep.subr.mxu0 0.0
    %791 = vmatpush2.msra.mxu0 0.0
    %792 = vmatprep.mubr.f32.mxu0 0.0
    %793 = vmatmul.mubr.f32.gmra.mxu0 %v371
    %v794 = vpop.f32.mrf.mxu0
    %v795 = vadd.f32 %v336, %v794
    %v796 = vpop.f32.mrf.mxu0
    %v797 = vadd.f32 %v340, %v796
    %798 = vdwg.mxu0
    %v799 = vld [vmem:[%s2] sm:$0x1]
    %v800 = vld [vmem:[%s2 + $0x1] sm:$0x1]
    %v801 = vld [vmem:[#allocation6] sm:$0xff]
    %v802 = vld [vmem:[#allocation6 + $0x8] sm:$0xff]
    %v803 = vld [vmem:[#allocation6 + $0x10] sm:$0xff]
    %v804 = vld [vmem:[#allocation6 + $0x18] sm:$0xff]
    %v805 = vld [vmem:[#allocation6 + $0x20] sm:$0xff]
    %v806 = vld [vmem:[#allocation6 + $0x28] sm:$0xff]
    %v807 = vld [vmem:[#allocation6 + $0x30] sm:$0xff]
    %v808 = vld [vmem:[#allocation6 + $0x38] sm:$0xff]
    %v809 = vld [vmem:[#allocation6 + $0x40] sm:$0xff]
    %v810 = vld [vmem:[#allocation6 + $0x48] sm:$0xff]
    %v811 = vld [vmem:[#allocation6 + $0x50] sm:$0xff]
    %v812 = vld [vmem:[#allocation6 + $0x58] sm:$0xff]
    %v813 = vld [vmem:[#allocation6 + $0x60] sm:$0xff]
    %v814 = vld [vmem:[#allocation6 + $0x68] sm:$0xff]
    %v815 = vld [vmem:[#allocation6 + $0x70] sm:$0xff]
    %v816 = vld [vmem:[#allocation6 + $0x78] sm:$0xff]
    %v817 = vld [vmem:[#allocation6 + $0x80] sm:$0xff]
    %v818 = vld [vmem:[#allocation6 + $0x88] sm:$0xff]
    %v819 = vld [vmem:[#allocation6 + $0x90] sm:$0xff]
    %v820 = vld [vmem:[#allocation6 + $0x98] sm:$0xff]
    %v821 = vld [vmem:[#allocation6 + $0xa0] sm:$0xff]
    %v822 = vld [vmem:[#allocation6 + $0xa8] sm:$0xff]
    %v823 = vld [vmem:[#allocation6 + $0xb0] sm:$0xff]
    %v824 = vld [vmem:[#allocation6 + $0xb8] sm:$0xff]
    %v825 = vld [vmem:[#allocation7] sm:$0xff]
    %v826 = vld [vmem:[#allocation7 + $0x8] sm:$0xf]
    %v829 = vlaneseq
    %v830 = vshrl.u32 %v829, 7
    %v831 = vsub.s32 0, %v830
    %v832 = vrot.slane %v825, %v831
    %v833 = vlaneseq
    %v834 = vshrl.u32 %v833, 7
    %v835 = vsub.s32 1, %v834
    %v836 = vrot.slane %v825, %v835
    %v837 = vlaneseq
    %v838 = vshrl.u32 %v837, 7
    %v839 = vsub.s32 2, %v838
    %v840 = vrot.slane %v825, %v839
    %v841 = vlaneseq
    %v842 = vshrl.u32 %v841, 7
    %v843 = vsub.s32 3, %v842
    %v844 = vrot.slane %v825, %v843
    %v845 = vlaneseq
    %v846 = vshrl.u32 %v845, 7
    %v847 = vsub.s32 4, %v846
    %v848 = vrot.slane %v825, %v847
    %v849 = vlaneseq
    %v850 = vshrl.u32 %v849, 7
    %v851 = vsub.s32 5, %v850
    %v852 = vrot.slane %v825, %v851
    %v853 = vlaneseq
    %v854 = vshrl.u32 %v853, 7
    %v855 = vsub.s32 6, %v854
    %v856 = vrot.slane %v825, %v855
    %v857 = vlaneseq
    %v858 = vshrl.u32 %v857, 7
    %v859 = vsub.s32 7, %v858
    %v860 = vrot.slane %v825, %v859
    %v861 = vlaneseq
    %v862 = vshrl.u32 %v861, 7
    %v863 = vsub.s32 0, %v862
    %v864 = vrot.slane %v826, %v863
    %v865 = vlaneseq
    %v866 = vshrl.u32 %v865, 7
    %v867 = vsub.s32 1, %v866
    %v868 = vrot.slane %v826, %v867
    %v869 = vlaneseq
    %v870 = vshrl.u32 %v869, 7
    %v871 = vsub.s32 2, %v870
    %v872 = vrot.slane %v826, %v871
    %v873 = vlaneseq
    %v874 = vshrl.u32 %v873, 7
    %v875 = vsub.s32 3, %v874
    %v876 = vrot.slane %v826, %v875
    %v891 = vcombine.low %v799, %v800
    %v893 = vunpack.c.l.s4 1966171168
    %v894 = vunpack.c.0.s8 %v893
    %v895 = vlaneseq
    %v896 = vshrl.u32 %v895, 7
    %v897 = vsub.s32 %v894, %v896
    %v898 = vrot.slane %v891, %v897
    %v900 = vunpack.c.l.s4 1966171168
    %v901 = vunpack.c.0.s8 %v900
    %v902 = vlaneseq
    %v903 = vshrl.u32 %v902, 7
    %v904 = vsub.s32 %v901, %v903
    %v905 = vrot.slane %v898, %v904
    %v906 = vsel %vm370, %v905, 0
    %908 = vmatprep.subr.mxu0 0.0
    %909 = vmatpush1.msra.mxu0 0.0
    %910 = vmatprep.subr.mxu0 0.0
    %911 = vmatpush1.msra.mxu0 0.0
    %912 = vmatprep.subr.mxu0 0.0
    %913 = vmatpush1.msra.mxu0 0.0
    %914 = vmatprep.subr.mxu0 0.0
    %915 = vmatpush1.msra.mxu0 0.0
    %916 = vmatprep.subr.mxu0 0.0
    %917 = vmatpush1.msra.mxu0 0.0
    %918 = vmatprep.subr.mxu0 0.0
    %919 = vmatpush1.msra.mxu0 0.0
    %920 = vmatprep.subr.mxu0 0.0
    %921 = vmatpush1.msra.mxu0 0.0
    %922 = vmatprep.subr.mxu0 0.0
    %923 = vmatpush1.msra.mxu0 0.0
    %924 = vmatprep.subr.mxu0 0.0
    %925 = vmatpush1.msra.mxu0 0.0
    %926 = vmatprep.subr.mxu0 0.0
    %927 = vmatpush1.msra.mxu0 0.0
    %928 = vmatprep.subr.mxu0 0.0
    %929 = vmatpush1.msra.mxu0 0.0
    %930 = vmatprep.subr.mxu0 0.0
    %931 = vmatpush1.msra.mxu0 0.0
    %932 = vmatprep.subr.mxu0 0.0
    %933 = vmatpush1.msra.mxu0 0.0
    %934 = vmatprep.subr.mxu0 0.0
    %935 = vmatpush1.msra.mxu0 0.0
    %936 = vmatprep.subr.mxu0 %v814
    %937 = vmatpush1.msra.mxu0 %v813
    %938 = vmatprep.subr.mxu0 %v802
    %939 = vmatpush1.msra.mxu0 %v801
    %940 = vmatprep.subr.mxu0 0.0
    %941 = vmatpush2.msra.mxu0 0.0
    %942 = vmatprep.subr.mxu0 0.0
    %943 = vmatpush2.msra.mxu0 0.0
    %944 = vmatprep.subr.mxu0 0.0
    %945 = vmatpush2.msra.mxu0 0.0
    %946 = vmatprep.subr.mxu0 0.0
    %947 = vmatpush2.msra.mxu0 0.0
    %948 = vmatprep.subr.mxu0 0.0
    %949 = vmatpush2.msra.mxu0 0.0
    %950 = vmatprep.subr.mxu0 0.0
    %951 = vmatpush2.msra.mxu0 0.0
    %952 = vmatprep.subr.mxu0 0.0
    %953 = vmatpush2.msra.mxu0 0.0
    %954 = vmatprep.subr.mxu0 0.0
    %955 = vmatpush2.msra.mxu0 0.0
    %956 = vmatprep.subr.mxu0 0.0
    %957 = vmatpush2.msra.mxu0 0.0
    %958 = vmatprep.subr.mxu0 0.0
    %959 = vmatpush2.msra.mxu0 0.0
    %960 = vmatprep.subr.mxu0 0.0
    %961 = vmatpush2.msra.mxu0 0.0
    %962 = vmatprep.subr.mxu0 0.0
    %963 = vmatpush2.msra.mxu0 0.0
    %964 = vmatprep.subr.mxu0 0.0
    %965 = vmatpush2.msra.mxu0 0.0
    %966 = vmatprep.subr.mxu0 0.0
    %967 = vmatpush2.msra.mxu0 0.0
    %968 = vmatprep.subr.mxu0 0.0
    %969 = vmatpush2.msra.mxu0 0.0
    %970 = vmatprep.subr.mxu0 0.0
    %971 = vmatpush2.msra.mxu0 0.0
    %972 = vmatprep.mubr.f32.mxu0 0.0
    %973 = vmatmul.mubr.f32.gmra.mxu0 %v906
    %v974 = vpop.f32.mrf.mxu0
    %v975 = vadd.f32 %v832, %v974
    %v976 = vpop.f32.mrf.mxu0
    %v977 = vadd.f32 %v836, %v976
    %978 = vdwg.mxu0
    %979 = vmatprep.subr.mxu0 0.0
    %980 = vmatpush1.msra.mxu0 0.0
    %981 = vmatprep.subr.mxu0 0.0
    %982 = vmatpush1.msra.mxu0 0.0
    %983 = vmatprep.subr.mxu0 0.0
    %984 = vmatpush1.msra.mxu0 0.0
    %985 = vmatprep.subr.mxu0 0.0
    %986 = vmatpush1.msra.mxu0 0.0
    %987 = vmatprep.subr.mxu0 0.0
    %988 = vmatpush1.msra.mxu0 0.0
    %989 = vmatprep.subr.mxu0 0.0
    %990 = vmatpush1.msra.mxu0 0.0
    %991 = vmatprep.subr.mxu0 0.0
    %992 = vmatpush1.msra.mxu0 0.0
    %993 = vmatprep.subr.mxu0 0.0
    %994 = vmatpush1.msra.mxu0 0.0
    %995 = vmatprep.subr.mxu0 0.0
    %996 = vmatpush1.msra.mxu0 0.0
    %997 = vmatprep.subr.mxu0 0.0
    %998 = vmatpush1.msra.mxu0 0.0
    %999 = vmatprep.subr.mxu0 0.0
    %1000 = vmatpush1.msra.mxu0 0.0
    %1001 = vmatprep.subr.mxu0 0.0
    %1002 = vmatpush1.msra.mxu0 0.0
    %1003 = vmatprep.subr.mxu0 0.0
    %1004 = vmatpush1.msra.mxu0 0.0
    %1005 = vmatprep.subr.mxu0 0.0
    %1006 = vmatpush1.msra.mxu0 0.0
    %1007 = vmatprep.subr.mxu0 %v816
    %1008 = vmatpush1.msra.mxu0 %v815
    %1009 = vmatprep.subr.mxu0 %v804
    %1010 = vmatpush1.msra.mxu0 %v803
    %1011 = vmatprep.subr.mxu0 0.0
    %1012 = vmatpush2.msra.mxu0 0.0
    %1013 = vmatprep.subr.mxu0 0.0
    %1014 = vmatpush2.msra.mxu0 0.0
    %1015 = vmatprep.subr.mxu0 0.0
    %1016 = vmatpush2.msra.mxu0 0.0
    %1017 = vmatprep.subr.mxu0 0.0
    %1018 = vmatpush2.msra.mxu0 0.0
    %1019 = vmatprep.subr.mxu0 0.0
    %1020 = vmatpush2.msra.mxu0 0.0
    %1021 = vmatprep.subr.mxu0 0.0
    %1022 = vmatpush2.msra.mxu0 0.0
    %1023 = vmatprep.subr.mxu0 0.0
    %1024 = vmatpush2.msra.mxu0 0.0
    %1025 = vmatprep.subr.mxu0 0.0
    %1026 = vmatpush2.msra.mxu0 0.0
    %1027 = vmatprep.subr.mxu0 0.0
    %1028 = vmatpush2.msra.mxu0 0.0
    %1029 = vmatprep.subr.mxu0 0.0
    %1030 = vmatpush2.msra.mxu0 0.0
    %1031 = vmatprep.subr.mxu0 0.0
    %1032 = vmatpush2.msra.mxu0 0.0
    %1033 = vmatprep.subr.mxu0 0.0
    %1034 = vmatpush2.msra.mxu0 0.0
    %1035 = vmatprep.subr.mxu0 0.0
    %1036 = vmatpush2.msra.mxu0 0.0
    %1037 = vmatprep.subr.mxu0 0.0
    %1038 = vmatpush2.msra.mxu0 0.0
    %1039 = vmatprep.subr.mxu0 0.0
    %1040 = vmatpush2.msra.mxu0 0.0
    %1041 = vmatprep.subr.mxu0 0.0
    %1042 = vmatpush2.msra.mxu0 0.0
    %1043 = vmatprep.mubr.f32.mxu0 0.0
    %1044 = vmatmul.mubr.f32.gmra.mxu0 %v906
    %v1045 = vpop.f32.mrf.mxu0
    %v1046 = vadd.f32 %v840, %v1045
    %v1047 = vpop.f32.mrf.mxu0
    %v1048 = vadd.f32 %v844, %v1047
    %1049 = vdwg.mxu0
    %1050 = vmatprep.subr.mxu0 0.0
    %1051 = vmatpush1.msra.mxu0 0.0
    %1052 = vmatprep.subr.mxu0 0.0
    %1053 = vmatpush1.msra.mxu0 0.0
    %1054 = vmatprep.subr.mxu0 0.0
    %1055 = vmatpush1.msra.mxu0 0.0
    %1056 = vmatprep.subr.mxu0 0.0
    %1057 = vmatpush1.msra.mxu0 0.0
    %1058 = vmatprep.subr.mxu0 0.0
    %1059 = vmatpush1.msra.mxu0 0.0
    %1060 = vmatprep.subr.mxu0 0.0
    %1061 = vmatpush1.msra.mxu0 0.0
    %1062 = vmatprep.subr.mxu0 0.0
    %1063 = vmatpush1.msra.mxu0 0.0
    %1064 = vmatprep.subr.mxu0 0.0
    %1065 = vmatpush1.msra.mxu0 0.0
    %1066 = vmatprep.subr.mxu0 0.0
    %1067 = vmatpush1.msra.mxu0 0.0
    %1068 = vmatprep.subr.mxu0 0.0
    %1069 = vmatpush1.msra.mxu0 0.0
    %1070 = vmatprep.subr.mxu0 0.0
    %1071 = vmatpush1.msra.mxu0 0.0
    %1072 = vmatprep.subr.mxu0 0.0
    %1073 = vmatpush1.msra.mxu0 0.0
    %1074 = vmatprep.subr.mxu0 0.0
    %1075 = vmatpush1.msra.mxu0 0.0
    %1076 = vmatprep.subr.mxu0 0.0
    %1077 = vmatpush1.msra.mxu0 0.0
    %1078 = vmatprep.subr.mxu0 %v818
    %1079 = vmatpush1.msra.mxu0 %v817
    %1080 = vmatprep.subr.mxu0 %v806
    %1081 = vmatpush1.msra.mxu0 %v805
    %1082 = vmatprep.subr.mxu0 0.0
    %1083 = vmatpush2.msra.mxu0 0.0
    %1084 = vmatprep.subr.mxu0 0.0
    %1085 = vmatpush2.msra.mxu0 0.0
    %1086 = vmatprep.subr.mxu0 0.0
    %1087 = vmatpush2.msra.mxu0 0.0
    %1088 = vmatprep.subr.mxu0 0.0
    %1089 = vmatpush2.msra.mxu0 0.0
    %1090 = vmatprep.subr.mxu0 0.0
    %1091 = vmatpush2.msra.mxu0 0.0
    %1092 = vmatprep.subr.mxu0 0.0
    %1093 = vmatpush2.msra.mxu0 0.0
    %1094 = vmatprep.subr.mxu0 0.0
    %1095 = vmatpush2.msra.mxu0 0.0
    %1096 = vmatprep.subr.mxu0 0.0
    %1097 = vmatpush2.msra.mxu0 0.0
    %1098 = vmatprep.subr.mxu0 0.0
    %1099 = vmatpush2.msra.mxu0 0.0
    %1100 = vmatprep.subr.mxu0 0.0
    %1101 = vmatpush2.msra.mxu0 0.0
    %1102 = vmatprep.subr.mxu0 0.0
    %1103 = vmatpush2.msra.mxu0 0.0
    %1104 = vmatprep.subr.mxu0 0.0
    %1105 = vmatpush2.msra.mxu0 0.0
    %1106 = vmatprep.subr.mxu0 0.0
    %1107 = vmatpush2.msra.mxu0 0.0
    %1108 = vmatprep.subr.mxu0 0.0
    %1109 = vmatpush2.msra.mxu0 0.0
    %1110 = vmatprep.subr.mxu0 0.0
    %1111 = vmatpush2.msra.mxu0 0.0
    %1112 = vmatprep.subr.mxu0 0.0
    %1113 = vmatpush2.msra.mxu0 0.0
    %1114 = vmatprep.mubr.f32.mxu0 0.0
    %1115 = vmatmul.mubr.f32.gmra.mxu0 %v906
    %v1116 = vpop.f32.mrf.mxu0
    %v1117 = vadd.f32 %v848, %v1116
    %v1118 = vpop.f32.mrf.mxu0
    %v1119 = vadd.f32 %v852, %v1118
    %1120 = vdwg.mxu0
    %1121 = vmatprep.subr.mxu0 0.0
    %1122 = vmatpush1.msra.mxu0 0.0
    %1123 = vmatprep.subr.mxu0 0.0
    %1124 = vmatpush1.msra.mxu0 0.0
    %1125 = vmatprep.subr.mxu0 0.0
    %1126 = vmatpush1.msra.mxu0 0.0
    %1127 = vmatprep.subr.mxu0 0.0
    %1128 = vmatpush1.msra.mxu0 0.0
    %1129 = vmatprep.subr.mxu0 0.0
    %1130 = vmatpush1.msra.mxu0 0.0
    %1131 = vmatprep.subr.mxu0 0.0
    %1132 = vmatpush1.msra.mxu0 0.0
    %1133 = vmatprep.subr.mxu0 0.0
    %1134 = vmatpush1.msra.mxu0 0.0
    %1135 = vmatprep.subr.mxu0 0.0
    %1136 = vmatpush1.msra.mxu0 0.0
    %1137 = vmatprep.subr.mxu0 0.0
    %1138 = vmatpush1.msra.mxu0 0.0
    %1139 = vmatprep.subr.mxu0 0.0
    %1140 = vmatpush1.msra.mxu0 0.0
    %1141 = vmatprep.subr.mxu0 0.0
    %1142 = vmatpush1.msra.mxu0 0.0
    %1143 = vmatprep.subr.mxu0 0.0
    %1144 = vmatpush1.msra.mxu0 0.0
    %1145 = vmatprep.subr.mxu0 0.0
    %1146 = vmatpush1.msra.mxu0 0.0
    %1147 = vmatprep.subr.mxu0 0.0
    %1148 = vmatpush1.msra.mxu0 0.0
    %1149 = vmatprep.subr.mxu0 %v820
    %1150 = vmatpush1.msra.mxu0 %v819
    %1151 = vmatprep.subr.mxu0 %v808
    %1152 = vmatpush1.msra.mxu0 %v807
    %1153 = vmatprep.subr.mxu0 0.0
    %1154 = vmatpush2.msra.mxu0 0.0
    %1155 = vmatprep.subr.mxu0 0.0
    %1156 = vmatpush2.msra.mxu0 0.0
    %1157 = vmatprep.subr.mxu0 0.0
    %1158 = vmatpush2.msra.mxu0 0.0
    %1159 = vmatprep.subr.mxu0 0.0
    %1160 = vmatpush2.msra.mxu0 0.0
    %1161 = vmatprep.subr.mxu0 0.0
    %1162 = vmatpush2.msra.mxu0 0.0
    %1163 = vmatprep.subr.mxu0 0.0
    %1164 = vmatpush2.msra.mxu0 0.0
    %1165 = vmatprep.subr.mxu0 0.0
    %1166 = vmatpush2.msra.mxu0 0.0
    %1167 = vmatprep.subr.mxu0 0.0
    %1168 = vmatpush2.msra.mxu0 0.0
    %1169 = vmatprep.subr.mxu0 0.0
    %1170 = vmatpush2.msra.mxu0 0.0
    %1171 = vmatprep.subr.mxu0 0.0
    %1172 = vmatpush2.msra.mxu0 0.0
    %1173 = vmatprep.subr.mxu0 0.0
    %1174 = vmatpush2.msra.mxu0 0.0
    %1175 = vmatprep.subr.mxu0 0.0
    %1176 = vmatpush2.msra.mxu0 0.0
    %1177 = vmatprep.subr.mxu0 0.0
    %1178 = vmatpush2.msra.mxu0 0.0
    %1179 = vmatprep.subr.mxu0 0.0
    %1180 = vmatpush2.msra.mxu0 0.0
    %1181 = vmatprep.subr.mxu0 0.0
    %1182 = vmatpush2.msra.mxu0 0.0
    %1183 = vmatprep.subr.mxu0 0.0
    %1184 = vmatpush2.msra.mxu0 0.0
    %1185 = vmatprep.mubr.f32.mxu0 0.0
    %1186 = vmatmul.mubr.f32.gmra.mxu0 %v906
    %v1187 = vpop.f32.mrf.mxu0
    %v1188 = vadd.f32 %v856, %v1187
    %v1189 = vpop.f32.mrf.mxu0
    %v1190 = vadd.f32 %v860, %v1189
    %1191 = vdwg.mxu0
    %1192 = vmatprep.subr.mxu0 0.0
    %1193 = vmatpush1.msra.mxu0 0.0
    %1194 = vmatprep.subr.mxu0 0.0
    %1195 = vmatpush1.msra.mxu0 0.0
    %1196 = vmatprep.subr.mxu0 0.0
    %1197 = vmatpush1.msra.mxu0 0.0
    %1198 = vmatprep.subr.mxu0 0.0
    %1199 = vmatpush1.msra.mxu0 0.0
    %1200 = vmatprep.subr.mxu0 0.0
    %1201 = vmatpush1.msra.mxu0 0.0
    %1202 = vmatprep.subr.mxu0 0.0
    %1203 = vmatpush1.msra.mxu0 0.0
    %1204 = vmatprep.subr.mxu0 0.0
    %1205 = vmatpush1.msra.mxu0 0.0
    %1206 = vmatprep.subr.mxu0 0.0
    %1207 = vmatpush1.msra.mxu0 0.0
    %1208 = vmatprep.subr.mxu0 0.0
    %1209 = vmatpush1.msra.mxu0 0.0
    %1210 = vmatprep.subr.mxu0 0.0
    %1211 = vmatpush1.msra.mxu0 0.0
    %1212 = vmatprep.subr.mxu0 0.0
    %1213 = vmatpush1.msra.mxu0 0.0
    %1214 = vmatprep.subr.mxu0 0.0
    %1215 = vmatpush1.msra.mxu0 0.0
    %1216 = vmatprep.subr.mxu0 0.0
    %1217 = vmatpush1.msra.mxu0 0.0
    %1218 = vmatprep.subr.mxu0 0.0
    %1219 = vmatpush1.msra.mxu0 0.0
    %1220 = vmatprep.subr.mxu0 %v822
    %1221 = vmatpush1.msra.mxu0 %v821
    %1222 = vmatprep.subr.mxu0 %v810
    %1223 = vmatpush1.msra.mxu0 %v809
    %1224 = vmatprep.subr.mxu0 0.0
    %1225 = vmatpush2.msra.mxu0 0.0
    %1226 = vmatprep.subr.mxu0 0.0
    %1227 = vmatpush2.msra.mxu0 0.0
    %1228 = vmatprep.subr.mxu0 0.0
    %1229 = vmatpush2.msra.mxu0 0.0
    %1230 = vmatprep.subr.mxu0 0.0
    %1231 = vmatpush2.msra.mxu0 0.0
    %1232 = vmatprep.subr.mxu0 0.0
    %1233 = vmatpush2.msra.mxu0 0.0
    %1234 = vmatprep.subr.mxu0 0.0
    %1235 = vmatpush2.msra.mxu0 0.0
    %1236 = vmatprep.subr.mxu0 0.0
    %1237 = vmatpush2.msra.mxu0 0.0
    %1238 = vmatprep.subr.mxu0 0.0
    %1239 = vmatpush2.msra.mxu0 0.0
    %1240 = vmatprep.subr.mxu0 0.0
    %1241 = vmatpush2.msra.mxu0 0.0
    %1242 = vmatprep.subr.mxu0 0.0
    %1243 = vmatpush2.msra.mxu0 0.0
    %1244 = vmatprep.subr.mxu0 0.0
    %1245 = vmatpush2.msra.mxu0 0.0
    %1246 = vmatprep.subr.mxu0 0.0
    %1247 = vmatpush2.msra.mxu0 0.0
    %1248 = vmatprep.subr.mxu0 0.0
    %1249 = vmatpush2.msra.mxu0 0.0
    %1250 = vmatprep.subr.mxu0 0.0
    %1251 = vmatpush2.msra.mxu0 0.0
    %1252 = vmatprep.subr.mxu0 0.0
    %1253 = vmatpush2.msra.mxu0 0.0
    %1254 = vmatprep.subr.mxu0 0.0
    %1255 = vmatpush2.msra.mxu0 0.0
    %1256 = vmatprep.mubr.f32.mxu0 0.0
    %1257 = vmatmul.mubr.f32.gmra.mxu0 %v906
    %v1258 = vpop.f32.mrf.mxu0
    %v1259 = vadd.f32 %v864, %v1258
    %v1260 = vpop.f32.mrf.mxu0
    %v1261 = vadd.f32 %v868, %v1260
    %1262 = vdwg.mxu0
    %1263 = vmatprep.subr.mxu0 0.0
    %1264 = vmatpush1.msra.mxu0 0.0
    %1265 = vmatprep.subr.mxu0 0.0
    %1266 = vmatpush1.msra.mxu0 0.0
    %1267 = vmatprep.subr.mxu0 0.0
    %1268 = vmatpush1.msra.mxu0 0.0
    %1269 = vmatprep.subr.mxu0 0.0
    %1270 = vmatpush1.msra.mxu0 0.0
    %1271 = vmatprep.subr.mxu0 0.0
    %1272 = vmatpush1.msra.mxu0 0.0
    %1273 = vmatprep.subr.mxu0 0.0
    %1274 = vmatpush1.msra.mxu0 0.0
    %1275 = vmatprep.subr.mxu0 0.0
    %1276 = vmatpush1.msra.mxu0 0.0
    %1277 = vmatprep.subr.mxu0 0.0
    %1278 = vmatpush1.msra.mxu0 0.0
    %1279 = vmatprep.subr.mxu0 0.0
    %1280 = vmatpush1.msra.mxu0 0.0
    %1281 = vmatprep.subr.mxu0 0.0
    %1282 = vmatpush1.msra.mxu0 0.0
    %1283 = vmatprep.subr.mxu0 0.0
    %1284 = vmatpush1.msra.mxu0 0.0
    %1285 = vmatprep.subr.mxu0 0.0
    %1286 = vmatpush1.msra.mxu0 0.0
    %1287 = vmatprep.subr.mxu0 0.0
    %1288 = vmatpush1.msra.mxu0 0.0
    %1289 = vmatprep.subr.mxu0 0.0
    %1290 = vmatpush1.msra.mxu0 0.0
    %1291 = vmatprep.subr.mxu0 %v824
    %1292 = vmatpush1.msra.mxu0 %v823
    %1293 = vmatprep.subr.mxu0 %v812
    %1294 = vmatpush1.msra.mxu0 %v811
    %1295 = vmatprep.subr.mxu0 0.0
    %1296 = vmatpush2.msra.mxu0 0.0
    %1297 = vmatprep.subr.mxu0 0.0
    %1298 = vmatpush2.msra.mxu0 0.0
    %1299 = vmatprep.subr.mxu0 0.0
    %1300 = vmatpush2.msra.mxu0 0.0
    %1301 = vmatprep.subr.mxu0 0.0
    %1302 = vmatpush2.msra.mxu0 0.0
    %1303 = vmatprep.subr.mxu0 0.0
    %1304 = vmatpush2.msra.mxu0 0.0
    %1305 = vmatprep.subr.mxu0 0.0
    %1306 = vmatpush2.msra.mxu0 0.0
    %1307 = vmatprep.subr.mxu0 0.0
    %1308 = vmatpush2.msra.mxu0 0.0
    %1309 = vmatprep.subr.mxu0 0.0
    %1310 = vmatpush2.msra.mxu0 0.0
    %1311 = vmatprep.subr.mxu0 0.0
    %1312 = vmatpush2.msra.mxu0 0.0
    %1313 = vmatprep.subr.mxu0 0.0
    %1314 = vmatpush2.msra.mxu0 0.0
    %1315 = vmatprep.subr.mxu0 0.0
    %1316 = vmatpush2.msra.mxu0 0.0
    %1317 = vmatprep.subr.mxu0 0.0
    %1318 = vmatpush2.msra.mxu0 0.0
    %1319 = vmatprep.subr.mxu0 0.0
    %1320 = vmatpush2.msra.mxu0 0.0
    %1321 = vmatprep.subr.mxu0 0.0
    %1322 = vmatpush2.msra.mxu0 0.0
    %1323 = vmatprep.subr.mxu0 0.0
    %1324 = vmatpush2.msra.mxu0 0.0
    %1325 = vmatprep.subr.mxu0 0.0
    %1326 = vmatpush2.msra.mxu0 0.0
    %1327 = vmatprep.mubr.f32.mxu0 0.0
    %1328 = vmatmul.mubr.f32.gmra.mxu0 %v906
    %v1329 = vpop.f32.mrf.mxu0
    %v1330 = vadd.f32 %v872, %v1329
    %v1331 = vpop.f32.mrf.mxu0
    %v1332 = vadd.f32 %v876, %v1331
    %1333 = vdwg.mxu0
    %v1334 = vld [vmem:[#allocation9] sm:$0xff]
    %v1335 = vld [vmem:[#allocation9 + $0x8] sm:$0xff]
    %v1337 = vsel %vm370, %v261, 0
    %v1340 = vsel %vm370, %v262, 0
    %1342 = vmatprep.subr.mxu0 0.0
    %1343 = vmatpush1.msra.mxu0 0.0
    %1344 = vmatprep.subr.mxu0 0.0
    %1345 = vmatpush1.msra.mxu0 0.0
    %1346 = vmatprep.subr.mxu0 0.0
    %1347 = vmatpush1.msra.mxu0 0.0
    %1348 = vmatprep.subr.mxu0 0.0
    %1349 = vmatpush1.msra.mxu0 0.0
    %1350 = vmatprep.subr.mxu0 0.0
    %1351 = vmatpush1.msra.mxu0 0.0
    %1352 = vmatprep.subr.mxu0 0.0
    %1353 = vmatpush1.msra.mxu0 0.0
    %1354 = vmatprep.subr.mxu0 0.0
    %1355 = vmatpush1.msra.mxu0 0.0
    %1356 = vmatprep.subr.mxu0 0.0
    %1357 = vmatpush1.msra.mxu0 0.0
    %1358 = vmatprep.subr.mxu0 0.0
    %1359 = vmatpush1.msra.mxu0 0.0
    %1360 = vmatprep.subr.mxu0 0.0
    %1361 = vmatpush1.msra.mxu0 0.0
    %1362 = vmatprep.subr.mxu0 0.0
    %1363 = vmatpush1.msra.mxu0 0.0
    %1364 = vmatprep.subr.mxu0 0.0
    %1365 = vmatpush1.msra.mxu0 0.0
    %1366 = vmatprep.subr.mxu0 0.0
    %1367 = vmatpush1.msra.mxu0 0.0
    %1368 = vmatprep.subr.mxu0 0.0
    %1369 = vmatpush1.msra.mxu0 0.0
    %1370 = vmatprep.subr.mxu0 0.0
    %1371 = vmatpush1.msra.mxu0 %v1335
    %1372 = vmatprep.subr.mxu0 0.0
    %1373 = vmatpush1.msra.mxu0 %v1334
    %1374 = vmatprep.subr.mxu0 0.0
    %1375 = vmatpush2.msra.mxu0 0.0
    %1376 = vmatprep.subr.mxu0 0.0
    %1377 = vmatpush2.msra.mxu0 0.0
    %1378 = vmatprep.subr.mxu0 0.0
    %1379 = vmatpush2.msra.mxu0 0.0
    %1380 = vmatprep.subr.mxu0 0.0
    %1381 = vmatpush2.msra.mxu0 0.0
    %1382 = vmatprep.subr.mxu0 0.0
    %1383 = vmatpush2.msra.mxu0 0.0
    %1384 = vmatprep.subr.mxu0 0.0
    %1385 = vmatpush2.msra.mxu0 0.0
    %1386 = vmatprep.subr.mxu0 0.0
    %1387 = vmatpush2.msra.mxu0 0.0
    %1388 = vmatprep.subr.mxu0 0.0
    %1389 = vmatpush2.msra.mxu0 0.0
    %1390 = vmatprep.subr.mxu0 0.0
    %1391 = vmatpush2.msra.mxu0 0.0
    %1392 = vmatprep.subr.mxu0 0.0
    %1393 = vmatpush2.msra.mxu0 0.0
    %1394 = vmatprep.subr.mxu0 0.0
    %1395 = vmatpush2.msra.mxu0 0.0
    %1396 = vmatprep.subr.mxu0 0.0
    %1397 = vmatpush2.msra.mxu0 0.0
    %1398 = vmatprep.subr.mxu0 0.0
    %1399 = vmatpush2.msra.mxu0 0.0
    %1400 = vmatprep.subr.mxu0 0.0
    %1401 = vmatpush2.msra.mxu0 0.0
    %1402 = vmatprep.subr.mxu0 0.0
    %1403 = vmatpush2.msra.mxu0 0.0
    %1404 = vmatprep.subr.mxu0 0.0
    %1405 = vmatpush2.msra.mxu0 0.0
    %1406 = vmatprep.mubr.f32.mxu0 0.0
    %1407 = vmatmul.mubr.f32.gmra.mxu0 %v1337
    %v1408 = vpop.f32.mrf.mxu0
    %v1409 = vadd.f32 0.0, %v1408
    %v1410 = vpop.f32.mrf.mxu0
    %1411 = vmatprep.mubr.f32.mxu0 0.0
    %1412 = vmatmul.mubr.f32.gmra.mxu0 %v1340
    %v1413 = vpop.f32.mrf.mxu0
    %v1414 = vadd.f32 0.0, %v1413
    %v1415 = vpop.f32.mrf.mxu0
    %1416 = vdwg.mxu0
    %v1417 = vsel %vm370, %v1409, 0.0
    %v1418 = vrot.slane %v1417, 4
    %v1419 = vadd.f32 %v1417, %v1418
    %v1420 = vrot.slane %v1419, 2
    %v1421 = vadd.f32 %v1419, %v1420
    %v1422 = vrot.slane %v1421, 1
    %v1423 = vadd.f32 %v1421, %v1422
    %v1424 = vsel %vm370, %v1414, 0.0
    %v1425 = vrot.slane %v1424, 4
    %v1426 = vadd.f32 %v1424, %v1425
    %v1427 = vrot.slane %v1426, 2
    %v1428 = vadd.f32 %v1426, %v1427
    %v1429 = vrot.slane %v1428, 1
    %v1430 = vadd.f32 %v1428, %v1429
    %v1431 = vmul.f32 %v1423, 0.125
    %v1432 = vmul.f32 %v1430, 0.125
    %v1433 = vmul.f32 %v1409, %v1409
    %v1434 = vmul.f32 %v1414, %v1414
    %v1435 = vsel %vm370, %v1433, 0.0
    %v1436 = vrot.slane %v1435, 4
    %v1437 = vadd.f32 %v1435, %v1436
    %v1438 = vrot.slane %v1437, 2
    %v1439 = vadd.f32 %v1437, %v1438
    %v1440 = vrot.slane %v1439, 1
    %v1441 = vadd.f32 %v1439, %v1440
    %v1442 = vsel %vm370, %v1434, 0.0
    %v1443 = vrot.slane %v1442, 4
    %v1444 = vadd.f32 %v1442, %v1443
    %v1445 = vrot.slane %v1444, 2
    %v1446 = vadd.f32 %v1444, %v1445
    %v1447 = vrot.slane %v1446, 1
    %v1448 = vadd.f32 %v1446, %v1447
    %v1449 = vmul.f32 %v1441, 0.125
    %v1450 = vmul.f32 %v1448, 0.125
    %v1451 = vmul.f32 %v1431, %v1431
    %v1452 = vmul.f32 %v1432, %v1432
    %v1453 = vsub.f32 %v1449, %v1451
    %v1454 = vsub.f32 %v1450, %v1452
    %v1455 = vmax.f32 %v1453, 0.0
    %v1456 = vmax.f32 %v1454, 0.0
    %v1459 = vunpack.c.l.s4 1966171168
    %v1460 = vunpack.c.0.s8 %v1459
    %v1461 = vlaneseq
    %v1462 = vshrl.u32 %v1461, 7
    %v1463 = vsub.s32 %v1460, %v1462
    %v1464 = vrot.slane %v440, %v1463
    %v1465 = vcombine.high %v1464, %v1464
    %v1467 = vunpack.c.l.s4 1966171168
    %v1468 = vunpack.c.0.s8 %v1467
    %v1469 = vlaneseq
    %v1470 = vshrl.u32 %v1469, 7
    %v1471 = vsub.s32 %v1468, %v1470
    %v1472 = vrot.slane %v1464, %v1471
    %v1474 = vunpack.c.l.s4 1966171168
    %v1475 = vunpack.c.0.s8 %v1474
    %v1476 = vlaneseq
    %v1477 = vshrl.u32 %v1476, 7
    %v1478 = vsub.s32 %v1475, %v1477
    %v1479 = vrot.slane %v1465, %v1478
    %v1484 = vunpack.c.l.s4 1966171168
    %v1485 = vunpack.c.0.s8 %v1484
    %v1486 = vlaneseq
    %v1487 = vshrl.u32 %v1486, 7
    %v1488 = vsub.s32 %v1485, %v1487
    %v1489 = vrot.slane %v442, %v1488
    %v1490 = vcombine.high %v1489, %v1489
    %v1492 = vunpack.c.l.s4 1966171168
    %v1493 = vunpack.c.0.s8 %v1492
    %v1494 = vlaneseq
    %v1495 = vshrl.u32 %v1494, 7
    %v1496 = vsub.s32 %v1493, %v1495
    %v1497 = vrot.slane %v1489, %v1496
    %v1499 = vunpack.c.l.s4 1966171168
    %v1500 = vunpack.c.0.s8 %v1499
    %v1501 = vlaneseq
    %v1502 = vshrl.u32 %v1501, 7
    %v1503 = vsub.s32 %v1500, %v1502
    %v1504 = vrot.slane %v1490, %v1503
    %v1507 = vadd.f32 %v1455, 1e-05
    %v1508 = vadd.f32 %v1456, 1e-05
    %v1509 = vrsqrt.pop %v1507
    %v1510 = vrsqrt.pop %v1508
    %v1511 = vmul.f32 %v1472, %v1509
    %v1512 = vmul.f32 %v1479, %v1510
    %v1513 = vmul.f32 %v1431, %v1511
    %v1514 = vmul.f32 %v1432, %v1512
    %v1515 = vsub.f32 %v1497, %v1513
    %v1516 = vsub.f32 %v1504, %v1514
    %v1519 = vlaneseq
    %v1520 = vshrl.u32 %v1519, 7
    %v1521 = vsub.s32 0, %v1520
    %v1522 = vrot.slane %v1511, %v1521
    %v1523 = vlaneseq
    %v1524 = vshrl.u32 %v1523, 7
    %v1525 = vsub.s32 0, %v1524
    %v1526 = vrot.slane %v1512, %v1525
    %v1529 = vmul.f32 %v1409, %v1522
    %v1530 = vmul.f32 %v1414, %v1526
    %v1533 = vlaneseq
    %v1534 = vshrl.u32 %v1533, 7
    %v1535 = vsub.s32 0, %v1534
    %v1536 = vrot.slane %v1515, %v1535
    %v1537 = vlaneseq
    %v1538 = vshrl.u32 %v1537, 7
    %v1539 = vsub.s32 0, %v1538
    %v1540 = vrot.slane %v1516, %v1539
    %v1543 = vadd.f32 %v1529, %v1536
    %v1544 = vadd.f32 %v1530, %v1540
    %v1545 = vmul.f32 %v1543, 0.2
    %v1546 = vmul.f32 %v1544, 0.2
    %v1547 = vmax.f32 %v1543, %v1545
    %v1548 = vmax.f32 %v1544, %v1546
    %v1549 = vld [vmem:[%s13] sm:$0xff]
    %v1550 = vld [vmem:[%s13 + $0x8] sm:$0xff]
    %1551 = vmatprep.subr.mxu0 0.0
    %1552 = vmatpush1.msra.mxu0 0.0
    %1553 = vmatprep.subr.mxu0 0.0
    %1554 = vmatpush1.msra.mxu0 0.0
    %1555 = vmatprep.subr.mxu0 0.0
    %1556 = vmatpush1.msra.mxu0 0.0
    %1557 = vmatprep.subr.mxu0 0.0
    %1558 = vmatpush1.msra.mxu0 0.0
    %1559 = vmatprep.subr.mxu0 0.0
    %1560 = vmatpush1.msra.mxu0 0.0
    %1561 = vmatprep.subr.mxu0 0.0
    %1562 = vmatpush1.msra.mxu0 0.0
    %1563 = vmatprep.subr.mxu0 0.0
    %1564 = vmatpush1.msra.mxu0 0.0
    %1565 = vmatprep.subr.mxu0 0.0
    %1566 = vmatpush1.msra.mxu0 0.0
    %1567 = vmatprep.subr.mxu0 0.0
    %1568 = vmatpush1.msra.mxu0 0.0
    %1569 = vmatprep.subr.mxu0 0.0
    %1570 = vmatpush1.msra.mxu0 0.0
    %1571 = vmatprep.subr.mxu0 0.0
    %1572 = vmatpush1.msra.mxu0 0.0
    %1573 = vmatprep.subr.mxu0 0.0
    %1574 = vmatpush1.msra.mxu0 0.0
    %1575 = vmatprep.subr.mxu0 0.0
    %1576 = vmatpush1.msra.mxu0 0.0
    %1577 = vmatprep.subr.mxu0 0.0
    %1578 = vmatpush1.msra.mxu0 0.0
    %1579 = vmatprep.subr.mxu0 0.0
    %1580 = vmatpush1.msra.mxu0 %v1550
    %1581 = vmatprep.subr.mxu0 0.0
    %1582 = vmatpush1.msra.mxu0 %v1549
    %1583 = vmatprep.subr.mxu0 0.0
    %1584 = vmatpush2.msra.mxu0 0.0
    %1585 = vmatprep.subr.mxu0 0.0
    %1586 = vmatpush2.msra.mxu0 0.0
    %1587 = vmatprep.subr.mxu0 0.0
    %1588 = vmatpush2.msra.mxu0 0.0
    %1589 = vmatprep.subr.mxu0 0.0
    %1590 = vmatpush2.msra.mxu0 0.0
    %1591 = vmatprep.subr.mxu0 0.0
    %1592 = vmatpush2.msra.mxu0 0.0
    %1593 = vmatprep.subr.mxu0 0.0
    %1594 = vmatpush2.msra.mxu0 0.0
    %1595 = vmatprep.subr.mxu0 0.0
    %1596 = vmatpush2.msra.mxu0 0.0
    %1597 = vmatprep.subr.mxu0 0.0
    %1598 = vmatpush2.msra.mxu0 0.0
    %1599 = vmatprep.subr.mxu0 0.0
    %1600 = vmatpush2.msra.mxu0 0.0
    %1601 = vmatprep.subr.mxu0 0.0
    %1602 = vmatpush2.msra.mxu0 0.0
    %1603 = vmatprep.subr.mxu0 0.0
    %1604 = vmatpush2.msra.mxu0 0.0
    %1605 = vmatprep.subr.mxu0 0.0
    %1606 = vmatpush2.msra.mxu0 0.0
    %1607 = vmatprep.subr.mxu0 0.0
    %1608 = vmatpush2.msra.mxu0 0.0
    %1609 = vmatprep.subr.mxu0 0.0
    %1610 = vmatpush2.msra.mxu0 0.0
    %1611 = vmatprep.subr.mxu0 0.0
    %1612 = vmatpush2.msra.mxu0 0.0
    %1613 = vmatprep.subr.mxu0 0.0
    %1614 = vmatpush2.msra.mxu0 0.0
    %1615 = vmatprep.mubr.f32.mxu0 0.0
    %1616 = vmatmul.mubr.f32.gmra.mxu0 %v1337
    %v1617 = vpop.f32.mrf.mxu0
    %v1618 = vadd.f32 0.0, %v1617
    %v1619 = vpop.f32.mrf.mxu0
    %1620 = vmatprep.mubr.f32.mxu0 0.0
    %1621 = vmatmul.mubr.f32.gmra.mxu0 %v1340
    %v1622 = vpop.f32.mrf.mxu0
    %v1623 = vadd.f32 0.0, %v1622
    %v1624 = vpop.f32.mrf.mxu0
    %1625 = vdwg.mxu0
    %v1626 = vsel %vm370, %v1618, 0.0
    %v1627 = vrot.slane %v1626, 4
    %v1628 = vadd.f32 %v1626, %v1627
    %v1629 = vrot.slane %v1628, 2
    %v1630 = vadd.f32 %v1628, %v1629
    %v1631 = vrot.slane %v1630, 1
    %v1632 = vadd.f32 %v1630, %v1631
    %v1633 = vsel %vm370, %v1623, 0.0
    %v1634 = vrot.slane %v1633, 4
    %v1635 = vadd.f32 %v1633, %v1634
    %v1636 = vrot.slane %v1635, 2
    %v1637 = vadd.f32 %v1635, %v1636
    %v1638 = vrot.slane %v1637, 1
    %v1639 = vadd.f32 %v1637, %v1638
    %v1640 = vmul.f32 %v1632, 0.125
    %v1641 = vmul.f32 %v1639, 0.125
    %v1642 = vmul.f32 %v1618, %v1618
    %v1643 = vmul.f32 %v1623, %v1623
    %v1644 = vsel %vm370, %v1642, 0.0
    %v1645 = vrot.slane %v1644, 4
    %v1646 = vadd.f32 %v1644, %v1645
    %v1647 = vrot.slane %v1646, 2
    %v1648 = vadd.f32 %v1646, %v1647
    %v1649 = vrot.slane %v1648, 1
    %v1650 = vadd.f32 %v1648, %v1649
    %v1651 = vsel %vm370, %v1643, 0.0
    %v1652 = vrot.slane %v1651, 4
    %v1653 = vadd.f32 %v1651, %v1652
    %v1654 = vrot.slane %v1653, 2
    %v1655 = vadd.f32 %v1653, %v1654
    %v1656 = vrot.slane %v1655, 1
    %v1657 = vadd.f32 %v1655, %v1656
    %v1658 = vmul.f32 %v1650, 0.125
    %v1659 = vmul.f32 %v1657, 0.125
    %v1660 = vmul.f32 %v1640, %v1640
    %v1661 = vmul.f32 %v1641, %v1641
    %v1662 = vsub.f32 %v1658, %v1660
    %v1663 = vsub.f32 %v1659, %v1661
    %v1664 = vmax.f32 %v1662, 0.0
    %v1665 = vmax.f32 %v1663, 0.0
    %v1668 = vunpack.c.l.s4 1966171168
    %v1669 = vunpack.c.0.s8 %v1668
    %v1670 = vlaneseq
    %v1671 = vshrl.u32 %v1670, 7
    %v1672 = vsub.s32 %v1669, %v1671
    %v1673 = vrot.slane %v975, %v1672
    %v1674 = vcombine.high %v1673, %v1673
    %v1676 = vunpack.c.l.s4 1966171168
    %v1677 = vunpack.c.0.s8 %v1676
    %v1678 = vlaneseq
    %v1679 = vshrl.u32 %v1678, 7
    %v1680 = vsub.s32 %v1677, %v1679
    %v1681 = vrot.slane %v1673, %v1680
    %v1683 = vunpack.c.l.s4 1966171168
    %v1684 = vunpack.c.0.s8 %v1683
    %v1685 = vlaneseq
    %v1686 = vshrl.u32 %v1685, 7
    %v1687 = vsub.s32 %v1684, %v1686
    %v1688 = vrot.slane %v1674, %v1687
    %v1693 = vunpack.c.l.s4 1966171168
    %v1694 = vunpack.c.0.s8 %v1693
    %v1695 = vlaneseq
    %v1696 = vshrl.u32 %v1695, 7
    %v1697 = vsub.s32 %v1694, %v1696
    %v1698 = vrot.slane %v977, %v1697
    %v1699 = vcombine.high %v1698, %v1698
    %v1701 = vunpack.c.l.s4 1966171168
    %v1702 = vunpack.c.0.s8 %v1701
    %v1703 = vlaneseq
    %v1704 = vshrl.u32 %v1703, 7
    %v1705 = vsub.s32 %v1702, %v1704
    %v1706 = vrot.slane %v1698, %v1705
    %v1708 = vunpack.c.l.s4 1966171168
    %v1709 = vunpack.c.0.s8 %v1708
    %v1710 = vlaneseq
    %v1711 = vshrl.u32 %v1710, 7
    %v1712 = vsub.s32 %v1709, %v1711
    %v1713 = vrot.slane %v1699, %v1712
    %v1716 = vadd.f32 %v1664, 1e-05
    %v1717 = vadd.f32 %v1665, 1e-05
    %v1718 = vrsqrt.pop %v1716
    %v1719 = vrsqrt.pop %v1717
    %v1720 = vmul.f32 %v1681, %v1718
    %v1721 = vmul.f32 %v1688, %v1719
    %v1722 = vmul.f32 %v1640, %v1720
    %v1723 = vmul.f32 %v1641, %v1721
    %v1724 = vsub.f32 %v1706, %v1722
    %v1725 = vsub.f32 %v1713, %v1723
    %v1728 = vlaneseq
    %v1729 = vshrl.u32 %v1728, 7
    %v1730 = vsub.s32 0, %v1729
    %v1731 = vrot.slane %v1720, %v1730
    %v1732 = vlaneseq
    %v1733 = vshrl.u32 %v1732, 7
    %v1734 = vsub.s32 0, %v1733
    %v1735 = vrot.slane %v1721, %v1734
    %v1738 = vmul.f32 %v1618, %v1731
    %v1739 = vmul.f32 %v1623, %v1735
    %v1742 = vlaneseq
    %v1743 = vshrl.u32 %v1742, 7
    %v1744 = vsub.s32 0, %v1743
    %v1745 = vrot.slane %v1724, %v1744
    %v1746 = vlaneseq
    %v1747 = vshrl.u32 %v1746, 7
    %v1748 = vsub.s32 0, %v1747
    %v1749 = vrot.slane %v1725, %v1748
    %v1752 = vadd.f32 %v1738, %v1745
    %v1753 = vadd.f32 %v1739, %v1749
    %v1754 = vmul.f32 %v1752, 0.2
    %v1755 = vmul.f32 %v1753, 0.2
    %v1756 = vmax.f32 %v1752, %v1754
    %v1757 = vmax.f32 %v1753, %v1755
    %v1758 = vld [vmem:[#allocation10] sm:$0xff]
    %v1759 = vld [vmem:[#allocation10 + $0x8] sm:$0xff]
    %v1761 = vsel %vm370, %v1547, 0
    %v1764 = vsel %vm370, %v1548, 0
    %1766 = vmatprep.subr.mxu0 0.0
    %1767 = vmatpush1.msra.mxu0 0.0
    %1768 = vmatprep.subr.mxu0 0.0
    %1769 = vmatpush1.msra.mxu0 0.0
    %1770 = vmatprep.subr.mxu0 0.0
    %1771 = vmatpush1.msra.mxu0 0.0
    %1772 = vmatprep.subr.mxu0 0.0
    %1773 = vmatpush1.msra.mxu0 0.0
    %1774 = vmatprep.subr.mxu0 0.0
    %1775 = vmatpush1.msra.mxu0 0.0
    %1776 = vmatprep.subr.mxu0 0.0
    %1777 = vmatpush1.msra.mxu0 0.0
    %1778 = vmatprep.subr.mxu0 0.0
    %1779 = vmatpush1.msra.mxu0 0.0
    %1780 = vmatprep.subr.mxu0 0.0
    %1781 = vmatpush1.msra.mxu0 0.0
    %1782 = vmatprep.subr.mxu0 0.0
    %1783 = vmatpush1.msra.mxu0 0.0
    %1784 = vmatprep.subr.mxu0 0.0
    %1785 = vmatpush1.msra.mxu0 0.0
    %1786 = vmatprep.subr.mxu0 0.0
    %1787 = vmatpush1.msra.mxu0 0.0
    %1788 = vmatprep.subr.mxu0 0.0
    %1789 = vmatpush1.msra.mxu0 0.0
    %1790 = vmatprep.subr.mxu0 0.0
    %1791 = vmatpush1.msra.mxu0 0.0
    %1792 = vmatprep.subr.mxu0 0.0
    %1793 = vmatpush1.msra.mxu0 0.0
    %1794 = vmatprep.subr.mxu0 0.0
    %1795 = vmatpush1.msra.mxu0 %v1759
    %1796 = vmatprep.subr.mxu0 0.0
    %1797 = vmatpush1.msra.mxu0 %v1758
    %1798 = vmatprep.subr.mxu0 0.0
    %1799 = vmatpush2.msra.mxu0 0.0
    %1800 = vmatprep.subr.mxu0 0.0
    %1801 = vmatpush2.msra.mxu0 0.0
    %1802 = vmatprep.subr.mxu0 0.0
    %1803 = vmatpush2.msra.mxu0 0.0
    %1804 = vmatprep.subr.mxu0 0.0
    %1805 = vmatpush2.msra.mxu0 0.0
    %1806 = vmatprep.subr.mxu0 0.0
    %1807 = vmatpush2.msra.mxu0 0.0
    %1808 = vmatprep.subr.mxu0 0.0
    %1809 = vmatpush2.msra.mxu0 0.0
    %1810 = vmatprep.subr.mxu0 0.0
    %1811 = vmatpush2.msra.mxu0 0.0
    %1812 = vmatprep.subr.mxu0 0.0
    %1813 = vmatpush2.msra.mxu0 0.0
    %1814 = vmatprep.subr.mxu0 0.0
    %1815 = vmatpush2.msra.mxu0 0.0
    %1816 = vmatprep.subr.mxu0 0.0
    %1817 = vmatpush2.msra.mxu0 0.0
    %1818 = vmatprep.subr.mxu0 0.0
    %1819 = vmatpush2.msra.mxu0 0.0
    %1820 = vmatprep.subr.mxu0 0.0
    %1821 = vmatpush2.msra.mxu0 0.0
    %1822 = vmatprep.subr.mxu0 0.0
    %1823 = vmatpush2.msra.mxu0 0.0
    %1824 = vmatprep.subr.mxu0 0.0
    %1825 = vmatpush2.msra.mxu0 0.0
    %1826 = vmatprep.subr.mxu0 0.0
    %1827 = vmatpush2.msra.mxu0 0.0
    %1828 = vmatprep.subr.mxu0 0.0
    %1829 = vmatpush2.msra.mxu0 0.0
    %1830 = vmatprep.mubr.f32.mxu0 0.0
    %1831 = vmatmul.mubr.f32.gmra.mxu0 %v1761
    %v1832 = vpop.f32.mrf.mxu0
    %v1833 = vadd.f32 0.0, %v1832
    %v1834 = vpop.f32.mrf.mxu0
    %1835 = vmatprep.mubr.f32.mxu0 0.0
    %1836 = vmatmul.mubr.f32.gmra.mxu0 %v1764
    %v1837 = vpop.f32.mrf.mxu0
    %v1838 = vadd.f32 0.0, %v1837
    %v1839 = vpop.f32.mrf.mxu0
    %1840 = vdwg.mxu0
    %vm1841 = vcmask 261120
    %v1842 = vsel %vm1841, %v1833, 0.0
    %v1843 = vrot.slane %v1842, 4
    %v1844 = vadd.f32 %v1842, %v1843
    %v1845 = vrot.slane %v1844, 2
    %v1846 = vadd.f32 %v1844, %v1845
    %v1847 = vrot.slane %v1846, 1
    %v1848 = vadd.f32 %v1846, %v1847
    %v1849 = vsel %vm1841, %v1838, 0.0
    %v1850 = vrot.slane %v1849, 4
    %v1851 = vadd.f32 %v1849, %v1850
    %v1852 = vrot.slane %v1851, 2
    %v1853 = vadd.f32 %v1851, %v1852
    %v1854 = vrot.slane %v1853, 1
    %v1855 = vadd.f32 %v1853, %v1854
    %v1856 = vmul.f32 %v1848, 0.125
    %v1857 = vmul.f32 %v1855, 0.125
    %v1858 = vmul.f32 %v1833, %v1833
    %v1859 = vmul.f32 %v1838, %v1838
    %v1860 = vsel %vm1841, %v1858, 0.0
    %v1861 = vrot.slane %v1860, 4
    %v1862 = vadd.f32 %v1860, %v1861
    %v1863 = vrot.slane %v1862, 2
    %v1864 = vadd.f32 %v1862, %v1863
    %v1865 = vrot.slane %v1864, 1
    %v1866 = vadd.f32 %v1864, %v1865
    %v1867 = vsel %vm1841, %v1859, 0.0
    %v1868 = vrot.slane %v1867, 4
    %v1869 = vadd.f32 %v1867, %v1868
    %v1870 = vrot.slane %v1869, 2
    %v1871 = vadd.f32 %v1869, %v1870
    %v1872 = vrot.slane %v1871, 1
    %v1873 = vadd.f32 %v1871, %v1872
    %v1874 = vmul.f32 %v1866, 0.125
    %v1875 = vmul.f32 %v1873, 0.125
    %v1876 = vmul.f32 %v1856, %v1856
    %v1877 = vmul.f32 %v1857, %v1857
    %v1878 = vsub.f32 %v1874, %v1876
    %v1879 = vsub.f32 %v1875, %v1877
    %v1880 = vmax.f32 %v1878, 0.0
    %v1881 = vmax.f32 %v1879, 0.0
    %v1884 = vunpack.c.l.s4 1966171168
    %v1885 = vunpack.c.0.s8 %v1884
    %v1886 = vlaneseq
    %v1887 = vshrl.u32 %v1886, 7
    %v1888 = vsub.s32 %v1885, %v1887
    %v1889 = vrot.slane %v511, %v1888
    %v1890 = vcombine.high %v1889, %v1889
    %v1892 = vunpack.c.l.s4 1966171168
    %v1893 = vunpack.c.0.s8 %v1892
    %v1894 = vlaneseq
    %v1895 = vshrl.u32 %v1894, 7
    %v1896 = vsub.s32 %v1893, %v1895
    %v1897 = vrot.slane %v1889, %v1896
    %v1899 = vunpack.c.l.s4 1966171168
    %v1900 = vunpack.c.0.s8 %v1899
    %v1901 = vlaneseq
    %v1902 = vshrl.u32 %v1901, 7
    %v1903 = vsub.s32 %v1900, %v1902
    %v1904 = vrot.slane %v1890, %v1903
    %v1909 = vunpack.c.l.s4 1966171168
    %v1910 = vunpack.c.0.s8 %v1909
    %v1911 = vlaneseq
    %v1912 = vshrl.u32 %v1911, 7
    %v1913 = vsub.s32 %v1910, %v1912
    %v1914 = vrot.slane %v513, %v1913
    %v1915 = vcombine.high %v1914, %v1914
    %v1917 = vunpack.c.l.s4 1966171168
    %v1918 = vunpack.c.0.s8 %v1917
    %v1919 = vlaneseq
    %v1920 = vshrl.u32 %v1919, 7
    %v1921 = vsub.s32 %v1918, %v1920
    %v1922 = vrot.slane %v1914, %v1921
    %v1924 = vunpack.c.l.s4 1966171168
    %v1925 = vunpack.c.0.s8 %v1924
    %v1926 = vlaneseq
    %v1927 = vshrl.u32 %v1926, 7
    %v1928 = vsub.s32 %v1925, %v1927
    %v1929 = vrot.slane %v1915, %v1928
    %v1932 = vadd.f32 %v1880, 1e-05
    %v1933 = vadd.f32 %v1881, 1e-05
    %v1934 = vrsqrt.pop %v1932
    %v1935 = vrsqrt.pop %v1933
    %v1936 = vmul.f32 %v1897, %v1934
    %v1937 = vmul.f32 %v1904, %v1935
    %v1938 = vmul.f32 %v1856, %v1936
    %v1939 = vmul.f32 %v1857, %v1937
    %v1940 = vsub.f32 %v1922, %v1938
    %v1941 = vsub.f32 %v1929, %v1939
    %v1944 = vlaneseq
    %v1945 = vshrl.u32 %v1944, 7
    %v1946 = vsub.s32 0, %v1945
    %v1947 = vrot.slane %v1936, %v1946
    %v1948 = vlaneseq
    %v1949 = vshrl.u32 %v1948, 7
    %v1950 = vsub.s32 0, %v1949
    %v1951 = vrot.slane %v1937, %v1950
    %v1954 = vmul.f32 %v1833, %v1947
    %v1955 = vmul.f32 %v1838, %v1951
    %v1958 = vlaneseq
    %v1959 = vshrl.u32 %v1958, 7
    %v1960 = vsub.s32 0, %v1959
    %v1961 = vrot.slane %v1940, %v1960
    %v1962 = vlaneseq
    %v1963 = vshrl.u32 %v1962, 7
    %v1964 = vsub.s32 0, %v1963
    %v1965 = vrot.slane %v1941, %v1964
    %v1968 = vadd.f32 %v1954, %v1961
    %v1969 = vadd.f32 %v1955, %v1965
    %v1970 = vmul.f32 %v1968, 0.2
    %v1971 = vmul.f32 %v1969, 0.2
    %v1972 = vmax.f32 %v1968, %v1970
    %v1973 = vmax.f32 %v1969, %v1971
    %v1974 = vld [vmem:[#allocation18] sm:$0xff]
    %v1975 = vld [vmem:[#allocation18 + $0x8] sm:$0xff]
    %v1977 = vsel %vm370, %v1756, 0
    %v1980 = vsel %vm370, %v1757, 0
    %1982 = vmatprep.subr.mxu0 0.0
    %1983 = vmatpush1.msra.mxu0 0.0
    %1984 = vmatprep.subr.mxu0 0.0
    %1985 = vmatpush1.msra.mxu0 0.0
    %1986 = vmatprep.subr.mxu0 0.0
    %1987 = vmatpush1.msra.mxu0 0.0
    %1988 = vmatprep.subr.mxu0 0.0
    %1989 = vmatpush1.msra.mxu0 0.0
    %1990 = vmatprep.subr.mxu0 0.0
    %1991 = vmatpush1.msra.mxu0 0.0
    %1992 = vmatprep.subr.mxu0 0.0
    %1993 = vmatpush1.msra.mxu0 0.0
    %1994 = vmatprep.subr.mxu0 0.0
    %1995 = vmatpush1.msra.mxu0 0.0
    %1996 = vmatprep.subr.mxu0 0.0
    %1997 = vmatpush1.msra.mxu0 0.0
    %1998 = vmatprep.subr.mxu0 0.0
    %1999 = vmatpush1.msra.mxu0 0.0
    %2000 = vmatprep.subr.mxu0 0.0
    %2001 = vmatpush1.msra.mxu0 0.0
    %2002 = vmatprep.subr.mxu0 0.0
    %2003 = vmatpush1.msra.mxu0 0.0
    %2004 = vmatprep.subr.mxu0 0.0
    %2005 = vmatpush1.msra.mxu0 0.0
    %2006 = vmatprep.subr.mxu0 0.0
    %2007 = vmatpush1.msra.mxu0 0.0
    %2008 = vmatprep.subr.mxu0 0.0
    %2009 = vmatpush1.msra.mxu0 0.0
    %2010 = vmatprep.subr.mxu0 0.0
    %2011 = vmatpush1.msra.mxu0 %v1975
    %2012 = vmatprep.subr.mxu0 0.0
    %2013 = vmatpush1.msra.mxu0 %v1974
    %2014 = vmatprep.subr.mxu0 0.0
    %2015 = vmatpush2.msra.mxu0 0.0
    %2016 = vmatprep.subr.mxu0 0.0
    %2017 = vmatpush2.msra.mxu0 0.0
    %2018 = vmatprep.subr.mxu0 0.0
    %2019 = vmatpush2.msra.mxu0 0.0
    %2020 = vmatprep.subr.mxu0 0.0
    %2021 = vmatpush2.msra.mxu0 0.0
    %2022 = vmatprep.subr.mxu0 0.0
    %2023 = vmatpush2.msra.mxu0 0.0
    %2024 = vmatprep.subr.mxu0 0.0
    %2025 = vmatpush2.msra.mxu0 0.0
    %2026 = vmatprep.subr.mxu0 0.0
    %2027 = vmatpush2.msra.mxu0 0.0
    %2028 = vmatprep.subr.mxu0 0.0
    %2029 = vmatpush2.msra.mxu0 0.0
    %2030 = vmatprep.subr.mxu0 0.0
    %2031 = vmatpush2.msra.mxu0 0.0
    %2032 = vmatprep.subr.mxu0 0.0
    %2033 = vmatpush2.msra.mxu0 0.0
    %2034 = vmatprep.subr.mxu0 0.0
    %2035 = vmatpush2.msra.mxu0 0.0
    %2036 = vmatprep.subr.mxu0 0.0
    %2037 = vmatpush2.msra.mxu0 0.0
    %2038 = vmatprep.subr.mxu0 0.0
    %2039 = vmatpush2.msra.mxu0 0.0
    %2040 = vmatprep.subr.mxu0 0.0
    %2041 = vmatpush2.msra.mxu0 0.0
    %2042 = vmatprep.subr.mxu0 0.0
    %2043 = vmatpush2.msra.mxu0 0.0
    %2044 = vmatprep.subr.mxu0 0.0
    %2045 = vmatpush2.msra.mxu0 0.0
    %2046 = vmatprep.mubr.f32.mxu0 0.0
    %2047 = vmatmul.mubr.f32.gmra.mxu0 %v1977
    %v2048 = vpop.f32.mrf.mxu0
    %v2049 = vadd.f32 0.0, %v2048
    %v2050 = vpop.f32.mrf.mxu0
    %2051 = vmatprep.mubr.f32.mxu0 0.0
    %2052 = vmatmul.mubr.f32.gmra.mxu0 %v1980
    %v2053 = vpop.f32.mrf.mxu0
    %v2054 = vadd.f32 0.0, %v2053
    %v2055 = vpop.f32.mrf.mxu0
    %2056 = vdwg.mxu0
    %v2057 = vsel %vm1841, %v2049, 0.0
    %v2058 = vrot.slane %v2057, 4
    %v2059 = vadd.f32 %v2057, %v2058
    %v2060 = vrot.slane %v2059, 2
    %v2061 = vadd.f32 %v2059, %v2060
    %v2062 = vrot.slane %v2061, 1
    %v2063 = vadd.f32 %v2061, %v2062
    %v2064 = vsel %vm1841, %v2054, 0.0
    %v2065 = vrot.slane %v2064, 4
    %v2066 = vadd.f32 %v2064, %v2065
    %v2067 = vrot.slane %v2066, 2
    %v2068 = vadd.f32 %v2066, %v2067
    %v2069 = vrot.slane %v2068, 1
    %v2070 = vadd.f32 %v2068, %v2069
    %v2071 = vmul.f32 %v2063, 0.125
    %v2072 = vmul.f32 %v2070, 0.125
    %v2073 = vmul.f32 %v2049, %v2049
    %v2074 = vmul.f32 %v2054, %v2054
    %v2075 = vsel %vm1841, %v2073, 0.0
    %v2076 = vrot.slane %v2075, 4
    %v2077 = vadd.f32 %v2075, %v2076
    %v2078 = vrot.slane %v2077, 2
    %v2079 = vadd.f32 %v2077, %v2078
    %v2080 = vrot.slane %v2079, 1
    %v2081 = vadd.f32 %v2079, %v2080
    %v2082 = vsel %vm1841, %v2074, 0.0
    %v2083 = vrot.slane %v2082, 4
    %v2084 = vadd.f32 %v2082, %v2083
    %v2085 = vrot.slane %v2084, 2
    %v2086 = vadd.f32 %v2084, %v2085
    %v2087 = vrot.slane %v2086, 1
    %v2088 = vadd.f32 %v2086, %v2087
    %v2089 = vmul.f32 %v2081, 0.125
    %v2090 = vmul.f32 %v2088, 0.125
    %v2091 = vmul.f32 %v2071, %v2071
    %v2092 = vmul.f32 %v2072, %v2072
    %v2093 = vsub.f32 %v2089, %v2091
    %v2094 = vsub.f32 %v2090, %v2092
    %v2095 = vmax.f32 %v2093, 0.0
    %v2096 = vmax.f32 %v2094, 0.0
    %v2099 = vunpack.c.l.s4 1966171168
    %v2100 = vunpack.c.0.s8 %v2099
    %v2101 = vlaneseq
    %v2102 = vshrl.u32 %v2101, 7
    %v2103 = vsub.s32 %v2100, %v2102
    %v2104 = vrot.slane %v1046, %v2103
    %v2105 = vcombine.high %v2104, %v2104
    %v2107 = vunpack.c.l.s4 1966171168
    %v2108 = vunpack.c.0.s8 %v2107
    %v2109 = vlaneseq
    %v2110 = vshrl.u32 %v2109, 7
    %v2111 = vsub.s32 %v2108, %v2110
    %v2112 = vrot.slane %v2104, %v2111
    %v2114 = vunpack.c.l.s4 1966171168
    %v2115 = vunpack.c.0.s8 %v2114
    %v2116 = vlaneseq
    %v2117 = vshrl.u32 %v2116, 7
    %v2118 = vsub.s32 %v2115, %v2117
    %v2119 = vrot.slane %v2105, %v2118
    %v2124 = vunpack.c.l.s4 1966171168
    %v2125 = vunpack.c.0.s8 %v2124
    %v2126 = vlaneseq
    %v2127 = vshrl.u32 %v2126, 7
    %v2128 = vsub.s32 %v2125, %v2127
    %v2129 = vrot.slane %v1048, %v2128
    %v2130 = vcombine.high %v2129, %v2129
    %v2132 = vunpack.c.l.s4 1966171168
    %v2133 = vunpack.c.0.s8 %v2132
    %v2134 = vlaneseq
    %v2135 = vshrl.u32 %v2134, 7
    %v2136 = vsub.s32 %v2133, %v2135
    %v2137 = vrot.slane %v2129, %v2136
    %v2139 = vunpack.c.l.s4 1966171168
    %v2140 = vunpack.c.0.s8 %v2139
    %v2141 = vlaneseq
    %v2142 = vshrl.u32 %v2141, 7
    %v2143 = vsub.s32 %v2140, %v2142
    %v2144 = vrot.slane %v2130, %v2143
    %v2147 = vadd.f32 %v2095, 1e-05
    %v2148 = vadd.f32 %v2096, 1e-05
    %v2149 = vrsqrt.pop %v2147
    %v2150 = vrsqrt.pop %v2148
    %v2151 = vmul.f32 %v2112, %v2149
    %v2152 = vmul.f32 %v2119, %v2150
    %v2153 = vmul.f32 %v2071, %v2151
    %v2154 = vmul.f32 %v2072, %v2152
    %v2155 = vsub.f32 %v2137, %v2153
    %v2156 = vsub.f32 %v2144, %v2154
    %v2159 = vlaneseq
    %v2160 = vshrl.u32 %v2159, 7
    %v2161 = vsub.s32 0, %v2160
    %v2162 = vrot.slane %v2151, %v2161
    %v2163 = vlaneseq
    %v2164 = vshrl.u32 %v2163, 7
    %v2165 = vsub.s32 0, %v2164
    %v2166 = vrot.slane %v2152, %v2165
    %v2169 = vmul.f32 %v2049, %v2162
    %v2170 = vmul.f32 %v2054, %v2166
    %v2173 = vlaneseq
    %v2174 = vshrl.u32 %v2173, 7
    %v2175 = vsub.s32 0, %v2174
    %v2176 = vrot.slane %v2155, %v2175
    %v2177 = vlaneseq
    %v2178 = vshrl.u32 %v2177, 7
    %v2179 = vsub.s32 0, %v2178
    %v2180 = vrot.slane %v2156, %v2179
    %v2183 = vadd.f32 %v2169, %v2176
    %v2184 = vadd.f32 %v2170, %v2180
    %v2185 = vmul.f32 %v2183, 0.2
    %v2186 = vmul.f32 %v2184, 0.2
    %v2187 = vmax.f32 %v2183, %v2185
    %v2188 = vmax.f32 %v2184, %v2186
    %v2189 = vld [vmem:[#allocation12] sm:$0xff]
    %v2190 = vld [vmem:[#allocation12 + $0x8] sm:$0xff]
    %v2191 = vld [vmem:[#allocation12 + $0x10] sm:$0xff]
    %v2192 = vld [vmem:[#allocation12 + $0x18] sm:$0xff]
    %v2194 = vsel %vm1841, %v1972, 0
    %v2197 = vsel %vm1841, %v1973, 0
    %2199 = vmatprep.subr.mxu0 0.0
    %2200 = vmatpush1.msra.mxu0 0.0
    %2201 = vmatprep.subr.mxu0 0.0
    %2202 = vmatpush1.msra.mxu0 0.0
    %2203 = vmatprep.subr.mxu0 0.0
    %2204 = vmatpush1.msra.mxu0 0.0
    %2205 = vmatprep.subr.mxu0 0.0
    %2206 = vmatpush1.msra.mxu0 0.0
    %2207 = vmatprep.subr.mxu0 0.0
    %2208 = vmatpush1.msra.mxu0 0.0
    %2209 = vmatprep.subr.mxu0 0.0
    %2210 = vmatpush1.msra.mxu0 0.0
    %2211 = vmatprep.subr.mxu0 0.0
    %2212 = vmatpush1.msra.mxu0 0.0
    %2213 = vmatprep.subr.mxu0 0.0
    %2214 = vmatpush1.msra.mxu0 0.0
    %2215 = vmatprep.subr.mxu0 0.0
    %2216 = vmatpush1.msra.mxu0 0.0
    %2217 = vmatprep.subr.mxu0 0.0
    %2218 = vmatpush1.msra.mxu0 0.0
    %2219 = vmatprep.subr.mxu0 0.0
    %2220 = vmatpush1.msra.mxu0 0.0
    %2221 = vmatprep.subr.mxu0 0.0
    %2222 = vmatpush1.msra.mxu0 0.0
    %2223 = vmatprep.subr.mxu0 0.0
    %2224 = vmatpush1.msra.mxu0 %v2192
    %2225 = vmatprep.subr.mxu0 0.0
    %2226 = vmatpush1.msra.mxu0 %v2191
    %2227 = vmatprep.subr.mxu0 0.0
    %2228 = vmatpush1.msra.mxu0 %v2190
    %2229 = vmatprep.subr.mxu0 0.0
    %2230 = vmatpush1.msra.mxu0 %v2189
    %2231 = vmatprep.subr.mxu0 0.0
    %2232 = vmatpush2.msra.mxu0 0.0
    %2233 = vmatprep.subr.mxu0 0.0
    %2234 = vmatpush2.msra.mxu0 0.0
    %2235 = vmatprep.subr.mxu0 0.0
    %2236 = vmatpush2.msra.mxu0 0.0
    %2237 = vmatprep.subr.mxu0 0.0
    %2238 = vmatpush2.msra.mxu0 0.0
    %2239 = vmatprep.subr.mxu0 0.0
    %2240 = vmatpush2.msra.mxu0 0.0
    %2241 = vmatprep.subr.mxu0 0.0
    %2242 = vmatpush2.msra.mxu0 0.0
    %2243 = vmatprep.subr.mxu0 0.0
    %2244 = vmatpush2.msra.mxu0 0.0
    %2245 = vmatprep.subr.mxu0 0.0
    %2246 = vmatpush2.msra.mxu0 0.0
    %2247 = vmatprep.subr.mxu0 0.0
    %2248 = vmatpush2.msra.mxu0 0.0
    %2249 = vmatprep.subr.mxu0 0.0
    %2250 = vmatpush2.msra.mxu0 0.0
    %2251 = vmatprep.subr.mxu0 0.0
    %2252 = vmatpush2.msra.mxu0 0.0
    %2253 = vmatprep.subr.mxu0 0.0
    %2254 = vmatpush2.msra.mxu0 0.0
    %2255 = vmatprep.subr.mxu0 0.0
    %2256 = vmatpush2.msra.mxu0 0.0
    %2257 = vmatprep.subr.mxu0 0.0
    %2258 = vmatpush2.msra.mxu0 0.0
    %2259 = vmatprep.subr.mxu0 0.0
    %2260 = vmatpush2.msra.mxu0 0.0
    %2261 = vmatprep.subr.mxu0 0.0
    %2262 = vmatpush2.msra.mxu0 0.0
    %2263 = vmatprep.mubr.f32.mxu0 0.0
    %2264 = vmatmul.mubr.f32.gmra.mxu0 %v2194
    %v2265 = vpop.f32.mrf.mxu0
    %v2266 = vadd.f32 0.0, %v2265
    %v2267 = vpop.f32.mrf.mxu0
    %2268 = vmatprep.mubr.f32.mxu0 0.0
    %2269 = vmatmul.mubr.f32.gmra.mxu0 %v2197
    %v2270 = vpop.f32.mrf.mxu0
    %v2271 = vadd.f32 0.0, %v2270
    %v2272 = vpop.f32.mrf.mxu0
    %2273 = vdwg.mxu0
    %v2274 = vsel %vm1841, %v2266, 0.0
    %v2275 = vrot.slane %v2274, 4
    %v2276 = vadd.f32 %v2274, %v2275
    %v2277 = vrot.slane %v2276, 2
    %v2278 = vadd.f32 %v2276, %v2277
    %v2279 = vrot.slane %v2278, 1
    %v2280 = vadd.f32 %v2278, %v2279
    %v2281 = vsel %vm1841, %v2271, 0.0
    %v2282 = vrot.slane %v2281, 4
    %v2283 = vadd.f32 %v2281, %v2282
    %v2284 = vrot.slane %v2283, 2
    %v2285 = vadd.f32 %v2283, %v2284
    %v2286 = vrot.slane %v2285, 1
    %v2287 = vadd.f32 %v2285, %v2286
    %v2288 = vmul.f32 %v2280, 0.125
    %v2289 = vmul.f32 %v2287, 0.125
    %v2290 = vmul.f32 %v2266, %v2266
    %v2291 = vmul.f32 %v2271, %v2271
    %v2292 = vsel %vm1841, %v2290, 0.0
    %v2293 = vrot.slane %v2292, 4
    %v2294 = vadd.f32 %v2292, %v2293
    %v2295 = vrot.slane %v2294, 2
    %v2296 = vadd.f32 %v2294, %v2295
    %v2297 = vrot.slane %v2296, 1
    %v2298 = vadd.f32 %v2296, %v2297
    %v2299 = vsel %vm1841, %v2291, 0.0
    %v2300 = vrot.slane %v2299, 4
    %v2301 = vadd.f32 %v2299, %v2300
    %v2302 = vrot.slane %v2301, 2
    %v2303 = vadd.f32 %v2301, %v2302
    %v2304 = vrot.slane %v2303, 1
    %v2305 = vadd.f32 %v2303, %v2304
    %v2306 = vmul.f32 %v2298, 0.125
    %v2307 = vmul.f32 %v2305, 0.125
    %v2308 = vmul.f32 %v2288, %v2288
    %v2309 = vmul.f32 %v2289, %v2289
    %v2310 = vsub.f32 %v2306, %v2308
    %v2311 = vsub.f32 %v2307, %v2309
    %v2312 = vmax.f32 %v2310, 0.0
    %v2313 = vmax.f32 %v2311, 0.0
    %v2316 = vunpack.c.l.s4 1966171168
    %v2317 = vunpack.c.0.s8 %v2316
    %v2318 = vlaneseq
    %v2319 = vshrl.u32 %v2318, 7
    %v2320 = vsub.s32 %v2317, %v2319
    %v2321 = vrot.slane %v582, %v2320
    %v2322 = vcombine.high %v2321, %v2321
    %v2324 = vunpack.c.l.s4 1966171168
    %v2325 = vunpack.c.0.s8 %v2324
    %v2326 = vlaneseq
    %v2327 = vshrl.u32 %v2326, 7
    %v2328 = vsub.s32 %v2325, %v2327
    %v2329 = vrot.slane %v2321, %v2328
    %v2331 = vunpack.c.l.s4 1966171168
    %v2332 = vunpack.c.0.s8 %v2331
    %v2333 = vlaneseq
    %v2334 = vshrl.u32 %v2333, 7
    %v2335 = vsub.s32 %v2332, %v2334
    %v2336 = vrot.slane %v2322, %v2335
    %v2341 = vunpack.c.l.s4 1966171168
    %v2342 = vunpack.c.0.s8 %v2341
    %v2343 = vlaneseq
    %v2344 = vshrl.u32 %v2343, 7
    %v2345 = vsub.s32 %v2342, %v2344
    %v2346 = vrot.slane %v584, %v2345
    %v2347 = vcombine.high %v2346, %v2346
    %v2349 = vunpack.c.l.s4 1966171168
    %v2350 = vunpack.c.0.s8 %v2349
    %v2351 = vlaneseq
    %v2352 = vshrl.u32 %v2351, 7
    %v2353 = vsub.s32 %v2350, %v2352
    %v2354 = vrot.slane %v2346, %v2353
    %v2356 = vunpack.c.l.s4 1966171168
    %v2357 = vunpack.c.0.s8 %v2356
    %v2358 = vlaneseq
    %v2359 = vshrl.u32 %v2358, 7
    %v2360 = vsub.s32 %v2357, %v2359
    %v2361 = vrot.slane %v2347, %v2360
    %v2364 = vadd.f32 %v2312, 1e-05
    %v2365 = vadd.f32 %v2313, 1e-05
    %v2366 = vrsqrt.pop %v2364
    %v2367 = vrsqrt.pop %v2365
    %v2368 = vmul.f32 %v2329, %v2366
    %v2369 = vmul.f32 %v2336, %v2367
    %v2370 = vmul.f32 %v2288, %v2368
    %v2371 = vmul.f32 %v2289, %v2369
    %v2372 = vsub.f32 %v2354, %v2370
    %v2373 = vsub.f32 %v2361, %v2371
    %v2376 = vlaneseq
    %v2377 = vshrl.u32 %v2376, 7
    %v2378 = vsub.s32 0, %v2377
    %v2379 = vrot.slane %v2368, %v2378
    %v2380 = vlaneseq
    %v2381 = vshrl.u32 %v2380, 7
    %v2382 = vsub.s32 0, %v2381
    %v2383 = vrot.slane %v2369, %v2382
    %v2386 = vmul.f32 %v2266, %v2379
    %v2387 = vmul.f32 %v2271, %v2383
    %v2390 = vlaneseq
    %v2391 = vshrl.u32 %v2390, 7
    %v2392 = vsub.s32 0, %v2391
    %v2393 = vrot.slane %v2372, %v2392
    %v2394 = vlaneseq
    %v2395 = vshrl.u32 %v2394, 7
    %v2396 = vsub.s32 0, %v2395
    %v2397 = vrot.slane %v2373, %v2396
    %v2400 = vadd.f32 %v2386, %v2393
    %v2401 = vadd.f32 %v2387, %v2397
    %v2402 = vmul.f32 %v2400, 0.2
    %v2403 = vmul.f32 %v2401, 0.2
    %v2404 = vmax.f32 %v2400, %v2402
    %v2405 = vmax.f32 %v2401, %v2403
    %v2406 = vld [vmem:[#allocation19] sm:$0xff]
    %v2407 = vld [vmem:[#allocation19 + $0x8] sm:$0xff]
    %v2408 = vld [vmem:[#allocation19 + $0x10] sm:$0xff]
    %v2409 = vld [vmem:[#allocation19 + $0x18] sm:$0xff]
    %v2411 = vsel %vm1841, %v2187, 0
    %v2414 = vsel %vm1841, %v2188, 0
    %2416 = vmatprep.subr.mxu0 0.0
    %2417 = vmatpush1.msra.mxu0 0.0
    %2418 = vmatprep.subr.mxu0 0.0
    %2419 = vmatpush1.msra.mxu0 0.0
    %2420 = vmatprep.subr.mxu0 0.0
    %2421 = vmatpush1.msra.mxu0 0.0
    %2422 = vmatprep.subr.mxu0 0.0
    %2423 = vmatpush1.msra.mxu0 0.0
    %2424 = vmatprep.subr.mxu0 0.0
    %2425 = vmatpush1.msra.mxu0 0.0
    %2426 = vmatprep.subr.mxu0 0.0
    %2427 = vmatpush1.msra.mxu0 0.0
    %2428 = vmatprep.subr.mxu0 0.0
    %2429 = vmatpush1.msra.mxu0 0.0
    %2430 = vmatprep.subr.mxu0 0.0
    %2431 = vmatpush1.msra.mxu0 0.0
    %2432 = vmatprep.subr.mxu0 0.0
    %2433 = vmatpush1.msra.mxu0 0.0
    %2434 = vmatprep.subr.mxu0 0.0
    %2435 = vmatpush1.msra.mxu0 0.0
    %2436 = vmatprep.subr.mxu0 0.0
    %2437 = vmatpush1.msra.mxu0 0.0
    %2438 = vmatprep.subr.mxu0 0.0
    %2439 = vmatpush1.msra.mxu0 0.0
    %2440 = vmatprep.subr.mxu0 0.0
    %2441 = vmatpush1.msra.mxu0 %v2409
    %2442 = vmatprep.subr.mxu0 0.0
    %2443 = vmatpush1.msra.mxu0 %v2408
    %2444 = vmatprep.subr.mxu0 0.0
    %2445 = vmatpush1.msra.mxu0 %v2407
    %2446 = vmatprep.subr.mxu0 0.0
    %2447 = vmatpush1.msra.mxu0 %v2406
    %2448 = vmatprep.subr.mxu0 0.0
    %2449 = vmatpush2.msra.mxu0 0.0
    %2450 = vmatprep.subr.mxu0 0.0
    %2451 = vmatpush2.msra.mxu0 0.0
    %2452 = vmatprep.subr.mxu0 0.0
    %2453 = vmatpush2.msra.mxu0 0.0
    %2454 = vmatprep.subr.mxu0 0.0
    %2455 = vmatpush2.msra.mxu0 0.0
    %2456 = vmatprep.subr.mxu0 0.0
    %2457 = vmatpush2.msra.mxu0 0.0
    %2458 = vmatprep.subr.mxu0 0.0
    %2459 = vmatpush2.msra.mxu0 0.0
    %2460 = vmatprep.subr.mxu0 0.0
    %2461 = vmatpush2.msra.mxu0 0.0
    %2462 = vmatprep.subr.mxu0 0.0
    %2463 = vmatpush2.msra.mxu0 0.0
    %2464 = vmatprep.subr.mxu0 0.0
    %2465 = vmatpush2.msra.mxu0 0.0
    %2466 = vmatprep.subr.mxu0 0.0
    %2467 = vmatpush2.msra.mxu0 0.0
    %2468 = vmatprep.subr.mxu0 0.0
    %2469 = vmatpush2.msra.mxu0 0.0
    %2470 = vmatprep.subr.mxu0 0.0
    %2471 = vmatpush2.msra.mxu0 0.0
    %2472 = vmatprep.subr.mxu0 0.0
    %2473 = vmatpush2.msra.mxu0 0.0
    %2474 = vmatprep.subr.mxu0 0.0
    %2475 = vmatpush2.msra.mxu0 0.0
    %2476 = vmatprep.subr.mxu0 0.0
    %2477 = vmatpush2.msra.mxu0 0.0
    %2478 = vmatprep.subr.mxu0 0.0
    %2479 = vmatpush2.msra.mxu0 0.0
    %2480 = vmatprep.mubr.f32.mxu0 0.0
    %2481 = vmatmul.mubr.f32.gmra.mxu0 %v2411
    %v2482 = vpop.f32.mrf.mxu0
    %v2483 = vadd.f32 0.0, %v2482
    %v2484 = vpop.f32.mrf.mxu0
    %2485 = vmatprep.mubr.f32.mxu0 0.0
    %2486 = vmatmul.mubr.f32.gmra.mxu0 %v2414
    %v2487 = vpop.f32.mrf.mxu0
    %v2488 = vadd.f32 0.0, %v2487
    %v2489 = vpop.f32.mrf.mxu0
    %2490 = vdwg.mxu0
    %v2491 = vsel %vm1841, %v2483, 0.0
    %v2492 = vrot.slane %v2491, 4
    %v2493 = vadd.f32 %v2491, %v2492
    %v2494 = vrot.slane %v2493, 2
    %v2495 = vadd.f32 %v2493, %v2494
    %v2496 = vrot.slane %v2495, 1
    %v2497 = vadd.f32 %v2495, %v2496
    %v2498 = vsel %vm1841, %v2488, 0.0
    %v2499 = vrot.slane %v2498, 4
    %v2500 = vadd.f32 %v2498, %v2499
    %v2501 = vrot.slane %v2500, 2
    %v2502 = vadd.f32 %v2500, %v2501
    %v2503 = vrot.slane %v2502, 1
    %v2504 = vadd.f32 %v2502, %v2503
    %v2505 = vmul.f32 %v2497, 0.125
    %v2506 = vmul.f32 %v2504, 0.125
    %v2507 = vmul.f32 %v2483, %v2483
    %v2508 = vmul.f32 %v2488, %v2488
    %v2509 = vsel %vm1841, %v2507, 0.0
    %v2510 = vrot.slane %v2509, 4
    %v2511 = vadd.f32 %v2509, %v2510
    %v2512 = vrot.slane %v2511, 2
    %v2513 = vadd.f32 %v2511, %v2512
    %v2514 = vrot.slane %v2513, 1
    %v2515 = vadd.f32 %v2513, %v2514
    %v2516 = vsel %vm1841, %v2508, 0.0
    %v2517 = vrot.slane %v2516, 4
    %v2518 = vadd.f32 %v2516, %v2517
    %v2519 = vrot.slane %v2518, 2
    %v2520 = vadd.f32 %v2518, %v2519
    %v2521 = vrot.slane %v2520, 1
    %v2522 = vadd.f32 %v2520, %v2521
    %v2523 = vmul.f32 %v2515, 0.125
    %v2524 = vmul.f32 %v2522, 0.125
    %v2525 = vmul.f32 %v2505, %v2505
    %v2526 = vmul.f32 %v2506, %v2506
    %v2527 = vsub.f32 %v2523, %v2525
    %v2528 = vsub.f32 %v2524, %v2526
    %v2529 = vmax.f32 %v2527, 0.0
    %v2530 = vmax.f32 %v2528, 0.0
    %v2533 = vunpack.c.l.s4 1966171168
    %v2534 = vunpack.c.0.s8 %v2533
    %v2535 = vlaneseq
    %v2536 = vshrl.u32 %v2535, 7
    %v2537 = vsub.s32 %v2534, %v2536
    %v2538 = vrot.slane %v1117, %v2537
    %v2539 = vcombine.high %v2538, %v2538
    %v2541 = vunpack.c.l.s4 1966171168
    %v2542 = vunpack.c.0.s8 %v2541
    %v2543 = vlaneseq
    %v2544 = vshrl.u32 %v2543, 7
    %v2545 = vsub.s32 %v2542, %v2544
    %v2546 = vrot.slane %v2538, %v2545
    %v2548 = vunpack.c.l.s4 1966171168
    %v2549 = vunpack.c.0.s8 %v2548
    %v2550 = vlaneseq
    %v2551 = vshrl.u32 %v2550, 7
    %v2552 = vsub.s32 %v2549, %v2551
    %v2553 = vrot.slane %v2539, %v2552
    %v2558 = vunpack.c.l.s4 1966171168
    %v2559 = vunpack.c.0.s8 %v2558
    %v2560 = vlaneseq
    %v2561 = vshrl.u32 %v2560, 7
    %v2562 = vsub.s32 %v2559, %v2561
    %v2563 = vrot.slane %v1119, %v2562
    %v2564 = vcombine.high %v2563, %v2563
    %v2566 = vunpack.c.l.s4 1966171168
    %v2567 = vunpack.c.0.s8 %v2566
    %v2568 = vlaneseq
    %v2569 = vshrl.u32 %v2568, 7
    %v2570 = vsub.s32 %v2567, %v2569
    %v2571 = vrot.slane %v2563, %v2570
    %v2573 = vunpack.c.l.s4 1966171168
    %v2574 = vunpack.c.0.s8 %v2573
    %v2575 = vlaneseq
    %v2576 = vshrl.u32 %v2575, 7
    %v2577 = vsub.s32 %v2574, %v2576
    %v2578 = vrot.slane %v2564, %v2577
    %v2581 = vadd.f32 %v2529, 1e-05
    %v2582 = vadd.f32 %v2530, 1e-05
    %v2583 = vrsqrt.pop %v2581
    %v2584 = vrsqrt.pop %v2582
    %v2585 = vmul.f32 %v2546, %v2583
    %v2586 = vmul.f32 %v2553, %v2584
    %v2587 = vmul.f32 %v2505, %v2585
    %v2588 = vmul.f32 %v2506, %v2586
    %v2589 = vsub.f32 %v2571, %v2587
    %v2590 = vsub.f32 %v2578, %v2588
    %v2593 = vlaneseq
    %v2594 = vshrl.u32 %v2593, 7
    %v2595 = vsub.s32 0, %v2594
    %v2596 = vrot.slane %v2585, %v2595
    %v2597 = vlaneseq
    %v2598 = vshrl.u32 %v2597, 7
    %v2599 = vsub.s32 0, %v2598
    %v2600 = vrot.slane %v2586, %v2599
    %v2603 = vmul.f32 %v2483, %v2596
    %v2604 = vmul.f32 %v2488, %v2600
    %v2607 = vlaneseq
    %v2608 = vshrl.u32 %v2607, 7
    %v2609 = vsub.s32 0, %v2608
    %v2610 = vrot.slane %v2589, %v2609
    %v2611 = vlaneseq
    %v2612 = vshrl.u32 %v2611, 7
    %v2613 = vsub.s32 0, %v2612
    %v2614 = vrot.slane %v2590, %v2613
    %v2617 = vadd.f32 %v2603, %v2610
    %v2618 = vadd.f32 %v2604, %v2614
    %v2619 = vmul.f32 %v2617, 0.2
    %v2620 = vmul.f32 %v2618, 0.2
    %v2621 = vmax.f32 %v2617, %v2619
    %v2622 = vmax.f32 %v2618, %v2620
    %v2623 = vld [vmem:[#allocation13] sm:$0xff]
    %v2624 = vld [vmem:[#allocation13 + $0x8] sm:$0xff]
    %v2625 = vld [vmem:[#allocation13 + $0x10] sm:$0xff]
    %v2626 = vld [vmem:[#allocation13 + $0x18] sm:$0xff]
    %v2628 = vsel %vm1841, %v2404, 0
    %v2631 = vsel %vm1841, %v2405, 0
    %2633 = vmatprep.subr.mxu0 0.0
    %2634 = vmatpush1.msra.mxu0 0.0
    %2635 = vmatprep.subr.mxu0 0.0
    %2636 = vmatpush1.msra.mxu0 0.0
    %2637 = vmatprep.subr.mxu0 0.0
    %2638 = vmatpush1.msra.mxu0 0.0
    %2639 = vmatprep.subr.mxu0 0.0
    %2640 = vmatpush1.msra.mxu0 0.0
    %2641 = vmatprep.subr.mxu0 0.0
    %2642 = vmatpush1.msra.mxu0 0.0
    %2643 = vmatprep.subr.mxu0 0.0
    %2644 = vmatpush1.msra.mxu0 0.0
    %2645 = vmatprep.subr.mxu0 0.0
    %2646 = vmatpush1.msra.mxu0 0.0
    %2647 = vmatprep.subr.mxu0 0.0
    %2648 = vmatpush1.msra.mxu0 0.0
    %2649 = vmatprep.subr.mxu0 0.0
    %2650 = vmatpush1.msra.mxu0 0.0
    %2651 = vmatprep.subr.mxu0 0.0
    %2652 = vmatpush1.msra.mxu0 0.0
    %2653 = vmatprep.subr.mxu0 0.0
    %2654 = vmatpush1.msra.mxu0 0.0
    %2655 = vmatprep.subr.mxu0 0.0
    %2656 = vmatpush1.msra.mxu0 0.0
    %2657 = vmatprep.subr.mxu0 0.0
    %2658 = vmatpush1.msra.mxu0 %v2626
    %2659 = vmatprep.subr.mxu0 0.0
    %2660 = vmatpush1.msra.mxu0 %v2625
    %2661 = vmatprep.subr.mxu0 0.0
    %2662 = vmatpush1.msra.mxu0 %v2624
    %2663 = vmatprep.subr.mxu0 0.0
    %2664 = vmatpush1.msra.mxu0 %v2623
    %2665 = vmatprep.subr.mxu0 0.0
    %2666 = vmatpush2.msra.mxu0 0.0
    %2667 = vmatprep.subr.mxu0 0.0
    %2668 = vmatpush2.msra.mxu0 0.0
    %2669 = vmatprep.subr.mxu0 0.0
    %2670 = vmatpush2.msra.mxu0 0.0
    %2671 = vmatprep.subr.mxu0 0.0
    %2672 = vmatpush2.msra.mxu0 0.0
    %2673 = vmatprep.subr.mxu0 0.0
    %2674 = vmatpush2.msra.mxu0 0.0
    %2675 = vmatprep.subr.mxu0 0.0
    %2676 = vmatpush2.msra.mxu0 0.0
    %2677 = vmatprep.subr.mxu0 0.0
    %2678 = vmatpush2.msra.mxu0 0.0
    %2679 = vmatprep.subr.mxu0 0.0
    %2680 = vmatpush2.msra.mxu0 0.0
    %2681 = vmatprep.subr.mxu0 0.0
    %2682 = vmatpush2.msra.mxu0 0.0
    %2683 = vmatprep.subr.mxu0 0.0
    %2684 = vmatpush2.msra.mxu0 0.0
    %2685 = vmatprep.subr.mxu0 0.0
    %2686 = vmatpush2.msra.mxu0 0.0
    %2687 = vmatprep.subr.mxu0 0.0
    %2688 = vmatpush2.msra.mxu0 0.0
    %2689 = vmatprep.subr.mxu0 0.0
    %2690 = vmatpush2.msra.mxu0 0.0
    %2691 = vmatprep.subr.mxu0 0.0
    %2692 = vmatpush2.msra.mxu0 0.0
    %2693 = vmatprep.subr.mxu0 0.0
    %2694 = vmatpush2.msra.mxu0 0.0
    %2695 = vmatprep.subr.mxu0 0.0
    %2696 = vmatpush2.msra.mxu0 0.0
    %2697 = vmatprep.mubr.f32.mxu0 0.0
    %2698 = vmatmul.mubr.f32.gmra.mxu0 %v2628
    %v2699 = vpop.f32.mrf.mxu0
    %v2700 = vadd.f32 0.0, %v2699
    %v2701 = vpop.f32.mrf.mxu0
    %2702 = vmatprep.mubr.f32.mxu0 0.0
    %2703 = vmatmul.mubr.f32.gmra.mxu0 %v2631
    %v2704 = vpop.f32.mrf.mxu0
    %v2705 = vadd.f32 0.0, %v2704
    %v2706 = vpop.f32.mrf.mxu0
    %2707 = vdwg.mxu0
    %vm2708 = vcmask 523264
    %v2709 = vsel %vm2708, %v2700, 0.0
    %v2710 = vrot.slane %v2709, 4
    %v2711 = vadd.f32 %v2709, %v2710
    %v2712 = vrot.slane %v2711, 2
    %v2713 = vadd.f32 %v2711, %v2712
    %v2714 = vrot.slane %v2713, 1
    %v2715 = vadd.f32 %v2713, %v2714
    %v2716 = vsel %vm2708, %v2705, 0.0
    %v2717 = vrot.slane %v2716, 4
    %v2718 = vadd.f32 %v2716, %v2717
    %v2719 = vrot.slane %v2718, 2
    %v2720 = vadd.f32 %v2718, %v2719
    %v2721 = vrot.slane %v2720, 1
    %v2722 = vadd.f32 %v2720, %v2721
    %v2723 = vmul.f32 %v2715, 0.125
    %v2724 = vmul.f32 %v2722, 0.125
    %v2725 = vmul.f32 %v2700, %v2700
    %v2726 = vmul.f32 %v2705, %v2705
    %v2727 = vsel %vm2708, %v2725, 0.0
    %v2728 = vrot.slane %v2727, 4
    %v2729 = vadd.f32 %v2727, %v2728
    %v2730 = vrot.slane %v2729, 2
    %v2731 = vadd.f32 %v2729, %v2730
    %v2732 = vrot.slane %v2731, 1
    %v2733 = vadd.f32 %v2731, %v2732
    %v2734 = vsel %vm2708, %v2726, 0.0
    %v2735 = vrot.slane %v2734, 4
    %v2736 = vadd.f32 %v2734, %v2735
    %v2737 = vrot.slane %v2736, 2
    %v2738 = vadd.f32 %v2736, %v2737
    %v2739 = vrot.slane %v2738, 1
    %v2740 = vadd.f32 %v2738, %v2739
    %v2741 = vmul.f32 %v2733, 0.125
    %v2742 = vmul.f32 %v2740, 0.125
    %v2743 = vmul.f32 %v2723, %v2723
    %v2744 = vmul.f32 %v2724, %v2724
    %v2745 = vsub.f32 %v2741, %v2743
    %v2746 = vsub.f32 %v2742, %v2744
    %v2747 = vmax.f32 %v2745, 0.0
    %v2748 = vmax.f32 %v2746, 0.0
    %v2751 = vunpack.c.l.s4 1966171168
    %v2752 = vunpack.c.0.s8 %v2751
    %v2753 = vlaneseq
    %v2754 = vshrl.u32 %v2753, 7
    %v2755 = vsub.s32 %v2752, %v2754
    %v2756 = vrot.slane %v653, %v2755
    %v2757 = vcombine.high %v2756, %v2756
    %v2759 = vunpack.c.l.s4 1966171168
    %v2760 = vunpack.c.0.s8 %v2759
    %v2761 = vlaneseq
    %v2762 = vshrl.u32 %v2761, 7
    %v2763 = vsub.s32 %v2760, %v2762
    %v2764 = vrot.slane %v2756, %v2763
    %v2766 = vunpack.c.l.s4 1966171168
    %v2767 = vunpack.c.0.s8 %v2766
    %v2768 = vlaneseq
    %v2769 = vshrl.u32 %v2768, 7
    %v2770 = vsub.s32 %v2767, %v2769
    %v2771 = vrot.slane %v2757, %v2770
    %v2776 = vunpack.c.l.s4 1966171168
    %v2777 = vunpack.c.0.s8 %v2776
    %v2778 = vlaneseq
    %v2779 = vshrl.u32 %v2778, 7
    %v2780 = vsub.s32 %v2777, %v2779
    %v2781 = vrot.slane %v655, %v2780
    %v2782 = vcombine.high %v2781, %v2781
    %v2784 = vunpack.c.l.s4 1966171168
    %v2785 = vunpack.c.0.s8 %v2784
    %v2786 = vlaneseq
    %v2787 = vshrl.u32 %v2786, 7
    %v2788 = vsub.s32 %v2785, %v2787
    %v2789 = vrot.slane %v2781, %v2788
    %v2791 = vunpack.c.l.s4 1966171168
    %v2792 = vunpack.c.0.s8 %v2791
    %v2793 = vlaneseq
    %v2794 = vshrl.u32 %v2793, 7
    %v2795 = vsub.s32 %v2792, %v2794
    %v2796 = vrot.slane %v2782, %v2795
    %v2799 = vadd.f32 %v2747, 1e-05
    %v2800 = vadd.f32 %v2748, 1e-05
    %v2801 = vrsqrt.pop %v2799
    %v2802 = vrsqrt.pop %v2800
    %v2803 = vmul.f32 %v2764, %v2801
    %v2804 = vmul.f32 %v2771, %v2802
    %v2805 = vmul.f32 %v2723, %v2803
    %v2806 = vmul.f32 %v2724, %v2804
    %v2807 = vsub.f32 %v2789, %v2805
    %v2808 = vsub.f32 %v2796, %v2806
    %v2811 = vlaneseq
    %v2812 = vshrl.u32 %v2811, 7
    %v2813 = vsub.s32 0, %v2812
    %v2814 = vrot.slane %v2803, %v2813
    %v2815 = vlaneseq
    %v2816 = vshrl.u32 %v2815, 7
    %v2817 = vsub.s32 0, %v2816
    %v2818 = vrot.slane %v2804, %v2817
    %v2821 = vmul.f32 %v2700, %v2814
    %v2822 = vmul.f32 %v2705, %v2818
    %v2825 = vlaneseq
    %v2826 = vshrl.u32 %v2825, 7
    %v2827 = vsub.s32 0, %v2826
    %v2828 = vrot.slane %v2807, %v2827
    %v2829 = vlaneseq
    %v2830 = vshrl.u32 %v2829, 7
    %v2831 = vsub.s32 0, %v2830
    %v2832 = vrot.slane %v2808, %v2831
    %v2835 = vadd.f32 %v2821, %v2828
    %v2836 = vadd.f32 %v2822, %v2832
    %v2837 = vmul.f32 %v2835, 0.2
    %v2838 = vmul.f32 %v2836, 0.2
    %v2839 = vmax.f32 %v2835, %v2837
    %v2840 = vmax.f32 %v2836, %v2838
    %v2841 = vld [vmem:[#allocation21] sm:$0xff]
    %v2842 = vld [vmem:[#allocation21 + $0x8] sm:$0xff]
    %v2843 = vld [vmem:[#allocation21 + $0x10] sm:$0xff]
    %v2844 = vld [vmem:[#allocation21 + $0x18] sm:$0xff]
    %v2846 = vsel %vm1841, %v2621, 0
    %v2849 = vsel %vm1841, %v2622, 0
    %2851 = vmatprep.subr.mxu0 0.0
    %2852 = vmatpush1.msra.mxu0 0.0
    %2853 = vmatprep.subr.mxu0 0.0
    %2854 = vmatpush1.msra.mxu0 0.0
    %2855 = vmatprep.subr.mxu0 0.0
    %2856 = vmatpush1.msra.mxu0 0.0
    %2857 = vmatprep.subr.mxu0 0.0
    %2858 = vmatpush1.msra.mxu0 0.0
    %2859 = vmatprep.subr.mxu0 0.0
    %2860 = vmatpush1.msra.mxu0 0.0
    %2861 = vmatprep.subr.mxu0 0.0
    %2862 = vmatpush1.msra.mxu0 0.0
    %2863 = vmatprep.subr.mxu0 0.0
    %2864 = vmatpush1.msra.mxu0 0.0
    %2865 = vmatprep.subr.mxu0 0.0
    %2866 = vmatpush1.msra.mxu0 0.0
    %2867 = vmatprep.subr.mxu0 0.0
    %2868 = vmatpush1.msra.mxu0 0.0
    %2869 = vmatprep.subr.mxu0 0.0
    %2870 = vmatpush1.msra.mxu0 0.0
    %2871 = vmatprep.subr.mxu0 0.0
    %2872 = vmatpush1.msra.mxu0 0.0
    %2873 = vmatprep.subr.mxu0 0.0
    %2874 = vmatpush1.msra.mxu0 0.0
    %2875 = vmatprep.subr.mxu0 0.0
    %2876 = vmatpush1.msra.mxu0 %v2844
    %2877 = vmatprep.subr.mxu0 0.0
    %2878 = vmatpush1.msra.mxu0 %v2843
    %2879 = vmatprep.subr.mxu0 0.0
    %2880 = vmatpush1.msra.mxu0 %v2842
    %2881 = vmatprep.subr.mxu0 0.0
    %2882 = vmatpush1.msra.mxu0 %v2841
    %2883 = vmatprep.subr.mxu0 0.0
    %2884 = vmatpush2.msra.mxu0 0.0
    %2885 = vmatprep.subr.mxu0 0.0
    %2886 = vmatpush2.msra.mxu0 0.0
    %2887 = vmatprep.subr.mxu0 0.0
    %2888 = vmatpush2.msra.mxu0 0.0
    %2889 = vmatprep.subr.mxu0 0.0
    %2890 = vmatpush2.msra.mxu0 0.0
    %2891 = vmatprep.subr.mxu0 0.0
    %2892 = vmatpush2.msra.mxu0 0.0
    %2893 = vmatprep.subr.mxu0 0.0
    %2894 = vmatpush2.msra.mxu0 0.0
    %2895 = vmatprep.subr.mxu0 0.0
    %2896 = vmatpush2.msra.mxu0 0.0
    %2897 = vmatprep.subr.mxu0 0.0
    %2898 = vmatpush2.msra.mxu0 0.0
    %2899 = vmatprep.subr.mxu0 0.0
    %2900 = vmatpush2.msra.mxu0 0.0
    %2901 = vmatprep.subr.mxu0 0.0
    %2902 = vmatpush2.msra.mxu0 0.0
    %2903 = vmatprep.subr.mxu0 0.0
    %2904 = vmatpush2.msra.mxu0 0.0
    %2905 = vmatprep.subr.mxu0 0.0
    %2906 = vmatpush2.msra.mxu0 0.0
    %2907 = vmatprep.subr.mxu0 0.0
    %2908 = vmatpush2.msra.mxu0 0.0
    %2909 = vmatprep.subr.mxu0 0.0
    %2910 = vmatpush2.msra.mxu0 0.0
    %2911 = vmatprep.subr.mxu0 0.0
    %2912 = vmatpush2.msra.mxu0 0.0
    %2913 = vmatprep.subr.mxu0 0.0
    %2914 = vmatpush2.msra.mxu0 0.0
    %2915 = vmatprep.mubr.f32.mxu0 0.0
    %2916 = vmatmul.mubr.f32.gmra.mxu0 %v2846
    %v2917 = vpop.f32.mrf.mxu0
    %v2918 = vadd.f32 0.0, %v2917
    %v2919 = vpop.f32.mrf.mxu0
    %2920 = vmatprep.mubr.f32.mxu0 0.0
    %2921 = vmatmul.mubr.f32.gmra.mxu0 %v2849
    %v2922 = vpop.f32.mrf.mxu0
    %v2923 = vadd.f32 0.0, %v2922
    %v2924 = vpop.f32.mrf.mxu0
    %2925 = vdwg.mxu0
    %v2926 = vsel %vm2708, %v2918, 0.0
    %v2927 = vrot.slane %v2926, 4
    %v2928 = vadd.f32 %v2926, %v2927
    %v2929 = vrot.slane %v2928, 2
    %v2930 = vadd.f32 %v2928, %v2929
    %v2931 = vrot.slane %v2930, 1
    %v2932 = vadd.f32 %v2930, %v2931
    %v2933 = vsel %vm2708, %v2923, 0.0
    %v2934 = vrot.slane %v2933, 4
    %v2935 = vadd.f32 %v2933, %v2934
    %v2936 = vrot.slane %v2935, 2
    %v2937 = vadd.f32 %v2935, %v2936
    %v2938 = vrot.slane %v2937, 1
    %v2939 = vadd.f32 %v2937, %v2938
    %v2940 = vmul.f32 %v2932, 0.125
    %v2941 = vmul.f32 %v2939, 0.125
    %v2942 = vmul.f32 %v2918, %v2918
    %v2943 = vmul.f32 %v2923, %v2923
    %v2944 = vsel %vm2708, %v2942, 0.0
    %v2945 = vrot.slane %v2944, 4
    %v2946 = vadd.f32 %v2944, %v2945
    %v2947 = vrot.slane %v2946, 2
    %v2948 = vadd.f32 %v2946, %v2947
    %v2949 = vrot.slane %v2948, 1
    %v2950 = vadd.f32 %v2948, %v2949
    %v2951 = vsel %vm2708, %v2943, 0.0
    %v2952 = vrot.slane %v2951, 4
    %v2953 = vadd.f32 %v2951, %v2952
    %v2954 = vrot.slane %v2953, 2
    %v2955 = vadd.f32 %v2953, %v2954
    %v2956 = vrot.slane %v2955, 1
    %v2957 = vadd.f32 %v2955, %v2956
    %v2958 = vmul.f32 %v2950, 0.125
    %v2959 = vmul.f32 %v2957, 0.125
    %v2960 = vmul.f32 %v2940, %v2940
    %v2961 = vmul.f32 %v2941, %v2941
    %v2962 = vsub.f32 %v2958, %v2960
    %v2963 = vsub.f32 %v2959, %v2961
    %v2964 = vmax.f32 %v2962, 0.0
    %v2965 = vmax.f32 %v2963, 0.0
    %v2968 = vunpack.c.l.s4 1966171168
    %v2969 = vunpack.c.0.s8 %v2968
    %v2970 = vlaneseq
    %v2971 = vshrl.u32 %v2970, 7
    %v2972 = vsub.s32 %v2969, %v2971
    %v2973 = vrot.slane %v1188, %v2972
    %v2974 = vcombine.high %v2973, %v2973
    %v2976 = vunpack.c.l.s4 1966171168
    %v2977 = vunpack.c.0.s8 %v2976
    %v2978 = vlaneseq
    %v2979 = vshrl.u32 %v2978, 7
    %v2980 = vsub.s32 %v2977, %v2979
    %v2981 = vrot.slane %v2973, %v2980
    %v2983 = vunpack.c.l.s4 1966171168
    %v2984 = vunpack.c.0.s8 %v2983
    %v2985 = vlaneseq
    %v2986 = vshrl.u32 %v2985, 7
    %v2987 = vsub.s32 %v2984, %v2986
    %v2988 = vrot.slane %v2974, %v2987
    %v2993 = vunpack.c.l.s4 1966171168
    %v2994 = vunpack.c.0.s8 %v2993
    %v2995 = vlaneseq
    %v2996 = vshrl.u32 %v2995, 7
    %v2997 = vsub.s32 %v2994, %v2996
    %v2998 = vrot.slane %v1190, %v2997
    %v2999 = vcombine.high %v2998, %v2998
    %v3001 = vunpack.c.l.s4 1966171168
    %v3002 = vunpack.c.0.s8 %v3001
    %v3003 = vlaneseq
    %v3004 = vshrl.u32 %v3003, 7
    %v3005 = vsub.s32 %v3002, %v3004
    %v3006 = vrot.slane %v2998, %v3005
    %v3008 = vunpack.c.l.s4 1966171168
    %v3009 = vunpack.c.0.s8 %v3008
    %v3010 = vlaneseq
    %v3011 = vshrl.u32 %v3010, 7
    %v3012 = vsub.s32 %v3009, %v3011
    %v3013 = vrot.slane %v2999, %v3012
    %v3016 = vadd.f32 %v2964, 1e-05
    %v3017 = vadd.f32 %v2965, 1e-05
    %v3018 = vrsqrt.pop %v3016
    %v3019 = vrsqrt.pop %v3017
    %v3020 = vmul.f32 %v2981, %v3018
    %v3021 = vmul.f32 %v2988, %v3019
    %v3022 = vmul.f32 %v2940, %v3020
    %v3023 = vmul.f32 %v2941, %v3021
    %v3024 = vsub.f32 %v3006, %v3022
    %v3025 = vsub.f32 %v3013, %v3023
    %v3028 = vlaneseq
    %v3029 = vshrl.u32 %v3028, 7
    %v3030 = vsub.s32 0, %v3029
    %v3031 = vrot.slane %v3020, %v3030
    %v3032 = vlaneseq
    %v3033 = vshrl.u32 %v3032, 7
    %v3034 = vsub.s32 0, %v3033
    %v3035 = vrot.slane %v3021, %v3034
    %v3038 = vmul.f32 %v2918, %v3031
    %v3039 = vmul.f32 %v2923, %v3035
    %v3042 = vlaneseq
    %v3043 = vshrl.u32 %v3042, 7
    %v3044 = vsub.s32 0, %v3043
    %v3045 = vrot.slane %v3024, %v3044
    %v3046 = vlaneseq
    %v3047 = vshrl.u32 %v3046, 7
    %v3048 = vsub.s32 0, %v3047
    %v3049 = vrot.slane %v3025, %v3048
    %v3052 = vadd.f32 %v3038, %v3045
    %v3053 = vadd.f32 %v3039, %v3049
    %v3054 = vmul.f32 %v3052, 0.2
    %v3055 = vmul.f32 %v3053, 0.2
    %v3056 = vmax.f32 %v3052, %v3054
    %v3057 = vmax.f32 %v3053, %v3055
    %v3058 = vld [vmem:[#allocation15] sm:$0xff]
    %v3059 = vld [vmem:[#allocation15 + $0x8] sm:$0xff]
    %v3060 = vld [vmem:[#allocation15 + $0x10] sm:$0xff]
    %v3061 = vld [vmem:[#allocation15 + $0x18] sm:$0xff]
    %v3062 = vld [vmem:[#allocation15 + $0x20] sm:$0xff]
    %v3063 = vld [vmem:[#allocation15 + $0x28] sm:$0xff]
    %v3064 = vld [vmem:[#allocation15 + $0x30] sm:$0xff]
    %v3065 = vld [vmem:[#allocation15 + $0x38] sm:$0xff]
    %v3067 = vsel %vm2708, %v2839, 0
    %v3070 = vsel %vm2708, %v2840, 0
    %3072 = vmatprep.subr.mxu0 0.0
    %3073 = vmatpush1.msra.mxu0 0.0
    %3074 = vmatprep.subr.mxu0 0.0
    %3075 = vmatpush1.msra.mxu0 0.0
    %3076 = vmatprep.subr.mxu0 0.0
    %3077 = vmatpush1.msra.mxu0 0.0
    %3078 = vmatprep.subr.mxu0 0.0
    %3079 = vmatpush1.msra.mxu0 0.0
    %3080 = vmatprep.subr.mxu0 0.0
    %3081 = vmatpush1.msra.mxu0 0.0
    %3082 = vmatprep.subr.mxu0 0.0
    %3083 = vmatpush1.msra.mxu0 0.0
    %3084 = vmatprep.subr.mxu0 0.0
    %3085 = vmatpush1.msra.mxu0 0.0
    %3086 = vmatprep.subr.mxu0 0.0
    %3087 = vmatpush1.msra.mxu0 0.0
    %3088 = vmatprep.subr.mxu0 0.0
    %3089 = vmatpush1.msra.mxu0 %v3065
    %3090 = vmatprep.subr.mxu0 0.0
    %3091 = vmatpush1.msra.mxu0 %v3064
    %3092 = vmatprep.subr.mxu0 0.0
    %3093 = vmatpush1.msra.mxu0 %v3063
    %3094 = vmatprep.subr.mxu0 0.0
    %3095 = vmatpush1.msra.mxu0 %v3062
    %3096 = vmatprep.subr.mxu0 0.0
    %3097 = vmatpush1.msra.mxu0 %v3061
    %3098 = vmatprep.subr.mxu0 0.0
    %3099 = vmatpush1.msra.mxu0 %v3060
    %3100 = vmatprep.subr.mxu0 0.0
    %3101 = vmatpush1.msra.mxu0 %v3059
    %3102 = vmatprep.subr.mxu0 0.0
    %3103 = vmatpush1.msra.mxu0 %v3058
    %3104 = vmatprep.subr.mxu0 0.0
    %3105 = vmatpush2.msra.mxu0 0.0
    %3106 = vmatprep.subr.mxu0 0.0
    %3107 = vmatpush2.msra.mxu0 0.0
    %3108 = vmatprep.subr.mxu0 0.0
    %3109 = vmatpush2.msra.mxu0 0.0
    %3110 = vmatprep.subr.mxu0 0.0
    %3111 = vmatpush2.msra.mxu0 0.0
    %3112 = vmatprep.subr.mxu0 0.0
    %3113 = vmatpush2.msra.mxu0 0.0
    %3114 = vmatprep.subr.mxu0 0.0
    %3115 = vmatpush2.msra.mxu0 0.0
    %3116 = vmatprep.subr.mxu0 0.0
    %3117 = vmatpush2.msra.mxu0 0.0
    %3118 = vmatprep.subr.mxu0 0.0
    %3119 = vmatpush2.msra.mxu0 0.0
    %3120 = vmatprep.subr.mxu0 0.0
    %3121 = vmatpush2.msra.mxu0 0.0
    %3122 = vmatprep.subr.mxu0 0.0
    %3123 = vmatpush2.msra.mxu0 0.0
    %3124 = vmatprep.subr.mxu0 0.0
    %3125 = vmatpush2.msra.mxu0 0.0
    %3126 = vmatprep.subr.mxu0 0.0
    %3127 = vmatpush2.msra.mxu0 0.0
    %3128 = vmatprep.subr.mxu0 0.0
    %3129 = vmatpush2.msra.mxu0 0.0
    %3130 = vmatprep.subr.mxu0 0.0
    %3131 = vmatpush2.msra.mxu0 0.0
    %3132 = vmatprep.subr.mxu0 0.0
    %3133 = vmatpush2.msra.mxu0 0.0
    %3134 = vmatprep.subr.mxu0 0.0
    %3135 = vmatpush2.msra.mxu0 0.0
    %3136 = vmatprep.mubr.f32.mxu0 0.0
    %3137 = vmatmul.mubr.f32.gmra.mxu0 %v3067
    %v3138 = vpop.f32.mrf.mxu0
    %v3139 = vadd.f32 0.0, %v3138
    %v3140 = vpop.f32.mrf.mxu0
    %3141 = vmatprep.mubr.f32.mxu0 0.0
    %3142 = vmatmul.mubr.f32.gmra.mxu0 %v3070
    %v3143 = vpop.f32.mrf.mxu0
    %v3144 = vadd.f32 0.0, %v3143
    %v3145 = vpop.f32.mrf.mxu0
    %3146 = vdwg.mxu0
    %v3147 = vsel %vm2708, %v3139, 0.0
    %v3148 = vrot.slane %v3147, 4
    %v3149 = vadd.f32 %v3147, %v3148
    %v3150 = vrot.slane %v3149, 2
    %v3151 = vadd.f32 %v3149, %v3150
    %v3152 = vrot.slane %v3151, 1
    %v3153 = vadd.f32 %v3151, %v3152
    %v3154 = vsel %vm2708, %v3144, 0.0
    %v3155 = vrot.slane %v3154, 4
    %v3156 = vadd.f32 %v3154, %v3155
    %v3157 = vrot.slane %v3156, 2
    %v3158 = vadd.f32 %v3156, %v3157
    %v3159 = vrot.slane %v3158, 1
    %v3160 = vadd.f32 %v3158, %v3159
    %v3161 = vmul.f32 %v3153, 0.125
    %v3162 = vmul.f32 %v3160, 0.125
    %v3163 = vmul.f32 %v3139, %v3139
    %v3164 = vmul.f32 %v3144, %v3144
    %v3165 = vsel %vm2708, %v3163, 0.0
    %v3166 = vrot.slane %v3165, 4
    %v3167 = vadd.f32 %v3165, %v3166
    %v3168 = vrot.slane %v3167, 2
    %v3169 = vadd.f32 %v3167, %v3168
    %v3170 = vrot.slane %v3169, 1
    %v3171 = vadd.f32 %v3169, %v3170
    %v3172 = vsel %vm2708, %v3164, 0.0
    %v3173 = vrot.slane %v3172, 4
    %v3174 = vadd.f32 %v3172, %v3173
    %v3175 = vrot.slane %v3174, 2
    %v3176 = vadd.f32 %v3174, %v3175
    %v3177 = vrot.slane %v3176, 1
    %v3178 = vadd.f32 %v3176, %v3177
    %v3179 = vmul.f32 %v3171, 0.125
    %v3180 = vmul.f32 %v3178, 0.125
    %v3181 = vmul.f32 %v3161, %v3161
    %v3182 = vmul.f32 %v3162, %v3162
    %v3183 = vsub.f32 %v3179, %v3181
    %v3184 = vsub.f32 %v3180, %v3182
    %v3185 = vmax.f32 %v3183, 0.0
    %v3186 = vmax.f32 %v3184, 0.0
    %v3189 = vunpack.c.l.s4 1966171168
    %v3190 = vunpack.c.0.s8 %v3189
    %v3191 = vlaneseq
    %v3192 = vshrl.u32 %v3191, 7
    %v3193 = vsub.s32 %v3190, %v3192
    %v3194 = vrot.slane %v724, %v3193
    %v3195 = vcombine.high %v3194, %v3194
    %v3197 = vunpack.c.l.s4 1966171168
    %v3198 = vunpack.c.0.s8 %v3197
    %v3199 = vlaneseq
    %v3200 = vshrl.u32 %v3199, 7
    %v3201 = vsub.s32 %v3198, %v3200
    %v3202 = vrot.slane %v3194, %v3201
    %v3204 = vunpack.c.l.s4 1966171168
    %v3205 = vunpack.c.0.s8 %v3204
    %v3206 = vlaneseq
    %v3207 = vshrl.u32 %v3206, 7
    %v3208 = vsub.s32 %v3205, %v3207
    %v3209 = vrot.slane %v3195, %v3208
    %v3214 = vunpack.c.l.s4 1966171168
    %v3215 = vunpack.c.0.s8 %v3214
    %v3216 = vlaneseq
    %v3217 = vshrl.u32 %v3216, 7
    %v3218 = vsub.s32 %v3215, %v3217
    %v3219 = vrot.slane %v726, %v3218
    %v3220 = vcombine.high %v3219, %v3219
    %v3222 = vunpack.c.l.s4 1966171168
    %v3223 = vunpack.c.0.s8 %v3222
    %v3224 = vlaneseq
    %v3225 = vshrl.u32 %v3224, 7
    %v3226 = vsub.s32 %v3223, %v3225
    %v3227 = vrot.slane %v3219, %v3226
    %v3229 = vunpack.c.l.s4 1966171168
    %v3230 = vunpack.c.0.s8 %v3229
    %v3231 = vlaneseq
    %v3232 = vshrl.u32 %v3231, 7
    %v3233 = vsub.s32 %v3230, %v3232
    %v3234 = vrot.slane %v3220, %v3233
    %v3237 = vadd.f32 %v3185, 1e-05
    %v3238 = vadd.f32 %v3186, 1e-05
    %v3239 = vrsqrt.pop %v3237
    %v3240 = vrsqrt.pop %v3238
    %v3241 = vmul.f32 %v3202, %v3239
    %v3242 = vmul.f32 %v3209, %v3240
    %v3243 = vmul.f32 %v3161, %v3241
    %v3244 = vmul.f32 %v3162, %v3242
    %v3245 = vsub.f32 %v3227, %v3243
    %v3246 = vsub.f32 %v3234, %v3244
    %v3249 = vlaneseq
    %v3250 = vshrl.u32 %v3249, 7
    %v3251 = vsub.s32 0, %v3250
    %v3252 = vrot.slane %v3241, %v3251
    %v3253 = vlaneseq
    %v3254 = vshrl.u32 %v3253, 7
    %v3255 = vsub.s32 0, %v3254
    %v3256 = vrot.slane %v3242, %v3255
    %v3259 = vmul.f32 %v3139, %v3252
    %v3260 = vmul.f32 %v3144, %v3256
    %v3263 = vlaneseq
    %v3264 = vshrl.u32 %v3263, 7
    %v3265 = vsub.s32 0, %v3264
    %v3266 = vrot.slane %v3245, %v3265
    %v3267 = vlaneseq
    %v3268 = vshrl.u32 %v3267, 7
    %v3269 = vsub.s32 0, %v3268
    %v3270 = vrot.slane %v3246, %v3269
    %v3273 = vadd.f32 %v3259, %v3266
    %v3274 = vadd.f32 %v3260, %v3270
    %v3275 = vmul.f32 %v3273, 0.2
    %v3276 = vmul.f32 %v3274, 0.2
    %v3277 = vmax.f32 %v3273, %v3275
    %v3278 = vmax.f32 %v3274, %v3276
    %v3279 = vld [vmem:[#allocation22] sm:$0xff]
    %v3280 = vld [vmem:[#allocation22 + $0x8] sm:$0xff]
    %v3281 = vld [vmem:[#allocation22 + $0x10] sm:$0xff]
    %v3282 = vld [vmem:[#allocation22 + $0x18] sm:$0xff]
    %v3283 = vld [vmem:[#allocation22 + $0x20] sm:$0xff]
    %v3284 = vld [vmem:[#allocation22 + $0x28] sm:$0xff]
    %v3285 = vld [vmem:[#allocation22 + $0x30] sm:$0xff]
    %v3286 = vld [vmem:[#allocation22 + $0x38] sm:$0xff]
    %v3288 = vsel %vm2708, %v3056, 0
    %v3291 = vsel %vm2708, %v3057, 0
    %3293 = vmatprep.subr.mxu0 0.0
    %3294 = vmatpush1.msra.mxu0 0.0
    %3295 = vmatprep.subr.mxu0 0.0
    %3296 = vmatpush1.msra.mxu0 0.0
    %3297 = vmatprep.subr.mxu0 0.0
    %3298 = vmatpush1.msra.mxu0 0.0
    %3299 = vmatprep.subr.mxu0 0.0
    %3300 = vmatpush1.msra.mxu0 0.0
    %3301 = vmatprep.subr.mxu0 0.0
    %3302 = vmatpush1.msra.mxu0 0.0
    %3303 = vmatprep.subr.mxu0 0.0
    %3304 = vmatpush1.msra.mxu0 0.0
    %3305 = vmatprep.subr.mxu0 0.0
    %3306 = vmatpush1.msra.mxu0 0.0
    %3307 = vmatprep.subr.mxu0 0.0
    %3308 = vmatpush1.msra.mxu0 0.0
    %3309 = vmatprep.subr.mxu0 0.0
    %3310 = vmatpush1.msra.mxu0 %v3286
    %3311 = vmatprep.subr.mxu0 0.0
    %3312 = vmatpush1.msra.mxu0 %v3285
    %3313 = vmatprep.subr.mxu0 0.0
    %3314 = vmatpush1.msra.mxu0 %v3284
    %3315 = vmatprep.subr.mxu0 0.0
    %3316 = vmatpush1.msra.mxu0 %v3283
    %3317 = vmatprep.subr.mxu0 0.0
    %3318 = vmatpush1.msra.mxu0 %v3282
    %3319 = vmatprep.subr.mxu0 0.0
    %3320 = vmatpush1.msra.mxu0 %v3281
    %3321 = vmatprep.subr.mxu0 0.0
    %3322 = vmatpush1.msra.mxu0 %v3280
    %3323 = vmatprep.subr.mxu0 0.0
    %3324 = vmatpush1.msra.mxu0 %v3279
    %3325 = vmatprep.subr.mxu0 0.0
    %3326 = vmatpush2.msra.mxu0 0.0
    %3327 = vmatprep.subr.mxu0 0.0
    %3328 = vmatpush2.msra.mxu0 0.0
    %3329 = vmatprep.subr.mxu0 0.0
    %3330 = vmatpush2.msra.mxu0 0.0
    %3331 = vmatprep.subr.mxu0 0.0
    %3332 = vmatpush2.msra.mxu0 0.0
    %3333 = vmatprep.subr.mxu0 0.0
    %3334 = vmatpush2.msra.mxu0 0.0
    %3335 = vmatprep.subr.mxu0 0.0
    %3336 = vmatpush2.msra.mxu0 0.0
    %3337 = vmatprep.subr.mxu0 0.0
    %3338 = vmatpush2.msra.mxu0 0.0
    %3339 = vmatprep.subr.mxu0 0.0
    %3340 = vmatpush2.msra.mxu0 0.0
    %3341 = vmatprep.subr.mxu0 0.0
    %3342 = vmatpush2.msra.mxu0 0.0
    %3343 = vmatprep.subr.mxu0 0.0
    %3344 = vmatpush2.msra.mxu0 0.0
    %3345 = vmatprep.subr.mxu0 0.0
    %3346 = vmatpush2.msra.mxu0 0.0
    %3347 = vmatprep.subr.mxu0 0.0
    %3348 = vmatpush2.msra.mxu0 0.0
    %3349 = vmatprep.subr.mxu0 0.0
    %3350 = vmatpush2.msra.mxu0 0.0
    %3351 = vmatprep.subr.mxu0 0.0
    %3352 = vmatpush2.msra.mxu0 0.0
    %3353 = vmatprep.subr.mxu0 0.0
    %3354 = vmatpush2.msra.mxu0 0.0
    %3355 = vmatprep.subr.mxu0 0.0
    %3356 = vmatpush2.msra.mxu0 0.0
    %3357 = vmatprep.mubr.f32.mxu0 0.0
    %3358 = vmatmul.mubr.f32.gmra.mxu0 %v3288
    %v3359 = vpop.f32.mrf.mxu0
    %v3360 = vadd.f32 0.0, %v3359
    %v3361 = vpop.f32.mrf.mxu0
    %3362 = vmatprep.mubr.f32.mxu0 0.0
    %3363 = vmatmul.mubr.f32.gmra.mxu0 %v3291
    %v3364 = vpop.f32.mrf.mxu0
    %v3365 = vadd.f32 0.0, %v3364
    %v3366 = vpop.f32.mrf.mxu0
    %3367 = vdwg.mxu0
    %v3368 = vsel %vm2708, %v3360, 0.0
    %v3369 = vrot.slane %v3368, 4
    %v3370 = vadd.f32 %v3368, %v3369
    %v3371 = vrot.slane %v3370, 2
    %v3372 = vadd.f32 %v3370, %v3371
    %v3373 = vrot.slane %v3372, 1
    %v3374 = vadd.f32 %v3372, %v3373
    %v3375 = vsel %vm2708, %v3365, 0.0
    %v3376 = vrot.slane %v3375, 4
    %v3377 = vadd.f32 %v3375, %v3376
    %v3378 = vrot.slane %v3377, 2
    %v3379 = vadd.f32 %v3377, %v3378
    %v3380 = vrot.slane %v3379, 1
    %v3381 = vadd.f32 %v3379, %v3380
    %v3382 = vmul.f32 %v3374, 0.125
    %v3383 = vmul.f32 %v3381, 0.125
    %v3384 = vmul.f32 %v3360, %v3360
    %v3385 = vmul.f32 %v3365, %v3365
    %v3386 = vsel %vm2708, %v3384, 0.0
    %v3387 = vrot.slane %v3386, 4
    %v3388 = vadd.f32 %v3386, %v3387
    %v3389 = vrot.slane %v3388, 2
    %v3390 = vadd.f32 %v3388, %v3389
    %v3391 = vrot.slane %v3390, 1
    %v3392 = vadd.f32 %v3390, %v3391
    %v3393 = vsel %vm2708, %v3385, 0.0
    %v3394 = vrot.slane %v3393, 4
    %v3395 = vadd.f32 %v3393, %v3394
    %v3396 = vrot.slane %v3395, 2
    %v3397 = vadd.f32 %v3395, %v3396
    %v3398 = vrot.slane %v3397, 1
    %v3399 = vadd.f32 %v3397, %v3398
    %v3400 = vmul.f32 %v3392, 0.125
    %v3401 = vmul.f32 %v3399, 0.125
    %v3402 = vmul.f32 %v3382, %v3382
    %v3403 = vmul.f32 %v3383, %v3383
    %v3404 = vsub.f32 %v3400, %v3402
    %v3405 = vsub.f32 %v3401, %v3403
    %v3406 = vmax.f32 %v3404, 0.0
    %v3407 = vmax.f32 %v3405, 0.0
    %v3410 = vunpack.c.l.s4 1966171168
    %v3411 = vunpack.c.0.s8 %v3410
    %v3412 = vlaneseq
    %v3413 = vshrl.u32 %v3412, 7
    %v3414 = vsub.s32 %v3411, %v3413
    %v3415 = vrot.slane %v1259, %v3414
    %v3416 = vcombine.high %v3415, %v3415
    %v3418 = vunpack.c.l.s4 1966171168
    %v3419 = vunpack.c.0.s8 %v3418
    %v3420 = vlaneseq
    %v3421 = vshrl.u32 %v3420, 7
    %v3422 = vsub.s32 %v3419, %v3421
    %v3423 = vrot.slane %v3415, %v3422
    %v3425 = vunpack.c.l.s4 1966171168
    %v3426 = vunpack.c.0.s8 %v3425
    %v3427 = vlaneseq
    %v3428 = vshrl.u32 %v3427, 7
    %v3429 = vsub.s32 %v3426, %v3428
    %v3430 = vrot.slane %v3416, %v3429
    %v3435 = vunpack.c.l.s4 1966171168
    %v3436 = vunpack.c.0.s8 %v3435
    %v3437 = vlaneseq
    %v3438 = vshrl.u32 %v3437, 7
    %v3439 = vsub.s32 %v3436, %v3438
    %v3440 = vrot.slane %v1261, %v3439
    %v3441 = vcombine.high %v3440, %v3440
    %v3443 = vunpack.c.l.s4 1966171168
    %v3444 = vunpack.c.0.s8 %v3443
    %v3445 = vlaneseq
    %v3446 = vshrl.u32 %v3445, 7
    %v3447 = vsub.s32 %v3444, %v3446
    %v3448 = vrot.slane %v3440, %v3447
    %v3450 = vunpack.c.l.s4 1966171168
    %v3451 = vunpack.c.0.s8 %v3450
    %v3452 = vlaneseq
    %v3453 = vshrl.u32 %v3452, 7
    %v3454 = vsub.s32 %v3451, %v3453
    %v3455 = vrot.slane %v3441, %v3454
    %v3458 = vadd.f32 %v3406, 1e-05
    %v3459 = vadd.f32 %v3407, 1e-05
    %v3460 = vrsqrt.pop %v3458
    %v3461 = vrsqrt.pop %v3459
    %v3462 = vmul.f32 %v3423, %v3460
    %v3463 = vmul.f32 %v3430, %v3461
    %v3464 = vmul.f32 %v3382, %v3462
    %v3465 = vmul.f32 %v3383, %v3463
    %v3466 = vsub.f32 %v3448, %v3464
    %v3467 = vsub.f32 %v3455, %v3465
    %v3470 = vlaneseq
    %v3471 = vshrl.u32 %v3470, 7
    %v3472 = vsub.s32 0, %v3471
    %v3473 = vrot.slane %v3462, %v3472
    %v3474 = vlaneseq
    %v3475 = vshrl.u32 %v3474, 7
    %v3476 = vsub.s32 0, %v3475
    %v3477 = vrot.slane %v3463, %v3476
    %v3480 = vmul.f32 %v3360, %v3473
    %v3481 = vmul.f32 %v3365, %v3477
    %v3484 = vlaneseq
    %v3485 = vshrl.u32 %v3484, 7
    %v3486 = vsub.s32 0, %v3485
    %v3487 = vrot.slane %v3466, %v3486
    %v3488 = vlaneseq
    %v3489 = vshrl.u32 %v3488, 7
    %v3490 = vsub.s32 0, %v3489
    %v3491 = vrot.slane %v3467, %v3490
    %v3494 = vadd.f32 %v3480, %v3487
    %v3495 = vadd.f32 %v3481, %v3491
    %v3496 = vmul.f32 %v3494, 0.2
    %v3497 = vmul.f32 %v3495, 0.2
    %v3498 = vmax.f32 %v3494, %v3496
    %v3499 = vmax.f32 %v3495, %v3497
    %v3500 = vld [vmem:[#allocation16] sm:$0xff]
    %v3501 = vld [vmem:[#allocation16 + $0x8] sm:$0xff]
    %v3502 = vld [vmem:[#allocation16 + $0x10] sm:$0xff]
    %v3503 = vld [vmem:[#allocation16 + $0x18] sm:$0xff]
    %v3504 = vld [vmem:[#allocation16 + $0x20] sm:$0xff]
    %v3505 = vld [vmem:[#allocation16 + $0x28] sm:$0xff]
    %v3506 = vld [vmem:[#allocation16 + $0x30] sm:$0xff]
    %v3507 = vld [vmem:[#allocation16 + $0x38] sm:$0xff]
    %v3509 = vsel %vm2708, %v3277, 0
    %v3512 = vsel %vm2708, %v3278, 0
    %3514 = vmatprep.subr.mxu0 0.0
    %3515 = vmatpush1.msra.mxu0 0.0
    %3516 = vmatprep.subr.mxu0 0.0
    %3517 = vmatpush1.msra.mxu0 0.0
    %3518 = vmatprep.subr.mxu0 0.0
    %3519 = vmatpush1.msra.mxu0 0.0
    %3520 = vmatprep.subr.mxu0 0.0
    %3521 = vmatpush1.msra.mxu0 0.0
    %3522 = vmatprep.subr.mxu0 0.0
    %3523 = vmatpush1.msra.mxu0 0.0
    %3524 = vmatprep.subr.mxu0 0.0
    %3525 = vmatpush1.msra.mxu0 0.0
    %3526 = vmatprep.subr.mxu0 0.0
    %3527 = vmatpush1.msra.mxu0 0.0
    %3528 = vmatprep.subr.mxu0 0.0
    %3529 = vmatpush1.msra.mxu0 0.0
    %3530 = vmatprep.subr.mxu0 0.0
    %3531 = vmatpush1.msra.mxu0 %v3507
    %3532 = vmatprep.subr.mxu0 0.0
    %3533 = vmatpush1.msra.mxu0 %v3506
    %3534 = vmatprep.subr.mxu0 0.0
    %3535 = vmatpush1.msra.mxu0 %v3505
    %3536 = vmatprep.subr.mxu0 0.0
    %3537 = vmatpush1.msra.mxu0 %v3504
    %3538 = vmatprep.subr.mxu0 0.0
    %3539 = vmatpush1.msra.mxu0 %v3503
    %3540 = vmatprep.subr.mxu0 0.0
    %3541 = vmatpush1.msra.mxu0 %v3502
    %3542 = vmatprep.subr.mxu0 0.0
    %3543 = vmatpush1.msra.mxu0 %v3501
    %3544 = vmatprep.subr.mxu0 0.0
    %3545 = vmatpush1.msra.mxu0 %v3500
    %3546 = vmatprep.subr.mxu0 0.0
    %3547 = vmatpush2.msra.mxu0 0.0
    %3548 = vmatprep.subr.mxu0 0.0
    %3549 = vmatpush2.msra.mxu0 0.0
    %3550 = vmatprep.subr.mxu0 0.0
    %3551 = vmatpush2.msra.mxu0 0.0
    %3552 = vmatprep.subr.mxu0 0.0
    %3553 = vmatpush2.msra.mxu0 0.0
    %3554 = vmatprep.subr.mxu0 0.0
    %3555 = vmatpush2.msra.mxu0 0.0
    %3556 = vmatprep.subr.mxu0 0.0
    %3557 = vmatpush2.msra.mxu0 0.0
    %3558 = vmatprep.subr.mxu0 0.0
    %3559 = vmatpush2.msra.mxu0 0.0
    %3560 = vmatprep.subr.mxu0 0.0
    %3561 = vmatpush2.msra.mxu0 0.0
    %3562 = vmatprep.subr.mxu0 0.0
    %3563 = vmatpush2.msra.mxu0 0.0
    %3564 = vmatprep.subr.mxu0 0.0
    %3565 = vmatpush2.msra.mxu0 0.0
    %3566 = vmatprep.subr.mxu0 0.0
    %3567 = vmatpush2.msra.mxu0 0.0
    %3568 = vmatprep.subr.mxu0 0.0
    %3569 = vmatpush2.msra.mxu0 0.0
    %3570 = vmatprep.subr.mxu0 0.0
    %3571 = vmatpush2.msra.mxu0 0.0
    %3572 = vmatprep.subr.mxu0 0.0
    %3573 = vmatpush2.msra.mxu0 0.0
    %3574 = vmatprep.subr.mxu0 0.0
    %3575 = vmatpush2.msra.mxu0 0.0
    %3576 = vmatprep.subr.mxu0 0.0
    %3577 = vmatpush2.msra.mxu0 0.0
    %3578 = vmatprep.mubr.f32.mxu0 0.0
    %3579 = vmatmul.mubr.f32.gmra.mxu0 %v3509
    %v3580 = vpop.f32.mrf.mxu0
    %v3581 = vadd.f32 0.0, %v3580
    %v3582 = vpop.f32.mrf.mxu0
    %3583 = vmatprep.mubr.f32.mxu0 0.0
    %3584 = vmatmul.mubr.f32.gmra.mxu0 %v3512
    %v3585 = vpop.f32.mrf.mxu0
    %v3586 = vadd.f32 0.0, %v3585
    %v3587 = vpop.f32.mrf.mxu0
    %3588 = vdwg.mxu0
    %v3589 = vrot.slane %v3581, 4
    %v3590 = vadd.f32 %v3581, %v3589
    %v3591 = vrot.slane %v3590, 2
    %v3592 = vadd.f32 %v3590, %v3591
    %v3593 = vrot.slane %v3592, 1
    %v3594 = vadd.f32 %v3592, %v3593
    %v3595 = vrot.slane %v3586, 4
    %v3596 = vadd.f32 %v3586, %v3595
    %v3597 = vrot.slane %v3596, 2
    %v3598 = vadd.f32 %v3596, %v3597
    %v3599 = vrot.slane %v3598, 1
    %v3600 = vadd.f32 %v3598, %v3599
    %v3601 = vmul.f32 %v3594, 0.125
    %v3602 = vmul.f32 %v3600, 0.125
    %v3603 = vmul.f32 %v3581, %v3581
    %v3604 = vmul.f32 %v3586, %v3586
    %v3605 = vrot.slane %v3603, 4
    %v3606 = vadd.f32 %v3603, %v3605
    %v3607 = vrot.slane %v3606, 2
    %v3608 = vadd.f32 %v3606, %v3607
    %v3609 = vrot.slane %v3608, 1
    %v3610 = vadd.f32 %v3608, %v3609
    %v3611 = vrot.slane %v3604, 4
    %v3612 = vadd.f32 %v3604, %v3611
    %v3613 = vrot.slane %v3612, 2
    %v3614 = vadd.f32 %v3612, %v3613
    %v3615 = vrot.slane %v3614, 1
    %v3616 = vadd.f32 %v3614, %v3615
    %v3617 = vmul.f32 %v3610, 0.125
    %v3618 = vmul.f32 %v3616, 0.125
    %v3619 = vmul.f32 %v3601, %v3601
    %v3620 = vmul.f32 %v3602, %v3602
    %v3621 = vsub.f32 %v3617, %v3619
    %v3622 = vsub.f32 %v3618, %v3620
    %v3623 = vmax.f32 %v3621, 0.0
    %v3624 = vmax.f32 %v3622, 0.0
    %v3627 = vunpack.c.l.s4 1966171168
    %v3628 = vunpack.c.0.s8 %v3627
    %v3629 = vlaneseq
    %v3630 = vshrl.u32 %v3629, 7
    %v3631 = vsub.s32 %v3628, %v3630
    %v3632 = vrot.slane %v795, %v3631
    %v3633 = vcombine.high %v3632, %v3632
    %v3635 = vunpack.c.l.s4 1966171168
    %v3636 = vunpack.c.0.s8 %v3635
    %v3637 = vlaneseq
    %v3638 = vshrl.u32 %v3637, 7
    %v3639 = vsub.s32 %v3636, %v3638
    %v3640 = vrot.slane %v3632, %v3639
    %v3642 = vunpack.c.l.s4 1966171168
    %v3643 = vunpack.c.0.s8 %v3642
    %v3644 = vlaneseq
    %v3645 = vshrl.u32 %v3644, 7
    %v3646 = vsub.s32 %v3643, %v3645
    %v3647 = vrot.slane %v3633, %v3646
    %v3652 = vunpack.c.l.s4 1966171168
    %v3653 = vunpack.c.0.s8 %v3652
    %v3654 = vlaneseq
    %v3655 = vshrl.u32 %v3654, 7
    %v3656 = vsub.s32 %v3653, %v3655
    %v3657 = vrot.slane %v797, %v3656
    %v3658 = vcombine.high %v3657, %v3657
    %v3660 = vunpack.c.l.s4 1966171168
    %v3661 = vunpack.c.0.s8 %v3660
    %v3662 = vlaneseq
    %v3663 = vshrl.u32 %v3662, 7
    %v3664 = vsub.s32 %v3661, %v3663
    %v3665 = vrot.slane %v3657, %v3664
    %v3667 = vunpack.c.l.s4 1966171168
    %v3668 = vunpack.c.0.s8 %v3667
    %v3669 = vlaneseq
    %v3670 = vshrl.u32 %v3669, 7
    %v3671 = vsub.s32 %v3668, %v3670
    %v3672 = vrot.slane %v3658, %v3671
    %v3675 = vadd.f32 %v3623, 1e-05
    %v3676 = vadd.f32 %v3624, 1e-05
    %v3677 = vrsqrt.pop %v3675
    %v3678 = vrsqrt.pop %v3676
    %v3679 = vmul.f32 %v3640, %v3677
    %v3680 = vmul.f32 %v3647, %v3678
    %v3681 = vmul.f32 %v3601, %v3679
    %v3682 = vmul.f32 %v3602, %v3680
    %v3683 = vsub.f32 %v3665, %v3681
    %v3684 = vsub.f32 %v3672, %v3682
    %v3687 = vlaneseq
    %v3688 = vshrl.u32 %v3687, 7
    %v3689 = vsub.s32 0, %v3688
    %v3690 = vrot.slane %v3679, %v3689
    %v3691 = vlaneseq
    %v3692 = vshrl.u32 %v3691, 7
    %v3693 = vsub.s32 0, %v3692
    %v3694 = vrot.slane %v3680, %v3693
    %v3697 = vmul.f32 %v3581, %v3690
    %v3698 = vmul.f32 %v3586, %v3694
    %v3701 = vlaneseq
    %v3702 = vshrl.u32 %v3701, 7
    %v3703 = vsub.s32 0, %v3702
    %v3704 = vrot.slane %v3683, %v3703
    %v3705 = vlaneseq
    %v3706 = vshrl.u32 %v3705, 7
    %v3707 = vsub.s32 0, %v3706
    %v3708 = vrot.slane %v3684, %v3707
    %v3711 = vadd.f32 %v3697, %v3704
    %v3712 = vadd.f32 %v3698, %v3708
    %v3713 = vmul.f32 %v3711, 0.2
    %v3714 = vmul.f32 %v3712, 0.2
    %v3715 = vmax.f32 %v3711, %v3713
    %v3716 = vmax.f32 %v3712, %v3714
    %v3717 = vld [vmem:[#allocation24] sm:$0xff]
    %v3718 = vld [vmem:[#allocation24 + $0x8] sm:$0xff]
    %v3719 = vld [vmem:[#allocation24 + $0x10] sm:$0xff]
    %v3720 = vld [vmem:[#allocation24 + $0x18] sm:$0xff]
    %v3721 = vld [vmem:[#allocation24 + $0x20] sm:$0xff]
    %v3722 = vld [vmem:[#allocation24 + $0x28] sm:$0xff]
    %v3723 = vld [vmem:[#allocation24 + $0x30] sm:$0xff]
    %v3724 = vld [vmem:[#allocation24 + $0x38] sm:$0xff]
    %v3726 = vsel %vm2708, %v3498, 0
    %v3729 = vsel %vm2708, %v3499, 0
    %3731 = vmatprep.subr.mxu0 0.0
    %3732 = vmatpush1.msra.mxu0 0.0
    %3733 = vmatprep.subr.mxu0 0.0
    %3734 = vmatpush1.msra.mxu0 0.0
    %3735 = vmatprep.subr.mxu0 0.0
    %3736 = vmatpush1.msra.mxu0 0.0
    %3737 = vmatprep.subr.mxu0 0.0
    %3738 = vmatpush1.msra.mxu0 0.0
    %3739 = vmatprep.subr.mxu0 0.0
    %3740 = vmatpush1.msra.mxu0 0.0
    %3741 = vmatprep.subr.mxu0 0.0
    %3742 = vmatpush1.msra.mxu0 0.0
    %3743 = vmatprep.subr.mxu0 0.0
    %3744 = vmatpush1.msra.mxu0 0.0
    %3745 = vmatprep.subr.mxu0 0.0
    %3746 = vmatpush1.msra.mxu0 0.0
    %3747 = vmatprep.subr.mxu0 0.0
    %3748 = vmatpush1.msra.mxu0 %v3724
    %3749 = vmatprep.subr.mxu0 0.0
    %3750 = vmatpush1.msra.mxu0 %v3723
    %3751 = vmatprep.subr.mxu0 0.0
    %3752 = vmatpush1.msra.mxu0 %v3722
    %3753 = vmatprep.subr.mxu0 0.0
    %3754 = vmatpush1.msra.mxu0 %v3721
    %3755 = vmatprep.subr.mxu0 0.0
    %3756 = vmatpush1.msra.mxu0 %v3720
    %3757 = vmatprep.subr.mxu0 0.0
    %3758 = vmatpush1.msra.mxu0 %v3719
    %3759 = vmatprep.subr.mxu0 0.0
    %3760 = vmatpush1.msra.mxu0 %v3718
    %3761 = vmatprep.subr.mxu0 0.0
    %3762 = vmatpush1.msra.mxu0 %v3717
    %3763 = vmatprep.subr.mxu0 0.0
    %3764 = vmatpush2.msra.mxu0 0.0
    %3765 = vmatprep.subr.mxu0 0.0
    %3766 = vmatpush2.msra.mxu0 0.0
    %3767 = vmatprep.subr.mxu0 0.0
    %3768 = vmatpush2.msra.mxu0 0.0
    %3769 = vmatprep.subr.mxu0 0.0
    %3770 = vmatpush2.msra.mxu0 0.0
    %3771 = vmatprep.subr.mxu0 0.0
    %3772 = vmatpush2.msra.mxu0 0.0
    %3773 = vmatprep.subr.mxu0 0.0
    %3774 = vmatpush2.msra.mxu0 0.0
    %3775 = vmatprep.subr.mxu0 0.0
    %3776 = vmatpush2.msra.mxu0 0.0
    %3777 = vmatprep.subr.mxu0 0.0
    %3778 = vmatpush2.msra.mxu0 0.0
    %3779 = vmatprep.subr.mxu0 0.0
    %3780 = vmatpush2.msra.mxu0 0.0
    %3781 = vmatprep.subr.mxu0 0.0
    %3782 = vmatpush2.msra.mxu0 0.0
    %3783 = vmatprep.subr.mxu0 0.0
    %3784 = vmatpush2.msra.mxu0 0.0
    %3785 = vmatprep.subr.mxu0 0.0
    %3786 = vmatpush2.msra.mxu0 0.0
    %3787 = vmatprep.subr.mxu0 0.0
    %3788 = vmatpush2.msra.mxu0 0.0
    %3789 = vmatprep.subr.mxu0 0.0
    %3790 = vmatpush2.msra.mxu0 0.0
    %3791 = vmatprep.subr.mxu0 0.0
    %3792 = vmatpush2.msra.mxu0 0.0
    %3793 = vmatprep.subr.mxu0 0.0
    %3794 = vmatpush2.msra.mxu0 0.0
    %3795 = vmatprep.mubr.f32.mxu0 0.0
    %3796 = vmatmul.mubr.f32.gmra.mxu0 %v3726
    %v3797 = vpop.f32.mrf.mxu0
    %v3798 = vadd.f32 0.0, %v3797
    %v3799 = vpop.f32.mrf.mxu0
    %3800 = vmatprep.mubr.f32.mxu0 0.0
    %3801 = vmatmul.mubr.f32.gmra.mxu0 %v3729
    %v3802 = vpop.f32.mrf.mxu0
    %v3803 = vadd.f32 0.0, %v3802
    %v3804 = vpop.f32.mrf.mxu0
    %3805 = vdwg.mxu0
    %v3806 = vrot.slane %v3798, 4
    %v3807 = vadd.f32 %v3798, %v3806
    %v3808 = vrot.slane %v3807, 2
    %v3809 = vadd.f32 %v3807, %v3808
    %v3810 = vrot.slane %v3809, 1
    %v3811 = vadd.f32 %v3809, %v3810
    %v3812 = vrot.slane %v3803, 4
    %v3813 = vadd.f32 %v3803, %v3812
    %v3814 = vrot.slane %v3813, 2
    %v3815 = vadd.f32 %v3813, %v3814
    %v3816 = vrot.slane %v3815, 1
    %v3817 = vadd.f32 %v3815, %v3816
    %v3818 = vmul.f32 %v3811, 0.125
    %v3819 = vmul.f32 %v3817, 0.125
    %v3820 = vmul.f32 %v3798, %v3798
    %v3821 = vmul.f32 %v3803, %v3803
    %v3822 = vrot.slane %v3820, 4
    %v3823 = vadd.f32 %v3820, %v3822
    %v3824 = vrot.slane %v3823, 2
    %v3825 = vadd.f32 %v3823, %v3824
    %v3826 = vrot.slane %v3825, 1
    %v3827 = vadd.f32 %v3825, %v3826
    %v3828 = vrot.slane %v3821, 4
    %v3829 = vadd.f32 %v3821, %v3828
    %v3830 = vrot.slane %v3829, 2
    %v3831 = vadd.f32 %v3829, %v3830
    %v3832 = vrot.slane %v3831, 1
    %v3833 = vadd.f32 %v3831, %v3832
    %v3834 = vmul.f32 %v3827, 0.125
    %v3835 = vmul.f32 %v3833, 0.125
    %v3836 = vmul.f32 %v3818, %v3818
    %v3837 = vmul.f32 %v3819, %v3819
    %v3838 = vsub.f32 %v3834, %v3836
    %v3839 = vsub.f32 %v3835, %v3837
    %v3840 = vmax.f32 %v3838, 0.0
    %v3841 = vmax.f32 %v3839, 0.0
    %v3844 = vunpack.c.l.s4 1966171168
    %v3845 = vunpack.c.0.s8 %v3844
    %v3846 = vlaneseq
    %v3847 = vshrl.u32 %v3846, 7
    %v3848 = vsub.s32 %v3845, %v3847
    %v3849 = vrot.slane %v1330, %v3848
    %v3850 = vcombine.high %v3849, %v3849
    %v3852 = vunpack.c.l.s4 1966171168
    %v3853 = vunpack.c.0.s8 %v3852
    %v3854 = vlaneseq
    %v3855 = vshrl.u32 %v3854, 7
    %v3856 = vsub.s32 %v3853, %v3855
    %v3857 = vrot.slane %v3849, %v3856
    %v3859 = vunpack.c.l.s4 1966171168
    %v3860 = vunpack.c.0.s8 %v3859
    %v3861 = vlaneseq
    %v3862 = vshrl.u32 %v3861, 7
    %v3863 = vsub.s32 %v3860, %v3862
    %v3864 = vrot.slane %v3850, %v3863
    %v3869 = vunpack.c.l.s4 1966171168
    %v3870 = vunpack.c.0.s8 %v3869
    %v3871 = vlaneseq
    %v3872 = vshrl.u32 %v3871, 7
    %v3873 = vsub.s32 %v3870, %v3872
    %v3874 = vrot.slane %v1332, %v3873
    %v3875 = vcombine.high %v3874, %v3874
    %v3877 = vunpack.c.l.s4 1966171168
    %v3878 = vunpack.c.0.s8 %v3877
    %v3879 = vlaneseq
    %v3880 = vshrl.u32 %v3879, 7
    %v3881 = vsub.s32 %v3878, %v3880
    %v3882 = vrot.slane %v3874, %v3881
    %v3884 = vunpack.c.l.s4 1966171168
    %v3885 = vunpack.c.0.s8 %v3884
    %v3886 = vlaneseq
    %v3887 = vshrl.u32 %v3886, 7
    %v3888 = vsub.s32 %v3885, %v3887
    %v3889 = vrot.slane %v3875, %v3888
    %v3892 = vadd.f32 %v3840, 1e-05
    %v3893 = vadd.f32 %v3841, 1e-05
    %v3894 = vrsqrt.pop %v3892
    %v3895 = vrsqrt.pop %v3893
    %v3896 = vmul.f32 %v3857, %v3894
    %v3897 = vmul.f32 %v3864, %v3895
    %v3898 = vmul.f32 %v3818, %v3896
    %v3899 = vmul.f32 %v3819, %v3897
    %v3900 = vsub.f32 %v3882, %v3898
    %v3901 = vsub.f32 %v3889, %v3899
    %v3904 = vlaneseq
    %v3905 = vshrl.u32 %v3904, 7
    %v3906 = vsub.s32 0, %v3905
    %v3907 = vrot.slane %v3896, %v3906
    %v3908 = vlaneseq
    %v3909 = vshrl.u32 %v3908, 7
    %v3910 = vsub.s32 0, %v3909
    %v3911 = vrot.slane %v3897, %v3910
    %v3914 = vmul.f32 %v3798, %v3907
    %v3915 = vmul.f32 %v3803, %v3911
    %v3918 = vlaneseq
    %v3919 = vshrl.u32 %v3918, 7
    %v3920 = vsub.s32 0, %v3919
    %v3921 = vrot.slane %v3900, %v3920
    %v3922 = vlaneseq
    %v3923 = vshrl.u32 %v3922, 7
    %v3924 = vsub.s32 0, %v3923
    %v3925 = vrot.slane %v3901, %v3924
    %v3928 = vadd.f32 %v3914, %v3921
    %v3929 = vadd.f32 %v3915, %v3925
    %v3930 = vmul.f32 %v3928, 0.2
    %v3931 = vmul.f32 %v3929, 0.2
    %v3932 = vmax.f32 %v3928, %v3930
    %v3933 = vmax.f32 %v3929, %v3931
    %3934 = vmatprep.subr.mxu0 0.0
    %3935 = vmatpush1.xpose.msra.mxu0 0.0
    %3936 = vmatprep.subr.mxu0 0.0
    %3937 = vmatpush1.xpose.msra.mxu0 0.0
    %3938 = vmatprep.subr.mxu0 0.0
    %3939 = vmatpush1.xpose.msra.mxu0 0.0
    %3940 = vmatprep.subr.mxu0 0.0
    %3941 = vmatpush1.xpose.msra.mxu0 0.0
    %3942 = vmatprep.subr.mxu0 0.0
    %3943 = vmatpush1.xpose.msra.mxu0 0.0
    %3944 = vmatprep.subr.mxu0 0.0
    %3945 = vmatpush1.xpose.msra.mxu0 0.0
    %3946 = vmatprep.subr.mxu0 0.0
    %3947 = vmatpush1.xpose.msra.mxu0 0.0
    %3948 = vmatprep.subr.mxu0 0.0
    %3949 = vmatpush1.xpose.msra.mxu0 0.0
    %3950 = vmatprep.subr.mxu0 0.0
    %3951 = vmatpush1.xpose.msra.mxu0 0.0
    %3952 = vmatprep.subr.mxu0 0.0
    %3953 = vmatpush1.xpose.msra.mxu0 0.0
    %3954 = vmatprep.subr.mxu0 0.0
    %3955 = vmatpush1.xpose.msra.mxu0 0.0
    %3956 = vmatprep.subr.mxu0 0.0
    %3957 = vmatpush1.xpose.msra.mxu0 0.0
    %3958 = vmatprep.subr.mxu0 0.0
    %3959 = vmatpush1.xpose.msra.mxu0 0.0
    %3960 = vmatprep.subr.mxu0 0.0
    %3961 = vmatpush1.xpose.msra.mxu0 0.0
    %3962 = vmatprep.subr.mxu0 0.0
    %3963 = vmatpush1.xpose.msra.mxu0 0.0
    %3964 = vmatprep.subr.mxu0 0.0
    %3965 = vmatpush1.xpose.msra.mxu0 %v3932
    %3966 = vmatprep.subr.mxu0 0.0
    %3967 = vmatpush2.xpose.msra.mxu0 0.0
    %3968 = vmatprep.subr.mxu0 0.0
    %3969 = vmatpush2.xpose.msra.mxu0 0.0
    %3970 = vmatprep.subr.mxu0 0.0
    %3971 = vmatpush2.xpose.msra.mxu0 0.0
    %3972 = vmatprep.subr.mxu0 0.0
    %3973 = vmatpush2.xpose.msra.mxu0 0.0
    %3974 = vmatprep.subr.mxu0 0.0
    %3975 = vmatpush2.xpose.msra.mxu0 0.0
    %3976 = vmatprep.subr.mxu0 0.0
    %3977 = vmatpush2.xpose.msra.mxu0 0.0
    %3978 = vmatprep.subr.mxu0 0.0
    %3979 = vmatpush2.xpose.msra.mxu0 0.0
    %3980 = vmatprep.subr.mxu0 0.0
    %3981 = vmatpush2.xpose.msra.mxu0 0.0
    %3982 = vmatprep.subr.mxu0 0.0
    %3983 = vmatpush2.xpose.msra.mxu0 0.0
    %3984 = vmatprep.subr.mxu0 0.0
    %3985 = vmatpush2.xpose.msra.mxu0 0.0
    %3986 = vmatprep.subr.mxu0 0.0
    %3987 = vmatpush2.xpose.msra.mxu0 0.0
    %3988 = vmatprep.subr.mxu0 0.0
    %3989 = vmatpush2.xpose.msra.mxu0 0.0
    %3990 = vmatprep.subr.mxu0 0.0
    %3991 = vmatpush2.xpose.msra.mxu0 0.0
    %3992 = vmatprep.subr.mxu0 0.0
    %3993 = vmatpush2.xpose.msra.mxu0 0.0
    %3994 = vmatprep.subr.mxu0 0.0
    %3995 = vmatpush2.xpose.msra.mxu0 0.0
    %3996 = vmatprep.subr.mxu0 0.0
    %3997 = vmatpush2.xpose.msra.mxu0 0.0
    %3998 = vmatprep.mubr.f32.mxu0 0.0
    %3999 = vmatmul.mubr.f32.gmra.mxu0 %v3715
    %v4000 = vpop.f32.mrf.mxu0
    %v4001 = vadd.f32 0.0, %v4000
    %v4002 = vpop.f32.mrf.mxu0
    %4003 = vdwg.mxu0
    %4004 = vmatprep.subr.mxu0 0.0
    %4005 = vmatpush1.xpose.msra.mxu0 0.0
    %4006 = vmatprep.subr.mxu0 0.0
    %4007 = vmatpush1.xpose.msra.mxu0 0.0
    %4008 = vmatprep.subr.mxu0 0.0
    %4009 = vmatpush1.xpose.msra.mxu0 0.0
    %4010 = vmatprep.subr.mxu0 0.0
    %4011 = vmatpush1.xpose.msra.mxu0 0.0
    %4012 = vmatprep.subr.mxu0 0.0
    %4013 = vmatpush1.xpose.msra.mxu0 0.0
    %4014 = vmatprep.subr.mxu0 0.0
    %4015 = vmatpush1.xpose.msra.mxu0 0.0
    %4016 = vmatprep.subr.mxu0 0.0
    %4017 = vmatpush1.xpose.msra.mxu0 0.0
    %4018 = vmatprep.subr.mxu0 0.0
    %4019 = vmatpush1.xpose.msra.mxu0 0.0
    %4020 = vmatprep.subr.mxu0 0.0
    %4021 = vmatpush1.xpose.msra.mxu0 0.0
    %4022 = vmatprep.subr.mxu0 0.0
    %4023 = vmatpush1.xpose.msra.mxu0 0.0
    %4024 = vmatprep.subr.mxu0 0.0
    %4025 = vmatpush1.xpose.msra.mxu0 0.0
    %4026 = vmatprep.subr.mxu0 0.0
    %4027 = vmatpush1.xpose.msra.mxu0 0.0
    %4028 = vmatprep.subr.mxu0 0.0
    %4029 = vmatpush1.xpose.msra.mxu0 0.0
    %4030 = vmatprep.subr.mxu0 0.0
    %4031 = vmatpush1.xpose.msra.mxu0 0.0
    %4032 = vmatprep.subr.mxu0 0.0
    %4033 = vmatpush1.xpose.msra.mxu0 0.0
    %4034 = vmatprep.subr.mxu0 0.0
    %4035 = vmatpush1.xpose.msra.mxu0 %v3933
    %4036 = vmatprep.subr.mxu0 0.0
    %4037 = vmatpush2.xpose.msra.mxu0 0.0
    %4038 = vmatprep.subr.mxu0 0.0
    %4039 = vmatpush2.xpose.msra.mxu0 0.0
    %4040 = vmatprep.subr.mxu0 0.0
    %4041 = vmatpush2.xpose.msra.mxu0 0.0
    %4042 = vmatprep.subr.mxu0 0.0
    %4043 = vmatpush2.xpose.msra.mxu0 0.0
    %4044 = vmatprep.subr.mxu0 0.0
    %4045 = vmatpush2.xpose.msra.mxu0 0.0
    %4046 = vmatprep.subr.mxu0 0.0
    %4047 = vmatpush2.xpose.msra.mxu0 0.0
    %4048 = vmatprep.subr.mxu0 0.0
    %4049 = vmatpush2.xpose.msra.mxu0 0.0
    %4050 = vmatprep.subr.mxu0 0.0
    %4051 = vmatpush2.xpose.msra.mxu0 0.0
    %4052 = vmatprep.subr.mxu0 0.0
    %4053 = vmatpush2.xpose.msra.mxu0 0.0
    %4054 = vmatprep.subr.mxu0 0.0
    %4055 = vmatpush2.xpose.msra.mxu0 0.0
    %4056 = vmatprep.subr.mxu0 0.0
    %4057 = vmatpush2.xpose.msra.mxu0 0.0
    %4058 = vmatprep.subr.mxu0 0.0
    %4059 = vmatpush2.xpose.msra.mxu0 0.0
    %4060 = vmatprep.subr.mxu0 0.0
    %4061 = vmatpush2.xpose.msra.mxu0 0.0
    %4062 = vmatprep.subr.mxu0 0.0
    %4063 = vmatpush2.xpose.msra.mxu0 0.0
    %4064 = vmatprep.subr.mxu0 0.0
    %4065 = vmatpush2.xpose.msra.mxu0 0.0
    %4066 = vmatprep.subr.mxu0 0.0
    %4067 = vmatpush2.xpose.msra.mxu0 0.0
    %4068 = vmatprep.mubr.f32.mxu0 0.0
    %4069 = vmatmul.mubr.f32.gmra.mxu0 %v3716
    %v4070 = vpop.f32.mrf.mxu0
    %v4071 = vadd.f32 0.0, %v4070
    %v4072 = vpop.f32.mrf.mxu0
    %4073 = vdwg.mxu0
    %4075 = vrot.lane.b32.xlu0 %v4071, 8
    %v4076 = vpop.permute.xlu0 %4075
    %vm4078 = vcmask 64512
    %v4079 = vsel %vm4078, %v4001, %v4076
    %4080 = vst.msk [vmem:[%s19] sm:$0xff] %vm370, %v4079
    // Predicated region
    $region138: #{decoder2_forward.1} parent=1 // pred_check
      _
    $region139: #{decoder2_forward.1} parent=1 // pred_check_branch
      %4082 = sbr.rel (0) target = $region141
    $region140: #{decoder2_forward.1} parent=1 // pred_region
      _
    $region141: #{decoder2_forward.1} parent=1 // pred_fallthru
      _
    // Predicated region
    $region142: #{decoder2_forward.1} parent=1 // pred_check
      _
    $region143: #{decoder2_forward.1} parent=1 // pred_check_branch
      %4084 = sbr.rel (0) target = $region145
    $region144: #{decoder2_forward.1} parent=1 // pred_region
      _
    $region145: #{decoder2_forward.1} parent=1 // pred_fallthru
      _
    %4085 = vsyncpa [#allocation3], 1
    %4086 = vsyncpa [#allocation5], 1
    %4087 = vsyncpa [#allocation8], 1
    %4088 = vsyncpa [#allocation11], 1
    %4089 = vsyncpa [#allocation14], 1
    %4090 = vsyncpa [#allocation17], 1
    %4091 = vsyncpa [#allocation20], 1
    %4092 = vsyncpa [#allocation23], 1

</llo_original>
